<compile_context>
chip_gen: v7x
topology: tpu7x:2x2x1
jax: 0.10.0
libtpu: 0.0.40
codegen_flags: <defaults>
</compile_context>

<pallas_src>
import functools
import math

import numpy as np
import jax
import jax.numpy as jnp
from jax.experimental import pallas as pl
from jax.experimental.pallas import tpu as pltpu

HIDDEN = 64  # nn.LSTM(3, 64, 2)


def _vmem():
    return pl.BlockSpec(memory_space=pltpu.MemorySpace.VMEM)


# ---------------------------------------------------------------------------
# Parameter init (deterministic, PyTorch layouts / shapes).
# ---------------------------------------------------------------------------
def init_params(key, batch):
    ks = list(jax.random.split(key, 22))

    def unif(k, shape, bound):
        return jax.random.uniform(k, shape, jnp.float32, -bound, bound)

    def xav(k, shape, fan_in, fan_out):
        return math.sqrt(2.0 / (fan_in + fan_out)) * jax.random.normal(k, shape, jnp.float32)

    p = {}
    kb = 1.0 / math.sqrt(HIDDEN)
    # LSTM (PyTorch layout: weight_ih_l* (4H, in), weight_hh_l* (4H, H), gate order i,f,g,o)
    p['w_ih0'] = unif(ks[0], (4 * HIDDEN, 3), kb)
    p['w_hh0'] = unif(ks[1], (4 * HIDDEN, HIDDEN), kb)
    p['b_ih0'] = unif(ks[2], (4 * HIDDEN,), kb)
    p['b_hh0'] = unif(ks[3], (4 * HIDDEN,), kb)
    p['w_ih1'] = unif(ks[4], (4 * HIDDEN, HIDDEN), kb)
    p['w_hh1'] = unif(ks[5], (4 * HIDDEN, HIDDEN), kb)
    p['b_ih1'] = unif(ks[6], (4 * HIDDEN,), kb)
    p['b_hh1'] = unif(ks[7], (4 * HIDDEN,), kb)
    # TODO(synk): torch builds h_0/c_0 in forward with xavier_normal_/orthogonal_ init;
    # replaced by deterministic scaled-normal states (init-only difference, forward math unchanged).
    p['h0'] = 0.1 * jax.random.normal(ks[8], (2, batch, HIDDEN), jnp.float32)
    p['c0'] = 0.1 * jax.random.normal(ks[9], (2, batch, HIDDEN), jnp.float32)
    # Convs (PyTorch (Cout, Cin, kh, kw)), xavier-normal weights, default-uniform bias.
    p['conv1_w'] = xav(ks[10], (8, 1, 3, 3), 1 * 9, 8 * 9)
    p['conv1_b'] = unif(ks[11], (8,), 1.0 / math.sqrt(1 * 9))
    p['conv2_w'] = xav(ks[12], (16, 8, 3, 3), 8 * 9, 16 * 9)
    p['conv2_b'] = unif(ks[13], (16,), 1.0 / math.sqrt(8 * 9))
    p['conv3_w'] = xav(ks[14], (32, 16, 3, 3), 16 * 9, 32 * 9)
    p['conv3_b'] = unif(ks[15], (32,), 1.0 / math.sqrt(16 * 9))
    # FC layers (PyTorch (out, in)), xavier-normal weights.
    p['fc1_w'] = xav(ks[16], (32, 96), 96, 32)
    p['fc1_b'] = unif(ks[17], (32,), 1.0 / math.sqrt(96))
    p['fc2_w'] = xav(ks[18], (16, 32), 32, 16)
    p['fc2_b'] = unif(ks[19], (16,), 1.0 / math.sqrt(32))
    p['fc3_w'] = xav(ks[20], (1, 16), 16, 1)
    p['fc3_b'] = unif(ks[21], (1,), 1.0 / math.sqrt(16))
    return p


# ---------------------------------------------------------------------------
# One-time parameter repack (transposes, pads, gate permutes, Toeplitz expansion,
# phase fusion, bf16 cast of all matmul RHS).  Runs once at init.
# ---------------------------------------------------------------------------
def _permute_gates(a):
    # torch gate order along last dim: [i, f, g, o] -> [i, f, o, g]
    # (sigmoid gates contiguous -> one 192-lane sigmoid + one 64-lane tanh per cell)
    i, f, g, o = np.split(a, 4, axis=-1)
    return np.concatenate([i, f, o, g], axis=-1)


def _conv_pool_toeplitz(w, hin, win, pool):
    # w: (cout, cin, 3, 3).  Returns (n_phases, hin*win*cin, ho*wo*cout) such that
    #   relu(max_q( act_flat @ T[q] ) + bias)  ==  maxpool2x2(relu(conv_valid(act, w)))
    # with activations flattened as lanes = (y*W + x)*cin + ci (channel minor).
    cout, cin, kh, kw = w.shape
    hc, wc = hin - kh + 1, win - kw + 1
    if pool:
        ho, wo = hc // 2, wc // 2
        phases = [(0, 0), (0, 1), (1, 0), (1, 1)]
    else:
        ho, wo = hc, wc
        phases = [(0, 0)]
    T = np.zeros((len(phases), hin * win * cin, ho * wo * cout), np.float32)
    for q, (dy, dx) in enumerate(phases):
        for yo in range(ho):
            for xo in range(wo):
                Y = (2 * yo + dy) if pool else yo
                X = (2 * xo + dx) if pool else xo
                dst = (yo * wo + xo) * cout
                for i in range(kh):
                    for j in range(kw):
                        src = ((Y + i) * win + (X + j)) * cin
                        for ci in range(cin):
                            T[q, src + ci, dst:dst + cout] = w[:, ci, i, j]
    return T


def prepare_params(p):
    n = {k: np.asarray(v) for k, v in p.items()}
    bf16 = jnp.bfloat16
    out = {}
    # --- LSTM: (in,4H) layout, b_ih+b_hh folded, layer-0 input padded 3->8, gates permuted.
    wih0 = np.zeros((8, 4 * HIDDEN), np.float32)
    wih0[:3, :] = n['w_ih0'].T
    out['wih0'] = jnp.asarray(_permute_gates(wih0), dtype=bf16)                  # (8, 256)
    out['whh0'] = jnp.asarray(_permute_gates(n['w_hh0'].T), dtype=bf16)          # (64, 256)
    out['b0'] = jnp.asarray(_permute_gates(n['b_ih0'] + n['b_hh0'])[None, :])    # (1, 256) f32
    out['wih1'] = jnp.asarray(_permute_gates(n['w_ih1'].T), dtype=bf16)          # (64, 256)
    out['whh1'] = jnp.asarray(_permute_gates(n['w_hh1'].T), dtype=bf16)          # (64, 256)
    out['b1'] = jnp.asarray(_permute_gates(n['b_ih1'] + n['b_hh1'])[None, :])    # (1, 256) f32
    out['h0'] = p['h0']                                                          # (2, B, 64) f32
    out['c0'] = p['c0']
    # --- CNN: conv+ReLU+pool folded into per-phase Toeplitz matrices, phases fused along N.
    t1 = _conv_pool_toeplitz(n['conv1_w'], 18, 18, True)                         # (4, 324, 512)
    out['t1'] = jnp.asarray(np.concatenate(list(t1), axis=1), dtype=bf16)        # (324, 2048)
    out['cb1'] = jnp.asarray(np.tile(n['conv1_b'], 64)[None, :])                 # (1, 512) f32
    t2 = _conv_pool_toeplitz(n['conv2_w'], 8, 8, True)                           # (4, 512, 144)
    out['t2'] = jnp.asarray(np.concatenate(list(t2), axis=1), dtype=bf16)        # (512, 576)
    out['cb2'] = jnp.asarray(np.tile(n['conv2_b'], 9)[None, :])                  # (1, 144) f32
    out['t3'] = jnp.asarray(_conv_pool_toeplitz(n['conv3_w'], 3, 3, False)[0],
                            dtype=bf16)                                          # (144, 32)
    out['cb3'] = jnp.asarray(n['conv3_b'][None, :])                              # (1, 32) f32
    # --- FC head: split fc1 into (lstm | cnn) halves -> concat never materializes.
    #     torch.cat((lstm_out[:, -1, :], cnn_flat)) puts lstm first -> f1a = rows 0:64.
    out['f1a'] = jnp.asarray(n['fc1_w'].T[:HIDDEN, :], dtype=bf16)               # (64, 32)
    out['f1b'] = jnp.asarray(n['fc1_w'].T[HIDDEN:, :], dtype=bf16)               # (32, 32)
    out['fb1'] = jnp.asarray(n['fc1_b'][None, :])                                # (1, 32) f32
    out['f2'] = jnp.asarray(n['fc2_w'].T, dtype=bf16)                            # (32, 16)
    out['fb2'] = jnp.asarray(n['fc2_b'][None, :])                                # (1, 16) f32
    out['f3'] = jnp.asarray(n['fc3_w'].T, dtype=bf16)                            # (16, 1)
    out['fb3'] = jnp.asarray(n['fc3_b'][None, :])                                # (1, 1)  f32
    return out


# ---------------------------------------------------------------------------
# The single fused kernel.  B here is the sublane-padded batch (multiple of 8).
# ---------------------------------------------------------------------------
def _crnn_kernel(x_ref, img_ref,
                 wih0_ref, whh0_ref, b0_ref, wih1_ref, whh1_ref, b1_ref,
                 h0_ref, c0_ref,
                 t1_ref, cb1_ref, t2_ref, cb2_ref, t3_ref, cb3_ref,
                 f1a_ref, f1b_ref, fb1_ref, f2_ref, fb2_ref, f3_ref, fb3_ref,
                 out_ref,
                 xp0_ref, *, T, B):
    H = HIDDEN
    f32, bf16 = jnp.float32, jnp.bfloat16

    def cell(g, c_prev):
        # permuted gate layout [i, f, o | g]: one sigmoid over 3H lanes, one tanh over H.
        s = jax.nn.sigmoid(g[:, :3 * H])
        i_g = s[:, 0 * H:1 * H]
        f_g = s[:, 1 * H:2 * H]
        o_g = s[:, 2 * H:3 * H]
        g_g = jnp.tanh(g[:, 3 * H:])
        c_new = f_g * c_prev + i_g * g_g
        return o_g * jnp.tanh(c_new), c_new

    # ---------------- LSTM: layer-0 input projections batched off the serial path ----
    xp0_ref[...] = (jnp.dot(x_ref[...].astype(bf16), wih0_ref[...],
                            preferred_element_type=f32) + b0_ref[...])

    whh0 = whh0_ref[...]
    wih1 = wih1_ref[...]
    whh1 = whh1_ref[...]
    b1 = b1_ref[...]
    h0, c0 = h0_ref[0], c0_ref[0]
    h1, c1 = h0_ref[1], c0_ref[1]
    # Fully unrolled, both layers interleaved per timestep: critical path ~T+1 cells.
    for t in range(T):
        g0 = xp0_ref[t * B:(t + 1) * B, :] + jnp.dot(
            h0.astype(bf16), whh0, preferred_element_type=f32)
        h0, c0 = cell(g0, c0)
        # layer-1 cell at time t: two independent K=64 dots (== [h0|h1] @ [wih1;whh1]).
        g1 = (jnp.dot(h0.astype(bf16), wih1, preferred_element_type=f32)
              + jnp.dot(h1.astype(bf16), whh1, preferred_element_type=f32) + b1)
        h1, c1 = cell(g1, c1)
    lstm_last = h1                                            # (B, 64) == lstm_out[:, -1, :]

    # ---------------- CNN branch: fused per-layer Toeplitz matmul + phase max ----------------
    img = img_ref[...].astype(bf16)                           # (B, 324)
    y1 = jnp.dot(img, t1_ref[...], preferred_element_type=f32)          # (B, 2048)
    p1 = jnp.maximum(jnp.maximum(y1[:, 0:512], y1[:, 512:1024]),
                     jnp.maximum(y1[:, 1024:1536], y1[:, 1536:2048]))    # 2x2 max-pool
    p1 = jnp.maximum(p1 + cb1_ref[...], 0.0)                             # bias + ReLU (B, 512)

    y2 = jnp.dot(p1.astype(bf16), t2_ref[...], preferred_element_type=f32)  # (B, 576)
    p2 = jnp.maximum(jnp.maximum(y2[:, 0:144], y2[:, 144:288]),
                     jnp.maximum(y2[:, 288:432], y2[:, 432:576]))
    p2 = jnp.maximum(p2 + cb2_ref[...], 0.0)                             # (B, 144)

    cnn_feat = jnp.maximum(                                              # conv3 + ReLU -> (B, 32)
        jnp.dot(p2.astype(bf16), t3_ref[...], preferred_element_type=f32)
        + cb3_ref[...], 0.0)

    # ---------------- FC head (concat folded into split fc1 weights) ----------------
    fc1 = jnp.maximum(
        jnp.dot(lstm_last.astype(bf16), f1a_ref[...], preferred_element_type=f32)
        + jnp.dot(cnn_feat.astype(bf16), f1b_ref[...], preferred_element_type=f32)
        + fb1_ref[...], 0.0)                                  # (B, 32)
    fc2 = jnp.maximum(jnp.dot(fc1.astype(bf16), f2_ref[...], preferred_element_type=f32)
                      + fb2_ref[...], 0.0)                    # (B, 16)
    out_ref[...] = (jnp.dot(fc2.astype(bf16), f3_ref[...], preferred_element_type=f32)
                    + fb3_ref[...])                           # (B, 1)


# ---------------------------------------------------------------------------
# Forward wrapper (mirrors CRNN.forward).  Pads batch to a full sublane tile.
# ---------------------------------------------------------------------------
def crnn_forward(prep, lstm_in, cnn_in):
    B, T, F = lstm_in.shape
    assert cnn_in.shape == (B, 1, 18, 18)
    Bp = max(8, -(-B // 8) * 8)                               # sublane-aligned batch

    # time-major (T*Bp, 8): batch padded to Bp, features zero-padded 3 -> 8.
    x = jnp.transpose(lstm_in, (1, 0, 2))                     # (T, B, F)
    x2d = jnp.pad(x, ((0, 0), (0, Bp - B), (0, 8 - F))).reshape(T * Bp, 8)
    img = jnp.pad(cnn_in.reshape(B, 18 * 18), ((0, Bp - B), (0, 0)))     # lanes = y*18 + x
    h0 = jnp.pad(prep['h0'], ((0, 0), (0, Bp - B), (0, 0)))
    c0 = jnp.pad(prep['c0'], ((0, 0), (0, Bp - B), (0, 0)))

    inputs = (x2d, img,
              prep['wih0'], prep['whh0'], prep['b0'],
              prep['wih1'], prep['whh1'], prep['b1'],
              h0, c0,
              prep['t1'], prep['cb1'], prep['t2'], prep['cb2'], prep['t3'], prep['cb3'],
              prep['f1a'], prep['f1b'], prep['fb1'],
              prep['f2'], prep['fb2'], prep['f3'], prep['fb3'])

    out = pl.pallas_call(
        functools.partial(_crnn_kernel, T=T, B=Bp),
        out_shape=jax.ShapeDtypeStruct((Bp, 1), jnp.float32),
        in_specs=[_vmem()] * len(inputs),
        out_specs=_vmem(),
        scratch_shapes=[
            pltpu.VMEM((T * Bp, 4 * HIDDEN), jnp.float32),    # layer-0 input projections
        ],
    )(*inputs)
    return out[:B]


if __name__ == "__main__":
    B, T = 2, 8
    key = jax.random.PRNGKey(0)
    kp, kl, kc = jax.random.split(key, 3)
    params = init_params(kp, B)
    prep = prepare_params(params)   # one-time weight repack (no per-forward glue)
    # cnn_in spatial 18x18 so conv/pool/conv/pool/conv yields 32 features -> concat width 96.
    lstm_in = jax.random.normal(kl, (B, T, 3), jnp.float32)
    cnn_in = jax.random.normal(kc, (B, 1, 18, 18), jnp.float32)

    fwd = jax.jit(crnn_forward)
    y_pred = fwd(prep, lstm_in, cnn_in)
    jax.block_until_ready(y_pred)
    assert y_pred.shape == (B, 1) and y_pred.dtype == jnp.float32
    print("KERNEL_OK")
</pallas_src>

<mosaic_0001>
module attributes {stable_mosaic.version = 11 : i64} {
  func.func @_crnn_kernel(%arg0: memref<64x8xf32, #tpu.memory_space<vmem>>, %arg1: memref<8x324xf32, #tpu.memory_space<vmem>>, %arg2: memref<8x256xbf16, #tpu.memory_space<vmem>>, %arg3: memref<64x256xbf16, #tpu.memory_space<vmem>>, %arg4: memref<1x256xf32, #tpu.memory_space<vmem>>, %arg5: memref<64x256xbf16, #tpu.memory_space<vmem>>, %arg6: memref<64x256xbf16, #tpu.memory_space<vmem>>, %arg7: memref<1x256xf32, #tpu.memory_space<vmem>>, %arg8: memref<2x8x64xf32, #tpu.memory_space<vmem>>, %arg9: memref<2x8x64xf32, #tpu.memory_space<vmem>>, %arg10: memref<324x2048xbf16, #tpu.memory_space<vmem>>, %arg11: memref<1x512xf32, #tpu.memory_space<vmem>>, %arg12: memref<512x576xbf16, #tpu.memory_space<vmem>>, %arg13: memref<1x144xf32, #tpu.memory_space<vmem>>, %arg14: memref<144x32xbf16, #tpu.memory_space<vmem>>, %arg15: memref<1x32xf32, #tpu.memory_space<vmem>>, %arg16: memref<64x32xbf16, #tpu.memory_space<vmem>>, %arg17: memref<32x32xbf16, #tpu.memory_space<vmem>>, %arg18: memref<1x32xf32, #tpu.memory_space<vmem>>, %arg19: memref<32x16xbf16, #tpu.memory_space<vmem>>, %arg20: memref<1x16xf32, #tpu.memory_space<vmem>>, %arg21: memref<16x1xbf16, #tpu.memory_space<vmem>>, %arg22: memref<1x1xf32, #tpu.memory_space<vmem>>, %arg23: memref<8x1xf32, #tpu.memory_space<vmem>>, %arg24: memref<64x256xf32, #tpu.memory_space<vmem>>) attributes {dimension_semantics = [], scalar_prefetch = 0 : i64, scratch_operands = 1 : i64, tpu.core_type = #tpu.core_type<tc>} {
    %c0 = arith.constant 0 : index
    %c0_0 = arith.constant 0 : index
    %0 = vector.load %arg0[%c0, %c0_0] : memref<64x8xf32, #tpu.memory_space<vmem>>, vector<64x8xf32>
    %1 = arith.truncf %0 : vector<64x8xf32> to vector<64x8xbf16>
    %c0_1 = arith.constant 0 : index
    %c0_2 = arith.constant 0 : index
    %2 = vector.load %arg2[%c0_1, %c0_2] : memref<8x256xbf16, #tpu.memory_space<vmem>>, vector<8x256xbf16>
    %cst = arith.constant dense<0.000000e+00> : vector<64x256xf32>
    %3 = tpu.matmul %1, %2, %cst {dimension_numbers = #tpu.dot_dimension_numbers<[1], [0], [0], [1], [0, 0, 1, 1], [], []>} : vector<64x8xbf16>, vector<8x256xbf16>, vector<64x256xf32> -> vector<64x256xf32>
    %c0_3 = arith.constant 0 : index
    %c0_4 = arith.constant 0 : index
    %4 = vector.load %arg4[%c0_3, %c0_4] : memref<1x256xf32, #tpu.memory_space<vmem>>, vector<1x256xf32>
    %5 = vector.broadcast %4 : vector<1x256xf32> to vector<64x256xf32>
    %6 = arith.addf %3, %5 : vector<64x256xf32>
    %c0_5 = arith.constant 0 : index
    %c0_6 = arith.constant 0 : index
    %7 = vector.load %arg24[%c0_5, %c0_6] : memref<64x256xf32, #tpu.memory_space<vmem>>, vector<64x256xf32>
    tpu.vector_store %arg24[%c0_5, %c0_6], %6 {strides = array<i32>} : memref<64x256xf32, #tpu.memory_space<vmem>>, vector<64x256xf32>,
    %c0_7 = arith.constant 0 : index
    %c0_8 = arith.constant 0 : index
    %8 = vector.load %arg3[%c0_7, %c0_8] : memref<64x256xbf16, #tpu.memory_space<vmem>>, vector<64x256xbf16>
    %c0_9 = arith.constant 0 : index
    %c0_10 = arith.constant 0 : index
    %9 = vector.load %arg5[%c0_9, %c0_10] : memref<64x256xbf16, #tpu.memory_space<vmem>>, vector<64x256xbf16>
    %c0_11 = arith.constant 0 : index
    %c0_12 = arith.constant 0 : index
    %10 = vector.load %arg6[%c0_11, %c0_12] : memref<64x256xbf16, #tpu.memory_space<vmem>>, vector<64x256xbf16>
    %c0_13 = arith.constant 0 : index
    %c0_14 = arith.constant 0 : index
    %11 = vector.load %arg7[%c0_13, %c0_14] : memref<1x256xf32, #tpu.memory_space<vmem>>, vector<1x256xf32>
    %c0_15 = arith.constant 0 : index
    %c0_16 = arith.constant 0 : index
    %c0_17 = arith.constant 0 : index
    %12 = vector.load %arg8[%c0_15, %c0_16, %c0_17] : memref<2x8x64xf32, #tpu.memory_space<vmem>>, vector<1x8x64xf32>
    %13 = vector.shape_cast %12 : vector<1x8x64xf32> to vector<8x64xf32>
    %c0_18 = arith.constant 0 : index
    %c0_19 = arith.constant 0 : index
    %c0_20 = arith.constant 0 : index
    %14 = vector.load %arg9[%c0_18, %c0_19, %c0_20] : memref<2x8x64xf32, #tpu.memory_space<vmem>>, vector<1x8x64xf32>
    %15 = vector.shape_cast %14 : vector<1x8x64xf32> to vector<8x64xf32>
    %c1 = arith.constant 1 : index
    %c0_21 = arith.constant 0 : index
    %c0_22 = arith.constant 0 : index
    %16 = vector.load %arg8[%c1, %c0_21, %c0_22] : memref<2x8x64xf32, #tpu.memory_space<vmem>>, vector<1x8x64xf32>
    %17 = vector.shape_cast %16 : vector<1x8x64xf32> to vector<8x64xf32>
    %c1_23 = arith.constant 1 : index
    %c0_24 = arith.constant 0 : index
    %c0_25 = arith.constant 0 : index
    %18 = vector.load %arg9[%c1_23, %c0_24, %c0_25] : memref<2x8x64xf32, #tpu.memory_space<vmem>>, vector<1x8x64xf32>
    %19 = vector.shape_cast %18 : vector<1x8x64xf32> to vector<8x64xf32>
    %c0_26 = arith.constant 0 : index
    %c0_27 = arith.constant 0 : index
    %20 = vector.load %arg24[%c0_26, %c0_27] : memref<64x256xf32, #tpu.memory_space<vmem>>, vector<8x256xf32>
    %21 = arith.truncf %13 : vector<8x64xf32> to vector<8x64xbf16>
    %cst_28 = arith.constant dense<0.000000e+00> : vector<8x256xf32>
    %22 = tpu.matmul %21, %8, %cst_28 {dimension_numbers = #tpu.dot_dimension_numbers<[1], [0], [0], [1], [0, 0, 1, 1], [], []>} : vector<8x64xbf16>, vector<64x256xbf16>, vector<8x256xf32> -> vector<8x256xf32>
    %23 = arith.addf %20, %22 : vector<8x256xf32>
    %24 = vector.extract_strided_slice %23 {offsets = [0, 0], sizes = [8, 192], strides = [1, 1]} : vector<8x256xf32> to vector<8x192xf32>
    %25 = arith.negf %24 : vector<8x192xf32>
    %26 = math.exp %25 : vector<8x192xf32>
    %cst_29 = arith.constant 1.000000e+00 : f32
    %27 = vector.broadcast %cst_29 : f32 to vector<8x192xf32>
    %28 = arith.addf %27, %26 : vector<8x192xf32>
    %29 = arith.divf %27, %28 : vector<8x192xf32>
    %30 = vector.extract_strided_slice %29 {offsets = [0, 0], sizes = [8, 64], strides = [1, 1]} : vector<8x192xf32> to vector<8x64xf32>
    %31 = vector.extract_strided_slice %29 {offsets = [0, 64], sizes = [8, 64], strides = [1, 1]} : vector<8x192xf32> to vector<8x64xf32>
    %32 = vector.extract_strided_slice %29 {offsets = [0, 128], sizes = [8, 64], strides = [1, 1]} : vector<8x192xf32> to vector<8x64xf32>
    %33 = vector.extract_strided_slice %23 {offsets = [0, 192], sizes = [8, 64], strides = [1, 1]} : vector<8x256xf32> to vector<8x64xf32>
    %34 = math.tanh %33 : vector<8x64xf32>
    %35 = arith.mulf %31, %15 : vector<8x64xf32>
    %36 = arith.mulf %30, %34 : vector<8x64xf32>
    %37 = arith.addf %35, %36 : vector<8x64xf32>
    %38 = math.tanh %37 : vector<8x64xf32>
    %39 = arith.mulf %32, %38 : vector<8x64xf32>
    %40 = arith.truncf %39 : vector<8x64xf32> to vector<8x64xbf16>
    %cst_30 = arith.constant dense<0.000000e+00> : vector<8x256xf32>
    %41 = tpu.matmul %40, %9, %cst_30 {dimension_numbers = #tpu.dot_dimension_numbers<[1], [0], [0], [1], [0, 0, 1, 1], [], []>} : vector<8x64xbf16>, vector<64x256xbf16>, vector<8x256xf32> -> vector<8x256xf32>
    %42 = arith.truncf %17 : vector<8x64xf32> to vector<8x64xbf16>
    %cst_31 = arith.constant dense<0.000000e+00> : vector<8x256xf32>
    %43 = tpu.matmul %42, %10, %cst_31 {dimension_numbers = #tpu.dot_dimension_numbers<[1], [0], [0], [1], [0, 0, 1, 1], [], []>} : vector<8x64xbf16>, vector<64x256xbf16>, vector<8x256xf32> -> vector<8x256xf32>
    %44 = arith.addf %41, %43 : vector<8x256xf32>
    %45 = vector.broadcast %11 : vector<1x256xf32> to vector<8x256xf32>
    %46 = arith.addf %44, %45 : vector<8x256xf32>
    %47 = vector.extract_strided_slice %46 {offsets = [0, 0], sizes = [8, 192], strides = [1, 1]} : vector<8x256xf32> to vector<8x192xf32>
    %48 = arith.negf %47 : vector<8x192xf32>
    %49 = math.exp %48 : vector<8x192xf32>
    %cst_32 = arith.constant 1.000000e+00 : f32
    %50 = vector.broadcast %cst_32 : f32 to vector<8x192xf32>
    %51 = arith.addf %50, %49 : vector<8x192xf32>
    %52 = arith.divf %50, %51 : vector<8x192xf32>
    %53 = vector.extract_strided_slice %52 {offsets = [0, 0], sizes = [8, 64], strides = [1, 1]} : vector<8x192xf32> to vector<8x64xf32>
    %54 = vector.extract_strided_slice %52 {offsets = [0, 64], sizes = [8, 64], strides = [1, 1]} : vector<8x192xf32> to vector<8x64xf32>
    %55 = vector.extract_strided_slice %52 {offsets = [0, 128], sizes = [8, 64], strides = [1, 1]} : vector<8x192xf32> to vector<8x64xf32>
    %56 = vector.extract_strided_slice %46 {offsets = [0, 192], sizes = [8, 64], strides = [1, 1]} : vector<8x256xf32> to vector<8x64xf32>
    %57 = math.tanh %56 : vector<8x64xf32>
    %58 = arith.mulf %54, %19 : vector<8x64xf32>
    %59 = arith.mulf %53, %57 : vector<8x64xf32>
    %60 = arith.addf %58, %59 : vector<8x64xf32>
    %61 = math.tanh %60 : vector<8x64xf32>
    %62 = arith.mulf %55, %61 : vector<8x64xf32>
    %c8 = arith.constant 8 : index
    %c0_33 = arith.constant 0 : index
    %63 = vector.load %arg24[%c8, %c0_33] : memref<64x256xf32, #tpu.memory_space<vmem>>, vector<8x256xf32>
    %64 = arith.truncf %39 : vector<8x64xf32> to vector<8x64xbf16>
    %cst_34 = arith.constant dense<0.000000e+00> : vector<8x256xf32>
    %65 = tpu.matmul %64, %8, %cst_34 {dimension_numbers = #tpu.dot_dimension_numbers<[1], [0], [0], [1], [0, 0, 1, 1], [], []>} : vector<8x64xbf16>, vector<64x256xbf16>, vector<8x256xf32> -> vector<8x256xf32>
    %66 = arith.addf %63, %65 : vector<8x256xf32>
    %67 = vector.extract_strided_slice %66 {offsets = [0, 0], sizes = [8, 192], strides = [1, 1]} : vector<8x256xf32> to vector<8x192xf32>
    %68 = arith.negf %67 : vector<8x192xf32>
    %69 = math.exp %68 : vector<8x192xf32>
    %cst_35 = arith.constant 1.000000e+00 : f32
    %70 = vector.broadcast %cst_35 : f32 to vector<8x192xf32>
    %71 = arith.addf %70, %69 : vector<8x192xf32>
    %72 = arith.divf %70, %71 : vector<8x192xf32>
    %73 = vector.extract_strided_slice %72 {offsets = [0, 0], sizes = [8, 64], strides = [1, 1]} : vector<8x192xf32> to vector<8x64xf32>
    %74 = vector.extract_strided_slice %72 {offsets = [0, 64], sizes = [8, 64], strides = [1, 1]} : vector<8x192xf32> to vector<8x64xf32>
    %75 = vector.extract_strided_slice %72 {offsets = [0, 128], sizes = [8, 64], strides = [1, 1]} : vector<8x192xf32> to vector<8x64xf32>
    %76 = vector.extract_strided_slice %66 {offsets = [0, 192], sizes = [8, 64], strides = [1, 1]} : vector<8x256xf32> to vector<8x64xf32>
    %77 = math.tanh %76 : vector<8x64xf32>
    %78 = arith.mulf %74, %37 : vector<8x64xf32>
    %79 = arith.mulf %73, %77 : vector<8x64xf32>
    %80 = arith.addf %78, %79 : vector<8x64xf32>
    %81 = math.tanh %80 : vector<8x64xf32>
    %82 = arith.mulf %75, %81 : vector<8x64xf32>
    %83 = arith.truncf %82 : vector<8x64xf32> to vector<8x64xbf16>
    %cst_36 = arith.constant dense<0.000000e+00> : vector<8x256xf32>
    %84 = tpu.matmul %83, %9, %cst_36 {dimension_numbers = #tpu.dot_dimension_numbers<[1], [0], [0], [1], [0, 0, 1, 1], [], []>} : vector<8x64xbf16>, vector<64x256xbf16>, vector<8x256xf32> -> vector<8x256xf32>
    %85 = arith.truncf %62 : vector<8x64xf32> to vector<8x64xbf16>
    %cst_37 = arith.constant dense<0.000000e+00> : vector<8x256xf32>
    %86 = tpu.matmul %85, %10, %cst_37 {dimension_numbers = #tpu.dot_dimension_numbers<[1], [0], [0], [1], [0, 0, 1, 1], [], []>} : vector<8x64xbf16>, vector<64x256xbf16>, vector<8x256xf32> -> vector<8x256xf32>
    %87 = arith.addf %84, %86 : vector<8x256xf32>
    %88 = vector.broadcast %11 : vector<1x256xf32> to vector<8x256xf32>
    %89 = arith.addf %87, %88 : vector<8x256xf32>
    %90 = vector.extract_strided_slice %89 {offsets = [0, 0], sizes = [8, 192], strides = [1, 1]} : vector<8x256xf32> to vector<8x192xf32>
    %91 = arith.negf %90 : vector<8x192xf32>
    %92 = math.exp %91 : vector<8x192xf32>
    %cst_38 = arith.constant 1.000000e+00 : f32
    %93 = vector.broadcast %cst_38 : f32 to vector<8x192xf32>
    %94 = arith.addf %93, %92 : vector<8x192xf32>
    %95 = arith.divf %93, %94 : vector<8x192xf32>
    %96 = vector.extract_strided_slice %95 {offsets = [0, 0], sizes = [8, 64], strides = [1, 1]} : vector<8x192xf32> to vector<8x64xf32>
    %97 = vector.extract_strided_slice %95 {offsets = [0, 64], sizes = [8, 64], strides = [1, 1]} : vector<8x192xf32> to vector<8x64xf32>
    %98 = vector.extract_strided_slice %95 {offsets = [0, 128], sizes = [8, 64], strides = [1, 1]} : vector<8x192xf32> to vector<8x64xf32>
    %99 = vector.extract_strided_slice %89 {offsets = [0, 192], sizes = [8, 64], strides = [1, 1]} : vector<8x256xf32> to vector<8x64xf32>
    %100 = math.tanh %99 : vector<8x64xf32>
    %101 = arith.mulf %97, %60 : vector<8x64xf32>
    %102 = arith.mulf %96, %100 : vector<8x64xf32>
    %103 = arith.addf %101, %102 : vector<8x64xf32>
    %104 = math.tanh %103 : vector<8x64xf32>
    %105 = arith.mulf %98, %104 : vector<8x64xf32>
    %c16 = arith.constant 16 : index
    %c0_39 = arith.constant 0 : index
    %106 = vector.load %arg24[%c16, %c0_39] : memref<64x256xf32, #tpu.memory_space<vmem>>, vector<8x256xf32>
    %107 = arith.truncf %82 : vector<8x64xf32> to vector<8x64xbf16>
    %cst_40 = arith.constant dense<0.000000e+00> : vector<8x256xf32>
    %108 = tpu.matmul %107, %8, %cst_40 {dimension_numbers = #tpu.dot_dimension_numbers<[1], [0], [0], [1], [0, 0, 1, 1], [], []>} : vector<8x64xbf16>, vector<64x256xbf16>, vector<8x256xf32> -> vector<8x256xf32>
    %109 = arith.addf %106, %108 : vector<8x256xf32>
    %110 = vector.extract_strided_slice %109 {offsets = [0, 0], sizes = [8, 192], strides = [1, 1]} : vector<8x256xf32> to vector<8x192xf32>
    %111 = arith.negf %110 : vector<8x192xf32>
    %112 = math.exp %111 : vector<8x192xf32>
    %cst_41 = arith.constant 1.000000e+00 : f32
    %113 = vector.broadcast %cst_41 : f32 to vector<8x192xf32>
    %114 = arith.addf %113, %112 : vector<8x192xf32>
    %115 = arith.divf %113, %114 : vector<8x192xf32>
    %116 = vector.extract_strided_slice %115 {offsets = [0, 0], sizes = [8, 64], strides = [1, 1]} : vector<8x192xf32> to vector<8x64xf32>
    %117 = vector.extract_strided_slice %115 {offsets = [0, 64], sizes = [8, 64], strides = [1, 1]} : vector<8x192xf32> to vector<8x64xf32>
    %118 = vector.extract_strided_slice %115 {offsets = [0, 128], sizes = [8, 64], strides = [1, 1]} : vector<8x192xf32> to vector<8x64xf32>
    %119 = vector.extract_strided_slice %109 {offsets = [0, 192], sizes = [8, 64], strides = [1, 1]} : vector<8x256xf32> to vector<8x64xf32>
    %120 = math.tanh %119 : vector<8x64xf32>
    %121 = arith.mulf %117, %80 : vector<8x64xf32>
    %122 = arith.mulf %116, %120 : vector<8x64xf32>
    %123 = arith.addf %121, %122 : vector<8x64xf32>
    %124 = math.tanh %123 : vector<8x64xf32>
    %125 = arith.mulf %118, %124 : vector<8x64xf32>
    %126 = arith.truncf %125 : vector<8x64xf32> to vector<8x64xbf16>
    %cst_42 = arith.constant dense<0.000000e+00> : vector<8x256xf32>
    %127 = tpu.matmul %126, %9, %cst_42 {dimension_numbers = #tpu.dot_dimension_numbers<[1], [0], [0], [1], [0, 0, 1, 1], [], []>} : vector<8x64xbf16>, vector<64x256xbf16>, vector<8x256xf32> -> vector<8x256xf32>
    %128 = arith.truncf %105 : vector<8x64xf32> to vector<8x64xbf16>
    %cst_43 = arith.constant dense<0.000000e+00> : vector<8x256xf32>
    %129 = tpu.matmul %128, %10, %cst_43 {dimension_numbers = #tpu.dot_dimension_numbers<[1], [0], [0], [1], [0, 0, 1, 1], [], []>} : vector<8x64xbf16>, vector<64x256xbf16>, vector<8x256xf32> -> vector<8x256xf32>
    %130 = arith.addf %127, %129 : vector<8x256xf32>
    %131 = vector.broadcast %11 : vector<1x256xf32> to vector<8x256xf32>
    %132 = arith.addf %130, %131 : vector<8x256xf32>
    %133 = vector.extract_strided_slice %132 {offsets = [0, 0], sizes = [8, 192], strides = [1, 1]} : vector<8x256xf32> to vector<8x192xf32>
    %134 = arith.negf %133 : vector<8x192xf32>
    %135 = math.exp %134 : vector<8x192xf32>
    %cst_44 = arith.constant 1.000000e+00 : f32
    %136 = vector.broadcast %cst_44 : f32 to vector<8x192xf32>
    %137 = arith.addf %136, %135 : vector<8x192xf32>
    %138 = arith.divf %136, %137 : vector<8x192xf32>
    %139 = vector.extract_strided_slice %138 {offsets = [0, 0], sizes = [8, 64], strides = [1, 1]} : vector<8x192xf32> to vector<8x64xf32>
    %140 = vector.extract_strided_slice %138 {offsets = [0, 64], sizes = [8, 64], strides = [1, 1]} : vector<8x192xf32> to vector<8x64xf32>
    %141 = vector.extract_strided_slice %138 {offsets = [0, 128], sizes = [8, 64], strides = [1, 1]} : vector<8x192xf32> to vector<8x64xf32>
    %142 = vector.extract_strided_slice %132 {offsets = [0, 192], sizes = [8, 64], strides = [1, 1]} : vector<8x256xf32> to vector<8x64xf32>
    %143 = math.tanh %142 : vector<8x64xf32>
    %144 = arith.mulf %140, %103 : vector<8x64xf32>
    %145 = arith.mulf %139, %143 : vector<8x64xf32>
    %146 = arith.addf %144, %145 : vector<8x64xf32>
    %147 = math.tanh %146 : vector<8x64xf32>
    %148 = arith.mulf %141, %147 : vector<8x64xf32>
    %c24 = arith.constant 24 : index
    %c0_45 = arith.constant 0 : index
    %149 = vector.load %arg24[%c24, %c0_45] : memref<64x256xf32, #tpu.memory_space<vmem>>, vector<8x256xf32>
    %150 = arith.truncf %125 : vector<8x64xf32> to vector<8x64xbf16>
    %cst_46 = arith.constant dense<0.000000e+00> : vector<8x256xf32>
    %151 = tpu.matmul %150, %8, %cst_46 {dimension_numbers = #tpu.dot_dimension_numbers<[1], [0], [0], [1], [0, 0, 1, 1], [], []>} : vector<8x64xbf16>, vector<64x256xbf16>, vector<8x256xf32> -> vector<8x256xf32>
    %152 = arith.addf %149, %151 : vector<8x256xf32>
    %153 = vector.extract_strided_slice %152 {offsets = [0, 0], sizes = [8, 192], strides = [1, 1]} : vector<8x256xf32> to vector<8x192xf32>
    %154 = arith.negf %153 : vector<8x192xf32>
    %155 = math.exp %154 : vector<8x192xf32>
    %cst_47 = arith.constant 1.000000e+00 : f32
    %156 = vector.broadcast %cst_47 : f32 to vector<8x192xf32>
    %157 = arith.addf %156, %155 : vector<8x192xf32>
    %158 = arith.divf %156, %157 : vector<8x192xf32>
    %159 = vector.extract_strided_slice %158 {offsets = [0, 0], sizes = [8, 64], strides = [1, 1]} : vector<8x192xf32> to vector<8x64xf32>
    %160 = vector.extract_strided_slice %158 {offsets = [0, 64], sizes = [8, 64], strides = [1, 1]} : vector<8x192xf32> to vector<8x64xf32>
    %161 = vector.extract_strided_slice %158 {offsets = [0, 128], sizes = [8, 64], strides = [1, 1]} : vector<8x192xf32> to vector<8x64xf32>
    %162 = vector.extract_strided_slice %152 {offsets = [0, 192], sizes = [8, 64], strides = [1, 1]} : vector<8x256xf32> to vector<8x64xf32>
    %163 = math.tanh %162 : vector<8x64xf32>
    %164 = arith.mulf %160, %123 : vector<8x64xf32>
    %165 = arith.mulf %159, %163 : vector<8x64xf32>
    %166 = arith.addf %164, %165 : vector<8x64xf32>
    %167 = math.tanh %166 : vector<8x64xf32>
    %168 = arith.mulf %161, %167 : vector<8x64xf32>
    %169 = arith.truncf %168 : vector<8x64xf32> to vector<8x64xbf16>
    %cst_48 = arith.constant dense<0.000000e+00> : vector<8x256xf32>
    %170 = tpu.matmul %169, %9, %cst_48 {dimension_numbers = #tpu.dot_dimension_numbers<[1], [0], [0], [1], [0, 0, 1, 1], [], []>} : vector<8x64xbf16>, vector<64x256xbf16>, vector<8x256xf32> -> vector<8x256xf32>
    %171 = arith.truncf %148 : vector<8x64xf32> to vector<8x64xbf16>
    %cst_49 = arith.constant dense<0.000000e+00> : vector<8x256xf32>
    %172 = tpu.matmul %171, %10, %cst_49 {dimension_numbers = #tpu.dot_dimension_numbers<[1], [0], [0], [1], [0, 0, 1, 1], [], []>} : vector<8x64xbf16>, vector<64x256xbf16>, vector<8x256xf32> -> vector<8x256xf32>
    %173 = arith.addf %170, %172 : vector<8x256xf32>
    %174 = vector.broadcast %11 : vector<1x256xf32> to vector<8x256xf32>
    %175 = arith.addf %173, %174 : vector<8x256xf32>
    %176 = vector.extract_strided_slice %175 {offsets = [0, 0], sizes = [8, 192], strides = [1, 1]} : vector<8x256xf32> to vector<8x192xf32>
    %177 = arith.negf %176 : vector<8x192xf32>
    %178 = math.exp %177 : vector<8x192xf32>
    %cst_50 = arith.constant 1.000000e+00 : f32
    %179 = vector.broadcast %cst_50 : f32 to vector<8x192xf32>
    %180 = arith.addf %179, %178 : vector<8x192xf32>
    %181 = arith.divf %179, %180 : vector<8x192xf32>
    %182 = vector.extract_strided_slice %181 {offsets = [0, 0], sizes = [8, 64], strides = [1, 1]} : vector<8x192xf32> to vector<8x64xf32>
    %183 = vector.extract_strided_slice %181 {offsets = [0, 64], sizes = [8, 64], strides = [1, 1]} : vector<8x192xf32> to vector<8x64xf32>
    %184 = vector.extract_strided_slice %181 {offsets = [0, 128], sizes = [8, 64], strides = [1, 1]} : vector<8x192xf32> to vector<8x64xf32>
    %185 = vector.extract_strided_slice %175 {offsets = [0, 192], sizes = [8, 64], strides = [1, 1]} : vector<8x256xf32> to vector<8x64xf32>
    %186 = math.tanh %185 : vector<8x64xf32>
    %187 = arith.mulf %183, %146 : vector<8x64xf32>
    %188 = arith.mulf %182, %186 : vector<8x64xf32>
    %189 = arith.addf %187, %188 : vector<8x64xf32>
    %190 = math.tanh %189 : vector<8x64xf32>
    %191 = arith.mulf %184, %190 : vector<8x64xf32>
    %c32 = arith.constant 32 : index
    %c0_51 = arith.constant 0 : index
    %192 = vector.load %arg24[%c32, %c0_51] : memref<64x256xf32, #tpu.memory_space<vmem>>, vector<8x256xf32>
    %193 = arith.truncf %168 : vector<8x64xf32> to vector<8x64xbf16>
    %cst_52 = arith.constant dense<0.000000e+00> : vector<8x256xf32>
    %194 = tpu.matmul %193, %8, %cst_52 {dimension_numbers = #tpu.dot_dimension_numbers<[1], [0], [0], [1], [0, 0, 1, 1], [], []>} : vector<8x64xbf16>, vector<64x256xbf16>, vector<8x256xf32> -> vector<8x256xf32>
    %195 = arith.addf %192, %194 : vector<8x256xf32>
    %196 = vector.extract_strided_slice %195 {offsets = [0, 0], sizes = [8, 192], strides = [1, 1]} : vector<8x256xf32> to vector<8x192xf32>
    %197 = arith.negf %196 : vector<8x192xf32>
    %198 = math.exp %197 : vector<8x192xf32>
    %cst_53 = arith.constant 1.000000e+00 : f32
    %199 = vector.broadcast %cst_53 : f32 to vector<8x192xf32>
    %200 = arith.addf %199, %198 : vector<8x192xf32>
    %201 = arith.divf %199, %200 : vector<8x192xf32>
    %202 = vector.extract_strided_slice %201 {offsets = [0, 0], sizes = [8, 64], strides = [1, 1]} : vector<8x192xf32> to vector<8x64xf32>
    %203 = vector.extract_strided_slice %201 {offsets = [0, 64], sizes = [8, 64], strides = [1, 1]} : vector<8x192xf32> to vector<8x64xf32>
    %204 = vector.extract_strided_slice %201 {offsets = [0, 128], sizes = [8, 64], strides = [1, 1]} : vector<8x192xf32> to vector<8x64xf32>
    %205 = vector.extract_strided_slice %195 {offsets = [0, 192], sizes = [8, 64], strides = [1, 1]} : vector<8x256xf32> to vector<8x64xf32>
    %206 = math.tanh %205 : vector<8x64xf32>
    %207 = arith.mulf %203, %166 : vector<8x64xf32>
    %208 = arith.mulf %202, %206 : vector<8x64xf32>
    %209 = arith.addf %207, %208 : vector<8x64xf32>
    %210 = math.tanh %209 : vector<8x64xf32>
    %211 = arith.mulf %204, %210 : vector<8x64xf32>
    %212 = arith.truncf %211 : vector<8x64xf32> to vector<8x64xbf16>
    %cst_54 = arith.constant dense<0.000000e+00> : vector<8x256xf32>
    %213 = tpu.matmul %212, %9, %cst_54 {dimension_numbers = #tpu.dot_dimension_numbers<[1], [0], [0], [1], [0, 0, 1, 1], [], []>} : vector<8x64xbf16>, vector<64x256xbf16>, vector<8x256xf32> -> vector<8x256xf32>
    %214 = arith.truncf %191 : vector<8x64xf32> to vector<8x64xbf16>
    %cst_55 = arith.constant dense<0.000000e+00> : vector<8x256xf32>
    %215 = tpu.matmul %214, %10, %cst_55 {dimension_numbers = #tpu.dot_dimension_numbers<[1], [0], [0], [1], [0, 0, 1, 1], [], []>} : vector<8x64xbf16>, vector<64x256xbf16>, vector<8x256xf32> -> vector<8x256xf32>
    %216 = arith.addf %213, %215 : vector<8x256xf32>
    %217 = vector.broadcast %11 : vector<1x256xf32> to vector<8x256xf32>
    %218 = arith.addf %216, %217 : vector<8x256xf32>
    %219 = vector.extract_strided_slice %218 {offsets = [0, 0], sizes = [8, 192], strides = [1, 1]} : vector<8x256xf32> to vector<8x192xf32>
    %220 = arith.negf %219 : vector<8x192xf32>
    %221 = math.exp %220 : vector<8x192xf32>
    %cst_56 = arith.constant 1.000000e+00 : f32
    %222 = vector.broadcast %cst_56 : f32 to vector<8x192xf32>
    %223 = arith.addf %222, %221 : vector<8x192xf32>
    %224 = arith.divf %222, %223 : vector<8x192xf32>
    %225 = vector.extract_strided_slice %224 {offsets = [0, 0], sizes = [8, 64], strides = [1, 1]} : vector<8x192xf32> to vector<8x64xf32>
    %226 = vector.extract_strided_slice %224 {offsets = [0, 64], sizes = [8, 64], strides = [1, 1]} : vector<8x192xf32> to vector<8x64xf32>
    %227 = vector.extract_strided_slice %224 {offsets = [0, 128], sizes = [8, 64], strides = [1, 1]} : vector<8x192xf32> to vector<8x64xf32>
    %228 = vector.extract_strided_slice %218 {offsets = [0, 192], sizes = [8, 64], strides = [1, 1]} : vector<8x256xf32> to vector<8x64xf32>
    %229 = math.tanh %228 : vector<8x64xf32>
    %230 = arith.mulf %226, %189 : vector<8x64xf32>
    %231 = arith.mulf %225, %229 : vector<8x64xf32>
    %232 = arith.addf %230, %231 : vector<8x64xf32>
    %233 = math.tanh %232 : vector<8x64xf32>
    %234 = arith.mulf %227, %233 : vector<8x64xf32>
    %c40 = arith.constant 40 : index
    %c0_57 = arith.constant 0 : index
    %235 = vector.load %arg24[%c40, %c0_57] : memref<64x256xf32, #tpu.memory_space<vmem>>, vector<8x256xf32>
    %236 = arith.truncf %211 : vector<8x64xf32> to vector<8x64xbf16>
    %cst_58 = arith.constant dense<0.000000e+00> : vector<8x256xf32>
    %237 = tpu.matmul %236, %8, %cst_58 {dimension_numbers = #tpu.dot_dimension_numbers<[1], [0], [0], [1], [0, 0, 1, 1], [], []>} : vector<8x64xbf16>, vector<64x256xbf16>, vector<8x256xf32> -> vector<8x256xf32>
    %238 = arith.addf %235, %237 : vector<8x256xf32>
    %239 = vector.extract_strided_slice %238 {offsets = [0, 0], sizes = [8, 192], strides = [1, 1]} : vector<8x256xf32> to vector<8x192xf32>
    %240 = arith.negf %239 : vector<8x192xf32>
    %241 = math.exp %240 : vector<8x192xf32>
    %cst_59 = arith.constant 1.000000e+00 : f32
    %242 = vector.broadcast %cst_59 : f32 to vector<8x192xf32>
    %243 = arith.addf %242, %241 : vector<8x192xf32>
    %244 = arith.divf %242, %243 : vector<8x192xf32>
    %245 = vector.extract_strided_slice %244 {offsets = [0, 0], sizes = [8, 64], strides = [1, 1]} : vector<8x192xf32> to vector<8x64xf32>
    %246 = vector.extract_strided_slice %244 {offsets = [0, 64], sizes = [8, 64], strides = [1, 1]} : vector<8x192xf32> to vector<8x64xf32>
    %247 = vector.extract_strided_slice %244 {offsets = [0, 128], sizes = [8, 64], strides = [1, 1]} : vector<8x192xf32> to vector<8x64xf32>
    %248 = vector.extract_strided_slice %238 {offsets = [0, 192], sizes = [8, 64], strides = [1, 1]} : vector<8x256xf32> to vector<8x64xf32>
    %249 = math.tanh %248 : vector<8x64xf32>
    %250 = arith.mulf %246, %209 : vector<8x64xf32>
    %251 = arith.mulf %245, %249 : vector<8x64xf32>
    %252 = arith.addf %250, %251 : vector<8x64xf32>
    %253 = math.tanh %252 : vector<8x64xf32>
    %254 = arith.mulf %247, %253 : vector<8x64xf32>
    %255 = arith.truncf %254 : vector<8x64xf32> to vector<8x64xbf16>
    %cst_60 = arith.constant dense<0.000000e+00> : vector<8x256xf32>
    %256 = tpu.matmul %255, %9, %cst_60 {dimension_numbers = #tpu.dot_dimension_numbers<[1], [0], [0], [1], [0, 0, 1, 1], [], []>} : vector<8x64xbf16>, vector<64x256xbf16>, vector<8x256xf32> -> vector<8x256xf32>
    %257 = arith.truncf %234 : vector<8x64xf32> to vector<8x64xbf16>
    %cst_61 = arith.constant dense<0.000000e+00> : vector<8x256xf32>
    %258 = tpu.matmul %257, %10, %cst_61 {dimension_numbers = #tpu.dot_dimension_numbers<[1], [0], [0], [1], [0, 0, 1, 1], [], []>} : vector<8x64xbf16>, vector<64x256xbf16>, vector<8x256xf32> -> vector<8x256xf32>
    %259 = arith.addf %256, %258 : vector<8x256xf32>
    %260 = vector.broadcast %11 : vector<1x256xf32> to vector<8x256xf32>
    %261 = arith.addf %259, %260 : vector<8x256xf32>
    %262 = vector.extract_strided_slice %261 {offsets = [0, 0], sizes = [8, 192], strides = [1, 1]} : vector<8x256xf32> to vector<8x192xf32>
    %263 = arith.negf %262 : vector<8x192xf32>
    %264 = math.exp %263 : vector<8x192xf32>
    %cst_62 = arith.constant 1.000000e+00 : f32
    %265 = vector.broadcast %cst_62 : f32 to vector<8x192xf32>
    %266 = arith.addf %265, %264 : vector<8x192xf32>
    %267 = arith.divf %265, %266 : vector<8x192xf32>
    %268 = vector.extract_strided_slice %267 {offsets = [0, 0], sizes = [8, 64], strides = [1, 1]} : vector<8x192xf32> to vector<8x64xf32>
    %269 = vector.extract_strided_slice %267 {offsets = [0, 64], sizes = [8, 64], strides = [1, 1]} : vector<8x192xf32> to vector<8x64xf32>
    %270 = vector.extract_strided_slice %267 {offsets = [0, 128], sizes = [8, 64], strides = [1, 1]} : vector<8x192xf32> to vector<8x64xf32>
    %271 = vector.extract_strided_slice %261 {offsets = [0, 192], sizes = [8, 64], strides = [1, 1]} : vector<8x256xf32> to vector<8x64xf32>
    %272 = math.tanh %271 : vector<8x64xf32>
    %273 = arith.mulf %269, %232 : vector<8x64xf32>
    %274 = arith.mulf %268, %272 : vector<8x64xf32>
    %275 = arith.addf %273, %274 : vector<8x64xf32>
    %276 = math.tanh %275 : vector<8x64xf32>
    %277 = arith.mulf %270, %276 : vector<8x64xf32>
    %c48 = arith.constant 48 : index
    %c0_63 = arith.constant 0 : index
    %278 = vector.load %arg24[%c48, %c0_63] : memref<64x256xf32, #tpu.memory_space<vmem>>, vector<8x256xf32>
    %279 = arith.truncf %254 : vector<8x64xf32> to vector<8x64xbf16>
    %cst_64 = arith.constant dense<0.000000e+00> : vector<8x256xf32>
    %280 = tpu.matmul %279, %8, %cst_64 {dimension_numbers = #tpu.dot_dimension_numbers<[1], [0], [0], [1], [0, 0, 1, 1], [], []>} : vector<8x64xbf16>, vector<64x256xbf16>, vector<8x256xf32> -> vector<8x256xf32>
    %281 = arith.addf %278, %280 : vector<8x256xf32>
    %282 = vector.extract_strided_slice %281 {offsets = [0, 0], sizes = [8, 192], strides = [1, 1]} : vector<8x256xf32> to vector<8x192xf32>
    %283 = arith.negf %282 : vector<8x192xf32>
    %284 = math.exp %283 : vector<8x192xf32>
    %cst_65 = arith.constant 1.000000e+00 : f32
    %285 = vector.broadcast %cst_65 : f32 to vector<8x192xf32>
    %286 = arith.addf %285, %284 : vector<8x192xf32>
    %287 = arith.divf %285, %286 : vector<8x192xf32>
    %288 = vector.extract_strided_slice %287 {offsets = [0, 0], sizes = [8, 64], strides = [1, 1]} : vector<8x192xf32> to vector<8x64xf32>
    %289 = vector.extract_strided_slice %287 {offsets = [0, 64], sizes = [8, 64], strides = [1, 1]} : vector<8x192xf32> to vector<8x64xf32>
    %290 = vector.extract_strided_slice %287 {offsets = [0, 128], sizes = [8, 64], strides = [1, 1]} : vector<8x192xf32> to vector<8x64xf32>
    %291 = vector.extract_strided_slice %281 {offsets = [0, 192], sizes = [8, 64], strides = [1, 1]} : vector<8x256xf32> to vector<8x64xf32>
    %292 = math.tanh %291 : vector<8x64xf32>
    %293 = arith.mulf %289, %252 : vector<8x64xf32>
    %294 = arith.mulf %288, %292 : vector<8x64xf32>
    %295 = arith.addf %293, %294 : vector<8x64xf32>
    %296 = math.tanh %295 : vector<8x64xf32>
    %297 = arith.mulf %290, %296 : vector<8x64xf32>
    %298 = arith.truncf %297 : vector<8x64xf32> to vector<8x64xbf16>
    %cst_66 = arith.constant dense<0.000000e+00> : vector<8x256xf32>
    %299 = tpu.matmul %298, %9, %cst_66 {dimension_numbers = #tpu.dot_dimension_numbers<[1], [0], [0], [1], [0, 0, 1, 1], [], []>} : vector<8x64xbf16>, vector<64x256xbf16>, vector<8x256xf32> -> vector<8x256xf32>
    %300 = arith.truncf %277 : vector<8x64xf32> to vector<8x64xbf16>
    %cst_67 = arith.constant dense<0.000000e+00> : vector<8x256xf32>
    %301 = tpu.matmul %300, %10, %cst_67 {dimension_numbers = #tpu.dot_dimension_numbers<[1], [0], [0], [1], [0, 0, 1, 1], [], []>} : vector<8x64xbf16>, vector<64x256xbf16>, vector<8x256xf32> -> vector<8x256xf32>
    %302 = arith.addf %299, %301 : vector<8x256xf32>
    %303 = vector.broadcast %11 : vector<1x256xf32> to vector<8x256xf32>
    %304 = arith.addf %302, %303 : vector<8x256xf32>
    %305 = vector.extract_strided_slice %304 {offsets = [0, 0], sizes = [8, 192], strides = [1, 1]} : vector<8x256xf32> to vector<8x192xf32>
    %306 = arith.negf %305 : vector<8x192xf32>
    %307 = math.exp %306 : vector<8x192xf32>
    %cst_68 = arith.constant 1.000000e+00 : f32
    %308 = vector.broadcast %cst_68 : f32 to vector<8x192xf32>
    %309 = arith.addf %308, %307 : vector<8x192xf32>
    %310 = arith.divf %308, %309 : vector<8x192xf32>
    %311 = vector.extract_strided_slice %310 {offsets = [0, 0], sizes = [8, 64], strides = [1, 1]} : vector<8x192xf32> to vector<8x64xf32>
    %312 = vector.extract_strided_slice %310 {offsets = [0, 64], sizes = [8, 64], strides = [1, 1]} : vector<8x192xf32> to vector<8x64xf32>
    %313 = vector.extract_strided_slice %310 {offsets = [0, 128], sizes = [8, 64], strides = [1, 1]} : vector<8x192xf32> to vector<8x64xf32>
    %314 = vector.extract_strided_slice %304 {offsets = [0, 192], sizes = [8, 64], strides = [1, 1]} : vector<8x256xf32> to vector<8x64xf32>
    %315 = math.tanh %314 : vector<8x64xf32>
    %316 = arith.mulf %312, %275 : vector<8x64xf32>
    %317 = arith.mulf %311, %315 : vector<8x64xf32>
    %318 = arith.addf %316, %317 : vector<8x64xf32>
    %319 = math.tanh %318 : vector<8x64xf32>
    %320 = arith.mulf %313, %319 : vector<8x64xf32>
    %c56 = arith.constant 56 : index
    %c0_69 = arith.constant 0 : index
    %321 = vector.load %arg24[%c56, %c0_69] : memref<64x256xf32, #tpu.memory_space<vmem>>, vector<8x256xf32>
    %322 = arith.truncf %297 : vector<8x64xf32> to vector<8x64xbf16>
    %cst_70 = arith.constant dense<0.000000e+00> : vector<8x256xf32>
    %323 = tpu.matmul %322, %8, %cst_70 {dimension_numbers = #tpu.dot_dimension_numbers<[1], [0], [0], [1], [0, 0, 1, 1], [], []>} : vector<8x64xbf16>, vector<64x256xbf16>, vector<8x256xf32> -> vector<8x256xf32>
    %324 = arith.addf %321, %323 : vector<8x256xf32>
    %325 = vector.extract_strided_slice %324 {offsets = [0, 0], sizes = [8, 192], strides = [1, 1]} : vector<8x256xf32> to vector<8x192xf32>
    %326 = arith.negf %325 : vector<8x192xf32>
    %327 = math.exp %326 : vector<8x192xf32>
    %cst_71 = arith.constant 1.000000e+00 : f32
    %328 = vector.broadcast %cst_71 : f32 to vector<8x192xf32>
    %329 = arith.addf %328, %327 : vector<8x192xf32>
    %330 = arith.divf %328, %329 : vector<8x192xf32>
    %331 = vector.extract_strided_slice %330 {offsets = [0, 0], sizes = [8, 64], strides = [1, 1]} : vector<8x192xf32> to vector<8x64xf32>
    %332 = vector.extract_strided_slice %330 {offsets = [0, 64], sizes = [8, 64], strides = [1, 1]} : vector<8x192xf32> to vector<8x64xf32>
    %333 = vector.extract_strided_slice %330 {offsets = [0, 128], sizes = [8, 64], strides = [1, 1]} : vector<8x192xf32> to vector<8x64xf32>
    %334 = vector.extract_strided_slice %324 {offsets = [0, 192], sizes = [8, 64], strides = [1, 1]} : vector<8x256xf32> to vector<8x64xf32>
    %335 = math.tanh %334 : vector<8x64xf32>
    %336 = arith.mulf %332, %295 : vector<8x64xf32>
    %337 = arith.mulf %331, %335 : vector<8x64xf32>
    %338 = arith.addf %336, %337 : vector<8x64xf32>
    %339 = math.tanh %338 : vector<8x64xf32>
    %340 = arith.mulf %333, %339 : vector<8x64xf32>
    %341 = arith.truncf %340 : vector<8x64xf32> to vector<8x64xbf16>
    %cst_72 = arith.constant dense<0.000000e+00> : vector<8x256xf32>
    %342 = tpu.matmul %341, %9, %cst_72 {dimension_numbers = #tpu.dot_dimension_numbers<[1], [0], [0], [1], [0, 0, 1, 1], [], []>} : vector<8x64xbf16>, vector<64x256xbf16>, vector<8x256xf32> -> vector<8x256xf32>
    %343 = arith.truncf %320 : vector<8x64xf32> to vector<8x64xbf16>
    %cst_73 = arith.constant dense<0.000000e+00> : vector<8x256xf32>
    %344 = tpu.matmul %343, %10, %cst_73 {dimension_numbers = #tpu.dot_dimension_numbers<[1], [0], [0], [1], [0, 0, 1, 1], [], []>} : vector<8x64xbf16>, vector<64x256xbf16>, vector<8x256xf32> -> vector<8x256xf32>
    %345 = arith.addf %342, %344 : vector<8x256xf32>
    %346 = vector.broadcast %11 : vector<1x256xf32> to vector<8x256xf32>
    %347 = arith.addf %345, %346 : vector<8x256xf32>
    %348 = vector.extract_strided_slice %347 {offsets = [0, 0], sizes = [8, 192], strides = [1, 1]} : vector<8x256xf32> to vector<8x192xf32>
    %349 = arith.negf %348 : vector<8x192xf32>
    %350 = math.exp %349 : vector<8x192xf32>
    %cst_74 = arith.constant 1.000000e+00 : f32
    %351 = vector.broadcast %cst_74 : f32 to vector<8x192xf32>
    %352 = arith.addf %351, %350 : vector<8x192xf32>
    %353 = arith.divf %351, %352 : vector<8x192xf32>
    %354 = vector.extract_strided_slice %353 {offsets = [0, 0], sizes = [8, 64], strides = [1, 1]} : vector<8x192xf32> to vector<8x64xf32>
    %355 = vector.extract_strided_slice %353 {offsets = [0, 64], sizes = [8, 64], strides = [1, 1]} : vector<8x192xf32> to vector<8x64xf32>
    %356 = vector.extract_strided_slice %353 {offsets = [0, 128], sizes = [8, 64], strides = [1, 1]} : vector<8x192xf32> to vector<8x64xf32>
    %357 = vector.extract_strided_slice %347 {offsets = [0, 192], sizes = [8, 64], strides = [1, 1]} : vector<8x256xf32> to vector<8x64xf32>
    %358 = math.tanh %357 : vector<8x64xf32>
    %359 = arith.mulf %355, %318 : vector<8x64xf32>
    %360 = arith.mulf %354, %358 : vector<8x64xf32>
    %361 = arith.addf %359, %360 : vector<8x64xf32>
    %362 = math.tanh %361 : vector<8x64xf32>
    %363 = arith.mulf %356, %362 : vector<8x64xf32>
    %c0_75 = arith.constant 0 : index
    %c0_76 = arith.constant 0 : index
    %364 = vector.load %arg1[%c0_75, %c0_76] : memref<8x324xf32, #tpu.memory_space<vmem>>, vector<8x324xf32>
    %365 = arith.truncf %364 : vector<8x324xf32> to vector<8x324xbf16>
    %c0_77 = arith.constant 0 : index
    %c0_78 = arith.constant 0 : index
    %366 = vector.load %arg10[%c0_77, %c0_78] : memref<324x2048xbf16, #tpu.memory_space<vmem>>, vector<324x2048xbf16>
    %cst_79 = arith.constant dense<0.000000e+00> : vector<8x2048xf32>
    %367 = tpu.matmul %365, %366, %cst_79 {dimension_numbers = #tpu.dot_dimension_numbers<[1], [0], [0], [1], [0, 0, 1, 1], [], []>} : vector<8x324xbf16>, vector<324x2048xbf16>, vector<8x2048xf32> -> vector<8x2048xf32>
    %368 = vector.extract_strided_slice %367 {offsets = [0, 0], sizes = [8, 512], strides = [1, 1]} : vector<8x2048xf32> to vector<8x512xf32>
    %369 = vector.extract_strided_slice %367 {offsets = [0, 512], sizes = [8, 512], strides = [1, 1]} : vector<8x2048xf32> to vector<8x512xf32>
    %370 = arith.maximumf %368, %369 : vector<8x512xf32>
    %371 = vector.extract_strided_slice %367 {offsets = [0, 1024], sizes = [8, 512], strides = [1, 1]} : vector<8x2048xf32> to vector<8x512xf32>
    %372 = vector.extract_strided_slice %367 {offsets = [0, 1536], sizes = [8, 512], strides = [1, 1]} : vector<8x2048xf32> to vector<8x512xf32>
    %373 = arith.maximumf %371, %372 : vector<8x512xf32>
    %374 = arith.maximumf %370, %373 : vector<8x512xf32>
    %c0_80 = arith.constant 0 : index
    %c0_81 = arith.constant 0 : index
    %375 = vector.load %arg11[%c0_80, %c0_81] : memref<1x512xf32, #tpu.memory_space<vmem>>, vector<1x512xf32>
    %376 = vector.broadcast %375 : vector<1x512xf32> to vector<8x512xf32>
    %377 = arith.addf %374, %376 : vector<8x512xf32>
    %cst_82 = arith.constant 0.000000e+00 : f32
    %378 = vector.broadcast %cst_82 : f32 to vector<8x512xf32>
    %379 = arith.maximumf %377, %378 : vector<8x512xf32>
    %380 = arith.truncf %379 : vector<8x512xf32> to vector<8x512xbf16>
    %c0_83 = arith.constant 0 : index
    %c0_84 = arith.constant 0 : index
    %381 = vector.load %arg12[%c0_83, %c0_84] : memref<512x576xbf16, #tpu.memory_space<vmem>>, vector<512x576xbf16>
    %cst_85 = arith.constant dense<0.000000e+00> : vector<8x576xf32>
    %382 = tpu.matmul %380, %381, %cst_85 {dimension_numbers = #tpu.dot_dimension_numbers<[1], [0], [0], [1], [0, 0, 1, 1], [], []>} : vector<8x512xbf16>, vector<512x576xbf16>, vector<8x576xf32> -> vector<8x576xf32>
    %383 = vector.extract_strided_slice %382 {offsets = [0, 0], sizes = [8, 144], strides = [1, 1]} : vector<8x576xf32> to vector<8x144xf32>
    %384 = vector.extract_strided_slice %382 {offsets = [0, 144], sizes = [8, 144], strides = [1, 1]} : vector<8x576xf32> to vector<8x144xf32>
    %385 = arith.maximumf %383, %384 : vector<8x144xf32>
    %386 = vector.extract_strided_slice %382 {offsets = [0, 288], sizes = [8, 144], strides = [1, 1]} : vector<8x576xf32> to vector<8x144xf32>
    %387 = vector.extract_strided_slice %382 {offsets = [0, 432], sizes = [8, 144], strides = [1, 1]} : vector<8x576xf32> to vector<8x144xf32>
    %388 = arith.maximumf %386, %387 : vector<8x144xf32>
    %389 = arith.maximumf %385, %388 : vector<8x144xf32>
    %c0_86 = arith.constant 0 : index
    %c0_87 = arith.constant 0 : index
    %390 = vector.load %arg13[%c0_86, %c0_87] : memref<1x144xf32, #tpu.memory_space<vmem>>, vector<1x144xf32>
    %391 = vector.broadcast %390 : vector<1x144xf32> to vector<8x144xf32>
    %392 = arith.addf %389, %391 : vector<8x144xf32>
    %cst_88 = arith.constant 0.000000e+00 : f32
    %393 = vector.broadcast %cst_88 : f32 to vector<8x144xf32>
    %394 = arith.maximumf %392, %393 : vector<8x144xf32>
    %395 = arith.truncf %394 : vector<8x144xf32> to vector<8x144xbf16>
    %c0_89 = arith.constant 0 : index
    %c0_90 = arith.constant 0 : index
    %396 = vector.load %arg14[%c0_89, %c0_90] : memref<144x32xbf16, #tpu.memory_space<vmem>>, vector<144x32xbf16>
    %cst_91 = arith.constant dense<0.000000e+00> : vector<8x32xf32>
    %397 = tpu.matmul %395, %396, %cst_91 {dimension_numbers = #tpu.dot_dimension_numbers<[1], [0], [0], [1], [0, 0, 1, 1], [], []>} : vector<8x144xbf16>, vector<144x32xbf16>, vector<8x32xf32> -> vector<8x32xf32>
    %c0_92 = arith.constant 0 : index
    %c0_93 = arith.constant 0 : index
    %398 = vector.load %arg15[%c0_92, %c0_93] : memref<1x32xf32, #tpu.memory_space<vmem>>, vector<1x32xf32>
    %399 = vector.broadcast %398 : vector<1x32xf32> to vector<8x32xf32>
    %400 = arith.addf %397, %399 : vector<8x32xf32>
    %cst_94 = arith.constant 0.000000e+00 : f32
    %401 = vector.broadcast %cst_94 : f32 to vector<8x32xf32>
    %402 = arith.maximumf %400, %401 : vector<8x32xf32>
    %403 = arith.truncf %363 : vector<8x64xf32> to vector<8x64xbf16>
    %c0_95 = arith.constant 0 : index
    %c0_96 = arith.constant 0 : index
    %404 = vector.load %arg16[%c0_95, %c0_96] : memref<64x32xbf16, #tpu.memory_space<vmem>>, vector<64x32xbf16>
    %cst_97 = arith.constant dense<0.000000e+00> : vector<8x32xf32>
    %405 = tpu.matmul %403, %404, %cst_97 {dimension_numbers = #tpu.dot_dimension_numbers<[1], [0], [0], [1], [0, 0, 1, 1], [], []>} : vector<8x64xbf16>, vector<64x32xbf16>, vector<8x32xf32> -> vector<8x32xf32>
    %406 = arith.truncf %402 : vector<8x32xf32> to vector<8x32xbf16>
    %c0_98 = arith.constant 0 : index
    %c0_99 = arith.constant 0 : index
    %407 = vector.load %arg17[%c0_98, %c0_99] : memref<32x32xbf16, #tpu.memory_space<vmem>>, vector<32x32xbf16>
    %cst_100 = arith.constant dense<0.000000e+00> : vector<8x32xf32>
    %408 = tpu.matmul %406, %407, %cst_100 {dimension_numbers = #tpu.dot_dimension_numbers<[1], [0], [0], [1], [0, 0, 1, 1], [], []>} : vector<8x32xbf16>, vector<32x32xbf16>, vector<8x32xf32> -> vector<8x32xf32>
    %409 = arith.addf %405, %408 : vector<8x32xf32>
    %c0_101 = arith.constant 0 : index
    %c0_102 = arith.constant 0 : index
    %410 = vector.load %arg18[%c0_101, %c0_102] : memref<1x32xf32, #tpu.memory_space<vmem>>, vector<1x32xf32>
    %411 = vector.broadcast %410 : vector<1x32xf32> to vector<8x32xf32>
    %412 = arith.addf %409, %411 : vector<8x32xf32>
    %cst_103 = arith.constant 0.000000e+00 : f32
    %413 = vector.broadcast %cst_103 : f32 to vector<8x32xf32>
    %414 = arith.maximumf %412, %413 : vector<8x32xf32>
    %415 = arith.truncf %414 : vector<8x32xf32> to vector<8x32xbf16>
    %c0_104 = arith.constant 0 : index
    %c0_105 = arith.constant 0 : index
    %416 = vector.load %arg19[%c0_104, %c0_105] : memref<32x16xbf16, #tpu.memory_space<vmem>>, vector<32x16xbf16>
    %cst_106 = arith.constant dense<0.000000e+00> : vector<8x16xf32>
    %417 = tpu.matmul %415, %416, %cst_106 {dimension_numbers = #tpu.dot_dimension_numbers<[1], [0], [0], [1], [0, 0, 1, 1], [], []>} : vector<8x32xbf16>, vector<32x16xbf16>, vector<8x16xf32> -> vector<8x16xf32>
    %c0_107 = arith.constant 0 : index
    %c0_108 = arith.constant 0 : index
    %418 = vector.load %arg20[%c0_107, %c0_108] : memref<1x16xf32, #tpu.memory_space<vmem>>, vector<1x16xf32>
    %419 = vector.broadcast %418 : vector<1x16xf32> to vector<8x16xf32>
    %420 = arith.addf %417, %419 : vector<8x16xf32>
    %cst_109 = arith.constant 0.000000e+00 : f32
    %421 = vector.broadcast %cst_109 : f32 to vector<8x16xf32>
    %422 = arith.maximumf %420, %421 : vector<8x16xf32>
    %423 = arith.truncf %422 : vector<8x16xf32> to vector<8x16xbf16>
    %c0_110 = arith.constant 0 : index
    %c0_111 = arith.constant 0 : index
    %424 = vector.load %arg21[%c0_110, %c0_111] : memref<16x1xbf16, #tpu.memory_space<vmem>>, vector<16x1xbf16>
    %cst_112 = arith.constant dense<0.000000e+00> : vector<8x1xf32>
    %425 = tpu.matmul %423, %424, %cst_112 {dimension_numbers = #tpu.dot_dimension_numbers<[1], [0], [0], [1], [0, 0, 1, 1], [], []>} : vector<8x16xbf16>, vector<16x1xbf16>, vector<8x1xf32> -> vector<8x1xf32>
    %c0_113 = arith.constant 0 : index
    %c0_114 = arith.constant 0 : index
    %426 = vector.load %arg22[%c0_113, %c0_114] : memref<1x1xf32, #tpu.memory_space<vmem>>, vector<1x1xf32>
    %427 = vector.broadcast %426 : vector<1x1xf32> to vector<8x1xf32>
    %428 = arith.addf %425, %427 : vector<8x1xf32>
    %c0_115 = arith.constant 0 : index
    %c0_116 = arith.constant 0 : index
    %429 = vector.load %arg23[%c0_115, %c0_116] : memref<8x1xf32, #tpu.memory_space<vmem>>, vector<8x1xf32>
    tpu.vector_store %arg23[%c0_115, %c0_116], %428 {strides = array<i32>} : memref<8x1xf32, #tpu.memory_space<vmem>>, vector<8x1xf32>,
    return
  }
}

</mosaic_0001>

<llo_original>
// kernel: crnn_forward.1
$region0: #{crnn_forward.1}
  #allocation0 [shape = 'u32[]', space=smem, size = 0x4, offset = 0x4, fixed_abs, tag = 'smem constant byte address 0x4 - core index']
  #allocation1 [shape = 'u32[144,128]{1,0:T(1,128)}', space=vmem, size = 0x12000, scoped, tag = 'internal scratch']
  #allocation2 [shape = 'f32[64,256]{1,0:T(8,128)}', space=vmem, size = 0x10000, scoped, tag = 'scratch operand']
  #allocation3 [shape = 'f32[1,1]{1,0:T(1,128)S(1)}', space=vmem, size = 0x200, scoped, tag = 'scoped memory for crnn_forward.1']
  %s0 = inlined_call_operand.vmem [shape: f32[64,8], index: 0, kind: input, shape index: {}]
  %s1 = inlined_call_operand.vmem [shape: f32[8,324], index: 1, kind: input, shape index: {}]
  %s2 = inlined_call_operand.vmem [shape: bf16[8,256], index: 2, kind: input, shape index: {}]
  %s3 = inlined_call_operand.vmem [shape: bf16[64,256], index: 3, kind: input, shape index: {}]
  %s4 = inlined_call_operand.vmem [shape: f32[1,256], index: 4, kind: input, shape index: {}]
  %s5 = inlined_call_operand.vmem [shape: bf16[64,256], index: 5, kind: input, shape index: {}]
  %s6 = inlined_call_operand.vmem [shape: bf16[64,256], index: 6, kind: input, shape index: {}]
  %s7 = inlined_call_operand.vmem [shape: f32[1,256], index: 7, kind: input, shape index: {}]
  %s8 = inlined_call_operand.vmem [shape: f32[2,8,64], index: 8, kind: input, shape index: {}]
  %s9 = inlined_call_operand.vmem [shape: f32[2,8,64], index: 9, kind: input, shape index: {}]
  %s10 = inlined_call_operand.vmem [shape: bf16[324,2048], index: 10, kind: input, shape index: {}]
  %s11 = inlined_call_operand.vmem [shape: f32[1,512], index: 11, kind: input, shape index: {}]
  %s12 = inlined_call_operand.vmem [shape: bf16[512,576], index: 12, kind: input, shape index: {}]
  %s13 = inlined_call_operand.vmem [shape: f32[1,144], index: 13, kind: input, shape index: {}]
  %s14 = inlined_call_operand.vmem [shape: bf16[144,32], index: 14, kind: input, shape index: {}]
  %s15 = inlined_call_operand.vmem [shape: f32[1,32], index: 15, kind: input, shape index: {}]
  %s16 = inlined_call_operand.vmem [shape: bf16[64,32], index: 16, kind: input, shape index: {}]
  %s17 = inlined_call_operand.vmem [shape: bf16[32,32], index: 17, kind: input, shape index: {}]
  %s18 = inlined_call_operand.vmem [shape: f32[1,32], index: 18, kind: input, shape index: {}]
  %s19 = inlined_call_operand.vmem [shape: bf16[32,16], index: 19, kind: input, shape index: {}]
  %s20 = inlined_call_operand.vmem [shape: f32[1,16], index: 20, kind: input, shape index: {}]
  %s21 = inlined_call_operand.vmem [shape: bf16[16,1], index: 21, kind: input, shape index: {}]
  %s22 = inlined_call_operand.<no memory space> [shape: f32[1,1], index: 22, kind: input, shape index: {}]
  %s23 = inlined_call_operand.vmem [shape: f32[8,1], index: 23, kind: output, shape index: {}]
  %s24 = sld [smem:[#allocation0]]
  $region102: #{crnn_forward.1} parent=0
    _
  %s26 = ssub.s32 1, %s24
  %s27 = scalar_select 0, %s26, %s24
  %v28 = vstv %s22
  %29 = vst [vmem:[#allocation3] sm:$0x1] %v28
  // Predicated region
  $region2: #{crnn_forward.1} parent=0 // pred_check
    _
  $region3: #{crnn_forward.1} parent=0 // pred_check_branch
    %31 = sbr.rel (0) target = $region5
  $region4: #{crnn_forward.1} parent=0 // pred_region
    _
  $region5: #{crnn_forward.1} parent=0 // pred_fallthru
    _
  // Predicated region
  $region6: #{crnn_forward.1} parent=0 // pred_check
    _
  $region7: #{crnn_forward.1} parent=0 // pred_check_branch
    %33 = sbr.rel (0) target = $region9
  $region8: #{crnn_forward.1} parent=0 // pred_region
    _
  $region9: #{crnn_forward.1} parent=0 // pred_fallthru
    _
  // Predicated region
  $region10: #{crnn_forward.1} parent=0 // pred_check
    _
  $region11: #{crnn_forward.1} parent=0 // pred_check_branch
    %35 = sbr.rel (0) target = $region13
  $region12: #{crnn_forward.1} parent=0 // pred_region
    _
  $region13: #{crnn_forward.1} parent=0 // pred_fallthru
    _
  // Predicated region
  $region14: #{crnn_forward.1} parent=0 // pred_check
    _
  $region15: #{crnn_forward.1} parent=0 // pred_check_branch
    %37 = sbr.rel (0) target = $region17
  $region16: #{crnn_forward.1} parent=0 // pred_region
    _
  $region17: #{crnn_forward.1} parent=0 // pred_fallthru
    _
  // Predicated region
  $region18: #{crnn_forward.1} parent=0 // pred_check
    _
  $region19: #{crnn_forward.1} parent=0 // pred_check_branch
    %39 = sbr.rel (0) target = $region21
  $region20: #{crnn_forward.1} parent=0 // pred_region
    _
  $region21: #{crnn_forward.1} parent=0 // pred_fallthru
    _
  // Predicated region
  $region22: #{crnn_forward.1} parent=0 // pred_check
    _
  $region23: #{crnn_forward.1} parent=0 // pred_check_branch
    %41 = sbr.rel (0) target = $region25
  $region24: #{crnn_forward.1} parent=0 // pred_region
    _
  $region25: #{crnn_forward.1} parent=0 // pred_fallthru
    _
  // Predicated region
  $region26: #{crnn_forward.1} parent=0 // pred_check
    _
  $region27: #{crnn_forward.1} parent=0 // pred_check_branch
    %43 = sbr.rel (0) target = $region29
  $region28: #{crnn_forward.1} parent=0 // pred_region
    _
  $region29: #{crnn_forward.1} parent=0 // pred_fallthru
    _
  // Predicated region
  $region30: #{crnn_forward.1} parent=0 // pred_check
    _
  $region31: #{crnn_forward.1} parent=0 // pred_check_branch
    %45 = sbr.rel (0) target = $region33
  $region32: #{crnn_forward.1} parent=0 // pred_region
    _
  $region33: #{crnn_forward.1} parent=0 // pred_fallthru
    _
  // Predicated region
  $region34: #{crnn_forward.1} parent=0 // pred_check
    _
  $region35: #{crnn_forward.1} parent=0 // pred_check_branch
    %47 = sbr.rel (0) target = $region37
  $region36: #{crnn_forward.1} parent=0 // pred_region
    _
  $region37: #{crnn_forward.1} parent=0 // pred_fallthru
    _
  // Predicated region
  $region38: #{crnn_forward.1} parent=0 // pred_check
    _
  $region39: #{crnn_forward.1} parent=0 // pred_check_branch
    %49 = sbr.rel (0) target = $region41
  $region40: #{crnn_forward.1} parent=0 // pred_region
    _
  $region41: #{crnn_forward.1} parent=0 // pred_fallthru
    _
  // Predicated region
  $region42: #{crnn_forward.1} parent=0 // pred_check
    _
  $region43: #{crnn_forward.1} parent=0 // pred_check_branch
    %51 = sbr.rel (0) target = $region45
  $region44: #{crnn_forward.1} parent=0 // pred_region
    _
  $region45: #{crnn_forward.1} parent=0 // pred_fallthru
    _
  // Predicated region
  $region46: #{crnn_forward.1} parent=0 // pred_check
    _
  $region47: #{crnn_forward.1} parent=0 // pred_check_branch
    %53 = sbr.rel (0) target = $region49
  $region48: #{crnn_forward.1} parent=0 // pred_region
    _
  $region49: #{crnn_forward.1} parent=0 // pred_fallthru
    _
  // Predicated region
  $region50: #{crnn_forward.1} parent=0 // pred_check
    _
  $region51: #{crnn_forward.1} parent=0 // pred_check_branch
    %55 = sbr.rel (0) target = $region53
  $region52: #{crnn_forward.1} parent=0 // pred_region
    _
  $region53: #{crnn_forward.1} parent=0 // pred_fallthru
    _
  // Predicated region
  $region54: #{crnn_forward.1} parent=0 // pred_check
    _
  $region55: #{crnn_forward.1} parent=0 // pred_check_branch
    %57 = sbr.rel (0) target = $region57
  $region56: #{crnn_forward.1} parent=0 // pred_region
    _
  $region57: #{crnn_forward.1} parent=0 // pred_fallthru
    _
  // Predicated region
  $region58: #{crnn_forward.1} parent=0 // pred_check
    _
  $region59: #{crnn_forward.1} parent=0 // pred_check_branch
    %59 = sbr.rel (0) target = $region61
  $region60: #{crnn_forward.1} parent=0 // pred_region
    _
  $region61: #{crnn_forward.1} parent=0 // pred_fallthru
    _
  // Predicated region
  $region62: #{crnn_forward.1} parent=0 // pred_check
    _
  $region63: #{crnn_forward.1} parent=0 // pred_check_branch
    %61 = sbr.rel (0) target = $region65
  $region64: #{crnn_forward.1} parent=0 // pred_region
    _
  $region65: #{crnn_forward.1} parent=0 // pred_fallthru
    _
  // Predicated region
  $region66: #{crnn_forward.1} parent=0 // pred_check
    _
  $region67: #{crnn_forward.1} parent=0 // pred_check_branch
    %63 = sbr.rel (0) target = $region69
  $region68: #{crnn_forward.1} parent=0 // pred_region
    _
  $region69: #{crnn_forward.1} parent=0 // pred_fallthru
    _
  // Predicated region
  $region70: #{crnn_forward.1} parent=0 // pred_check
    _
  $region71: #{crnn_forward.1} parent=0 // pred_check_branch
    %65 = sbr.rel (0) target = $region73
  $region72: #{crnn_forward.1} parent=0 // pred_region
    _
  $region73: #{crnn_forward.1} parent=0 // pred_fallthru
    _
  // Predicated region
  $region74: #{crnn_forward.1} parent=0 // pred_check
    _
  $region75: #{crnn_forward.1} parent=0 // pred_check_branch
    %67 = sbr.rel (0) target = $region77
  $region76: #{crnn_forward.1} parent=0 // pred_region
    _
  $region77: #{crnn_forward.1} parent=0 // pred_fallthru
    _
  // Predicated region
  $region78: #{crnn_forward.1} parent=0 // pred_check
    _
  $region79: #{crnn_forward.1} parent=0 // pred_check_branch
    %69 = sbr.rel (0) target = $region81
  $region80: #{crnn_forward.1} parent=0 // pred_region
    _
  $region81: #{crnn_forward.1} parent=0 // pred_fallthru
    _
  // Predicated region
  $region82: #{crnn_forward.1} parent=0 // pred_check
    _
  $region83: #{crnn_forward.1} parent=0 // pred_check_branch
    %71 = sbr.rel (0) target = $region85
  $region84: #{crnn_forward.1} parent=0 // pred_region
    _
  $region85: #{crnn_forward.1} parent=0 // pred_fallthru
    _
  // Predicated region
  $region86: #{crnn_forward.1} parent=0 // pred_check
    _
  $region87: #{crnn_forward.1} parent=0 // pred_check_branch
    %73 = sbr.rel (0) target = $region89
  $region88: #{crnn_forward.1} parent=0 // pred_region
    _
  $region89: #{crnn_forward.1} parent=0 // pred_fallthru
    _
  // Predicated region
  $region90: #{crnn_forward.1} parent=0 // pred_check
    _
  $region91: #{crnn_forward.1} parent=0 // pred_check_branch
    %75 = sbr.rel (0) target = $region93
  $region92: #{crnn_forward.1} parent=0 // pred_region
    _
  $region93: #{crnn_forward.1} parent=0 // pred_fallthru
    _
  %v77 = vld [vmem:[%s0] sm:$0xff]
  %v78 = vld [vmem:[%s0 + $0x8] sm:$0xff]
  %v79 = vld [vmem:[%s0 + $0x10] sm:$0xff]
  %v80 = vld [vmem:[%s0 + $0x18] sm:$0xff]
  %v81 = vld [vmem:[%s0 + $0x20] sm:$0xff]
  %v82 = vld [vmem:[%s0 + $0x28] sm:$0xff]
  %v83 = vld [vmem:[%s0 + $0x30] sm:$0xff]
  %v84 = vld [vmem:[%s0 + $0x38] sm:$0xff]
  %v85 = vpack.c.bf16 %v78, %v77
  %v86 = vpack.c.bf16 %v80, %v79
  %v87 = vpack.c.bf16 %v82, %v81
  %v88 = vpack.c.bf16 %v84, %v83
  %v89 = vld [vmem:[%s2] sm:$0xff]
  %v90 = vld [vmem:[%s4] sm:$0x3]
  %v92 = vlaneseq
  %v93 = vshrl.u32 %v92, 7
  %v94 = vsub.s32 0, %v93
  %v95 = vrot.slane %v90, %v94
  %v96 = vlaneseq
  %v97 = vshrl.u32 %v96, 7
  %v98 = vsub.s32 1, %v97
  %v99 = vrot.slane %v90, %v98
  %v103 = vunpack.c.l.b16 %v89
  %v104 = vunpack.c.h.b16 %v89
  %v105 = vpack.c.b16 %v103, %v103
  %v106 = vpack.c.b16 %v104, %v104
  %vm107 = vcmask 64512
  %v109 = vsel %vm107, %v85, 0
  %v112 = vsel %vm107, %v86, 0
  %v115 = vsel %vm107, %v87, 0
  %v118 = vsel %vm107, %v88, 0
  %vm120 = vcmask 1043456
  %v122 = vsel %vm120, %v105, 0
  %v125 = vsel %vm120, %v106, 0
  %127 = vmatprep.subr.bf16.mxu0 %v125
  %128 = vmatpush1.bf16.msra.mxu0 %v122
  %129 = vmatprep.subr.bf16.mxu0 0
  %130 = vmatpush1.bf16.msra.mxu0 0
  %131 = vmatprep.subr.bf16.mxu0 0
  %132 = vmatpush1.bf16.msra.mxu0 0
  %133 = vmatprep.subr.bf16.mxu0 0
  %134 = vmatpush1.bf16.msra.mxu0 0
  %135 = vmatprep.subr.bf16.mxu0 0
  %136 = vmatpush1.bf16.msra.mxu0 0
  %137 = vmatprep.subr.bf16.mxu0 0
  %138 = vmatpush1.bf16.msra.mxu0 0
  %139 = vmatprep.subr.bf16.mxu0 0
  %140 = vmatpush1.bf16.msra.mxu0 0
  %141 = vmatprep.subr.bf16.mxu0 0
  %142 = vmatpush1.bf16.msra.mxu0 0
  %143 = vmatprep.subr.bf16.mxu0 0
  %144 = vmatpush1.bf16.msra.mxu0 0
  %145 = vmatprep.subr.bf16.mxu0 0
  %146 = vmatpush1.bf16.msra.mxu0 0
  %147 = vmatprep.subr.bf16.mxu0 0
  %148 = vmatpush1.bf16.msra.mxu0 0
  %149 = vmatprep.subr.bf16.mxu0 0
  %150 = vmatpush1.bf16.msra.mxu0 0
  %151 = vmatprep.subr.bf16.mxu0 0
  %152 = vmatpush1.bf16.msra.mxu0 0
  %153 = vmatprep.subr.bf16.mxu0 0
  %154 = vmatpush1.bf16.msra.mxu0 0
  %155 = vmatprep.subr.bf16.mxu0 0
  %156 = vmatpush1.bf16.msra.mxu0 0
  %157 = vmatprep.subr.bf16.mxu0 0
  %158 = vmatpush1.bf16.msra.mxu0 0
  %159 = vmatprep.mubr.bf16.mxu0 0
  %160 = vmatmul.mubr.bf16.gmra.mrb[0].mxu0 %v109
  %v161 = vpop.f32.mrb[0].mxu0
  %v162 = vadd.f32 %v95, %v161
  %v163 = vpop.f32.mrb[0].mxu0
  %v164 = vadd.f32 %v99, %v163
  %v165 = vpop.f32.mrb[0].mxu0
  %v166 = vadd.f32 %v95, %v165
  %v167 = vpop.f32.mrb[0].mxu0
  %v168 = vadd.f32 %v99, %v167
  %169 = vmatprep.mubr.bf16.mxu0 0
  %170 = vmatmul.mubr.bf16.gmra.mrb[0].mxu0 %v112
  %v171 = vpop.f32.mrb[0].mxu0
  %v172 = vadd.f32 %v95, %v171
  %v173 = vpop.f32.mrb[0].mxu0
  %v174 = vadd.f32 %v99, %v173
  %v175 = vpop.f32.mrb[0].mxu0
  %v176 = vadd.f32 %v95, %v175
  %v177 = vpop.f32.mrb[0].mxu0
  %v178 = vadd.f32 %v99, %v177
  %179 = vmatprep.mubr.bf16.mxu0 0
  %180 = vmatmul.mubr.bf16.gmra.mrb[0].mxu0 %v115
  %v181 = vpop.f32.mrb[0].mxu0
  %v182 = vadd.f32 %v95, %v181
  %v183 = vpop.f32.mrb[0].mxu0
  %v184 = vadd.f32 %v99, %v183
  %v185 = vpop.f32.mrb[0].mxu0
  %v186 = vadd.f32 %v95, %v185
  %v187 = vpop.f32.mrb[0].mxu0
  %v188 = vadd.f32 %v99, %v187
  %189 = vmatprep.mubr.bf16.mxu0 0
  %190 = vmatmul.mubr.bf16.gmra.mrb[0].mxu0 %v118
  %v191 = vpop.f32.mrb[0].mxu0
  %v192 = vadd.f32 %v95, %v191
  %v193 = vpop.f32.mrb[0].mxu0
  %v194 = vadd.f32 %v99, %v193
  %v195 = vpop.f32.mrb[0].mxu0
  %v196 = vadd.f32 %v95, %v195
  %v197 = vpop.f32.mrb[0].mxu0
  %v198 = vadd.f32 %v99, %v197
  %199 = vdwg.mxu0
  %200 = vst [vmem:[#allocation2] sm:$0xff] %v162
  %201 = vst [vmem:[#allocation2 + $0x8] sm:$0xff] %v164
  %202 = vst [vmem:[#allocation2 + $0x10] sm:$0xff] %v166
  %203 = vst [vmem:[#allocation2 + $0x18] sm:$0xff] %v168
  %204 = vst [vmem:[#allocation2 + $0x20] sm:$0xff] %v172
  %205 = vst [vmem:[#allocation2 + $0x28] sm:$0xff] %v174
  %206 = vst [vmem:[#allocation2 + $0x30] sm:$0xff] %v176
  %207 = vst [vmem:[#allocation2 + $0x38] sm:$0xff] %v178
  %208 = vst [vmem:[#allocation2 + $0x40] sm:$0xff] %v182
  %209 = vst [vmem:[#allocation2 + $0x48] sm:$0xff] %v184
  %210 = vst [vmem:[#allocation2 + $0x50] sm:$0xff] %v186
  %211 = vst [vmem:[#allocation2 + $0x58] sm:$0xff] %v188
  %212 = vst [vmem:[#allocation2 + $0x60] sm:$0xff] %v192
  %213 = vst [vmem:[#allocation2 + $0x68] sm:$0xff] %v194
  %214 = vst [vmem:[#allocation2 + $0x70] sm:$0xff] %v196
  %215 = vst [vmem:[#allocation2 + $0x78] sm:$0xff] %v198
  %v216 = vld [vmem:[%s3] sm:$0xff]
  %v217 = vld [vmem:[%s3 + $0x8] sm:$0xff]
  %v218 = vld [vmem:[%s3 + $0x10] sm:$0xff]
  %v219 = vld [vmem:[%s3 + $0x18] sm:$0xff]
  %v220 = vld [vmem:[%s3 + $0x20] sm:$0xff]
  %v221 = vld [vmem:[%s3 + $0x28] sm:$0xff]
  %v222 = vld [vmem:[%s3 + $0x30] sm:$0xff]
  %v223 = vld [vmem:[%s3 + $0x38] sm:$0xff]
  %v224 = vld [vmem:[%s5] sm:$0xff]
  %v225 = vld [vmem:[%s5 + $0x8] sm:$0xff]
  %v226 = vld [vmem:[%s5 + $0x10] sm:$0xff]
  %v227 = vld [vmem:[%s5 + $0x18] sm:$0xff]
  %v228 = vld [vmem:[%s5 + $0x20] sm:$0xff]
  %v229 = vld [vmem:[%s5 + $0x28] sm:$0xff]
  %v230 = vld [vmem:[%s5 + $0x30] sm:$0xff]
  %v231 = vld [vmem:[%s5 + $0x38] sm:$0xff]
  %v232 = vld [vmem:[%s6] sm:$0xff]
  %v233 = vld [vmem:[%s6 + $0x8] sm:$0xff]
  %v234 = vld [vmem:[%s6 + $0x10] sm:$0xff]
  %v235 = vld [vmem:[%s6 + $0x18] sm:$0xff]
  %v236 = vld [vmem:[%s6 + $0x20] sm:$0xff]
  %v237 = vld [vmem:[%s6 + $0x28] sm:$0xff]
  %v238 = vld [vmem:[%s6 + $0x30] sm:$0xff]
  %v239 = vld [vmem:[%s6 + $0x38] sm:$0xff]
  %v240 = vld [vmem:[%s7] sm:$0x3]
  %v241 = vld [vmem:[%s8] sm:$0xff]
  %v242 = vld [vmem:[%s9] sm:$0xff]
  %s243 = scalar_lea.vmem %s8, 8
  %v244 = vld [vmem:[%s243] sm:$0xff]
  %s245 = scalar_lea.vmem %s9, 8
  %v246 = vld [vmem:[%s245] sm:$0xff]
  %v247 = vld [vmem:[#allocation2] sm:$0xff]
  %v248 = vld [vmem:[#allocation2 + $0x8] sm:$0xff]
  %v249 = vpack.c.bf16 %v241, %v241
  %v258 = vunpack.c.l.b16 %v216
  %v259 = vunpack.c.h.b16 %v216
  %v260 = vunpack.c.l.b16 %v217
  %v261 = vunpack.c.h.b16 %v217
  %v262 = vunpack.c.l.b16 %v218
  %v263 = vunpack.c.h.b16 %v218
  %v264 = vunpack.c.l.b16 %v219
  %v265 = vunpack.c.h.b16 %v219
  %v266 = vunpack.c.l.b16 %v220
  %v267 = vunpack.c.h.b16 %v220
  %v268 = vunpack.c.l.b16 %v221
  %v269 = vunpack.c.h.b16 %v221
  %v270 = vunpack.c.l.b16 %v222
  %v271 = vunpack.c.h.b16 %v222
  %v272 = vunpack.c.l.b16 %v223
  %v273 = vunpack.c.h.b16 %v223
  %v274 = vpack.c.b16 %v260, %v258
  %v275 = vpack.c.b16 %v261, %v259
  %v276 = vpack.c.b16 %v264, %v262
  %v277 = vpack.c.b16 %v265, %v263
  %v278 = vpack.c.b16 %v268, %v266
  %v279 = vpack.c.b16 %v269, %v267
  %v280 = vpack.c.b16 %v272, %v270
  %v281 = vpack.c.b16 %v273, %v271
  %vm290 = vcmask 523264
  %v292 = vsel %vm290, %v249, 0
  %294 = vmatprep.subr.bf16.mxu0 %v275
  %295 = vmatpush1.bf16.msra.mxu0 %v274
  %296 = vmatprep.subr.bf16.mxu0 %v277
  %297 = vmatpush1.bf16.msra.mxu0 %v276
  %298 = vmatprep.subr.bf16.mxu0 %v279
  %299 = vmatpush1.bf16.msra.mxu0 %v278
  %300 = vmatprep.subr.bf16.mxu0 %v281
  %301 = vmatpush1.bf16.msra.mxu0 %v280
  %302 = vmatprep.subr.bf16.mxu0 0
  %303 = vmatpush1.bf16.msra.mxu0 0
  %304 = vmatprep.subr.bf16.mxu0 0
  %305 = vmatpush1.bf16.msra.mxu0 0
  %306 = vmatprep.subr.bf16.mxu0 0
  %307 = vmatpush1.bf16.msra.mxu0 0
  %308 = vmatprep.subr.bf16.mxu0 0
  %309 = vmatpush1.bf16.msra.mxu0 0
  %310 = vmatprep.subr.bf16.mxu0 0
  %311 = vmatpush1.bf16.msra.mxu0 0
  %312 = vmatprep.subr.bf16.mxu0 0
  %313 = vmatpush1.bf16.msra.mxu0 0
  %314 = vmatprep.subr.bf16.mxu0 0
  %315 = vmatpush1.bf16.msra.mxu0 0
  %316 = vmatprep.subr.bf16.mxu0 0
  %317 = vmatpush1.bf16.msra.mxu0 0
  %318 = vmatprep.subr.bf16.mxu0 0
  %319 = vmatpush1.bf16.msra.mxu0 0
  %320 = vmatprep.subr.bf16.mxu0 0
  %321 = vmatpush1.bf16.msra.mxu0 0
  %322 = vmatprep.subr.bf16.mxu0 0
  %323 = vmatpush1.bf16.msra.mxu0 0
  %324 = vmatprep.subr.bf16.mxu0 0
  %325 = vmatpush1.bf16.msra.mxu0 0
  %326 = vmatprep.mubr.bf16.mxu0 0
  %327 = vmatmul.mubr.bf16.gmra.mrb[0].mxu0 %v292
  %v328 = vpop.f32.mrb[0].mxu0
  %v329 = vadd.f32 0.0, %v328
  %v330 = vpop.f32.mrb[0].mxu0
  %v331 = vadd.f32 0.0, %v330
  %v332 = vpop.f32.mrb[0].mxu0
  %v333 = vpop.f32.mrb[0].mxu0
  %334 = vdwg.mxu0
  %v335 = vadd.f32 %v247, %v329
  %v336 = vadd.f32 %v248, %v331
  %v337 = vxor.u32 %v335, 2147483648
  %v338 = vxor.u32 %v336, 2147483648
  %v339 = vmul.f32 %v337, 1.442695
  %v340 = vpow.pop %v339
  %v341 = vmul.f32 %v338, 1.442695
  %v342 = vpow.pop %v341
  %v343 = vadd.f32 %v340, 1.0
  %v344 = vadd.f32 %v342, 1.0
  %v345 = vrcp.pop %v343
  %v346 = vmul.f32 1.0, %v345
  %v347 = vrcp.pop %v344
  %v348 = vmul.f32 1.0, %v347
  %v349 = vtanh.pop %v336
  %351 = vrot.lane.b32.xlu0 %v242, 64
  %v352 = vpop.permute.xlu0 %351
  %v354 = vmul.f32 %v346, %v352
  %356 = vrot.lane.b32.xlu0 %v349, 64
  %v357 = vpop.permute.xlu0 %356
  %v359 = vmul.f32 %v346, %v357
  %361 = vrot.lane.b32.xlu0 %v359, 64
  %v362 = vpop.permute.xlu0 %361
  %v364 = vadd.f32 %v354, %v362
  %v365 = vtanh.pop %v364
  %367 = vrot.lane.b32.xlu0 %v365, 64
  %v368 = vpop.permute.xlu0 %367
  %v370 = vmul.f32 %v348, %v368
  %v371 = vpack.c.bf16 %v370, %v370
  %v372 = vpack.c.bf16 %v244, %v244
  %v381 = vunpack.c.l.b16 %v232
  %v382 = vunpack.c.h.b16 %v232
  %v383 = vunpack.c.l.b16 %v233
  %v384 = vunpack.c.h.b16 %v233
  %v385 = vunpack.c.l.b16 %v234
  %v386 = vunpack.c.h.b16 %v234
  %v387 = vunpack.c.l.b16 %v235
  %v388 = vunpack.c.h.b16 %v235
  %v389 = vunpack.c.l.b16 %v236
  %v390 = vunpack.c.h.b16 %v236
  %v391 = vunpack.c.l.b16 %v237
  %v392 = vunpack.c.h.b16 %v237
  %v393 = vunpack.c.l.b16 %v238
  %v394 = vunpack.c.h.b16 %v238
  %v395 = vunpack.c.l.b16 %v239
  %v396 = vunpack.c.h.b16 %v239
  %v397 = vpack.c.b16 %v383, %v381
  %v398 = vpack.c.b16 %v384, %v382
  %v399 = vpack.c.b16 %v387, %v385
  %v400 = vpack.c.b16 %v388, %v386
  %v401 = vpack.c.b16 %v391, %v389
  %v402 = vpack.c.b16 %v392, %v390
  %v403 = vpack.c.b16 %v395, %v393
  %v404 = vpack.c.b16 %v396, %v394
  %v414 = vsel %vm290, %v372, 0
  %416 = vmatprep.subr.bf16.mxu0 %v398
  %417 = vmatpush1.bf16.msra.mxu0 %v397
  %418 = vmatprep.subr.bf16.mxu0 %v400
  %419 = vmatpush1.bf16.msra.mxu0 %v399
  %420 = vmatprep.subr.bf16.mxu0 %v402
  %421 = vmatpush1.bf16.msra.mxu0 %v401
  %422 = vmatprep.subr.bf16.mxu0 %v404
  %423 = vmatpush1.bf16.msra.mxu0 %v403
  %424 = vmatprep.subr.bf16.mxu0 0
  %425 = vmatpush1.bf16.msra.mxu0 0
  %426 = vmatprep.subr.bf16.mxu0 0
  %427 = vmatpush1.bf16.msra.mxu0 0
  %428 = vmatprep.subr.bf16.mxu0 0
  %429 = vmatpush1.bf16.msra.mxu0 0
  %430 = vmatprep.subr.bf16.mxu0 0
  %431 = vmatpush1.bf16.msra.mxu0 0
  %432 = vmatprep.subr.bf16.mxu0 0
  %433 = vmatpush1.bf16.msra.mxu0 0
  %434 = vmatprep.subr.bf16.mxu0 0
  %435 = vmatpush1.bf16.msra.mxu0 0
  %436 = vmatprep.subr.bf16.mxu0 0
  %437 = vmatpush1.bf16.msra.mxu0 0
  %438 = vmatprep.subr.bf16.mxu0 0
  %439 = vmatpush1.bf16.msra.mxu0 0
  %440 = vmatprep.subr.bf16.mxu0 0
  %441 = vmatpush1.bf16.msra.mxu0 0
  %442 = vmatprep.subr.bf16.mxu0 0
  %443 = vmatpush1.bf16.msra.mxu0 0
  %444 = vmatprep.subr.bf16.mxu0 0
  %445 = vmatpush1.bf16.msra.mxu0 0
  %446 = vmatprep.subr.bf16.mxu0 0
  %447 = vmatpush1.bf16.msra.mxu0 0
  %448 = vmatprep.mubr.bf16.mxu0 0
  %449 = vmatmul.mubr.bf16.gmra.mrb[0].mxu0 %v414
  %v450 = vpop.f32.mrb[0].mxu0
  %v451 = vadd.f32 0.0, %v450
  %v452 = vpop.f32.mrb[0].mxu0
  %v453 = vadd.f32 0.0, %v452
  %v454 = vpop.f32.mrb[0].mxu0
  %v455 = vpop.f32.mrb[0].mxu0
  %456 = vdwg.mxu0
  %v465 = vunpack.c.l.b16 %v224
  %v466 = vunpack.c.h.b16 %v224
  %v467 = vunpack.c.l.b16 %v225
  %v468 = vunpack.c.h.b16 %v225
  %v469 = vunpack.c.l.b16 %v226
  %v470 = vunpack.c.h.b16 %v226
  %v471 = vunpack.c.l.b16 %v227
  %v472 = vunpack.c.h.b16 %v227
  %v473 = vunpack.c.l.b16 %v228
  %v474 = vunpack.c.h.b16 %v228
  %v475 = vunpack.c.l.b16 %v229
  %v476 = vunpack.c.h.b16 %v229
  %v477 = vunpack.c.l.b16 %v230
  %v478 = vunpack.c.h.b16 %v230
  %v479 = vunpack.c.l.b16 %v231
  %v480 = vunpack.c.h.b16 %v231
  %v481 = vpack.c.b16 %v467, %v465
  %v482 = vpack.c.b16 %v468, %v466
  %v483 = vpack.c.b16 %v471, %v469
  %v484 = vpack.c.b16 %v472, %v470
  %v485 = vpack.c.b16 %v475, %v473
  %v486 = vpack.c.b16 %v476, %v474
  %v487 = vpack.c.b16 %v479, %v477
  %v488 = vpack.c.b16 %v480, %v478
  %v498 = vsel %vm290, %v371, 0
  %500 = vmatprep.subr.bf16.mxu0 %v482
  %501 = vmatpush1.bf16.msra.mxu0 %v481
  %502 = vmatprep.subr.bf16.mxu0 %v484
  %503 = vmatpush1.bf16.msra.mxu0 %v483
  %504 = vmatprep.subr.bf16.mxu0 %v486
  %505 = vmatpush1.bf16.msra.mxu0 %v485
  %506 = vmatprep.subr.bf16.mxu0 %v488
  %507 = vmatpush1.bf16.msra.mxu0 %v487
  %508 = vmatprep.subr.bf16.mxu0 0
  %509 = vmatpush1.bf16.msra.mxu0 0
  %510 = vmatprep.subr.bf16.mxu0 0
  %511 = vmatpush1.bf16.msra.mxu0 0
  %512 = vmatprep.subr.bf16.mxu0 0
  %513 = vmatpush1.bf16.msra.mxu0 0
  %514 = vmatprep.subr.bf16.mxu0 0
  %515 = vmatpush1.bf16.msra.mxu0 0
  %516 = vmatprep.subr.bf16.mxu0 0
  %517 = vmatpush1.bf16.msra.mxu0 0
  %518 = vmatprep.subr.bf16.mxu0 0
  %519 = vmatpush1.bf16.msra.mxu0 0
  %520 = vmatprep.subr.bf16.mxu0 0
  %521 = vmatpush1.bf16.msra.mxu0 0
  %522 = vmatprep.subr.bf16.mxu0 0
  %523 = vmatpush1.bf16.msra.mxu0 0
  %524 = vmatprep.subr.bf16.mxu0 0
  %525 = vmatpush1.bf16.msra.mxu0 0
  %526 = vmatprep.subr.bf16.mxu0 0
  %527 = vmatpush1.bf16.msra.mxu0 0
  %528 = vmatprep.subr.bf16.mxu0 0
  %529 = vmatpush1.bf16.msra.mxu0 0
  %530 = vmatprep.subr.bf16.mxu0 0
  %531 = vmatpush1.bf16.msra.mxu0 0
  %532 = vmatprep.mubr.bf16.mxu0 0
  %533 = vmatmul.mubr.bf16.gmra.mrb[0].mxu0 %v498
  %v534 = vpop.f32.mrb[0].mxu0
  %v535 = vadd.f32 %v451, %v534
  %v536 = vpop.f32.mrb[0].mxu0
  %v537 = vadd.f32 %v453, %v536
  %v538 = vpop.f32.mrb[0].mxu0
  %v539 = vpop.f32.mrb[0].mxu0
  %540 = vdwg.mxu0
  %v542 = vlaneseq
  %v543 = vshrl.u32 %v542, 7
  %v544 = vsub.s32 0, %v543
  %v545 = vrot.slane %v240, %v544
  %v546 = vlaneseq
  %v547 = vshrl.u32 %v546, 7
  %v548 = vsub.s32 1, %v547
  %v549 = vrot.slane %v240, %v548
  %v552 = vadd.f32 %v535, %v545
  %v553 = vadd.f32 %v537, %v549
  %v554 = vxor.u32 %v552, 2147483648
  %v555 = vxor.u32 %v553, 2147483648
  %v556 = vmul.f32 %v554, 1.442695
  %v557 = vpow.pop %v556
  %v558 = vmul.f32 %v555, 1.442695
  %v559 = vpow.pop %v558
  %v560 = vadd.f32 %v557, 1.0
  %v561 = vadd.f32 %v559, 1.0
  %v562 = vrcp.pop %v560
  %v563 = vmul.f32 1.0, %v562
  %v564 = vrcp.pop %v561
  %v565 = vmul.f32 1.0, %v564
  %v566 = vtanh.pop %v553
  %568 = vrot.lane.b32.xlu0 %v246, 64
  %v569 = vpop.permute.xlu0 %568
  %v571 = vmul.f32 %v563, %v569
  %573 = vrot.lane.b32.xlu0 %v566, 64
  %v574 = vpop.permute.xlu0 %573
  %v576 = vmul.f32 %v563, %v574
  %578 = vrot.lane.b32.xlu0 %v576, 64
  %v579 = vpop.permute.xlu0 %578
  %v581 = vadd.f32 %v571, %v579
  %v582 = vtanh.pop %v581
  %584 = vrot.lane.b32.xlu0 %v582, 64
  %v585 = vpop.permute.xlu0 %584
  %v587 = vmul.f32 %v565, %v585
  %v588 = vld [vmem:[#allocation2 + $0x10] sm:$0xff]
  %v589 = vld [vmem:[#allocation2 + $0x18] sm:$0xff]
  %590 = vmatprep.subr.bf16.mxu0 %v275
  %591 = vmatpush1.bf16.msra.mxu0 %v274
  %592 = vmatprep.subr.bf16.mxu0 %v277
  %593 = vmatpush1.bf16.msra.mxu0 %v276
  %594 = vmatprep.subr.bf16.mxu0 %v279
  %595 = vmatpush1.bf16.msra.mxu0 %v278
  %596 = vmatprep.subr.bf16.mxu0 %v281
  %597 = vmatpush1.bf16.msra.mxu0 %v280
  %598 = vmatprep.subr.bf16.mxu0 0
  %599 = vmatpush1.bf16.msra.mxu0 0
  %600 = vmatprep.subr.bf16.mxu0 0
  %601 = vmatpush1.bf16.msra.mxu0 0
  %602 = vmatprep.subr.bf16.mxu0 0
  %603 = vmatpush1.bf16.msra.mxu0 0
  %604 = vmatprep.subr.bf16.mxu0 0
  %605 = vmatpush1.bf16.msra.mxu0 0
  %606 = vmatprep.subr.bf16.mxu0 0
  %607 = vmatpush1.bf16.msra.mxu0 0
  %608 = vmatprep.subr.bf16.mxu0 0
  %609 = vmatpush1.bf16.msra.mxu0 0
  %610 = vmatprep.subr.bf16.mxu0 0
  %611 = vmatpush1.bf16.msra.mxu0 0
  %612 = vmatprep.subr.bf16.mxu0 0
  %613 = vmatpush1.bf16.msra.mxu0 0
  %614 = vmatprep.subr.bf16.mxu0 0
  %615 = vmatpush1.bf16.msra.mxu0 0
  %616 = vmatprep.subr.bf16.mxu0 0
  %617 = vmatpush1.bf16.msra.mxu0 0
  %618 = vmatprep.subr.bf16.mxu0 0
  %619 = vmatpush1.bf16.msra.mxu0 0
  %620 = vmatprep.subr.bf16.mxu0 0
  %621 = vmatpush1.bf16.msra.mxu0 0
  %622 = vmatprep.mubr.bf16.mxu0 0
  %623 = vmatmul.mubr.bf16.gmra.mrb[0].mxu0 %v498
  %v624 = vpop.f32.mrb[0].mxu0
  %v625 = vadd.f32 0.0, %v624
  %v626 = vpop.f32.mrb[0].mxu0
  %v627 = vadd.f32 0.0, %v626
  %v628 = vpop.f32.mrb[0].mxu0
  %v629 = vpop.f32.mrb[0].mxu0
  %630 = vdwg.mxu0
  %v631 = vadd.f32 %v588, %v625
  %v632 = vadd.f32 %v589, %v627
  %v633 = vxor.u32 %v631, 2147483648
  %v634 = vxor.u32 %v632, 2147483648
  %v635 = vmul.f32 %v633, 1.442695
  %v636 = vpow.pop %v635
  %v637 = vmul.f32 %v634, 1.442695
  %v638 = vpow.pop %v637
  %v639 = vadd.f32 %v636, 1.0
  %v640 = vadd.f32 %v638, 1.0
  %v641 = vrcp.pop %v639
  %v642 = vmul.f32 1.0, %v641
  %v643 = vrcp.pop %v640
  %v644 = vmul.f32 1.0, %v643
  %v645 = vtanh.pop %v632
  %v646 = vmul.f32 %v642, %v364
  %648 = vrot.lane.b32.xlu0 %v645, 64
  %v649 = vpop.permute.xlu0 %648
  %v651 = vmul.f32 %v642, %v649
  %653 = vrot.lane.b32.xlu0 %v651, 64
  %v654 = vpop.permute.xlu0 %653
  %v656 = vadd.f32 %v646, %v654
  %v657 = vtanh.pop %v656
  %659 = vrot.lane.b32.xlu0 %v657, 64
  %v660 = vpop.permute.xlu0 %659
  %v662 = vmul.f32 %v644, %v660
  %v663 = vpack.c.bf16 %v662, %v662
  %v664 = vpack.c.bf16 %v587, %v587
  %v666 = vsel %vm290, %v664, 0
  %668 = vmatprep.subr.bf16.mxu0 %v398
  %669 = vmatpush1.bf16.msra.mxu0 %v397
  %670 = vmatprep.subr.bf16.mxu0 %v400
  %671 = vmatpush1.bf16.msra.mxu0 %v399
  %672 = vmatprep.subr.bf16.mxu0 %v402
  %673 = vmatpush1.bf16.msra.mxu0 %v401
  %674 = vmatprep.subr.bf16.mxu0 %v404
  %675 = vmatpush1.bf16.msra.mxu0 %v403
  %676 = vmatprep.subr.bf16.mxu0 0
  %677 = vmatpush1.bf16.msra.mxu0 0
  %678 = vmatprep.subr.bf16.mxu0 0
  %679 = vmatpush1.bf16.msra.mxu0 0
  %680 = vmatprep.subr.bf16.mxu0 0
  %681 = vmatpush1.bf16.msra.mxu0 0
  %682 = vmatprep.subr.bf16.mxu0 0
  %683 = vmatpush1.bf16.msra.mxu0 0
  %684 = vmatprep.subr.bf16.mxu0 0
  %685 = vmatpush1.bf16.msra.mxu0 0
  %686 = vmatprep.subr.bf16.mxu0 0
  %687 = vmatpush1.bf16.msra.mxu0 0
  %688 = vmatprep.subr.bf16.mxu0 0
  %689 = vmatpush1.bf16.msra.mxu0 0
  %690 = vmatprep.subr.bf16.mxu0 0
  %691 = vmatpush1.bf16.msra.mxu0 0
  %692 = vmatprep.subr.bf16.mxu0 0
  %693 = vmatpush1.bf16.msra.mxu0 0
  %694 = vmatprep.subr.bf16.mxu0 0
  %695 = vmatpush1.bf16.msra.mxu0 0
  %696 = vmatprep.subr.bf16.mxu0 0
  %697 = vmatpush1.bf16.msra.mxu0 0
  %698 = vmatprep.subr.bf16.mxu0 0
  %699 = vmatpush1.bf16.msra.mxu0 0
  %700 = vmatprep.mubr.bf16.mxu0 0
  %701 = vmatmul.mubr.bf16.gmra.mrb[0].mxu0 %v666
  %v702 = vpop.f32.mrb[0].mxu0
  %v703 = vadd.f32 0.0, %v702
  %v704 = vpop.f32.mrb[0].mxu0
  %v705 = vadd.f32 0.0, %v704
  %v706 = vpop.f32.mrb[0].mxu0
  %v707 = vpop.f32.mrb[0].mxu0
  %708 = vdwg.mxu0
  %v710 = vsel %vm290, %v663, 0
  %712 = vmatprep.subr.bf16.mxu0 %v482
  %713 = vmatpush1.bf16.msra.mxu0 %v481
  %714 = vmatprep.subr.bf16.mxu0 %v484
  %715 = vmatpush1.bf16.msra.mxu0 %v483
  %716 = vmatprep.subr.bf16.mxu0 %v486
  %717 = vmatpush1.bf16.msra.mxu0 %v485
  %718 = vmatprep.subr.bf16.mxu0 %v488
  %719 = vmatpush1.bf16.msra.mxu0 %v487
  %720 = vmatprep.subr.bf16.mxu0 0
  %721 = vmatpush1.bf16.msra.mxu0 0
  %722 = vmatprep.subr.bf16.mxu0 0
  %723 = vmatpush1.bf16.msra.mxu0 0
  %724 = vmatprep.subr.bf16.mxu0 0
  %725 = vmatpush1.bf16.msra.mxu0 0
  %726 = vmatprep.subr.bf16.mxu0 0
  %727 = vmatpush1.bf16.msra.mxu0 0
  %728 = vmatprep.subr.bf16.mxu0 0
  %729 = vmatpush1.bf16.msra.mxu0 0
  %730 = vmatprep.subr.bf16.mxu0 0
  %731 = vmatpush1.bf16.msra.mxu0 0
  %732 = vmatprep.subr.bf16.mxu0 0
  %733 = vmatpush1.bf16.msra.mxu0 0
  %734 = vmatprep.subr.bf16.mxu0 0
  %735 = vmatpush1.bf16.msra.mxu0 0
  %736 = vmatprep.subr.bf16.mxu0 0
  %737 = vmatpush1.bf16.msra.mxu0 0
  %738 = vmatprep.subr.bf16.mxu0 0
  %739 = vmatpush1.bf16.msra.mxu0 0
  %740 = vmatprep.subr.bf16.mxu0 0
  %741 = vmatpush1.bf16.msra.mxu0 0
  %742 = vmatprep.subr.bf16.mxu0 0
  %743 = vmatpush1.bf16.msra.mxu0 0
  %744 = vmatprep.mubr.bf16.mxu0 0
  %745 = vmatmul.mubr.bf16.gmra.mrb[0].mxu0 %v710
  %v746 = vpop.f32.mrb[0].mxu0
  %v747 = vadd.f32 %v703, %v746
  %v748 = vpop.f32.mrb[0].mxu0
  %v749 = vadd.f32 %v705, %v748
  %v750 = vpop.f32.mrb[0].mxu0
  %v751 = vpop.f32.mrb[0].mxu0
  %752 = vdwg.mxu0
  %v753 = vadd.f32 %v747, %v545
  %v754 = vadd.f32 %v749, %v549
  %v755 = vxor.u32 %v753, 2147483648
  %v756 = vxor.u32 %v754, 2147483648
  %v757 = vmul.f32 %v755, 1.442695
  %v758 = vpow.pop %v757
  %v759 = vmul.f32 %v756, 1.442695
  %v760 = vpow.pop %v759
  %v761 = vadd.f32 %v758, 1.0
  %v762 = vadd.f32 %v760, 1.0
  %v763 = vrcp.pop %v761
  %v764 = vmul.f32 1.0, %v763
  %v765 = vrcp.pop %v762
  %v766 = vmul.f32 1.0, %v765
  %v767 = vtanh.pop %v754
  %v768 = vmul.f32 %v764, %v581
  %770 = vrot.lane.b32.xlu0 %v767, 64
  %v771 = vpop.permute.xlu0 %770
  %v773 = vmul.f32 %v764, %v771
  %775 = vrot.lane.b32.xlu0 %v773, 64
  %v776 = vpop.permute.xlu0 %775
  %v778 = vadd.f32 %v768, %v776
  %v779 = vtanh.pop %v778
  %781 = vrot.lane.b32.xlu0 %v779, 64
  %v782 = vpop.permute.xlu0 %781
  %v784 = vmul.f32 %v766, %v782
  %v785 = vld [vmem:[#allocation2 + $0x20] sm:$0xff]
  %v786 = vld [vmem:[#allocation2 + $0x28] sm:$0xff]
  %787 = vmatprep.subr.bf16.mxu0 %v275
  %788 = vmatpush1.bf16.msra.mxu0 %v274
  %789 = vmatprep.subr.bf16.mxu0 %v277
  %790 = vmatpush1.bf16.msra.mxu0 %v276
  %791 = vmatprep.subr.bf16.mxu0 %v279
  %792 = vmatpush1.bf16.msra.mxu0 %v278
  %793 = vmatprep.subr.bf16.mxu0 %v281
  %794 = vmatpush1.bf16.msra.mxu0 %v280
  %795 = vmatprep.subr.bf16.mxu0 0
  %796 = vmatpush1.bf16.msra.mxu0 0
  %797 = vmatprep.subr.bf16.mxu0 0
  %798 = vmatpush1.bf16.msra.mxu0 0
  %799 = vmatprep.subr.bf16.mxu0 0
  %800 = vmatpush1.bf16.msra.mxu0 0
  %801 = vmatprep.subr.bf16.mxu0 0
  %802 = vmatpush1.bf16.msra.mxu0 0
  %803 = vmatprep.subr.bf16.mxu0 0
  %804 = vmatpush1.bf16.msra.mxu0 0
  %805 = vmatprep.subr.bf16.mxu0 0
  %806 = vmatpush1.bf16.msra.mxu0 0
  %807 = vmatprep.subr.bf16.mxu0 0
  %808 = vmatpush1.bf16.msra.mxu0 0
  %809 = vmatprep.subr.bf16.mxu0 0
  %810 = vmatpush1.bf16.msra.mxu0 0
  %811 = vmatprep.subr.bf16.mxu0 0
  %812 = vmatpush1.bf16.msra.mxu0 0
  %813 = vmatprep.subr.bf16.mxu0 0
  %814 = vmatpush1.bf16.msra.mxu0 0
  %815 = vmatprep.subr.bf16.mxu0 0
  %816 = vmatpush1.bf16.msra.mxu0 0
  %817 = vmatprep.subr.bf16.mxu0 0
  %818 = vmatpush1.bf16.msra.mxu0 0
  %819 = vmatprep.mubr.bf16.mxu0 0
  %820 = vmatmul.mubr.bf16.gmra.mrb[0].mxu0 %v710
  %v821 = vpop.f32.mrb[0].mxu0
  %v822 = vadd.f32 0.0, %v821
  %v823 = vpop.f32.mrb[0].mxu0
  %v824 = vadd.f32 0.0, %v823
  %v825 = vpop.f32.mrb[0].mxu0
  %v826 = vpop.f32.mrb[0].mxu0
  %827 = vdwg.mxu0
  %v828 = vadd.f32 %v785, %v822
  %v829 = vadd.f32 %v786, %v824
  %v830 = vxor.u32 %v828, 2147483648
  %v831 = vxor.u32 %v829, 2147483648
  %v832 = vmul.f32 %v830, 1.442695
  %v833 = vpow.pop %v832
  %v834 = vmul.f32 %v831, 1.442695
  %v835 = vpow.pop %v834
  %v836 = vadd.f32 %v833, 1.0
  %v837 = vadd.f32 %v835, 1.0
  %v838 = vrcp.pop %v836
  %v839 = vmul.f32 1.0, %v838
  %v840 = vrcp.pop %v837
  %v841 = vmul.f32 1.0, %v840
  %v842 = vtanh.pop %v829
  %v843 = vmul.f32 %v839, %v656
  %845 = vrot.lane.b32.xlu0 %v842, 64
  %v846 = vpop.permute.xlu0 %845
  %v848 = vmul.f32 %v839, %v846
  %850 = vrot.lane.b32.xlu0 %v848, 64
  %v851 = vpop.permute.xlu0 %850
  %v853 = vadd.f32 %v843, %v851
  %v854 = vtanh.pop %v853
  %856 = vrot.lane.b32.xlu0 %v854, 64
  %v857 = vpop.permute.xlu0 %856
  %v859 = vmul.f32 %v841, %v857
  %v860 = vpack.c.bf16 %v859, %v859
  %v861 = vpack.c.bf16 %v784, %v784
  %v863 = vsel %vm290, %v861, 0
  %865 = vmatprep.subr.bf16.mxu0 %v398
  %866 = vmatpush1.bf16.msra.mxu0 %v397
  %867 = vmatprep.subr.bf16.mxu0 %v400
  %868 = vmatpush1.bf16.msra.mxu0 %v399
  %869 = vmatprep.subr.bf16.mxu0 %v402
  %870 = vmatpush1.bf16.msra.mxu0 %v401
  %871 = vmatprep.subr.bf16.mxu0 %v404
  %872 = vmatpush1.bf16.msra.mxu0 %v403
  %873 = vmatprep.subr.bf16.mxu0 0
  %874 = vmatpush1.bf16.msra.mxu0 0
  %875 = vmatprep.subr.bf16.mxu0 0
  %876 = vmatpush1.bf16.msra.mxu0 0
  %877 = vmatprep.subr.bf16.mxu0 0
  %878 = vmatpush1.bf16.msra.mxu0 0
  %879 = vmatprep.subr.bf16.mxu0 0
  %880 = vmatpush1.bf16.msra.mxu0 0
  %881 = vmatprep.subr.bf16.mxu0 0
  %882 = vmatpush1.bf16.msra.mxu0 0
  %883 = vmatprep.subr.bf16.mxu0 0
  %884 = vmatpush1.bf16.msra.mxu0 0
  %885 = vmatprep.subr.bf16.mxu0 0
  %886 = vmatpush1.bf16.msra.mxu0 0
  %887 = vmatprep.subr.bf16.mxu0 0
  %888 = vmatpush1.bf16.msra.mxu0 0
  %889 = vmatprep.subr.bf16.mxu0 0
  %890 = vmatpush1.bf16.msra.mxu0 0
  %891 = vmatprep.subr.bf16.mxu0 0
  %892 = vmatpush1.bf16.msra.mxu0 0
  %893 = vmatprep.subr.bf16.mxu0 0
  %894 = vmatpush1.bf16.msra.mxu0 0
  %895 = vmatprep.subr.bf16.mxu0 0
  %896 = vmatpush1.bf16.msra.mxu0 0
  %897 = vmatprep.mubr.bf16.mxu0 0
  %898 = vmatmul.mubr.bf16.gmra.mrb[0].mxu0 %v863
  %v899 = vpop.f32.mrb[0].mxu0
  %v900 = vadd.f32 0.0, %v899
  %v901 = vpop.f32.mrb[0].mxu0
  %v902 = vadd.f32 0.0, %v901
  %v903 = vpop.f32.mrb[0].mxu0
  %v904 = vpop.f32.mrb[0].mxu0
  %905 = vdwg.mxu0
  %v907 = vsel %vm290, %v860, 0
  %909 = vmatprep.subr.bf16.mxu0 %v482
  %910 = vmatpush1.bf16.msra.mxu0 %v481
  %911 = vmatprep.subr.bf16.mxu0 %v484
  %912 = vmatpush1.bf16.msra.mxu0 %v483
  %913 = vmatprep.subr.bf16.mxu0 %v486
  %914 = vmatpush1.bf16.msra.mxu0 %v485
  %915 = vmatprep.subr.bf16.mxu0 %v488
  %916 = vmatpush1.bf16.msra.mxu0 %v487
  %917 = vmatprep.subr.bf16.mxu0 0
  %918 = vmatpush1.bf16.msra.mxu0 0
  %919 = vmatprep.subr.bf16.mxu0 0
  %920 = vmatpush1.bf16.msra.mxu0 0
  %921 = vmatprep.subr.bf16.mxu0 0
  %922 = vmatpush1.bf16.msra.mxu0 0
  %923 = vmatprep.subr.bf16.mxu0 0
  %924 = vmatpush1.bf16.msra.mxu0 0
  %925 = vmatprep.subr.bf16.mxu0 0
  %926 = vmatpush1.bf16.msra.mxu0 0
  %927 = vmatprep.subr.bf16.mxu0 0
  %928 = vmatpush1.bf16.msra.mxu0 0
  %929 = vmatprep.subr.bf16.mxu0 0
  %930 = vmatpush1.bf16.msra.mxu0 0
  %931 = vmatprep.subr.bf16.mxu0 0
  %932 = vmatpush1.bf16.msra.mxu0 0
  %933 = vmatprep.subr.bf16.mxu0 0
  %934 = vmatpush1.bf16.msra.mxu0 0
  %935 = vmatprep.subr.bf16.mxu0 0
  %936 = vmatpush1.bf16.msra.mxu0 0
  %937 = vmatprep.subr.bf16.mxu0 0
  %938 = vmatpush1.bf16.msra.mxu0 0
  %939 = vmatprep.subr.bf16.mxu0 0
  %940 = vmatpush1.bf16.msra.mxu0 0
  %941 = vmatprep.mubr.bf16.mxu0 0
  %942 = vmatmul.mubr.bf16.gmra.mrb[0].mxu0 %v907
  %v943 = vpop.f32.mrb[0].mxu0
  %v944 = vadd.f32 %v900, %v943
  %v945 = vpop.f32.mrb[0].mxu0
  %v946 = vadd.f32 %v902, %v945
  %v947 = vpop.f32.mrb[0].mxu0
  %v948 = vpop.f32.mrb[0].mxu0
  %949 = vdwg.mxu0
  %v950 = vadd.f32 %v944, %v545
  %v951 = vadd.f32 %v946, %v549
  %v952 = vxor.u32 %v950, 2147483648
  %v953 = vxor.u32 %v951, 2147483648
  %v954 = vmul.f32 %v952, 1.442695
  %v955 = vpow.pop %v954
  %v956 = vmul.f32 %v953, 1.442695
  %v957 = vpow.pop %v956
  %v958 = vadd.f32 %v955, 1.0
  %v959 = vadd.f32 %v957, 1.0
  %v960 = vrcp.pop %v958
  %v961 = vmul.f32 1.0, %v960
  %v962 = vrcp.pop %v959
  %v963 = vmul.f32 1.0, %v962
  %v964 = vtanh.pop %v951
  %v965 = vmul.f32 %v961, %v778
  %967 = vrot.lane.b32.xlu0 %v964, 64
  %v968 = vpop.permute.xlu0 %967
  %v970 = vmul.f32 %v961, %v968
  %972 = vrot.lane.b32.xlu0 %v970, 64
  %v973 = vpop.permute.xlu0 %972
  %v975 = vadd.f32 %v965, %v973
  %v976 = vtanh.pop %v975
  %978 = vrot.lane.b32.xlu0 %v976, 64
  %v979 = vpop.permute.xlu0 %978
  %v981 = vmul.f32 %v963, %v979
  %v982 = vld [vmem:[#allocation2 + $0x30] sm:$0xff]
  %v983 = vld [vmem:[#allocation2 + $0x38] sm:$0xff]
  %984 = vmatprep.subr.bf16.mxu0 %v275
  %985 = vmatpush1.bf16.msra.mxu0 %v274
  %986 = vmatprep.subr.bf16.mxu0 %v277
  %987 = vmatpush1.bf16.msra.mxu0 %v276
  %988 = vmatprep.subr.bf16.mxu0 %v279
  %989 = vmatpush1.bf16.msra.mxu0 %v278
  %990 = vmatprep.subr.bf16.mxu0 %v281
  %991 = vmatpush1.bf16.msra.mxu0 %v280
  %992 = vmatprep.subr.bf16.mxu0 0
  %993 = vmatpush1.bf16.msra.mxu0 0
  %994 = vmatprep.subr.bf16.mxu0 0
  %995 = vmatpush1.bf16.msra.mxu0 0
  %996 = vmatprep.subr.bf16.mxu0 0
  %997 = vmatpush1.bf16.msra.mxu0 0
  %998 = vmatprep.subr.bf16.mxu0 0
  %999 = vmatpush1.bf16.msra.mxu0 0
  %1000 = vmatprep.subr.bf16.mxu0 0
  %1001 = vmatpush1.bf16.msra.mxu0 0
  %1002 = vmatprep.subr.bf16.mxu0 0
  %1003 = vmatpush1.bf16.msra.mxu0 0
  %1004 = vmatprep.subr.bf16.mxu0 0
  %1005 = vmatpush1.bf16.msra.mxu0 0
  %1006 = vmatprep.subr.bf16.mxu0 0
  %1007 = vmatpush1.bf16.msra.mxu0 0
  %1008 = vmatprep.subr.bf16.mxu0 0
  %1009 = vmatpush1.bf16.msra.mxu0 0
  %1010 = vmatprep.subr.bf16.mxu0 0
  %1011 = vmatpush1.bf16.msra.mxu0 0
  %1012 = vmatprep.subr.bf16.mxu0 0
  %1013 = vmatpush1.bf16.msra.mxu0 0
  %1014 = vmatprep.subr.bf16.mxu0 0
  %1015 = vmatpush1.bf16.msra.mxu0 0
  %1016 = vmatprep.mubr.bf16.mxu0 0
  %1017 = vmatmul.mubr.bf16.gmra.mrb[0].mxu0 %v907
  %v1018 = vpop.f32.mrb[0].mxu0
  %v1019 = vadd.f32 0.0, %v1018
  %v1020 = vpop.f32.mrb[0].mxu0
  %v1021 = vadd.f32 0.0, %v1020
  %v1022 = vpop.f32.mrb[0].mxu0
  %v1023 = vpop.f32.mrb[0].mxu0
  %1024 = vdwg.mxu0
  %v1025 = vadd.f32 %v982, %v1019
  %v1026 = vadd.f32 %v983, %v1021
  %v1027 = vxor.u32 %v1025, 2147483648
  %v1028 = vxor.u32 %v1026, 2147483648
  %v1029 = vmul.f32 %v1027, 1.442695
  %v1030 = vpow.pop %v1029
  %v1031 = vmul.f32 %v1028, 1.442695
  %v1032 = vpow.pop %v1031
  %v1033 = vadd.f32 %v1030, 1.0
  %v1034 = vadd.f32 %v1032, 1.0
  %v1035 = vrcp.pop %v1033
  %v1036 = vmul.f32 1.0, %v1035
  %v1037 = vrcp.pop %v1034
  %v1038 = vmul.f32 1.0, %v1037
  %v1039 = vtanh.pop %v1026
  %v1040 = vmul.f32 %v1036, %v853
  %1042 = vrot.lane.b32.xlu0 %v1039, 64
  %v1043 = vpop.permute.xlu0 %1042
  %v1045 = vmul.f32 %v1036, %v1043
  %1047 = vrot.lane.b32.xlu0 %v1045, 64
  %v1048 = vpop.permute.xlu0 %1047
  %v1050 = vadd.f32 %v1040, %v1048
  %v1051 = vtanh.pop %v1050
  %1053 = vrot.lane.b32.xlu0 %v1051, 64
  %v1054 = vpop.permute.xlu0 %1053
  %v1056 = vmul.f32 %v1038, %v1054
  %v1057 = vpack.c.bf16 %v1056, %v1056
  %v1058 = vpack.c.bf16 %v981, %v981
  %v1060 = vsel %vm290, %v1058, 0
  %1062 = vmatprep.subr.bf16.mxu0 %v398
  %1063 = vmatpush1.bf16.msra.mxu0 %v397
  %1064 = vmatprep.subr.bf16.mxu0 %v400
  %1065 = vmatpush1.bf16.msra.mxu0 %v399
  %1066 = vmatprep.subr.bf16.mxu0 %v402
  %1067 = vmatpush1.bf16.msra.mxu0 %v401
  %1068 = vmatprep.subr.bf16.mxu0 %v404
  %1069 = vmatpush1.bf16.msra.mxu0 %v403
  %1070 = vmatprep.subr.bf16.mxu0 0
  %1071 = vmatpush1.bf16.msra.mxu0 0
  %1072 = vmatprep.subr.bf16.mxu0 0
  %1073 = vmatpush1.bf16.msra.mxu0 0
  %1074 = vmatprep.subr.bf16.mxu0 0
  %1075 = vmatpush1.bf16.msra.mxu0 0
  %1076 = vmatprep.subr.bf16.mxu0 0
  %1077 = vmatpush1.bf16.msra.mxu0 0
  %1078 = vmatprep.subr.bf16.mxu0 0
  %1079 = vmatpush1.bf16.msra.mxu0 0
  %1080 = vmatprep.subr.bf16.mxu0 0
  %1081 = vmatpush1.bf16.msra.mxu0 0
  %1082 = vmatprep.subr.bf16.mxu0 0
  %1083 = vmatpush1.bf16.msra.mxu0 0
  %1084 = vmatprep.subr.bf16.mxu0 0
  %1085 = vmatpush1.bf16.msra.mxu0 0
  %1086 = vmatprep.subr.bf16.mxu0 0
  %1087 = vmatpush1.bf16.msra.mxu0 0
  %1088 = vmatprep.subr.bf16.mxu0 0
  %1089 = vmatpush1.bf16.msra.mxu0 0
  %1090 = vmatprep.subr.bf16.mxu0 0
  %1091 = vmatpush1.bf16.msra.mxu0 0
  %1092 = vmatprep.subr.bf16.mxu0 0
  %1093 = vmatpush1.bf16.msra.mxu0 0
  %1094 = vmatprep.mubr.bf16.mxu0 0
  %1095 = vmatmul.mubr.bf16.gmra.mrb[0].mxu0 %v1060
  %v1096 = vpop.f32.mrb[0].mxu0
  %v1097 = vadd.f32 0.0, %v1096
  %v1098 = vpop.f32.mrb[0].mxu0
  %v1099 = vadd.f32 0.0, %v1098
  %v1100 = vpop.f32.mrb[0].mxu0
  %v1101 = vpop.f32.mrb[0].mxu0
  %1102 = vdwg.mxu0
  %v1104 = vsel %vm290, %v1057, 0
  %1106 = vmatprep.subr.bf16.mxu0 %v482
  %1107 = vmatpush1.bf16.msra.mxu0 %v481
  %1108 = vmatprep.subr.bf16.mxu0 %v484
  %1109 = vmatpush1.bf16.msra.mxu0 %v483
  %1110 = vmatprep.subr.bf16.mxu0 %v486
  %1111 = vmatpush1.bf16.msra.mxu0 %v485
  %1112 = vmatprep.subr.bf16.mxu0 %v488
  %1113 = vmatpush1.bf16.msra.mxu0 %v487
  %1114 = vmatprep.subr.bf16.mxu0 0
  %1115 = vmatpush1.bf16.msra.mxu0 0
  %1116 = vmatprep.subr.bf16.mxu0 0
  %1117 = vmatpush1.bf16.msra.mxu0 0
  %1118 = vmatprep.subr.bf16.mxu0 0
  %1119 = vmatpush1.bf16.msra.mxu0 0
  %1120 = vmatprep.subr.bf16.mxu0 0
  %1121 = vmatpush1.bf16.msra.mxu0 0
  %1122 = vmatprep.subr.bf16.mxu0 0
  %1123 = vmatpush1.bf16.msra.mxu0 0
  %1124 = vmatprep.subr.bf16.mxu0 0
  %1125 = vmatpush1.bf16.msra.mxu0 0
  %1126 = vmatprep.subr.bf16.mxu0 0
  %1127 = vmatpush1.bf16.msra.mxu0 0
  %1128 = vmatprep.subr.bf16.mxu0 0
  %1129 = vmatpush1.bf16.msra.mxu0 0
  %1130 = vmatprep.subr.bf16.mxu0 0
  %1131 = vmatpush1.bf16.msra.mxu0 0
  %1132 = vmatprep.subr.bf16.mxu0 0
  %1133 = vmatpush1.bf16.msra.mxu0 0
  %1134 = vmatprep.subr.bf16.mxu0 0
  %1135 = vmatpush1.bf16.msra.mxu0 0
  %1136 = vmatprep.subr.bf16.mxu0 0
  %1137 = vmatpush1.bf16.msra.mxu0 0
  %1138 = vmatprep.mubr.bf16.mxu0 0
  %1139 = vmatmul.mubr.bf16.gmra.mrb[0].mxu0 %v1104
  %v1140 = vpop.f32.mrb[0].mxu0
  %v1141 = vadd.f32 %v1097, %v1140
  %v1142 = vpop.f32.mrb[0].mxu0
  %v1143 = vadd.f32 %v1099, %v1142
  %v1144 = vpop.f32.mrb[0].mxu0
  %v1145 = vpop.f32.mrb[0].mxu0
  %1146 = vdwg.mxu0
  %v1147 = vadd.f32 %v1141, %v545
  %v1148 = vadd.f32 %v1143, %v549
  %v1149 = vxor.u32 %v1147, 2147483648
  %v1150 = vxor.u32 %v1148, 2147483648
  %v1151 = vmul.f32 %v1149, 1.442695
  %v1152 = vpow.pop %v1151
  %v1153 = vmul.f32 %v1150, 1.442695
  %v1154 = vpow.pop %v1153
  %v1155 = vadd.f32 %v1152, 1.0
  %v1156 = vadd.f32 %v1154, 1.0
  %v1157 = vrcp.pop %v1155
  %v1158 = vmul.f32 1.0, %v1157
  %v1159 = vrcp.pop %v1156
  %v1160 = vmul.f32 1.0, %v1159
  %v1161 = vtanh.pop %v1148
  %v1162 = vmul.f32 %v1158, %v975
  %1164 = vrot.lane.b32.xlu0 %v1161, 64
  %v1165 = vpop.permute.xlu0 %1164
  %v1167 = vmul.f32 %v1158, %v1165
  %1169 = vrot.lane.b32.xlu0 %v1167, 64
  %v1170 = vpop.permute.xlu0 %1169
  %v1172 = vadd.f32 %v1162, %v1170
  %v1173 = vtanh.pop %v1172
  %1175 = vrot.lane.b32.xlu0 %v1173, 64
  %v1176 = vpop.permute.xlu0 %1175
  %v1178 = vmul.f32 %v1160, %v1176
  %v1179 = vld [vmem:[#allocation2 + $0x40] sm:$0xff]
  %v1180 = vld [vmem:[#allocation2 + $0x48] sm:$0xff]
  %1181 = vmatprep.subr.bf16.mxu0 %v275
  %1182 = vmatpush1.bf16.msra.mxu0 %v274
  %1183 = vmatprep.subr.bf16.mxu0 %v277
  %1184 = vmatpush1.bf16.msra.mxu0 %v276
  %1185 = vmatprep.subr.bf16.mxu0 %v279
  %1186 = vmatpush1.bf16.msra.mxu0 %v278
  %1187 = vmatprep.subr.bf16.mxu0 %v281
  %1188 = vmatpush1.bf16.msra.mxu0 %v280
  %1189 = vmatprep.subr.bf16.mxu0 0
  %1190 = vmatpush1.bf16.msra.mxu0 0
  %1191 = vmatprep.subr.bf16.mxu0 0
  %1192 = vmatpush1.bf16.msra.mxu0 0
  %1193 = vmatprep.subr.bf16.mxu0 0
  %1194 = vmatpush1.bf16.msra.mxu0 0
  %1195 = vmatprep.subr.bf16.mxu0 0
  %1196 = vmatpush1.bf16.msra.mxu0 0
  %1197 = vmatprep.subr.bf16.mxu0 0
  %1198 = vmatpush1.bf16.msra.mxu0 0
  %1199 = vmatprep.subr.bf16.mxu0 0
  %1200 = vmatpush1.bf16.msra.mxu0 0
  %1201 = vmatprep.subr.bf16.mxu0 0
  %1202 = vmatpush1.bf16.msra.mxu0 0
  %1203 = vmatprep.subr.bf16.mxu0 0
  %1204 = vmatpush1.bf16.msra.mxu0 0
  %1205 = vmatprep.subr.bf16.mxu0 0
  %1206 = vmatpush1.bf16.msra.mxu0 0
  %1207 = vmatprep.subr.bf16.mxu0 0
  %1208 = vmatpush1.bf16.msra.mxu0 0
  %1209 = vmatprep.subr.bf16.mxu0 0
  %1210 = vmatpush1.bf16.msra.mxu0 0
  %1211 = vmatprep.subr.bf16.mxu0 0
  %1212 = vmatpush1.bf16.msra.mxu0 0
  %1213 = vmatprep.mubr.bf16.mxu0 0
  %1214 = vmatmul.mubr.bf16.gmra.mrb[0].mxu0 %v1104
  %v1215 = vpop.f32.mrb[0].mxu0
  %v1216 = vadd.f32 0.0, %v1215
  %v1217 = vpop.f32.mrb[0].mxu0
  %v1218 = vadd.f32 0.0, %v1217
  %v1219 = vpop.f32.mrb[0].mxu0
  %v1220 = vpop.f32.mrb[0].mxu0
  %1221 = vdwg.mxu0
  %v1222 = vadd.f32 %v1179, %v1216
  %v1223 = vadd.f32 %v1180, %v1218
  %v1224 = vxor.u32 %v1222, 2147483648
  %v1225 = vxor.u32 %v1223, 2147483648
  %v1226 = vmul.f32 %v1224, 1.442695
  %v1227 = vpow.pop %v1226
  %v1228 = vmul.f32 %v1225, 1.442695
  %v1229 = vpow.pop %v1228
  %v1230 = vadd.f32 %v1227, 1.0
  %v1231 = vadd.f32 %v1229, 1.0
  %v1232 = vrcp.pop %v1230
  %v1233 = vmul.f32 1.0, %v1232
  %v1234 = vrcp.pop %v1231
  %v1235 = vmul.f32 1.0, %v1234
  %v1236 = vtanh.pop %v1223
  %v1237 = vmul.f32 %v1233, %v1050
  %1239 = vrot.lane.b32.xlu0 %v1236, 64
  %v1240 = vpop.permute.xlu0 %1239
  %v1242 = vmul.f32 %v1233, %v1240
  %1244 = vrot.lane.b32.xlu0 %v1242, 64
  %v1245 = vpop.permute.xlu0 %1244
  %v1247 = vadd.f32 %v1237, %v1245
  %v1248 = vtanh.pop %v1247
  %1250 = vrot.lane.b32.xlu0 %v1248, 64
  %v1251 = vpop.permute.xlu0 %1250
  %v1253 = vmul.f32 %v1235, %v1251
  %v1254 = vpack.c.bf16 %v1253, %v1253
  %v1255 = vpack.c.bf16 %v1178, %v1178
  %v1257 = vsel %vm290, %v1255, 0
  %1259 = vmatprep.subr.bf16.mxu0 %v398
  %1260 = vmatpush1.bf16.msra.mxu0 %v397
  %1261 = vmatprep.subr.bf16.mxu0 %v400
  %1262 = vmatpush1.bf16.msra.mxu0 %v399
  %1263 = vmatprep.subr.bf16.mxu0 %v402
  %1264 = vmatpush1.bf16.msra.mxu0 %v401
  %1265 = vmatprep.subr.bf16.mxu0 %v404
  %1266 = vmatpush1.bf16.msra.mxu0 %v403
  %1267 = vmatprep.subr.bf16.mxu0 0
  %1268 = vmatpush1.bf16.msra.mxu0 0
  %1269 = vmatprep.subr.bf16.mxu0 0
  %1270 = vmatpush1.bf16.msra.mxu0 0
  %1271 = vmatprep.subr.bf16.mxu0 0
  %1272 = vmatpush1.bf16.msra.mxu0 0
  %1273 = vmatprep.subr.bf16.mxu0 0
  %1274 = vmatpush1.bf16.msra.mxu0 0
  %1275 = vmatprep.subr.bf16.mxu0 0
  %1276 = vmatpush1.bf16.msra.mxu0 0
  %1277 = vmatprep.subr.bf16.mxu0 0
  %1278 = vmatpush1.bf16.msra.mxu0 0
  %1279 = vmatprep.subr.bf16.mxu0 0
  %1280 = vmatpush1.bf16.msra.mxu0 0
  %1281 = vmatprep.subr.bf16.mxu0 0
  %1282 = vmatpush1.bf16.msra.mxu0 0
  %1283 = vmatprep.subr.bf16.mxu0 0
  %1284 = vmatpush1.bf16.msra.mxu0 0
  %1285 = vmatprep.subr.bf16.mxu0 0
  %1286 = vmatpush1.bf16.msra.mxu0 0
  %1287 = vmatprep.subr.bf16.mxu0 0
  %1288 = vmatpush1.bf16.msra.mxu0 0
  %1289 = vmatprep.subr.bf16.mxu0 0
  %1290 = vmatpush1.bf16.msra.mxu0 0
  %1291 = vmatprep.mubr.bf16.mxu0 0
  %1292 = vmatmul.mubr.bf16.gmra.mrb[0].mxu0 %v1257
  %v1293 = vpop.f32.mrb[0].mxu0
  %v1294 = vadd.f32 0.0, %v1293
  %v1295 = vpop.f32.mrb[0].mxu0
  %v1296 = vadd.f32 0.0, %v1295
  %v1297 = vpop.f32.mrb[0].mxu0
  %v1298 = vpop.f32.mrb[0].mxu0
  %1299 = vdwg.mxu0
  %v1301 = vsel %vm290, %v1254, 0
  %1303 = vmatprep.subr.bf16.mxu0 %v482
  %1304 = vmatpush1.bf16.msra.mxu0 %v481
  %1305 = vmatprep.subr.bf16.mxu0 %v484
  %1306 = vmatpush1.bf16.msra.mxu0 %v483
  %1307 = vmatprep.subr.bf16.mxu0 %v486
  %1308 = vmatpush1.bf16.msra.mxu0 %v485
  %1309 = vmatprep.subr.bf16.mxu0 %v488
  %1310 = vmatpush1.bf16.msra.mxu0 %v487
  %1311 = vmatprep.subr.bf16.mxu0 0
  %1312 = vmatpush1.bf16.msra.mxu0 0
  %1313 = vmatprep.subr.bf16.mxu0 0
  %1314 = vmatpush1.bf16.msra.mxu0 0
  %1315 = vmatprep.subr.bf16.mxu0 0
  %1316 = vmatpush1.bf16.msra.mxu0 0
  %1317 = vmatprep.subr.bf16.mxu0 0
  %1318 = vmatpush1.bf16.msra.mxu0 0
  %1319 = vmatprep.subr.bf16.mxu0 0
  %1320 = vmatpush1.bf16.msra.mxu0 0
  %1321 = vmatprep.subr.bf16.mxu0 0
  %1322 = vmatpush1.bf16.msra.mxu0 0
  %1323 = vmatprep.subr.bf16.mxu0 0
  %1324 = vmatpush1.bf16.msra.mxu0 0
  %1325 = vmatprep.subr.bf16.mxu0 0
  %1326 = vmatpush1.bf16.msra.mxu0 0
  %1327 = vmatprep.subr.bf16.mxu0 0
  %1328 = vmatpush1.bf16.msra.mxu0 0
  %1329 = vmatprep.subr.bf16.mxu0 0
  %1330 = vmatpush1.bf16.msra.mxu0 0
  %1331 = vmatprep.subr.bf16.mxu0 0
  %1332 = vmatpush1.bf16.msra.mxu0 0
  %1333 = vmatprep.subr.bf16.mxu0 0
  %1334 = vmatpush1.bf16.msra.mxu0 0
  %1335 = vmatprep.mubr.bf16.mxu0 0
  %1336 = vmatmul.mubr.bf16.gmra.mrb[0].mxu0 %v1301
  %v1337 = vpop.f32.mrb[0].mxu0
  %v1338 = vadd.f32 %v1294, %v1337
  %v1339 = vpop.f32.mrb[0].mxu0
  %v1340 = vadd.f32 %v1296, %v1339
  %v1341 = vpop.f32.mrb[0].mxu0
  %v1342 = vpop.f32.mrb[0].mxu0
  %1343 = vdwg.mxu0
  %v1344 = vadd.f32 %v1338, %v545
  %v1345 = vadd.f32 %v1340, %v549
  %v1346 = vxor.u32 %v1344, 2147483648
  %v1347 = vxor.u32 %v1345, 2147483648
  %v1348 = vmul.f32 %v1346, 1.442695
  %v1349 = vpow.pop %v1348
  %v1350 = vmul.f32 %v1347, 1.442695
  %v1351 = vpow.pop %v1350
  %v1352 = vadd.f32 %v1349, 1.0
  %v1353 = vadd.f32 %v1351, 1.0
  %v1354 = vrcp.pop %v1352
  %v1355 = vmul.f32 1.0, %v1354
  %v1356 = vrcp.pop %v1353
  %v1357 = vmul.f32 1.0, %v1356
  %v1358 = vtanh.pop %v1345
  %v1359 = vmul.f32 %v1355, %v1172
  %1361 = vrot.lane.b32.xlu0 %v1358, 64
  %v1362 = vpop.permute.xlu0 %1361
  %v1364 = vmul.f32 %v1355, %v1362
  %1366 = vrot.lane.b32.xlu0 %v1364, 64
  %v1367 = vpop.permute.xlu0 %1366
  %v1369 = vadd.f32 %v1359, %v1367
  %v1370 = vtanh.pop %v1369
  %1372 = vrot.lane.b32.xlu0 %v1370, 64
  %v1373 = vpop.permute.xlu0 %1372
  %v1375 = vmul.f32 %v1357, %v1373
  %v1376 = vld [vmem:[#allocation2 + $0x50] sm:$0xff]
  %v1377 = vld [vmem:[#allocation2 + $0x58] sm:$0xff]
  %1378 = vmatprep.subr.bf16.mxu0 %v275
  %1379 = vmatpush1.bf16.msra.mxu0 %v274
  %1380 = vmatprep.subr.bf16.mxu0 %v277
  %1381 = vmatpush1.bf16.msra.mxu0 %v276
  %1382 = vmatprep.subr.bf16.mxu0 %v279
  %1383 = vmatpush1.bf16.msra.mxu0 %v278
  %1384 = vmatprep.subr.bf16.mxu0 %v281
  %1385 = vmatpush1.bf16.msra.mxu0 %v280
  %1386 = vmatprep.subr.bf16.mxu0 0
  %1387 = vmatpush1.bf16.msra.mxu0 0
  %1388 = vmatprep.subr.bf16.mxu0 0
  %1389 = vmatpush1.bf16.msra.mxu0 0
  %1390 = vmatprep.subr.bf16.mxu0 0
  %1391 = vmatpush1.bf16.msra.mxu0 0
  %1392 = vmatprep.subr.bf16.mxu0 0
  %1393 = vmatpush1.bf16.msra.mxu0 0
  %1394 = vmatprep.subr.bf16.mxu0 0
  %1395 = vmatpush1.bf16.msra.mxu0 0
  %1396 = vmatprep.subr.bf16.mxu0 0
  %1397 = vmatpush1.bf16.msra.mxu0 0
  %1398 = vmatprep.subr.bf16.mxu0 0
  %1399 = vmatpush1.bf16.msra.mxu0 0
  %1400 = vmatprep.subr.bf16.mxu0 0
  %1401 = vmatpush1.bf16.msra.mxu0 0
  %1402 = vmatprep.subr.bf16.mxu0 0
  %1403 = vmatpush1.bf16.msra.mxu0 0
  %1404 = vmatprep.subr.bf16.mxu0 0
  %1405 = vmatpush1.bf16.msra.mxu0 0
  %1406 = vmatprep.subr.bf16.mxu0 0
  %1407 = vmatpush1.bf16.msra.mxu0 0
  %1408 = vmatprep.subr.bf16.mxu0 0
  %1409 = vmatpush1.bf16.msra.mxu0 0
  %1410 = vmatprep.mubr.bf16.mxu0 0
  %1411 = vmatmul.mubr.bf16.gmra.mrb[0].mxu0 %v1301
  %v1412 = vpop.f32.mrb[0].mxu0
  %v1413 = vadd.f32 0.0, %v1412
  %v1414 = vpop.f32.mrb[0].mxu0
  %v1415 = vadd.f32 0.0, %v1414
  %v1416 = vpop.f32.mrb[0].mxu0
  %v1417 = vpop.f32.mrb[0].mxu0
  %1418 = vdwg.mxu0
  %v1419 = vadd.f32 %v1376, %v1413
  %v1420 = vadd.f32 %v1377, %v1415
  %v1421 = vxor.u32 %v1419, 2147483648
  %v1422 = vxor.u32 %v1420, 2147483648
  %v1423 = vmul.f32 %v1421, 1.442695
  %v1424 = vpow.pop %v1423
  %v1425 = vmul.f32 %v1422, 1.442695
  %v1426 = vpow.pop %v1425
  %v1427 = vadd.f32 %v1424, 1.0
  %v1428 = vadd.f32 %v1426, 1.0
  %v1429 = vrcp.pop %v1427
  %v1430 = vmul.f32 1.0, %v1429
  %v1431 = vrcp.pop %v1428
  %v1432 = vmul.f32 1.0, %v1431
  %v1433 = vtanh.pop %v1420
  %v1434 = vmul.f32 %v1430, %v1247
  %1436 = vrot.lane.b32.xlu0 %v1433, 64
  %v1437 = vpop.permute.xlu0 %1436
  %v1439 = vmul.f32 %v1430, %v1437
  %1441 = vrot.lane.b32.xlu0 %v1439, 64
  %v1442 = vpop.permute.xlu0 %1441
  %v1444 = vadd.f32 %v1434, %v1442
  %v1445 = vtanh.pop %v1444
  %1447 = vrot.lane.b32.xlu0 %v1445, 64
  %v1448 = vpop.permute.xlu0 %1447
  %v1450 = vmul.f32 %v1432, %v1448
  %v1451 = vpack.c.bf16 %v1450, %v1450
  %v1452 = vpack.c.bf16 %v1375, %v1375
  %v1454 = vsel %vm290, %v1452, 0
  %1456 = vmatprep.subr.bf16.mxu0 %v398
  %1457 = vmatpush1.bf16.msra.mxu0 %v397
  %1458 = vmatprep.subr.bf16.mxu0 %v400
  %1459 = vmatpush1.bf16.msra.mxu0 %v399
  %1460 = vmatprep.subr.bf16.mxu0 %v402
  %1461 = vmatpush1.bf16.msra.mxu0 %v401
  %1462 = vmatprep.subr.bf16.mxu0 %v404
  %1463 = vmatpush1.bf16.msra.mxu0 %v403
  %1464 = vmatprep.subr.bf16.mxu0 0
  %1465 = vmatpush1.bf16.msra.mxu0 0
  %1466 = vmatprep.subr.bf16.mxu0 0
  %1467 = vmatpush1.bf16.msra.mxu0 0
  %1468 = vmatprep.subr.bf16.mxu0 0
  %1469 = vmatpush1.bf16.msra.mxu0 0
  %1470 = vmatprep.subr.bf16.mxu0 0
  %1471 = vmatpush1.bf16.msra.mxu0 0
  %1472 = vmatprep.subr.bf16.mxu0 0
  %1473 = vmatpush1.bf16.msra.mxu0 0
  %1474 = vmatprep.subr.bf16.mxu0 0
  %1475 = vmatpush1.bf16.msra.mxu0 0
  %1476 = vmatprep.subr.bf16.mxu0 0
  %1477 = vmatpush1.bf16.msra.mxu0 0
  %1478 = vmatprep.subr.bf16.mxu0 0
  %1479 = vmatpush1.bf16.msra.mxu0 0
  %1480 = vmatprep.subr.bf16.mxu0 0
  %1481 = vmatpush1.bf16.msra.mxu0 0
  %1482 = vmatprep.subr.bf16.mxu0 0
  %1483 = vmatpush1.bf16.msra.mxu0 0
  %1484 = vmatprep.subr.bf16.mxu0 0
  %1485 = vmatpush1.bf16.msra.mxu0 0
  %1486 = vmatprep.subr.bf16.mxu0 0
  %1487 = vmatpush1.bf16.msra.mxu0 0
  %1488 = vmatprep.mubr.bf16.mxu0 0
  %1489 = vmatmul.mubr.bf16.gmra.mrb[0].mxu0 %v1454
  %v1490 = vpop.f32.mrb[0].mxu0
  %v1491 = vadd.f32 0.0, %v1490
  %v1492 = vpop.f32.mrb[0].mxu0
  %v1493 = vadd.f32 0.0, %v1492
  %v1494 = vpop.f32.mrb[0].mxu0
  %v1495 = vpop.f32.mrb[0].mxu0
  %1496 = vdwg.mxu0
  %v1498 = vsel %vm290, %v1451, 0
  %1500 = vmatprep.subr.bf16.mxu0 %v482
  %1501 = vmatpush1.bf16.msra.mxu0 %v481
  %1502 = vmatprep.subr.bf16.mxu0 %v484
  %1503 = vmatpush1.bf16.msra.mxu0 %v483
  %1504 = vmatprep.subr.bf16.mxu0 %v486
  %1505 = vmatpush1.bf16.msra.mxu0 %v485
  %1506 = vmatprep.subr.bf16.mxu0 %v488
  %1507 = vmatpush1.bf16.msra.mxu0 %v487
  %1508 = vmatprep.subr.bf16.mxu0 0
  %1509 = vmatpush1.bf16.msra.mxu0 0
  %1510 = vmatprep.subr.bf16.mxu0 0
  %1511 = vmatpush1.bf16.msra.mxu0 0
  %1512 = vmatprep.subr.bf16.mxu0 0
  %1513 = vmatpush1.bf16.msra.mxu0 0
  %1514 = vmatprep.subr.bf16.mxu0 0
  %1515 = vmatpush1.bf16.msra.mxu0 0
  %1516 = vmatprep.subr.bf16.mxu0 0
  %1517 = vmatpush1.bf16.msra.mxu0 0
  %1518 = vmatprep.subr.bf16.mxu0 0
  %1519 = vmatpush1.bf16.msra.mxu0 0
  %1520 = vmatprep.subr.bf16.mxu0 0
  %1521 = vmatpush1.bf16.msra.mxu0 0
  %1522 = vmatprep.subr.bf16.mxu0 0
  %1523 = vmatpush1.bf16.msra.mxu0 0
  %1524 = vmatprep.subr.bf16.mxu0 0
  %1525 = vmatpush1.bf16.msra.mxu0 0
  %1526 = vmatprep.subr.bf16.mxu0 0
  %1527 = vmatpush1.bf16.msra.mxu0 0
  %1528 = vmatprep.subr.bf16.mxu0 0
  %1529 = vmatpush1.bf16.msra.mxu0 0
  %1530 = vmatprep.subr.bf16.mxu0 0
  %1531 = vmatpush1.bf16.msra.mxu0 0
  %1532 = vmatprep.mubr.bf16.mxu0 0
  %1533 = vmatmul.mubr.bf16.gmra.mrb[0].mxu0 %v1498
  %v1534 = vpop.f32.mrb[0].mxu0
  %v1535 = vadd.f32 %v1491, %v1534
  %v1536 = vpop.f32.mrb[0].mxu0
  %v1537 = vadd.f32 %v1493, %v1536
  %v1538 = vpop.f32.mrb[0].mxu0
  %v1539 = vpop.f32.mrb[0].mxu0
  %1540 = vdwg.mxu0
  %v1541 = vadd.f32 %v1535, %v545
  %v1542 = vadd.f32 %v1537, %v549
  %v1543 = vxor.u32 %v1541, 2147483648
  %v1544 = vxor.u32 %v1542, 2147483648
  %v1545 = vmul.f32 %v1543, 1.442695
  %v1546 = vpow.pop %v1545
  %v1547 = vmul.f32 %v1544, 1.442695
  %v1548 = vpow.pop %v1547
  %v1549 = vadd.f32 %v1546, 1.0
  %v1550 = vadd.f32 %v1548, 1.0
  %v1551 = vrcp.pop %v1549
  %v1552 = vmul.f32 1.0, %v1551
  %v1553 = vrcp.pop %v1550
  %v1554 = vmul.f32 1.0, %v1553
  %v1555 = vtanh.pop %v1542
  %v1556 = vmul.f32 %v1552, %v1369
  %1558 = vrot.lane.b32.xlu0 %v1555, 64
  %v1559 = vpop.permute.xlu0 %1558
  %v1561 = vmul.f32 %v1552, %v1559
  %1563 = vrot.lane.b32.xlu0 %v1561, 64
  %v1564 = vpop.permute.xlu0 %1563
  %v1566 = vadd.f32 %v1556, %v1564
  %v1567 = vtanh.pop %v1566
  %1569 = vrot.lane.b32.xlu0 %v1567, 64
  %v1570 = vpop.permute.xlu0 %1569
  %v1572 = vmul.f32 %v1554, %v1570
  %v1573 = vld [vmem:[#allocation2 + $0x60] sm:$0xff]
  %v1574 = vld [vmem:[#allocation2 + $0x68] sm:$0xff]
  %1575 = vmatprep.subr.bf16.mxu0 %v275
  %1576 = vmatpush1.bf16.msra.mxu0 %v274
  %1577 = vmatprep.subr.bf16.mxu0 %v277
  %1578 = vmatpush1.bf16.msra.mxu0 %v276
  %1579 = vmatprep.subr.bf16.mxu0 %v279
  %1580 = vmatpush1.bf16.msra.mxu0 %v278
  %1581 = vmatprep.subr.bf16.mxu0 %v281
  %1582 = vmatpush1.bf16.msra.mxu0 %v280
  %1583 = vmatprep.subr.bf16.mxu0 0
  %1584 = vmatpush1.bf16.msra.mxu0 0
  %1585 = vmatprep.subr.bf16.mxu0 0
  %1586 = vmatpush1.bf16.msra.mxu0 0
  %1587 = vmatprep.subr.bf16.mxu0 0
  %1588 = vmatpush1.bf16.msra.mxu0 0
  %1589 = vmatprep.subr.bf16.mxu0 0
  %1590 = vmatpush1.bf16.msra.mxu0 0
  %1591 = vmatprep.subr.bf16.mxu0 0
  %1592 = vmatpush1.bf16.msra.mxu0 0
  %1593 = vmatprep.subr.bf16.mxu0 0
  %1594 = vmatpush1.bf16.msra.mxu0 0
  %1595 = vmatprep.subr.bf16.mxu0 0
  %1596 = vmatpush1.bf16.msra.mxu0 0
  %1597 = vmatprep.subr.bf16.mxu0 0
  %1598 = vmatpush1.bf16.msra.mxu0 0
  %1599 = vmatprep.subr.bf16.mxu0 0
  %1600 = vmatpush1.bf16.msra.mxu0 0
  %1601 = vmatprep.subr.bf16.mxu0 0
  %1602 = vmatpush1.bf16.msra.mxu0 0
  %1603 = vmatprep.subr.bf16.mxu0 0
  %1604 = vmatpush1.bf16.msra.mxu0 0
  %1605 = vmatprep.subr.bf16.mxu0 0
  %1606 = vmatpush1.bf16.msra.mxu0 0
  %1607 = vmatprep.mubr.bf16.mxu0 0
  %1608 = vmatmul.mubr.bf16.gmra.mrb[0].mxu0 %v1498
  %v1609 = vpop.f32.mrb[0].mxu0
  %v1610 = vadd.f32 0.0, %v1609
  %v1611 = vpop.f32.mrb[0].mxu0
  %v1612 = vadd.f32 0.0, %v1611
  %v1613 = vpop.f32.mrb[0].mxu0
  %v1614 = vpop.f32.mrb[0].mxu0
  %1615 = vdwg.mxu0
  %v1616 = vadd.f32 %v1573, %v1610
  %v1617 = vadd.f32 %v1574, %v1612
  %v1618 = vxor.u32 %v1616, 2147483648
  %v1619 = vxor.u32 %v1617, 2147483648
  %v1620 = vmul.f32 %v1618, 1.442695
  %v1621 = vpow.pop %v1620
  %v1622 = vmul.f32 %v1619, 1.442695
  %v1623 = vpow.pop %v1622
  %v1624 = vadd.f32 %v1621, 1.0
  %v1625 = vadd.f32 %v1623, 1.0
  %v1626 = vrcp.pop %v1624
  %v1627 = vmul.f32 1.0, %v1626
  %v1628 = vrcp.pop %v1625
  %v1629 = vmul.f32 1.0, %v1628
  %v1630 = vtanh.pop %v1617
  %v1631 = vmul.f32 %v1627, %v1444
  %1633 = vrot.lane.b32.xlu0 %v1630, 64
  %v1634 = vpop.permute.xlu0 %1633
  %v1636 = vmul.f32 %v1627, %v1634
  %1638 = vrot.lane.b32.xlu0 %v1636, 64
  %v1639 = vpop.permute.xlu0 %1638
  %v1641 = vadd.f32 %v1631, %v1639
  %v1642 = vtanh.pop %v1641
  %1644 = vrot.lane.b32.xlu0 %v1642, 64
  %v1645 = vpop.permute.xlu0 %1644
  %v1647 = vmul.f32 %v1629, %v1645
  %v1648 = vpack.c.bf16 %v1647, %v1647
  %v1649 = vpack.c.bf16 %v1572, %v1572
  %v1651 = vsel %vm290, %v1649, 0
  %1653 = vmatprep.subr.bf16.mxu0 %v398
  %1654 = vmatpush1.bf16.msra.mxu0 %v397
  %1655 = vmatprep.subr.bf16.mxu0 %v400
  %1656 = vmatpush1.bf16.msra.mxu0 %v399
  %1657 = vmatprep.subr.bf16.mxu0 %v402
  %1658 = vmatpush1.bf16.msra.mxu0 %v401
  %1659 = vmatprep.subr.bf16.mxu0 %v404
  %1660 = vmatpush1.bf16.msra.mxu0 %v403
  %1661 = vmatprep.subr.bf16.mxu0 0
  %1662 = vmatpush1.bf16.msra.mxu0 0
  %1663 = vmatprep.subr.bf16.mxu0 0
  %1664 = vmatpush1.bf16.msra.mxu0 0
  %1665 = vmatprep.subr.bf16.mxu0 0
  %1666 = vmatpush1.bf16.msra.mxu0 0
  %1667 = vmatprep.subr.bf16.mxu0 0
  %1668 = vmatpush1.bf16.msra.mxu0 0
  %1669 = vmatprep.subr.bf16.mxu0 0
  %1670 = vmatpush1.bf16.msra.mxu0 0
  %1671 = vmatprep.subr.bf16.mxu0 0
  %1672 = vmatpush1.bf16.msra.mxu0 0
  %1673 = vmatprep.subr.bf16.mxu0 0
  %1674 = vmatpush1.bf16.msra.mxu0 0
  %1675 = vmatprep.subr.bf16.mxu0 0
  %1676 = vmatpush1.bf16.msra.mxu0 0
  %1677 = vmatprep.subr.bf16.mxu0 0
  %1678 = vmatpush1.bf16.msra.mxu0 0
  %1679 = vmatprep.subr.bf16.mxu0 0
  %1680 = vmatpush1.bf16.msra.mxu0 0
  %1681 = vmatprep.subr.bf16.mxu0 0
  %1682 = vmatpush1.bf16.msra.mxu0 0
  %1683 = vmatprep.subr.bf16.mxu0 0
  %1684 = vmatpush1.bf16.msra.mxu0 0
  %1685 = vmatprep.mubr.bf16.mxu0 0
  %1686 = vmatmul.mubr.bf16.gmra.mrb[0].mxu0 %v1651
  %v1687 = vpop.f32.mrb[0].mxu0
  %v1688 = vadd.f32 0.0, %v1687
  %v1689 = vpop.f32.mrb[0].mxu0
  %v1690 = vadd.f32 0.0, %v1689
  %v1691 = vpop.f32.mrb[0].mxu0
  %v1692 = vpop.f32.mrb[0].mxu0
  %1693 = vdwg.mxu0
  %v1695 = vsel %vm290, %v1648, 0
  %1697 = vmatprep.subr.bf16.mxu0 %v482
  %1698 = vmatpush1.bf16.msra.mxu0 %v481
  %1699 = vmatprep.subr.bf16.mxu0 %v484
  %1700 = vmatpush1.bf16.msra.mxu0 %v483
  %1701 = vmatprep.subr.bf16.mxu0 %v486
  %1702 = vmatpush1.bf16.msra.mxu0 %v485
  %1703 = vmatprep.subr.bf16.mxu0 %v488
  %1704 = vmatpush1.bf16.msra.mxu0 %v487
  %1705 = vmatprep.subr.bf16.mxu0 0
  %1706 = vmatpush1.bf16.msra.mxu0 0
  %1707 = vmatprep.subr.bf16.mxu0 0
  %1708 = vmatpush1.bf16.msra.mxu0 0
  %1709 = vmatprep.subr.bf16.mxu0 0
  %1710 = vmatpush1.bf16.msra.mxu0 0
  %1711 = vmatprep.subr.bf16.mxu0 0
  %1712 = vmatpush1.bf16.msra.mxu0 0
  %1713 = vmatprep.subr.bf16.mxu0 0
  %1714 = vmatpush1.bf16.msra.mxu0 0
  %1715 = vmatprep.subr.bf16.mxu0 0
  %1716 = vmatpush1.bf16.msra.mxu0 0
  %1717 = vmatprep.subr.bf16.mxu0 0
  %1718 = vmatpush1.bf16.msra.mxu0 0
  %1719 = vmatprep.subr.bf16.mxu0 0
  %1720 = vmatpush1.bf16.msra.mxu0 0
  %1721 = vmatprep.subr.bf16.mxu0 0
  %1722 = vmatpush1.bf16.msra.mxu0 0
  %1723 = vmatprep.subr.bf16.mxu0 0
  %1724 = vmatpush1.bf16.msra.mxu0 0
  %1725 = vmatprep.subr.bf16.mxu0 0
  %1726 = vmatpush1.bf16.msra.mxu0 0
  %1727 = vmatprep.subr.bf16.mxu0 0
  %1728 = vmatpush1.bf16.msra.mxu0 0
  %1729 = vmatprep.mubr.bf16.mxu0 0
  %1730 = vmatmul.mubr.bf16.gmra.mrb[0].mxu0 %v1695
  %v1731 = vpop.f32.mrb[0].mxu0
  %v1732 = vadd.f32 %v1688, %v1731
  %v1733 = vpop.f32.mrb[0].mxu0
  %v1734 = vadd.f32 %v1690, %v1733
  %v1735 = vpop.f32.mrb[0].mxu0
  %v1736 = vpop.f32.mrb[0].mxu0
  %1737 = vdwg.mxu0
  %v1738 = vadd.f32 %v1732, %v545
  %v1739 = vadd.f32 %v1734, %v549
  %v1740 = vxor.u32 %v1738, 2147483648
  %v1741 = vxor.u32 %v1739, 2147483648
  %v1742 = vmul.f32 %v1740, 1.442695
  %v1743 = vpow.pop %v1742
  %v1744 = vmul.f32 %v1741, 1.442695
  %v1745 = vpow.pop %v1744
  %v1746 = vadd.f32 %v1743, 1.0
  %v1747 = vadd.f32 %v1745, 1.0
  %v1748 = vrcp.pop %v1746
  %v1749 = vmul.f32 1.0, %v1748
  %v1750 = vrcp.pop %v1747
  %v1751 = vmul.f32 1.0, %v1750
  %v1752 = vtanh.pop %v1739
  %v1753 = vmul.f32 %v1749, %v1566
  %1755 = vrot.lane.b32.xlu0 %v1752, 64
  %v1756 = vpop.permute.xlu0 %1755
  %v1758 = vmul.f32 %v1749, %v1756
  %1760 = vrot.lane.b32.xlu0 %v1758, 64
  %v1761 = vpop.permute.xlu0 %1760
  %v1763 = vadd.f32 %v1753, %v1761
  %v1764 = vtanh.pop %v1763
  %1766 = vrot.lane.b32.xlu0 %v1764, 64
  %v1767 = vpop.permute.xlu0 %1766
  %v1769 = vmul.f32 %v1751, %v1767
  %v1770 = vld [vmem:[#allocation2 + $0x70] sm:$0xff]
  %v1771 = vld [vmem:[#allocation2 + $0x78] sm:$0xff]
  %1772 = vmatprep.subr.bf16.mxu0 %v275
  %1773 = vmatpush1.bf16.msra.mxu0 %v274
  %1774 = vmatprep.subr.bf16.mxu0 %v277
  %1775 = vmatpush1.bf16.msra.mxu0 %v276
  %1776 = vmatprep.subr.bf16.mxu0 %v279
  %1777 = vmatpush1.bf16.msra.mxu0 %v278
  %1778 = vmatprep.subr.bf16.mxu0 %v281
  %1779 = vmatpush1.bf16.msra.mxu0 %v280
  %1780 = vmatprep.subr.bf16.mxu0 0
  %1781 = vmatpush1.bf16.msra.mxu0 0
  %1782 = vmatprep.subr.bf16.mxu0 0
  %1783 = vmatpush1.bf16.msra.mxu0 0
  %1784 = vmatprep.subr.bf16.mxu0 0
  %1785 = vmatpush1.bf16.msra.mxu0 0
  %1786 = vmatprep.subr.bf16.mxu0 0
  %1787 = vmatpush1.bf16.msra.mxu0 0
  %1788 = vmatprep.subr.bf16.mxu0 0
  %1789 = vmatpush1.bf16.msra.mxu0 0
  %1790 = vmatprep.subr.bf16.mxu0 0
  %1791 = vmatpush1.bf16.msra.mxu0 0
  %1792 = vmatprep.subr.bf16.mxu0 0
  %1793 = vmatpush1.bf16.msra.mxu0 0
  %1794 = vmatprep.subr.bf16.mxu0 0
  %1795 = vmatpush1.bf16.msra.mxu0 0
  %1796 = vmatprep.subr.bf16.mxu0 0
  %1797 = vmatpush1.bf16.msra.mxu0 0
  %1798 = vmatprep.subr.bf16.mxu0 0
  %1799 = vmatpush1.bf16.msra.mxu0 0
  %1800 = vmatprep.subr.bf16.mxu0 0
  %1801 = vmatpush1.bf16.msra.mxu0 0
  %1802 = vmatprep.subr.bf16.mxu0 0
  %1803 = vmatpush1.bf16.msra.mxu0 0
  %1804 = vmatprep.mubr.bf16.mxu0 0
  %1805 = vmatmul.mubr.bf16.gmra.mrb[0].mxu0 %v1695
  %v1806 = vpop.f32.mrb[0].mxu0
  %v1807 = vadd.f32 0.0, %v1806
  %v1808 = vpop.f32.mrb[0].mxu0
  %v1809 = vadd.f32 0.0, %v1808
  %v1810 = vpop.f32.mrb[0].mxu0
  %v1811 = vpop.f32.mrb[0].mxu0
  %1812 = vdwg.mxu0
  %v1813 = vadd.f32 %v1770, %v1807
  %v1814 = vadd.f32 %v1771, %v1809
  %v1815 = vxor.u32 %v1813, 2147483648
  %v1816 = vxor.u32 %v1814, 2147483648
  %v1817 = vmul.f32 %v1815, 1.442695
  %v1818 = vpow.pop %v1817
  %v1819 = vmul.f32 %v1816, 1.442695
  %v1820 = vpow.pop %v1819
  %v1821 = vadd.f32 %v1818, 1.0
  %v1822 = vadd.f32 %v1820, 1.0
  %v1823 = vrcp.pop %v1821
  %v1824 = vmul.f32 1.0, %v1823
  %v1825 = vrcp.pop %v1822
  %v1826 = vmul.f32 1.0, %v1825
  %v1827 = vtanh.pop %v1814
  %v1828 = vmul.f32 %v1824, %v1641
  %1830 = vrot.lane.b32.xlu0 %v1827, 64
  %v1831 = vpop.permute.xlu0 %1830
  %v1833 = vmul.f32 %v1824, %v1831
  %1835 = vrot.lane.b32.xlu0 %v1833, 64
  %v1836 = vpop.permute.xlu0 %1835
  %v1838 = vadd.f32 %v1828, %v1836
  %v1839 = vtanh.pop %v1838
  %1841 = vrot.lane.b32.xlu0 %v1839, 64
  %v1842 = vpop.permute.xlu0 %1841
  %v1844 = vmul.f32 %v1826, %v1842
  %v1845 = vpack.c.bf16 %v1844, %v1844
  %v1846 = vpack.c.bf16 %v1769, %v1769
  %v1848 = vsel %vm290, %v1846, 0
  %1850 = vmatprep.subr.bf16.mxu0 %v398
  %1851 = vmatpush1.bf16.msra.mxu0 %v397
  %1852 = vmatprep.subr.bf16.mxu0 %v400
  %1853 = vmatpush1.bf16.msra.mxu0 %v399
  %1854 = vmatprep.subr.bf16.mxu0 %v402
  %1855 = vmatpush1.bf16.msra.mxu0 %v401
  %1856 = vmatprep.subr.bf16.mxu0 %v404
  %1857 = vmatpush1.bf16.msra.mxu0 %v403
  %1858 = vmatprep.subr.bf16.mxu0 0
  %1859 = vmatpush1.bf16.msra.mxu0 0
  %1860 = vmatprep.subr.bf16.mxu0 0
  %1861 = vmatpush1.bf16.msra.mxu0 0
  %1862 = vmatprep.subr.bf16.mxu0 0
  %1863 = vmatpush1.bf16.msra.mxu0 0
  %1864 = vmatprep.subr.bf16.mxu0 0
  %1865 = vmatpush1.bf16.msra.mxu0 0
  %1866 = vmatprep.subr.bf16.mxu0 0
  %1867 = vmatpush1.bf16.msra.mxu0 0
  %1868 = vmatprep.subr.bf16.mxu0 0
  %1869 = vmatpush1.bf16.msra.mxu0 0
  %1870 = vmatprep.subr.bf16.mxu0 0
  %1871 = vmatpush1.bf16.msra.mxu0 0
  %1872 = vmatprep.subr.bf16.mxu0 0
  %1873 = vmatpush1.bf16.msra.mxu0 0
  %1874 = vmatprep.subr.bf16.mxu0 0
  %1875 = vmatpush1.bf16.msra.mxu0 0
  %1876 = vmatprep.subr.bf16.mxu0 0
  %1877 = vmatpush1.bf16.msra.mxu0 0
  %1878 = vmatprep.subr.bf16.mxu0 0
  %1879 = vmatpush1.bf16.msra.mxu0 0
  %1880 = vmatprep.subr.bf16.mxu0 0
  %1881 = vmatpush1.bf16.msra.mxu0 0
  %1882 = vmatprep.mubr.bf16.mxu0 0
  %1883 = vmatmul.mubr.bf16.gmra.mrb[0].mxu0 %v1848
  %v1884 = vpop.f32.mrb[0].mxu0
  %v1885 = vadd.f32 0.0, %v1884
  %v1886 = vpop.f32.mrb[0].mxu0
  %v1887 = vadd.f32 0.0, %v1886
  %v1888 = vpop.f32.mrb[0].mxu0
  %v1889 = vpop.f32.mrb[0].mxu0
  %1890 = vdwg.mxu0
  %v1892 = vsel %vm290, %v1845, 0
  %1894 = vmatprep.subr.bf16.mxu0 %v482
  %1895 = vmatpush1.bf16.msra.mxu0 %v481
  %1896 = vmatprep.subr.bf16.mxu0 %v484
  %1897 = vmatpush1.bf16.msra.mxu0 %v483
  %1898 = vmatprep.subr.bf16.mxu0 %v486
  %1899 = vmatpush1.bf16.msra.mxu0 %v485
  %1900 = vmatprep.subr.bf16.mxu0 %v488
  %1901 = vmatpush1.bf16.msra.mxu0 %v487
  %1902 = vmatprep.subr.bf16.mxu0 0
  %1903 = vmatpush1.bf16.msra.mxu0 0
  %1904 = vmatprep.subr.bf16.mxu0 0
  %1905 = vmatpush1.bf16.msra.mxu0 0
  %1906 = vmatprep.subr.bf16.mxu0 0
  %1907 = vmatpush1.bf16.msra.mxu0 0
  %1908 = vmatprep.subr.bf16.mxu0 0
  %1909 = vmatpush1.bf16.msra.mxu0 0
  %1910 = vmatprep.subr.bf16.mxu0 0
  %1911 = vmatpush1.bf16.msra.mxu0 0
  %1912 = vmatprep.subr.bf16.mxu0 0
  %1913 = vmatpush1.bf16.msra.mxu0 0
  %1914 = vmatprep.subr.bf16.mxu0 0
  %1915 = vmatpush1.bf16.msra.mxu0 0
  %1916 = vmatprep.subr.bf16.mxu0 0
  %1917 = vmatpush1.bf16.msra.mxu0 0
  %1918 = vmatprep.subr.bf16.mxu0 0
  %1919 = vmatpush1.bf16.msra.mxu0 0
  %1920 = vmatprep.subr.bf16.mxu0 0
  %1921 = vmatpush1.bf16.msra.mxu0 0
  %1922 = vmatprep.subr.bf16.mxu0 0
  %1923 = vmatpush1.bf16.msra.mxu0 0
  %1924 = vmatprep.subr.bf16.mxu0 0
  %1925 = vmatpush1.bf16.msra.mxu0 0
  %1926 = vmatprep.mubr.bf16.mxu0 0
  %1927 = vmatmul.mubr.bf16.gmra.mrb[0].mxu0 %v1892
  %v1928 = vpop.f32.mrb[0].mxu0
  %v1929 = vadd.f32 %v1885, %v1928
  %v1930 = vpop.f32.mrb[0].mxu0
  %v1931 = vadd.f32 %v1887, %v1930
  %v1932 = vpop.f32.mrb[0].mxu0
  %v1933 = vpop.f32.mrb[0].mxu0
  %1934 = vdwg.mxu0
  %v1935 = vadd.f32 %v1929, %v545
  %v1936 = vadd.f32 %v1931, %v549
  %v1937 = vxor.u32 %v1935, 2147483648
  %v1938 = vxor.u32 %v1936, 2147483648
  %v1939 = vmul.f32 %v1937, 1.442695
  %v1940 = vpow.pop %v1939
  %v1941 = vmul.f32 %v1938, 1.442695
  %v1942 = vpow.pop %v1941
  %v1943 = vadd.f32 %v1940, 1.0
  %v1944 = vadd.f32 %v1942, 1.0
  %v1945 = vrcp.pop %v1943
  %v1946 = vmul.f32 1.0, %v1945
  %v1947 = vrcp.pop %v1944
  %v1948 = vmul.f32 1.0, %v1947
  %v1949 = vtanh.pop %v1936
  %v1950 = vmul.f32 %v1946, %v1763
  %1952 = vrot.lane.b32.xlu0 %v1949, 64
  %v1953 = vpop.permute.xlu0 %1952
  %v1955 = vmul.f32 %v1946, %v1953
  %1957 = vrot.lane.b32.xlu0 %v1955, 64
  %v1958 = vpop.permute.xlu0 %1957
  %v1960 = vadd.f32 %v1950, %v1958
  %v1961 = vtanh.pop %v1960
  %1963 = vrot.lane.b32.xlu0 %v1961, 64
  %v1964 = vpop.permute.xlu0 %1963
  %v1966 = vmul.f32 %v1948, %v1964
  %v1967 = vld [vmem:[%s1] sm:$0xff]
  %v1968 = vld [vmem:[%s1 + $0x8] sm:$0xff]
  %v1969 = vld [vmem:[%s1 + $0x10] sm:$0xff]
  %v1970 = vpack.c.bf16 %v1967, %v1967
  %v1971 = vpack.c.bf16 %v1968, %v1968
  %v1972 = vpack.c.bf16 %v1969, %v1969
  %v1973 = vld [vmem:[%s10] sm:$0xff]
  %v1974 = vld [vmem:[%s10 + $0x8] sm:$0xff]
  %v1975 = vld [vmem:[%s10 + $0x10] sm:$0xff]
  %v1976 = vld [vmem:[%s10 + $0x18] sm:$0xff]
  %v1977 = vld [vmem:[%s10 + $0x20] sm:$0xff]
  %v1978 = vld [vmem:[%s10 + $0x28] sm:$0xff]
  %v1979 = vld [vmem:[%s10 + $0x30] sm:$0xff]
  %v1980 = vld [vmem:[%s10 + $0x38] sm:$0xff]
  %v1981 = vld [vmem:[%s10 + $0x40] sm:$0xff]
  %v1982 = vld [vmem:[%s10 + $0x48] sm:$0xff]
  %v1983 = vld [vmem:[%s10 + $0x50] sm:$0xff]
  %v1984 = vld [vmem:[%s10 + $0x58] sm:$0xff]
  %v1985 = vld [vmem:[%s10 + $0x60] sm:$0xff]
  %v1986 = vld [vmem:[%s10 + $0x68] sm:$0xff]
  %v1987 = vld [vmem:[%s10 + $0x70] sm:$0xff]
  %v1988 = vld [vmem:[%s10 + $0x78] sm:$0xff]
  %v1989 = vld [vmem:[%s10 + $0x80] sm:$0xff]
  %v1990 = vld [vmem:[%s10 + $0x88] sm:$0xff]
  %v1991 = vld [vmem:[%s10 + $0x90] sm:$0xff]
  %v1992 = vld [vmem:[%s10 + $0x98] sm:$0xff]
  %v1993 = vld [vmem:[%s10 + $0xa0] sm:$0xff]
  %v1994 = vld [vmem:[%s10 + $0xa8] sm:$0xff]
  %v1995 = vld [vmem:[%s10 + $0xb0] sm:$0xff]
  %v1996 = vld [vmem:[%s10 + $0xb8] sm:$0xff]
  %v1997 = vld [vmem:[%s10 + $0xc0] sm:$0xff]
  %v1998 = vld [vmem:[%s10 + $0xc8] sm:$0xff]
  %v1999 = vld [vmem:[%s10 + $0xd0] sm:$0xff]
  %v2000 = vld [vmem:[%s10 + $0xd8] sm:$0xff]
  %v2001 = vld [vmem:[%s10 + $0xe0] sm:$0xff]
  %v2002 = vld [vmem:[%s10 + $0xe8] sm:$0xff]
  %v2003 = vld [vmem:[%s10 + $0xf0] sm:$0xff]
  %v2004 = vld [vmem:[%s10 + $0xf8] sm:$0xff]
  %v2005 = vld [vmem:[%s10 + $0x100] sm:$0xff]
  %v2006 = vld [vmem:[%s10 + $0x108] sm:$0xff]
  %v2007 = vld [vmem:[%s10 + $0x110] sm:$0xff]
  %v2008 = vld [vmem:[%s10 + $0x118] sm:$0xff]
  %v2009 = vld [vmem:[%s10 + $0x120] sm:$0xff]
  %v2010 = vld [vmem:[%s10 + $0x128] sm:$0xff]
  %v2011 = vld [vmem:[%s10 + $0x130] sm:$0xff]
  %v2012 = vld [vmem:[%s10 + $0x138] sm:$0xff]
  %v2013 = vld [vmem:[%s10 + $0x140] sm:$0xff]
  %v2014 = vld [vmem:[%s10 + $0x148] sm:$0xff]
  %v2015 = vld [vmem:[%s10 + $0x150] sm:$0xff]
  %v2016 = vld [vmem:[%s10 + $0x158] sm:$0xff]
  %v2017 = vld [vmem:[%s10 + $0x160] sm:$0xff]
  %v2018 = vld [vmem:[%s10 + $0x168] sm:$0xff]
  %v2019 = vld [vmem:[%s10 + $0x170] sm:$0xff]
  %v2020 = vld [vmem:[%s10 + $0x178] sm:$0xff]
  %v2021 = vld [vmem:[%s10 + $0x180] sm:$0xff]
  %v2022 = vld [vmem:[%s10 + $0x188] sm:$0xff]
  %v2023 = vld [vmem:[%s10 + $0x190] sm:$0xff]
  %v2024 = vld [vmem:[%s10 + $0x198] sm:$0xff]
  %v2025 = vld [vmem:[%s10 + $0x1a0] sm:$0xff]
  %v2026 = vld [vmem:[%s10 + $0x1a8] sm:$0xff]
  %v2027 = vld [vmem:[%s10 + $0x1b0] sm:$0xff]
  %v2028 = vld [vmem:[%s10 + $0x1b8] sm:$0xff]
  %v2029 = vld [vmem:[%s10 + $0x1c0] sm:$0xff]
  %v2030 = vld [vmem:[%s10 + $0x1c8] sm:$0xff]
  %v2031 = vld [vmem:[%s10 + $0x1d0] sm:$0xff]
  %v2032 = vld [vmem:[%s10 + $0x1d8] sm:$0xff]
  %v2033 = vld [vmem:[%s10 + $0x1e0] sm:$0xff]
  %v2034 = vld [vmem:[%s10 + $0x1e8] sm:$0xff]
  %v2035 = vld [vmem:[%s10 + $0x1f0] sm:$0xff]
  %v2036 = vld [vmem:[%s10 + $0x1f8] sm:$0xff]
  %v2037 = vld [vmem:[%s10 + $0x200] sm:$0xff]
  %v2038 = vld [vmem:[%s10 + $0x208] sm:$0xff]
  %v2039 = vld [vmem:[%s10 + $0x210] sm:$0xff]
  %v2040 = vld [vmem:[%s10 + $0x218] sm:$0xff]
  %v2041 = vld [vmem:[%s10 + $0x220] sm:$0xff]
  %v2042 = vld [vmem:[%s10 + $0x228] sm:$0xff]
  %v2043 = vld [vmem:[%s10 + $0x230] sm:$0xff]
  %v2044 = vld [vmem:[%s10 + $0x238] sm:$0xff]
  %v2045 = vld [vmem:[%s10 + $0x240] sm:$0xff]
  %v2046 = vld [vmem:[%s10 + $0x248] sm:$0xff]
  %v2047 = vld [vmem:[%s10 + $0x250] sm:$0xff]
  %v2048 = vld [vmem:[%s10 + $0x258] sm:$0xff]
  %v2049 = vld [vmem:[%s10 + $0x260] sm:$0xff]
  %v2050 = vld [vmem:[%s10 + $0x268] sm:$0xff]
  %v2051 = vld [vmem:[%s10 + $0x270] sm:$0xff]
  %v2052 = vld [vmem:[%s10 + $0x278] sm:$0xff]
  %v2053 = vld [vmem:[%s10 + $0x280] sm:$0xff]
  %v2054 = vld [vmem:[%s10 + $0x288] sm:$0xff]
  %v2055 = vld [vmem:[%s10 + $0x290] sm:$0xff]
  %v2056 = vld [vmem:[%s10 + $0x298] sm:$0xff]
  %v2057 = vld [vmem:[%s10 + $0x2a0] sm:$0xff]
  %v2058 = vld [vmem:[%s10 + $0x2a8] sm:$0xff]
  %v2059 = vld [vmem:[%s10 + $0x2b0] sm:$0xff]
  %v2060 = vld [vmem:[%s10 + $0x2b8] sm:$0xff]
  %v2061 = vld [vmem:[%s10 + $0x2c0] sm:$0xff]
  %v2062 = vld [vmem:[%s10 + $0x2c8] sm:$0xff]
  %v2063 = vld [vmem:[%s10 + $0x2d0] sm:$0xff]
  %v2064 = vld [vmem:[%s10 + $0x2d8] sm:$0xff]
  %v2065 = vld [vmem:[%s10 + $0x2e0] sm:$0xff]
  %v2066 = vld [vmem:[%s10 + $0x2e8] sm:$0xff]
  %v2067 = vld [vmem:[%s10 + $0x2f0] sm:$0xff]
  %v2068 = vld [vmem:[%s10 + $0x2f8] sm:$0xff]
  %v2069 = vld [vmem:[%s10 + $0x300] sm:$0xff]
  %v2070 = vld [vmem:[%s10 + $0x308] sm:$0xff]
  %v2071 = vld [vmem:[%s10 + $0x310] sm:$0xff]
  %v2072 = vld [vmem:[%s10 + $0x318] sm:$0xff]
  %v2073 = vld [vmem:[%s10 + $0x320] sm:$0xff]
  %v2074 = vld [vmem:[%s10 + $0x328] sm:$0xff]
  %v2075 = vld [vmem:[%s10 + $0x330] sm:$0xff]
  %v2076 = vld [vmem:[%s10 + $0x338] sm:$0xff]
  %v2077 = vld [vmem:[%s10 + $0x340] sm:$0xff]
  %v2078 = vld [vmem:[%s10 + $0x348] sm:$0xff]
  %v2079 = vld [vmem:[%s10 + $0x350] sm:$0xff]
  %v2080 = vld [vmem:[%s10 + $0x358] sm:$0xff]
  %v2081 = vld [vmem:[%s10 + $0x360] sm:$0xff]
  %v2082 = vld [vmem:[%s10 + $0x368] sm:$0xff]
  %v2083 = vld [vmem:[%s10 + $0x370] sm:$0xff]
  %v2084 = vld [vmem:[%s10 + $0x378] sm:$0xff]
  %v2085 = vld [vmem:[%s10 + $0x380] sm:$0xff]
  %v2086 = vld [vmem:[%s10 + $0x388] sm:$0xff]
  %v2087 = vld [vmem:[%s10 + $0x390] sm:$0xff]
  %v2088 = vld [vmem:[%s10 + $0x398] sm:$0xff]
  %v2089 = vld [vmem:[%s10 + $0x3a0] sm:$0xff]
  %v2090 = vld [vmem:[%s10 + $0x3a8] sm:$0xff]
  %v2091 = vld [vmem:[%s10 + $0x3b0] sm:$0xff]
  %v2092 = vld [vmem:[%s10 + $0x3b8] sm:$0xff]
  %v2093 = vld [vmem:[%s10 + $0x3c0] sm:$0xff]
  %v2094 = vld [vmem:[%s10 + $0x3c8] sm:$0xff]
  %v2095 = vld [vmem:[%s10 + $0x3d0] sm:$0xff]
  %v2096 = vld [vmem:[%s10 + $0x3d8] sm:$0xff]
  %v2097 = vld [vmem:[%s10 + $0x3e0] sm:$0xff]
  %v2098 = vld [vmem:[%s10 + $0x3e8] sm:$0xff]
  %v2099 = vld [vmem:[%s10 + $0x3f0] sm:$0xff]
  %v2100 = vld [vmem:[%s10 + $0x3f8] sm:$0xff]
  %v2101 = vld [vmem:[%s10 + $0x400] sm:$0xff]
  %v2102 = vld [vmem:[%s10 + $0x408] sm:$0xff]
  %v2103 = vld [vmem:[%s10 + $0x410] sm:$0xff]
  %v2104 = vld [vmem:[%s10 + $0x418] sm:$0xff]
  %v2105 = vld [vmem:[%s10 + $0x420] sm:$0xff]
  %v2106 = vld [vmem:[%s10 + $0x428] sm:$0xff]
  %v2107 = vld [vmem:[%s10 + $0x430] sm:$0xff]
  %v2108 = vld [vmem:[%s10 + $0x438] sm:$0xff]
  %v2109 = vld [vmem:[%s10 + $0x440] sm:$0xff]
  %v2110 = vld [vmem:[%s10 + $0x448] sm:$0xff]
  %v2111 = vld [vmem:[%s10 + $0x450] sm:$0xff]
  %v2112 = vld [vmem:[%s10 + $0x458] sm:$0xff]
  %v2113 = vld [vmem:[%s10 + $0x460] sm:$0xff]
  %v2114 = vld [vmem:[%s10 + $0x468] sm:$0xff]
  %v2115 = vld [vmem:[%s10 + $0x470] sm:$0xff]
  %v2116 = vld [vmem:[%s10 + $0x478] sm:$0xff]
  %v2117 = vld [vmem:[%s10 + $0x480] sm:$0xff]
  %v2118 = vld [vmem:[%s10 + $0x488] sm:$0xff]
  %v2119 = vld [vmem:[%s10 + $0x490] sm:$0xff]
  %v2120 = vld [vmem:[%s10 + $0x498] sm:$0xff]
  %v2121 = vld [vmem:[%s10 + $0x4a0] sm:$0xff]
  %v2122 = vld [vmem:[%s10 + $0x4a8] sm:$0xff]
  %v2123 = vld [vmem:[%s10 + $0x4b0] sm:$0xff]
  %v2124 = vld [vmem:[%s10 + $0x4b8] sm:$0xff]
  %v2125 = vld [vmem:[%s10 + $0x4c0] sm:$0xff]
  %v2126 = vld [vmem:[%s10 + $0x4c8] sm:$0xff]
  %v2127 = vld [vmem:[%s10 + $0x4d0] sm:$0xff]
  %v2128 = vld [vmem:[%s10 + $0x4d8] sm:$0xff]
  %v2129 = vld [vmem:[%s10 + $0x4e0] sm:$0xff]
  %v2130 = vld [vmem:[%s10 + $0x4e8] sm:$0xff]
  %v2131 = vld [vmem:[%s10 + $0x4f0] sm:$0xff]
  %v2132 = vld [vmem:[%s10 + $0x4f8] sm:$0xff]
  %v2133 = vld [vmem:[%s10 + $0x500] sm:$0xff]
  %v2134 = vld [vmem:[%s10 + $0x508] sm:$0xff]
  %v2135 = vld [vmem:[%s10 + $0x510] sm:$0xff]
  %v2136 = vld [vmem:[%s10 + $0x518] sm:$0xff]
  %v2137 = vld [vmem:[%s10 + $0x520] sm:$0xff]
  %v2138 = vld [vmem:[%s10 + $0x528] sm:$0xff]
  %v2139 = vld [vmem:[%s10 + $0x530] sm:$0xff]
  %v2140 = vld [vmem:[%s10 + $0x538] sm:$0xff]
  %v2141 = vld [vmem:[%s10 + $0x540] sm:$0xff]
  %v2142 = vld [vmem:[%s10 + $0x548] sm:$0xff]
  %v2143 = vld [vmem:[%s10 + $0x550] sm:$0xff]
  %v2144 = vld [vmem:[%s10 + $0x558] sm:$0xff]
  %v2145 = vld [vmem:[%s10 + $0x560] sm:$0xff]
  %v2146 = vld [vmem:[%s10 + $0x568] sm:$0xff]
  %v2147 = vld [vmem:[%s10 + $0x570] sm:$0xff]
  %v2148 = vld [vmem:[%s10 + $0x578] sm:$0xff]
  %v2149 = vld [vmem:[%s10 + $0x580] sm:$0xff]
  %v2150 = vld [vmem:[%s10 + $0x588] sm:$0xff]
  %v2151 = vld [vmem:[%s10 + $0x590] sm:$0xff]
  %v2152 = vld [vmem:[%s10 + $0x598] sm:$0xff]
  %v2153 = vld [vmem:[%s10 + $0x5a0] sm:$0xff]
  %v2154 = vld [vmem:[%s10 + $0x5a8] sm:$0xff]
  %v2155 = vld [vmem:[%s10 + $0x5b0] sm:$0xff]
  %v2156 = vld [vmem:[%s10 + $0x5b8] sm:$0xff]
  %v2157 = vld [vmem:[%s10 + $0x5c0] sm:$0xff]
  %v2158 = vld [vmem:[%s10 + $0x5c8] sm:$0xff]
  %v2159 = vld [vmem:[%s10 + $0x5d0] sm:$0xff]
  %v2160 = vld [vmem:[%s10 + $0x5d8] sm:$0xff]
  %v2161 = vld [vmem:[%s10 + $0x5e0] sm:$0xff]
  %v2162 = vld [vmem:[%s10 + $0x5e8] sm:$0xff]
  %v2163 = vld [vmem:[%s10 + $0x5f0] sm:$0xff]
  %v2164 = vld [vmem:[%s10 + $0x5f8] sm:$0xff]
  %v2165 = vld [vmem:[%s10 + $0x600] sm:$0xff]
  %v2166 = vld [vmem:[%s10 + $0x608] sm:$0xff]
  %v2167 = vld [vmem:[%s10 + $0x610] sm:$0xff]
  %v2168 = vld [vmem:[%s10 + $0x618] sm:$0xff]
  %v2169 = vld [vmem:[%s10 + $0x620] sm:$0xff]
  %v2170 = vld [vmem:[%s10 + $0x628] sm:$0xff]
  %v2171 = vld [vmem:[%s10 + $0x630] sm:$0xff]
  %v2172 = vld [vmem:[%s10 + $0x638] sm:$0xff]
  %v2173 = vld [vmem:[%s10 + $0x640] sm:$0xff]
  %v2174 = vld [vmem:[%s10 + $0x648] sm:$0xff]
  %v2175 = vld [vmem:[%s10 + $0x650] sm:$0xff]
  %v2176 = vld [vmem:[%s10 + $0x658] sm:$0xff]
  %v2177 = vld [vmem:[%s10 + $0x660] sm:$0xff]
  %v2178 = vld [vmem:[%s10 + $0x668] sm:$0xff]
  %v2179 = vld [vmem:[%s10 + $0x670] sm:$0xff]
  %v2180 = vld [vmem:[%s10 + $0x678] sm:$0xff]
  %v2181 = vld [vmem:[%s10 + $0x680] sm:$0xff]
  %v2182 = vld [vmem:[%s10 + $0x688] sm:$0xff]
  %v2183 = vld [vmem:[%s10 + $0x690] sm:$0xff]
  %v2184 = vld [vmem:[%s10 + $0x698] sm:$0xff]
  %v2185 = vld [vmem:[%s10 + $0x6a0] sm:$0xff]
  %v2186 = vld [vmem:[%s10 + $0x6a8] sm:$0xff]
  %v2187 = vld [vmem:[%s10 + $0x6b0] sm:$0xff]
  %v2188 = vld [vmem:[%s10 + $0x6b8] sm:$0xff]
  %v2189 = vld [vmem:[%s10 + $0x6c0] sm:$0xff]
  %v2190 = vld [vmem:[%s10 + $0x6c8] sm:$0xff]
  %v2191 = vld [vmem:[%s10 + $0x6d0] sm:$0xff]
  %v2192 = vld [vmem:[%s10 + $0x6d8] sm:$0xff]
  %v2193 = vld [vmem:[%s10 + $0x6e0] sm:$0xff]
  %v2194 = vld [vmem:[%s10 + $0x6e8] sm:$0xff]
  %v2195 = vld [vmem:[%s10 + $0x6f0] sm:$0xff]
  %v2196 = vld [vmem:[%s10 + $0x6f8] sm:$0xff]
  %v2197 = vld [vmem:[%s10 + $0x700] sm:$0xff]
  %v2198 = vld [vmem:[%s10 + $0x708] sm:$0xff]
  %v2199 = vld [vmem:[%s10 + $0x710] sm:$0xff]
  %v2200 = vld [vmem:[%s10 + $0x718] sm:$0xff]
  %v2201 = vld [vmem:[%s10 + $0x720] sm:$0xff]
  %v2202 = vld [vmem:[%s10 + $0x728] sm:$0xff]
  %v2203 = vld [vmem:[%s10 + $0x730] sm:$0xff]
  %v2204 = vld [vmem:[%s10 + $0x738] sm:$0xff]
  %v2205 = vld [vmem:[%s10 + $0x740] sm:$0xff]
  %v2206 = vld [vmem:[%s10 + $0x748] sm:$0xff]
  %v2207 = vld [vmem:[%s10 + $0x750] sm:$0xff]
  %v2208 = vld [vmem:[%s10 + $0x758] sm:$0xff]
  %v2209 = vld [vmem:[%s10 + $0x760] sm:$0xff]
  %v2210 = vld [vmem:[%s10 + $0x768] sm:$0xff]
  %v2211 = vld [vmem:[%s10 + $0x770] sm:$0xff]
  %v2212 = vld [vmem:[%s10 + $0x778] sm:$0xff]
  %v2213 = vld [vmem:[%s10 + $0x780] sm:$0xff]
  %v2214 = vld [vmem:[%s10 + $0x788] sm:$0xff]
  %v2215 = vld [vmem:[%s10 + $0x790] sm:$0xff]
  %v2216 = vld [vmem:[%s10 + $0x798] sm:$0xff]
  %v2217 = vld [vmem:[%s10 + $0x7a0] sm:$0xff]
  %v2218 = vld [vmem:[%s10 + $0x7a8] sm:$0xff]
  %v2219 = vld [vmem:[%s10 + $0x7b0] sm:$0xff]
  %v2220 = vld [vmem:[%s10 + $0x7b8] sm:$0xff]
  %v2221 = vld [vmem:[%s10 + $0x7c0] sm:$0xff]
  %v2222 = vld [vmem:[%s10 + $0x7c8] sm:$0xff]
  %v2223 = vld [vmem:[%s10 + $0x7d0] sm:$0xff]
  %v2224 = vld [vmem:[%s10 + $0x7d8] sm:$0xff]
  %v2225 = vld [vmem:[%s10 + $0x7e0] sm:$0xff]
  %v2226 = vld [vmem:[%s10 + $0x7e8] sm:$0xff]
  %v2227 = vld [vmem:[%s10 + $0x7f0] sm:$0xff]
  %v2228 = vld [vmem:[%s10 + $0x7f8] sm:$0xff]
  %v2229 = vld [vmem:[%s10 + $0x800] sm:$0xff]
  %v2230 = vld [vmem:[%s10 + $0x808] sm:$0xff]
  %v2231 = vld [vmem:[%s10 + $0x810] sm:$0xff]
  %v2232 = vld [vmem:[%s10 + $0x818] sm:$0xff]
  %v2233 = vld [vmem:[%s10 + $0x820] sm:$0xff]
  %v2234 = vld [vmem:[%s10 + $0x828] sm:$0xff]
  %v2235 = vld [vmem:[%s10 + $0x830] sm:$0xff]
  %v2236 = vld [vmem:[%s10 + $0x838] sm:$0xff]
  %v2237 = vld [vmem:[%s10 + $0x840] sm:$0xff]
  %v2238 = vld [vmem:[%s10 + $0x848] sm:$0xff]
  %v2239 = vld [vmem:[%s10 + $0x850] sm:$0xff]
  %v2240 = vld [vmem:[%s10 + $0x858] sm:$0xff]
  %v2241 = vld [vmem:[%s10 + $0x860] sm:$0xff]
  %v2242 = vld [vmem:[%s10 + $0x868] sm:$0xff]
  %v2243 = vld [vmem:[%s10 + $0x870] sm:$0xff]
  %v2244 = vld [vmem:[%s10 + $0x878] sm:$0xff]
  %v2245 = vld [vmem:[%s10 + $0x880] sm:$0xff]
  %v2246 = vld [vmem:[%s10 + $0x888] sm:$0xff]
  %v2247 = vld [vmem:[%s10 + $0x890] sm:$0xff]
  %v2248 = vld [vmem:[%s10 + $0x898] sm:$0xff]
  %v2249 = vld [vmem:[%s10 + $0x8a0] sm:$0xff]
  %v2250 = vld [vmem:[%s10 + $0x8a8] sm:$0xff]
  %v2251 = vld [vmem:[%s10 + $0x8b0] sm:$0xff]
  %v2252 = vld [vmem:[%s10 + $0x8b8] sm:$0xff]
  %v2253 = vld [vmem:[%s10 + $0x8c0] sm:$0xff]
  %v2254 = vld [vmem:[%s10 + $0x8c8] sm:$0xff]
  %v2255 = vld [vmem:[%s10 + $0x8d0] sm:$0xff]
  %v2256 = vld [vmem:[%s10 + $0x8d8] sm:$0xff]
  %v2257 = vld [vmem:[%s10 + $0x8e0] sm:$0xff]
  %v2258 = vld [vmem:[%s10 + $0x8e8] sm:$0xff]
  %v2259 = vld [vmem:[%s10 + $0x8f0] sm:$0xff]
  %v2260 = vld [vmem:[%s10 + $0x8f8] sm:$0xff]
  %v2261 = vld [vmem:[%s10 + $0x900] sm:$0xff]
  %v2262 = vld [vmem:[%s10 + $0x908] sm:$0xff]
  %v2263 = vld [vmem:[%s10 + $0x910] sm:$0xff]
  %v2264 = vld [vmem:[%s10 + $0x918] sm:$0xff]
  %v2265 = vld [vmem:[%s10 + $0x920] sm:$0xff]
  %v2266 = vld [vmem:[%s10 + $0x928] sm:$0xff]
  %v2267 = vld [vmem:[%s10 + $0x930] sm:$0xff]
  %v2268 = vld [vmem:[%s10 + $0x938] sm:$0xff]
  %v2269 = vld [vmem:[%s10 + $0x940] sm:$0xff]
  %v2270 = vld [vmem:[%s10 + $0x948] sm:$0xff]
  %v2271 = vld [vmem:[%s10 + $0x950] sm:$0xff]
  %v2272 = vld [vmem:[%s10 + $0x958] sm:$0xff]
  %v2273 = vld [vmem:[%s10 + $0x960] sm:$0xff]
  %v2274 = vld [vmem:[%s10 + $0x968] sm:$0xff]
  %v2275 = vld [vmem:[%s10 + $0x970] sm:$0xff]
  %v2276 = vld [vmem:[%s10 + $0x978] sm:$0xff]
  %v2277 = vld [vmem:[%s10 + $0x980] sm:$0xff]
  %v2278 = vld [vmem:[%s10 + $0x988] sm:$0xff]
  %v2279 = vld [vmem:[%s10 + $0x990] sm:$0xff]
  %v2280 = vld [vmem:[%s10 + $0x998] sm:$0xff]
  %v2281 = vld [vmem:[%s10 + $0x9a0] sm:$0xff]
  %v2282 = vld [vmem:[%s10 + $0x9a8] sm:$0xff]
  %v2283 = vld [vmem:[%s10 + $0x9b0] sm:$0xff]
  %v2284 = vld [vmem:[%s10 + $0x9b8] sm:$0xff]
  %v2285 = vld [vmem:[%s10 + $0x9c0] sm:$0xff]
  %v2286 = vld [vmem:[%s10 + $0x9c8] sm:$0xff]
  %v2287 = vld [vmem:[%s10 + $0x9d0] sm:$0xff]
  %v2288 = vld [vmem:[%s10 + $0x9d8] sm:$0xff]
  %v2289 = vld [vmem:[%s10 + $0x9e0] sm:$0xff]
  %v2290 = vld [vmem:[%s10 + $0x9e8] sm:$0xff]
  %v2291 = vld [vmem:[%s10 + $0x9f0] sm:$0xff]
  %v2292 = vld [vmem:[%s10 + $0x9f8] sm:$0xff]
  %v2293 = vld [vmem:[%s10 + $0xa00] sm:$0x33]
  %v2294 = vld [vmem:[%s10 + $0xa08] sm:$0x33]
  %v2295 = vld [vmem:[%s10 + $0xa10] sm:$0x33]
  %v2296 = vld [vmem:[%s10 + $0xa18] sm:$0x33]
  %v2297 = vld [vmem:[%s10 + $0xa20] sm:$0x33]
  %v2298 = vld [vmem:[%s10 + $0xa28] sm:$0x33]
  %v2299 = vld [vmem:[%s10 + $0xa30] sm:$0x33]
  %v2300 = vld [vmem:[%s10 + $0xa38] sm:$0x33]
  %v2629 = vunpack.c.l.b16 %v1973
  %v2630 = vunpack.c.h.b16 %v1973
  %v2631 = vunpack.c.l.b16 %v1974
  %v2632 = vunpack.c.h.b16 %v1974
  %v2633 = vunpack.c.l.b16 %v1975
  %v2634 = vunpack.c.h.b16 %v1975
  %v2635 = vunpack.c.l.b16 %v1976
  %v2636 = vunpack.c.h.b16 %v1976
  %v2637 = vunpack.c.l.b16 %v1977
  %v2638 = vunpack.c.h.b16 %v1977
  %v2639 = vunpack.c.l.b16 %v1978
  %v2640 = vunpack.c.h.b16 %v1978
  %v2641 = vunpack.c.l.b16 %v1979
  %v2642 = vunpack.c.h.b16 %v1979
  %v2643 = vunpack.c.l.b16 %v1980
  %v2644 = vunpack.c.h.b16 %v1980
  %v2645 = vunpack.c.l.b16 %v1981
  %v2646 = vunpack.c.h.b16 %v1981
  %v2647 = vunpack.c.l.b16 %v1982
  %v2648 = vunpack.c.h.b16 %v1982
  %v2649 = vunpack.c.l.b16 %v1983
  %v2650 = vunpack.c.h.b16 %v1983
  %v2651 = vunpack.c.l.b16 %v1984
  %v2652 = vunpack.c.h.b16 %v1984
  %v2653 = vunpack.c.l.b16 %v1985
  %v2654 = vunpack.c.h.b16 %v1985
  %v2655 = vunpack.c.l.b16 %v1986
  %v2656 = vunpack.c.h.b16 %v1986
  %v2657 = vunpack.c.l.b16 %v1987
  %v2658 = vunpack.c.h.b16 %v1987
  %v2659 = vunpack.c.l.b16 %v1988
  %v2660 = vunpack.c.h.b16 %v1988
  %v2661 = vunpack.c.l.b16 %v1989
  %v2662 = vunpack.c.h.b16 %v1989
  %v2663 = vunpack.c.l.b16 %v1990
  %v2664 = vunpack.c.h.b16 %v1990
  %v2665 = vunpack.c.l.b16 %v1991
  %v2666 = vunpack.c.h.b16 %v1991
  %v2667 = vunpack.c.l.b16 %v1992
  %v2668 = vunpack.c.h.b16 %v1992
  %v2669 = vunpack.c.l.b16 %v1993
  %v2670 = vunpack.c.h.b16 %v1993
  %v2671 = vunpack.c.l.b16 %v1994
  %v2672 = vunpack.c.h.b16 %v1994
  %v2673 = vunpack.c.l.b16 %v1995
  %v2674 = vunpack.c.h.b16 %v1995
  %v2675 = vunpack.c.l.b16 %v1996
  %v2676 = vunpack.c.h.b16 %v1996
  %v2677 = vunpack.c.l.b16 %v1997
  %v2678 = vunpack.c.h.b16 %v1997
  %v2679 = vunpack.c.l.b16 %v1998
  %v2680 = vunpack.c.h.b16 %v1998
  %v2681 = vunpack.c.l.b16 %v1999
  %v2682 = vunpack.c.h.b16 %v1999
  %v2683 = vunpack.c.l.b16 %v2000
  %v2684 = vunpack.c.h.b16 %v2000
  %v2685 = vunpack.c.l.b16 %v2001
  %v2686 = vunpack.c.h.b16 %v2001
  %v2687 = vunpack.c.l.b16 %v2002
  %v2688 = vunpack.c.h.b16 %v2002
  %v2689 = vunpack.c.l.b16 %v2003
  %v2690 = vunpack.c.h.b16 %v2003
  %v2691 = vunpack.c.l.b16 %v2004
  %v2692 = vunpack.c.h.b16 %v2004
  %v2693 = vunpack.c.l.b16 %v2005
  %v2694 = vunpack.c.h.b16 %v2005
  %v2695 = vunpack.c.l.b16 %v2006
  %v2696 = vunpack.c.h.b16 %v2006
  %v2697 = vunpack.c.l.b16 %v2007
  %v2698 = vunpack.c.h.b16 %v2007
  %v2699 = vunpack.c.l.b16 %v2008
  %v2700 = vunpack.c.h.b16 %v2008
  %v2701 = vunpack.c.l.b16 %v2009
  %v2702 = vunpack.c.h.b16 %v2009
  %v2703 = vunpack.c.l.b16 %v2010
  %v2704 = vunpack.c.h.b16 %v2010
  %v2705 = vunpack.c.l.b16 %v2011
  %v2706 = vunpack.c.h.b16 %v2011
  %v2707 = vunpack.c.l.b16 %v2012
  %v2708 = vunpack.c.h.b16 %v2012
  %v2709 = vunpack.c.l.b16 %v2013
  %v2710 = vunpack.c.h.b16 %v2013
  %v2711 = vunpack.c.l.b16 %v2014
  %v2712 = vunpack.c.h.b16 %v2014
  %v2713 = vunpack.c.l.b16 %v2015
  %v2714 = vunpack.c.h.b16 %v2015
  %v2715 = vunpack.c.l.b16 %v2016
  %v2716 = vunpack.c.h.b16 %v2016
  %v2717 = vunpack.c.l.b16 %v2017
  %v2718 = vunpack.c.h.b16 %v2017
  %v2719 = vunpack.c.l.b16 %v2018
  %v2720 = vunpack.c.h.b16 %v2018
  %v2721 = vunpack.c.l.b16 %v2019
  %v2722 = vunpack.c.h.b16 %v2019
  %v2723 = vunpack.c.l.b16 %v2020
  %v2724 = vunpack.c.h.b16 %v2020
  %v2725 = vunpack.c.l.b16 %v2021
  %v2726 = vunpack.c.h.b16 %v2021
  %v2727 = vunpack.c.l.b16 %v2022
  %v2728 = vunpack.c.h.b16 %v2022
  %v2729 = vunpack.c.l.b16 %v2023
  %v2730 = vunpack.c.h.b16 %v2023
  %v2731 = vunpack.c.l.b16 %v2024
  %v2732 = vunpack.c.h.b16 %v2024
  %v2733 = vunpack.c.l.b16 %v2025
  %v2734 = vunpack.c.h.b16 %v2025
  %v2735 = vunpack.c.l.b16 %v2026
  %v2736 = vunpack.c.h.b16 %v2026
  %v2737 = vunpack.c.l.b16 %v2027
  %v2738 = vunpack.c.h.b16 %v2027
  %v2739 = vunpack.c.l.b16 %v2028
  %v2740 = vunpack.c.h.b16 %v2028
  %v2741 = vunpack.c.l.b16 %v2029
  %v2742 = vunpack.c.h.b16 %v2029
  %v2743 = vunpack.c.l.b16 %v2030
  %v2744 = vunpack.c.h.b16 %v2030
  %v2745 = vunpack.c.l.b16 %v2031
  %v2746 = vunpack.c.h.b16 %v2031
  %v2747 = vunpack.c.l.b16 %v2032
  %v2748 = vunpack.c.h.b16 %v2032
  %v2749 = vunpack.c.l.b16 %v2033
  %v2750 = vunpack.c.h.b16 %v2033
  %v2751 = vunpack.c.l.b16 %v2034
  %v2752 = vunpack.c.h.b16 %v2034
  %v2753 = vunpack.c.l.b16 %v2035
  %v2754 = vunpack.c.h.b16 %v2035
  %v2755 = vunpack.c.l.b16 %v2036
  %v2756 = vunpack.c.h.b16 %v2036
  %v2757 = vunpack.c.l.b16 %v2037
  %v2758 = vunpack.c.h.b16 %v2037
  %v2759 = vunpack.c.l.b16 %v2038
  %v2760 = vunpack.c.h.b16 %v2038
  %v2761 = vunpack.c.l.b16 %v2039
  %v2762 = vunpack.c.h.b16 %v2039
  %v2763 = vunpack.c.l.b16 %v2040
  %v2764 = vunpack.c.h.b16 %v2040
  %v2765 = vunpack.c.l.b16 %v2041
  %v2766 = vunpack.c.h.b16 %v2041
  %v2767 = vunpack.c.l.b16 %v2042
  %v2768 = vunpack.c.h.b16 %v2042
  %v2769 = vunpack.c.l.b16 %v2043
  %v2770 = vunpack.c.h.b16 %v2043
  %v2771 = vunpack.c.l.b16 %v2044
  %v2772 = vunpack.c.h.b16 %v2044
  %v2773 = vunpack.c.l.b16 %v2045
  %v2774 = vunpack.c.h.b16 %v2045
  %v2775 = vunpack.c.l.b16 %v2046
  %v2776 = vunpack.c.h.b16 %v2046
  %v2777 = vunpack.c.l.b16 %v2047
  %v2778 = vunpack.c.h.b16 %v2047
  %v2779 = vunpack.c.l.b16 %v2048
  %v2780 = vunpack.c.h.b16 %v2048
  %v2781 = vunpack.c.l.b16 %v2049
  %v2782 = vunpack.c.h.b16 %v2049
  %v2783 = vunpack.c.l.b16 %v2050
  %v2784 = vunpack.c.h.b16 %v2050
  %v2785 = vunpack.c.l.b16 %v2051
  %v2786 = vunpack.c.h.b16 %v2051
  %v2787 = vunpack.c.l.b16 %v2052
  %v2788 = vunpack.c.h.b16 %v2052
  %v2789 = vunpack.c.l.b16 %v2053
  %v2790 = vunpack.c.h.b16 %v2053
  %v2791 = vunpack.c.l.b16 %v2054
  %v2792 = vunpack.c.h.b16 %v2054
  %v2793 = vunpack.c.l.b16 %v2055
  %v2794 = vunpack.c.h.b16 %v2055
  %v2795 = vunpack.c.l.b16 %v2056
  %v2796 = vunpack.c.h.b16 %v2056
  %v2797 = vunpack.c.l.b16 %v2057
  %v2798 = vunpack.c.h.b16 %v2057
  %v2799 = vunpack.c.l.b16 %v2058
  %v2800 = vunpack.c.h.b16 %v2058
  %v2801 = vunpack.c.l.b16 %v2059
  %v2802 = vunpack.c.h.b16 %v2059
  %v2803 = vunpack.c.l.b16 %v2060
  %v2804 = vunpack.c.h.b16 %v2060
  %v2805 = vunpack.c.l.b16 %v2061
  %v2806 = vunpack.c.h.b16 %v2061
  %v2807 = vunpack.c.l.b16 %v2062
  %v2808 = vunpack.c.h.b16 %v2062
  %v2809 = vunpack.c.l.b16 %v2063
  %v2810 = vunpack.c.h.b16 %v2063
  %v2811 = vunpack.c.l.b16 %v2064
  %v2812 = vunpack.c.h.b16 %v2064
  %v2813 = vunpack.c.l.b16 %v2065
  %v2814 = vunpack.c.h.b16 %v2065
  %v2815 = vunpack.c.l.b16 %v2066
  %v2816 = vunpack.c.h.b16 %v2066
  %v2817 = vunpack.c.l.b16 %v2067
  %v2818 = vunpack.c.h.b16 %v2067
  %v2819 = vunpack.c.l.b16 %v2068
  %v2820 = vunpack.c.h.b16 %v2068
  %v2821 = vunpack.c.l.b16 %v2069
  %v2822 = vunpack.c.h.b16 %v2069
  %v2823 = vunpack.c.l.b16 %v2070
  %v2824 = vunpack.c.h.b16 %v2070
  %v2825 = vunpack.c.l.b16 %v2071
  %v2826 = vunpack.c.h.b16 %v2071
  %v2827 = vunpack.c.l.b16 %v2072
  %v2828 = vunpack.c.h.b16 %v2072
  %v2829 = vunpack.c.l.b16 %v2073
  %v2830 = vunpack.c.h.b16 %v2073
  %v2831 = vunpack.c.l.b16 %v2074
  %v2832 = vunpack.c.h.b16 %v2074
  %v2833 = vunpack.c.l.b16 %v2075
  %v2834 = vunpack.c.h.b16 %v2075
  %v2835 = vunpack.c.l.b16 %v2076
  %v2836 = vunpack.c.h.b16 %v2076
  %v2837 = vunpack.c.l.b16 %v2077
  %v2838 = vunpack.c.h.b16 %v2077
  %v2839 = vunpack.c.l.b16 %v2078
  %v2840 = vunpack.c.h.b16 %v2078
  %v2841 = vunpack.c.l.b16 %v2079
  %v2842 = vunpack.c.h.b16 %v2079
  %v2843 = vunpack.c.l.b16 %v2080
  %v2844 = vunpack.c.h.b16 %v2080
  %v2845 = vunpack.c.l.b16 %v2081
  %v2846 = vunpack.c.h.b16 %v2081
  %v2847 = vunpack.c.l.b16 %v2082
  %v2848 = vunpack.c.h.b16 %v2082
  %v2849 = vunpack.c.l.b16 %v2083
  %v2850 = vunpack.c.h.b16 %v2083
  %v2851 = vunpack.c.l.b16 %v2084
  %v2852 = vunpack.c.h.b16 %v2084
  %v2853 = vunpack.c.l.b16 %v2085
  %v2854 = vunpack.c.h.b16 %v2085
  %v2855 = vunpack.c.l.b16 %v2086
  %v2856 = vunpack.c.h.b16 %v2086
  %v2857 = vunpack.c.l.b16 %v2087
  %v2858 = vunpack.c.h.b16 %v2087
  %v2859 = vunpack.c.l.b16 %v2088
  %v2860 = vunpack.c.h.b16 %v2088
  %v2861 = vunpack.c.l.b16 %v2089
  %v2862 = vunpack.c.h.b16 %v2089
  %v2863 = vunpack.c.l.b16 %v2090
  %v2864 = vunpack.c.h.b16 %v2090
  %v2865 = vunpack.c.l.b16 %v2091
  %v2866 = vunpack.c.h.b16 %v2091
  %v2867 = vunpack.c.l.b16 %v2092
  %v2868 = vunpack.c.h.b16 %v2092
  %v2869 = vunpack.c.l.b16 %v2093
  %v2870 = vunpack.c.h.b16 %v2093
  %v2871 = vunpack.c.l.b16 %v2094
  %v2872 = vunpack.c.h.b16 %v2094
  %v2873 = vunpack.c.l.b16 %v2095
  %v2874 = vunpack.c.h.b16 %v2095
  %v2875 = vunpack.c.l.b16 %v2096
  %v2876 = vunpack.c.h.b16 %v2096
  %v2877 = vunpack.c.l.b16 %v2097
  %v2878 = vunpack.c.h.b16 %v2097
  %v2879 = vunpack.c.l.b16 %v2098
  %v2880 = vunpack.c.h.b16 %v2098
  %v2881 = vunpack.c.l.b16 %v2099
  %v2882 = vunpack.c.h.b16 %v2099
  %v2883 = vunpack.c.l.b16 %v2100
  %v2884 = vunpack.c.h.b16 %v2100
  %v2885 = vunpack.c.l.b16 %v2101
  %v2886 = vunpack.c.h.b16 %v2101
  %v2887 = vunpack.c.l.b16 %v2102
  %v2888 = vunpack.c.h.b16 %v2102
  %v2889 = vunpack.c.l.b16 %v2103
  %v2890 = vunpack.c.h.b16 %v2103
  %v2891 = vunpack.c.l.b16 %v2104
  %v2892 = vunpack.c.h.b16 %v2104
  %v2893 = vunpack.c.l.b16 %v2105
  %v2894 = vunpack.c.h.b16 %v2105
  %v2895 = vunpack.c.l.b16 %v2106
  %v2896 = vunpack.c.h.b16 %v2106
  %v2897 = vunpack.c.l.b16 %v2107
  %v2898 = vunpack.c.h.b16 %v2107
  %v2899 = vunpack.c.l.b16 %v2108
  %v2900 = vunpack.c.h.b16 %v2108
  %v2901 = vunpack.c.l.b16 %v2109
  %v2902 = vunpack.c.h.b16 %v2109
  %v2903 = vunpack.c.l.b16 %v2110
  %v2904 = vunpack.c.h.b16 %v2110
  %v2905 = vunpack.c.l.b16 %v2111
  %v2906 = vunpack.c.h.b16 %v2111
  %v2907 = vunpack.c.l.b16 %v2112
  %v2908 = vunpack.c.h.b16 %v2112
  %v2909 = vunpack.c.l.b16 %v2113
  %v2910 = vunpack.c.h.b16 %v2113
  %v2911 = vunpack.c.l.b16 %v2114
  %v2912 = vunpack.c.h.b16 %v2114
  %v2913 = vunpack.c.l.b16 %v2115
  %v2914 = vunpack.c.h.b16 %v2115
  %v2915 = vunpack.c.l.b16 %v2116
  %v2916 = vunpack.c.h.b16 %v2116
  %v2917 = vunpack.c.l.b16 %v2117
  %v2918 = vunpack.c.h.b16 %v2117
  %v2919 = vunpack.c.l.b16 %v2118
  %v2920 = vunpack.c.h.b16 %v2118
  %v2921 = vunpack.c.l.b16 %v2119
  %v2922 = vunpack.c.h.b16 %v2119
  %v2923 = vunpack.c.l.b16 %v2120
  %v2924 = vunpack.c.h.b16 %v2120
  %v2925 = vunpack.c.l.b16 %v2121
  %v2926 = vunpack.c.h.b16 %v2121
  %v2927 = vunpack.c.l.b16 %v2122
  %v2928 = vunpack.c.h.b16 %v2122
  %v2929 = vunpack.c.l.b16 %v2123
  %v2930 = vunpack.c.h.b16 %v2123
  %v2931 = vunpack.c.l.b16 %v2124
  %v2932 = vunpack.c.h.b16 %v2124
  %v2933 = vunpack.c.l.b16 %v2125
  %v2934 = vunpack.c.h.b16 %v2125
  %v2935 = vunpack.c.l.b16 %v2126
  %v2936 = vunpack.c.h.b16 %v2126
  %v2937 = vunpack.c.l.b16 %v2127
  %v2938 = vunpack.c.h.b16 %v2127
  %v2939 = vunpack.c.l.b16 %v2128
  %v2940 = vunpack.c.h.b16 %v2128
  %v2941 = vunpack.c.l.b16 %v2129
  %v2942 = vunpack.c.h.b16 %v2129
  %v2943 = vunpack.c.l.b16 %v2130
  %v2944 = vunpack.c.h.b16 %v2130
  %v2945 = vunpack.c.l.b16 %v2131
  %v2946 = vunpack.c.h.b16 %v2131
  %v2947 = vunpack.c.l.b16 %v2132
  %v2948 = vunpack.c.h.b16 %v2132
  %v2949 = vunpack.c.l.b16 %v2133
  %v2950 = vunpack.c.h.b16 %v2133
  %v2951 = vunpack.c.l.b16 %v2134
  %v2952 = vunpack.c.h.b16 %v2134
  %v2953 = vunpack.c.l.b16 %v2135
  %v2954 = vunpack.c.h.b16 %v2135
  %v2955 = vunpack.c.l.b16 %v2136
  %v2956 = vunpack.c.h.b16 %v2136
  %v2957 = vunpack.c.l.b16 %v2137
  %v2958 = vunpack.c.h.b16 %v2137
  %v2959 = vunpack.c.l.b16 %v2138
  %v2960 = vunpack.c.h.b16 %v2138
  %v2961 = vunpack.c.l.b16 %v2139
  %v2962 = vunpack.c.h.b16 %v2139
  %v2963 = vunpack.c.l.b16 %v2140
  %v2964 = vunpack.c.h.b16 %v2140
  %v2965 = vunpack.c.l.b16 %v2141
  %v2966 = vunpack.c.h.b16 %v2141
  %v2967 = vunpack.c.l.b16 %v2142
  %v2968 = vunpack.c.h.b16 %v2142
  %v2969 = vunpack.c.l.b16 %v2143
  %v2970 = vunpack.c.h.b16 %v2143
  %v2971 = vunpack.c.l.b16 %v2144
  %v2972 = vunpack.c.h.b16 %v2144
  %v2973 = vunpack.c.l.b16 %v2145
  %v2974 = vunpack.c.h.b16 %v2145
  %v2975 = vunpack.c.l.b16 %v2146
  %v2976 = vunpack.c.h.b16 %v2146
  %v2977 = vunpack.c.l.b16 %v2147
  %v2978 = vunpack.c.h.b16 %v2147
  %v2979 = vunpack.c.l.b16 %v2148
  %v2980 = vunpack.c.h.b16 %v2148
  %v2981 = vunpack.c.l.b16 %v2149
  %v2982 = vunpack.c.h.b16 %v2149
  %v2983 = vunpack.c.l.b16 %v2150
  %v2984 = vunpack.c.h.b16 %v2150
  %v2985 = vunpack.c.l.b16 %v2151
  %v2986 = vunpack.c.h.b16 %v2151
  %v2987 = vunpack.c.l.b16 %v2152
  %v2988 = vunpack.c.h.b16 %v2152
  %v2989 = vunpack.c.l.b16 %v2153
  %v2990 = vunpack.c.h.b16 %v2153
  %v2991 = vunpack.c.l.b16 %v2154
  %v2992 = vunpack.c.h.b16 %v2154
  %v2993 = vunpack.c.l.b16 %v2155
  %v2994 = vunpack.c.h.b16 %v2155
  %v2995 = vunpack.c.l.b16 %v2156
  %v2996 = vunpack.c.h.b16 %v2156
  %v2997 = vunpack.c.l.b16 %v2157
  %v2998 = vunpack.c.h.b16 %v2157
  %v2999 = vunpack.c.l.b16 %v2158
  %v3000 = vunpack.c.h.b16 %v2158
  %v3001 = vunpack.c.l.b16 %v2159
  %v3002 = vunpack.c.h.b16 %v2159
  %v3003 = vunpack.c.l.b16 %v2160
  %v3004 = vunpack.c.h.b16 %v2160
  %v3005 = vunpack.c.l.b16 %v2161
  %v3006 = vunpack.c.h.b16 %v2161
  %v3007 = vunpack.c.l.b16 %v2162
  %v3008 = vunpack.c.h.b16 %v2162
  %v3009 = vunpack.c.l.b16 %v2163
  %v3010 = vunpack.c.h.b16 %v2163
  %v3011 = vunpack.c.l.b16 %v2164
  %v3012 = vunpack.c.h.b16 %v2164
  %v3013 = vunpack.c.l.b16 %v2165
  %v3014 = vunpack.c.h.b16 %v2165
  %v3015 = vunpack.c.l.b16 %v2166
  %v3016 = vunpack.c.h.b16 %v2166
  %v3017 = vunpack.c.l.b16 %v2167
  %v3018 = vunpack.c.h.b16 %v2167
  %v3019 = vunpack.c.l.b16 %v2168
  %v3020 = vunpack.c.h.b16 %v2168
  %v3021 = vunpack.c.l.b16 %v2169
  %v3022 = vunpack.c.h.b16 %v2169
  %v3023 = vunpack.c.l.b16 %v2170
  %v3024 = vunpack.c.h.b16 %v2170
  %v3025 = vunpack.c.l.b16 %v2171
  %v3026 = vunpack.c.h.b16 %v2171
  %v3027 = vunpack.c.l.b16 %v2172
  %v3028 = vunpack.c.h.b16 %v2172
  %v3029 = vunpack.c.l.b16 %v2173
  %v3030 = vunpack.c.h.b16 %v2173
  %v3031 = vunpack.c.l.b16 %v2174
  %v3032 = vunpack.c.h.b16 %v2174
  %v3033 = vunpack.c.l.b16 %v2175
  %v3034 = vunpack.c.h.b16 %v2175
  %v3035 = vunpack.c.l.b16 %v2176
  %v3036 = vunpack.c.h.b16 %v2176
  %v3037 = vunpack.c.l.b16 %v2177
  %v3038 = vunpack.c.h.b16 %v2177
  %v3039 = vunpack.c.l.b16 %v2178
  %v3040 = vunpack.c.h.b16 %v2178
  %v3041 = vunpack.c.l.b16 %v2179
  %v3042 = vunpack.c.h.b16 %v2179
  %v3043 = vunpack.c.l.b16 %v2180
  %v3044 = vunpack.c.h.b16 %v2180
  %v3045 = vunpack.c.l.b16 %v2181
  %v3046 = vunpack.c.h.b16 %v2181
  %v3047 = vunpack.c.l.b16 %v2182
  %v3048 = vunpack.c.h.b16 %v2182
  %v3049 = vunpack.c.l.b16 %v2183
  %v3050 = vunpack.c.h.b16 %v2183
  %v3051 = vunpack.c.l.b16 %v2184
  %v3052 = vunpack.c.h.b16 %v2184
  %v3053 = vunpack.c.l.b16 %v2185
  %v3054 = vunpack.c.h.b16 %v2185
  %v3055 = vunpack.c.l.b16 %v2186
  %v3056 = vunpack.c.h.b16 %v2186
  %v3057 = vunpack.c.l.b16 %v2187
  %v3058 = vunpack.c.h.b16 %v2187
  %v3059 = vunpack.c.l.b16 %v2188
  %v3060 = vunpack.c.h.b16 %v2188
  %v3061 = vunpack.c.l.b16 %v2189
  %v3062 = vunpack.c.h.b16 %v2189
  %v3063 = vunpack.c.l.b16 %v2190
  %v3064 = vunpack.c.h.b16 %v2190
  %v3065 = vunpack.c.l.b16 %v2191
  %v3066 = vunpack.c.h.b16 %v2191
  %v3067 = vunpack.c.l.b16 %v2192
  %v3068 = vunpack.c.h.b16 %v2192
  %v3069 = vunpack.c.l.b16 %v2193
  %v3070 = vunpack.c.h.b16 %v2193
  %v3071 = vunpack.c.l.b16 %v2194
  %v3072 = vunpack.c.h.b16 %v2194
  %v3073 = vunpack.c.l.b16 %v2195
  %v3074 = vunpack.c.h.b16 %v2195
  %v3075 = vunpack.c.l.b16 %v2196
  %v3076 = vunpack.c.h.b16 %v2196
  %v3077 = vunpack.c.l.b16 %v2197
  %v3078 = vunpack.c.h.b16 %v2197
  %v3079 = vunpack.c.l.b16 %v2198
  %v3080 = vunpack.c.h.b16 %v2198
  %v3081 = vunpack.c.l.b16 %v2199
  %v3082 = vunpack.c.h.b16 %v2199
  %v3083 = vunpack.c.l.b16 %v2200
  %v3084 = vunpack.c.h.b16 %v2200
  %v3085 = vunpack.c.l.b16 %v2201
  %v3086 = vunpack.c.h.b16 %v2201
  %v3087 = vunpack.c.l.b16 %v2202
  %v3088 = vunpack.c.h.b16 %v2202
  %v3089 = vunpack.c.l.b16 %v2203
  %v3090 = vunpack.c.h.b16 %v2203
  %v3091 = vunpack.c.l.b16 %v2204
  %v3092 = vunpack.c.h.b16 %v2204
  %v3093 = vunpack.c.l.b16 %v2205
  %v3094 = vunpack.c.h.b16 %v2205
  %v3095 = vunpack.c.l.b16 %v2206
  %v3096 = vunpack.c.h.b16 %v2206
  %v3097 = vunpack.c.l.b16 %v2207
  %v3098 = vunpack.c.h.b16 %v2207
  %v3099 = vunpack.c.l.b16 %v2208
  %v3100 = vunpack.c.h.b16 %v2208
  %v3101 = vunpack.c.l.b16 %v2209
  %v3102 = vunpack.c.h.b16 %v2209
  %v3103 = vunpack.c.l.b16 %v2210
  %v3104 = vunpack.c.h.b16 %v2210
  %v3105 = vunpack.c.l.b16 %v2211
  %v3106 = vunpack.c.h.b16 %v2211
  %v3107 = vunpack.c.l.b16 %v2212
  %v3108 = vunpack.c.h.b16 %v2212
  %v3109 = vunpack.c.l.b16 %v2213
  %v3110 = vunpack.c.h.b16 %v2213
  %v3111 = vunpack.c.l.b16 %v2214
  %v3112 = vunpack.c.h.b16 %v2214
  %v3113 = vunpack.c.l.b16 %v2215
  %v3114 = vunpack.c.h.b16 %v2215
  %v3115 = vunpack.c.l.b16 %v2216
  %v3116 = vunpack.c.h.b16 %v2216
  %v3117 = vunpack.c.l.b16 %v2217
  %v3118 = vunpack.c.h.b16 %v2217
  %v3119 = vunpack.c.l.b16 %v2218
  %v3120 = vunpack.c.h.b16 %v2218
  %v3121 = vunpack.c.l.b16 %v2219
  %v3122 = vunpack.c.h.b16 %v2219
  %v3123 = vunpack.c.l.b16 %v2220
  %v3124 = vunpack.c.h.b16 %v2220
  %v3125 = vunpack.c.l.b16 %v2221
  %v3126 = vunpack.c.h.b16 %v2221
  %v3127 = vunpack.c.l.b16 %v2222
  %v3128 = vunpack.c.h.b16 %v2222
  %v3129 = vunpack.c.l.b16 %v2223
  %v3130 = vunpack.c.h.b16 %v2223
  %v3131 = vunpack.c.l.b16 %v2224
  %v3132 = vunpack.c.h.b16 %v2224
  %v3133 = vunpack.c.l.b16 %v2225
  %v3134 = vunpack.c.h.b16 %v2225
  %v3135 = vunpack.c.l.b16 %v2226
  %v3136 = vunpack.c.h.b16 %v2226
  %v3137 = vunpack.c.l.b16 %v2227
  %v3138 = vunpack.c.h.b16 %v2227
  %v3139 = vunpack.c.l.b16 %v2228
  %v3140 = vunpack.c.h.b16 %v2228
  %v3141 = vunpack.c.l.b16 %v2229
  %v3142 = vunpack.c.h.b16 %v2229
  %v3143 = vunpack.c.l.b16 %v2230
  %v3144 = vunpack.c.h.b16 %v2230
  %v3145 = vunpack.c.l.b16 %v2231
  %v3146 = vunpack.c.h.b16 %v2231
  %v3147 = vunpack.c.l.b16 %v2232
  %v3148 = vunpack.c.h.b16 %v2232
  %v3149 = vunpack.c.l.b16 %v2233
  %v3150 = vunpack.c.h.b16 %v2233
  %v3151 = vunpack.c.l.b16 %v2234
  %v3152 = vunpack.c.h.b16 %v2234
  %v3153 = vunpack.c.l.b16 %v2235
  %v3154 = vunpack.c.h.b16 %v2235
  %v3155 = vunpack.c.l.b16 %v2236
  %v3156 = vunpack.c.h.b16 %v2236
  %v3157 = vunpack.c.l.b16 %v2237
  %v3158 = vunpack.c.h.b16 %v2237
  %v3159 = vunpack.c.l.b16 %v2238
  %v3160 = vunpack.c.h.b16 %v2238
  %v3161 = vunpack.c.l.b16 %v2239
  %v3162 = vunpack.c.h.b16 %v2239
  %v3163 = vunpack.c.l.b16 %v2240
  %v3164 = vunpack.c.h.b16 %v2240
  %v3165 = vunpack.c.l.b16 %v2241
  %v3166 = vunpack.c.h.b16 %v2241
  %v3167 = vunpack.c.l.b16 %v2242
  %v3168 = vunpack.c.h.b16 %v2242
  %v3169 = vunpack.c.l.b16 %v2243
  %v3170 = vunpack.c.h.b16 %v2243
  %v3171 = vunpack.c.l.b16 %v2244
  %v3172 = vunpack.c.h.b16 %v2244
  %v3173 = vunpack.c.l.b16 %v2245
  %v3174 = vunpack.c.h.b16 %v2245
  %v3175 = vunpack.c.l.b16 %v2246
  %v3176 = vunpack.c.h.b16 %v2246
  %v3177 = vunpack.c.l.b16 %v2247
  %v3178 = vunpack.c.h.b16 %v2247
  %v3179 = vunpack.c.l.b16 %v2248
  %v3180 = vunpack.c.h.b16 %v2248
  %v3181 = vunpack.c.l.b16 %v2249
  %v3182 = vunpack.c.h.b16 %v2249
  %v3183 = vunpack.c.l.b16 %v2250
  %v3184 = vunpack.c.h.b16 %v2250
  %v3185 = vunpack.c.l.b16 %v2251
  %v3186 = vunpack.c.h.b16 %v2251
  %v3187 = vunpack.c.l.b16 %v2252
  %v3188 = vunpack.c.h.b16 %v2252
  %v3189 = vunpack.c.l.b16 %v2253
  %v3190 = vunpack.c.h.b16 %v2253
  %v3191 = vunpack.c.l.b16 %v2254
  %v3192 = vunpack.c.h.b16 %v2254
  %v3193 = vunpack.c.l.b16 %v2255
  %v3194 = vunpack.c.h.b16 %v2255
  %v3195 = vunpack.c.l.b16 %v2256
  %v3196 = vunpack.c.h.b16 %v2256
  %v3197 = vunpack.c.l.b16 %v2257
  %v3198 = vunpack.c.h.b16 %v2257
  %v3199 = vunpack.c.l.b16 %v2258
  %v3200 = vunpack.c.h.b16 %v2258
  %v3201 = vunpack.c.l.b16 %v2259
  %v3202 = vunpack.c.h.b16 %v2259
  %v3203 = vunpack.c.l.b16 %v2260
  %v3204 = vunpack.c.h.b16 %v2260
  %v3205 = vunpack.c.l.b16 %v2261
  %v3206 = vunpack.c.h.b16 %v2261
  %v3207 = vunpack.c.l.b16 %v2262
  %v3208 = vunpack.c.h.b16 %v2262
  %v3209 = vunpack.c.l.b16 %v2263
  %v3210 = vunpack.c.h.b16 %v2263
  %v3211 = vunpack.c.l.b16 %v2264
  %v3212 = vunpack.c.h.b16 %v2264
  %v3213 = vunpack.c.l.b16 %v2265
  %v3214 = vunpack.c.h.b16 %v2265
  %v3215 = vunpack.c.l.b16 %v2266
  %v3216 = vunpack.c.h.b16 %v2266
  %v3217 = vunpack.c.l.b16 %v2267
  %v3218 = vunpack.c.h.b16 %v2267
  %v3219 = vunpack.c.l.b16 %v2268
  %v3220 = vunpack.c.h.b16 %v2268
  %v3221 = vunpack.c.l.b16 %v2269
  %v3222 = vunpack.c.h.b16 %v2269
  %v3223 = vunpack.c.l.b16 %v2270
  %v3224 = vunpack.c.h.b16 %v2270
  %v3225 = vunpack.c.l.b16 %v2271
  %v3226 = vunpack.c.h.b16 %v2271
  %v3227 = vunpack.c.l.b16 %v2272
  %v3228 = vunpack.c.h.b16 %v2272
  %v3229 = vunpack.c.l.b16 %v2273
  %v3230 = vunpack.c.h.b16 %v2273
  %v3231 = vunpack.c.l.b16 %v2274
  %v3232 = vunpack.c.h.b16 %v2274
  %v3233 = vunpack.c.l.b16 %v2275
  %v3234 = vunpack.c.h.b16 %v2275
  %v3235 = vunpack.c.l.b16 %v2276
  %v3236 = vunpack.c.h.b16 %v2276
  %v3237 = vunpack.c.l.b16 %v2277
  %v3238 = vunpack.c.h.b16 %v2277
  %v3239 = vunpack.c.l.b16 %v2278
  %v3240 = vunpack.c.h.b16 %v2278
  %v3241 = vunpack.c.l.b16 %v2279
  %v3242 = vunpack.c.h.b16 %v2279
  %v3243 = vunpack.c.l.b16 %v2280
  %v3244 = vunpack.c.h.b16 %v2280
  %v3245 = vunpack.c.l.b16 %v2281
  %v3246 = vunpack.c.h.b16 %v2281
  %v3247 = vunpack.c.l.b16 %v2282
  %v3248 = vunpack.c.h.b16 %v2282
  %v3249 = vunpack.c.l.b16 %v2283
  %v3250 = vunpack.c.h.b16 %v2283
  %v3251 = vunpack.c.l.b16 %v2284
  %v3252 = vunpack.c.h.b16 %v2284
  %v3253 = vunpack.c.l.b16 %v2285
  %v3254 = vunpack.c.h.b16 %v2285
  %v3255 = vunpack.c.l.b16 %v2286
  %v3256 = vunpack.c.h.b16 %v2286
  %v3257 = vunpack.c.l.b16 %v2287
  %v3258 = vunpack.c.h.b16 %v2287
  %v3259 = vunpack.c.l.b16 %v2288
  %v3260 = vunpack.c.h.b16 %v2288
  %v3261 = vunpack.c.l.b16 %v2289
  %v3262 = vunpack.c.h.b16 %v2289
  %v3263 = vunpack.c.l.b16 %v2290
  %v3264 = vunpack.c.h.b16 %v2290
  %v3265 = vunpack.c.l.b16 %v2291
  %v3266 = vunpack.c.h.b16 %v2291
  %v3267 = vunpack.c.l.b16 %v2292
  %v3268 = vunpack.c.h.b16 %v2292
  %v3269 = vunpack.c.l.b16 %v2293
  %v3270 = vunpack.c.h.b16 %v2293
  %v3271 = vunpack.c.l.b16 %v2294
  %v3272 = vunpack.c.h.b16 %v2294
  %v3273 = vunpack.c.l.b16 %v2295
  %v3274 = vunpack.c.h.b16 %v2295
  %v3275 = vunpack.c.l.b16 %v2296
  %v3276 = vunpack.c.h.b16 %v2296
  %v3277 = vunpack.c.l.b16 %v2297
  %v3278 = vunpack.c.h.b16 %v2297
  %v3279 = vunpack.c.l.b16 %v2298
  %v3280 = vunpack.c.h.b16 %v2298
  %v3281 = vunpack.c.l.b16 %v2299
  %v3282 = vunpack.c.h.b16 %v2299
  %v3283 = vunpack.c.l.b16 %v2300
  %v3284 = vunpack.c.h.b16 %v2300
  %v3285 = vpack.c.b16 %v2645, %v2629
  %v3286 = vpack.c.b16 %v2646, %v2630
  %v3287 = vpack.c.b16 %v2647, %v2631
  %v3288 = vpack.c.b16 %v2648, %v2632
  %v3289 = vpack.c.b16 %v2649, %v2633
  %v3290 = vpack.c.b16 %v2650, %v2634
  %v3291 = vpack.c.b16 %v2651, %v2635
  %v3292 = vpack.c.b16 %v2652, %v2636
  %v3293 = vpack.c.b16 %v2653, %v2637
  %v3294 = vpack.c.b16 %v2654, %v2638
  %v3295 = vpack.c.b16 %v2655, %v2639
  %v3296 = vpack.c.b16 %v2656, %v2640
  %v3297 = vpack.c.b16 %v2657, %v2641
  %v3298 = vpack.c.b16 %v2658, %v2642
  %v3299 = vpack.c.b16 %v2659, %v2643
  %v3300 = vpack.c.b16 %v2660, %v2644
  %v3301 = vpack.c.b16 %v2677, %v2661
  %v3302 = vpack.c.b16 %v2678, %v2662
  %v3303 = vpack.c.b16 %v2679, %v2663
  %v3304 = vpack.c.b16 %v2680, %v2664
  %v3305 = vpack.c.b16 %v2681, %v2665
  %v3306 = vpack.c.b16 %v2682, %v2666
  %v3307 = vpack.c.b16 %v2683, %v2667
  %v3308 = vpack.c.b16 %v2684, %v2668
  %v3309 = vpack.c.b16 %v2685, %v2669
  %v3310 = vpack.c.b16 %v2686, %v2670
  %v3311 = vpack.c.b16 %v2687, %v2671
  %v3312 = vpack.c.b16 %v2688, %v2672
  %v3313 = vpack.c.b16 %v2689, %v2673
  %v3314 = vpack.c.b16 %v2690, %v2674
  %v3315 = vpack.c.b16 %v2691, %v2675
  %v3316 = vpack.c.b16 %v2692, %v2676
  %v3317 = vpack.c.b16 %v2709, %v2693
  %v3318 = vpack.c.b16 %v2710, %v2694
  %v3319 = vpack.c.b16 %v2711, %v2695
  %v3320 = vpack.c.b16 %v2712, %v2696
  %v3321 = vpack.c.b16 %v2713, %v2697
  %v3322 = vpack.c.b16 %v2714, %v2698
  %v3323 = vpack.c.b16 %v2715, %v2699
  %v3324 = vpack.c.b16 %v2716, %v2700
  %v3325 = vpack.c.b16 %v2717, %v2701
  %v3326 = vpack.c.b16 %v2718, %v2702
  %v3327 = vpack.c.b16 %v2719, %v2703
  %v3328 = vpack.c.b16 %v2720, %v2704
  %v3329 = vpack.c.b16 %v2721, %v2705
  %v3330 = vpack.c.b16 %v2722, %v2706
  %v3331 = vpack.c.b16 %v2723, %v2707
  %v3332 = vpack.c.b16 %v2724, %v2708
  %v3333 = vpack.c.b16 %v2741, %v2725
  %v3334 = vpack.c.b16 %v2742, %v2726
  %v3335 = vpack.c.b16 %v2743, %v2727
  %v3336 = vpack.c.b16 %v2744, %v2728
  %v3337 = vpack.c.b16 %v2745, %v2729
  %v3338 = vpack.c.b16 %v2746, %v2730
  %v3339 = vpack.c.b16 %v2747, %v2731
  %v3340 = vpack.c.b16 %v2748, %v2732
  %v3341 = vpack.c.b16 %v2749, %v2733
  %v3342 = vpack.c.b16 %v2750, %v2734
  %v3343 = vpack.c.b16 %v2751, %v2735
  %v3344 = vpack.c.b16 %v2752, %v2736
  %v3345 = vpack.c.b16 %v2753, %v2737
  %v3346 = vpack.c.b16 %v2754, %v2738
  %v3347 = vpack.c.b16 %v2755, %v2739
  %v3348 = vpack.c.b16 %v2756, %v2740
  %v3349 = vpack.c.b16 %v2773, %v2757
  %v3350 = vpack.c.b16 %v2774, %v2758
  %v3351 = vpack.c.b16 %v2775, %v2759
  %v3352 = vpack.c.b16 %v2776, %v2760
  %v3353 = vpack.c.b16 %v2777, %v2761
  %v3354 = vpack.c.b16 %v2778, %v2762
  %v3355 = vpack.c.b16 %v2779, %v2763
  %v3356 = vpack.c.b16 %v2780, %v2764
  %v3357 = vpack.c.b16 %v2781, %v2765
  %v3358 = vpack.c.b16 %v2782, %v2766
  %v3359 = vpack.c.b16 %v2783, %v2767
  %v3360 = vpack.c.b16 %v2784, %v2768
  %v3361 = vpack.c.b16 %v2785, %v2769
  %v3362 = vpack.c.b16 %v2786, %v2770
  %v3363 = vpack.c.b16 %v2787, %v2771
  %v3364 = vpack.c.b16 %v2788, %v2772
  %v3365 = vpack.c.b16 %v2805, %v2789
  %v3366 = vpack.c.b16 %v2806, %v2790
  %v3367 = vpack.c.b16 %v2807, %v2791
  %v3368 = vpack.c.b16 %v2808, %v2792
  %v3369 = vpack.c.b16 %v2809, %v2793
  %v3370 = vpack.c.b16 %v2810, %v2794
  %v3371 = vpack.c.b16 %v2811, %v2795
  %v3372 = vpack.c.b16 %v2812, %v2796
  %v3373 = vpack.c.b16 %v2813, %v2797
  %v3374 = vpack.c.b16 %v2814, %v2798
  %v3375 = vpack.c.b16 %v2815, %v2799
  %v3376 = vpack.c.b16 %v2816, %v2800
  %v3377 = vpack.c.b16 %v2817, %v2801
  %v3378 = vpack.c.b16 %v2818, %v2802
  %v3379 = vpack.c.b16 %v2819, %v2803
  %v3380 = vpack.c.b16 %v2820, %v2804
  %v3381 = vpack.c.b16 %v2837, %v2821
  %v3382 = vpack.c.b16 %v2838, %v2822
  %v3383 = vpack.c.b16 %v2839, %v2823
  %v3384 = vpack.c.b16 %v2840, %v2824
  %v3385 = vpack.c.b16 %v2841, %v2825
  %v3386 = vpack.c.b16 %v2842, %v2826
  %v3387 = vpack.c.b16 %v2843, %v2827
  %v3388 = vpack.c.b16 %v2844, %v2828
  %v3389 = vpack.c.b16 %v2845, %v2829
  %v3390 = vpack.c.b16 %v2846, %v2830
  %v3391 = vpack.c.b16 %v2847, %v2831
  %v3392 = vpack.c.b16 %v2848, %v2832
  %v3393 = vpack.c.b16 %v2849, %v2833
  %v3394 = vpack.c.b16 %v2850, %v2834
  %v3395 = vpack.c.b16 %v2851, %v2835
  %v3396 = vpack.c.b16 %v2852, %v2836
  %v3397 = vpack.c.b16 %v2869, %v2853
  %v3398 = vpack.c.b16 %v2870, %v2854
  %v3399 = vpack.c.b16 %v2871, %v2855
  %v3400 = vpack.c.b16 %v2872, %v2856
  %v3401 = vpack.c.b16 %v2873, %v2857
  %v3402 = vpack.c.b16 %v2874, %v2858
  %v3403 = vpack.c.b16 %v2875, %v2859
  %v3404 = vpack.c.b16 %v2876, %v2860
  %v3405 = vpack.c.b16 %v2877, %v2861
  %v3406 = vpack.c.b16 %v2878, %v2862
  %v3407 = vpack.c.b16 %v2879, %v2863
  %v3408 = vpack.c.b16 %v2880, %v2864
  %v3409 = vpack.c.b16 %v2881, %v2865
  %v3410 = vpack.c.b16 %v2882, %v2866
  %v3411 = vpack.c.b16 %v2883, %v2867
  %v3412 = vpack.c.b16 %v2884, %v2868
  %v3413 = vpack.c.b16 %v2901, %v2885
  %v3414 = vpack.c.b16 %v2902, %v2886
  %v3415 = vpack.c.b16 %v2903, %v2887
  %v3416 = vpack.c.b16 %v2904, %v2888
  %v3417 = vpack.c.b16 %v2905, %v2889
  %v3418 = vpack.c.b16 %v2906, %v2890
  %v3419 = vpack.c.b16 %v2907, %v2891
  %v3420 = vpack.c.b16 %v2908, %v2892
  %v3421 = vpack.c.b16 %v2909, %v2893
  %v3422 = vpack.c.b16 %v2910, %v2894
  %v3423 = vpack.c.b16 %v2911, %v2895
  %v3424 = vpack.c.b16 %v2912, %v2896
  %v3425 = vpack.c.b16 %v2913, %v2897
  %v3426 = vpack.c.b16 %v2914, %v2898
  %v3427 = vpack.c.b16 %v2915, %v2899
  %v3428 = vpack.c.b16 %v2916, %v2900
  %v3429 = vpack.c.b16 %v2933, %v2917
  %v3430 = vpack.c.b16 %v2934, %v2918
  %v3431 = vpack.c.b16 %v2935, %v2919
  %v3432 = vpack.c.b16 %v2936, %v2920
  %v3433 = vpack.c.b16 %v2937, %v2921
  %v3434 = vpack.c.b16 %v2938, %v2922
  %v3435 = vpack.c.b16 %v2939, %v2923
  %v3436 = vpack.c.b16 %v2940, %v2924
  %v3437 = vpack.c.b16 %v2941, %v2925
  %v3438 = vpack.c.b16 %v2942, %v2926
  %v3439 = vpack.c.b16 %v2943, %v2927
  %v3440 = vpack.c.b16 %v2944, %v2928
  %v3441 = vpack.c.b16 %v2945, %v2929
  %v3442 = vpack.c.b16 %v2946, %v2930
  %v3443 = vpack.c.b16 %v2947, %v2931
  %v3444 = vpack.c.b16 %v2948, %v2932
  %v3445 = vpack.c.b16 %v2965, %v2949
  %v3446 = vpack.c.b16 %v2966, %v2950
  %v3447 = vpack.c.b16 %v2967, %v2951
  %v3448 = vpack.c.b16 %v2968, %v2952
  %v3449 = vpack.c.b16 %v2969, %v2953
  %v3450 = vpack.c.b16 %v2970, %v2954
  %v3451 = vpack.c.b16 %v2971, %v2955
  %v3452 = vpack.c.b16 %v2972, %v2956
  %v3453 = vpack.c.b16 %v2973, %v2957
  %v3454 = vpack.c.b16 %v2974, %v2958
  %v3455 = vpack.c.b16 %v2975, %v2959
  %v3456 = vpack.c.b16 %v2976, %v2960
  %v3457 = vpack.c.b16 %v2977, %v2961
  %v3458 = vpack.c.b16 %v2978, %v2962
  %v3459 = vpack.c.b16 %v2979, %v2963
  %v3460 = vpack.c.b16 %v2980, %v2964
  %v3461 = vpack.c.b16 %v2997, %v2981
  %v3462 = vpack.c.b16 %v2998, %v2982
  %v3463 = vpack.c.b16 %v2999, %v2983
  %v3464 = vpack.c.b16 %v3000, %v2984
  %v3465 = vpack.c.b16 %v3001, %v2985
  %v3466 = vpack.c.b16 %v3002, %v2986
  %v3467 = vpack.c.b16 %v3003, %v2987
  %v3468 = vpack.c.b16 %v3004, %v2988
  %v3469 = vpack.c.b16 %v3005, %v2989
  %v3470 = vpack.c.b16 %v3006, %v2990
  %v3471 = vpack.c.b16 %v3007, %v2991
  %v3472 = vpack.c.b16 %v3008, %v2992
  %v3473 = vpack.c.b16 %v3009, %v2993
  %v3474 = vpack.c.b16 %v3010, %v2994
  %v3475 = vpack.c.b16 %v3011, %v2995
  %v3476 = vpack.c.b16 %v3012, %v2996
  %v3477 = vpack.c.b16 %v3029, %v3013
  %v3478 = vpack.c.b16 %v3030, %v3014
  %v3479 = vpack.c.b16 %v3031, %v3015
  %v3480 = vpack.c.b16 %v3032, %v3016
  %v3481 = vpack.c.b16 %v3033, %v3017
  %v3482 = vpack.c.b16 %v3034, %v3018
  %v3483 = vpack.c.b16 %v3035, %v3019
  %v3484 = vpack.c.b16 %v3036, %v3020
  %v3485 = vpack.c.b16 %v3037, %v3021
  %v3486 = vpack.c.b16 %v3038, %v3022
  %v3487 = vpack.c.b16 %v3039, %v3023
  %v3488 = vpack.c.b16 %v3040, %v3024
  %v3489 = vpack.c.b16 %v3041, %v3025
  %v3490 = vpack.c.b16 %v3042, %v3026
  %v3491 = vpack.c.b16 %v3043, %v3027
  %v3492 = vpack.c.b16 %v3044, %v3028
  %v3493 = vpack.c.b16 %v3061, %v3045
  %v3494 = vpack.c.b16 %v3062, %v3046
  %v3495 = vpack.c.b16 %v3063, %v3047
  %v3496 = vpack.c.b16 %v3064, %v3048
  %v3497 = vpack.c.b16 %v3065, %v3049
  %v3498 = vpack.c.b16 %v3066, %v3050
  %v3499 = vpack.c.b16 %v3067, %v3051
  %v3500 = vpack.c.b16 %v3068, %v3052
  %v3501 = vpack.c.b16 %v3069, %v3053
  %v3502 = vpack.c.b16 %v3070, %v3054
  %v3503 = vpack.c.b16 %v3071, %v3055
  %v3504 = vpack.c.b16 %v3072, %v3056
  %v3505 = vpack.c.b16 %v3073, %v3057
  %v3506 = vpack.c.b16 %v3074, %v3058
  %v3507 = vpack.c.b16 %v3075, %v3059
  %v3508 = vpack.c.b16 %v3076, %v3060
  %v3509 = vpack.c.b16 %v3093, %v3077
  %v3510 = vpack.c.b16 %v3094, %v3078
  %v3511 = vpack.c.b16 %v3095, %v3079
  %v3512 = vpack.c.b16 %v3096, %v3080
  %v3513 = vpack.c.b16 %v3097, %v3081
  %v3514 = vpack.c.b16 %v3098, %v3082
  %v3515 = vpack.c.b16 %v3099, %v3083
  %v3516 = vpack.c.b16 %v3100, %v3084
  %v3517 = vpack.c.b16 %v3101, %v3085
  %v3518 = vpack.c.b16 %v3102, %v3086
  %v3519 = vpack.c.b16 %v3103, %v3087
  %v3520 = vpack.c.b16 %v3104, %v3088
  %v3521 = vpack.c.b16 %v3105, %v3089
  %v3522 = vpack.c.b16 %v3106, %v3090
  %v3523 = vpack.c.b16 %v3107, %v3091
  %v3524 = vpack.c.b16 %v3108, %v3092
  %v3525 = vpack.c.b16 %v3125, %v3109
  %v3526 = vpack.c.b16 %v3126, %v3110
  %v3527 = vpack.c.b16 %v3127, %v3111
  %v3528 = vpack.c.b16 %v3128, %v3112
  %v3529 = vpack.c.b16 %v3129, %v3113
  %v3530 = vpack.c.b16 %v3130, %v3114
  %v3531 = vpack.c.b16 %v3131, %v3115
  %v3532 = vpack.c.b16 %v3132, %v3116
  %v3533 = vpack.c.b16 %v3133, %v3117
  %v3534 = vpack.c.b16 %v3134, %v3118
  %v3535 = vpack.c.b16 %v3135, %v3119
  %v3536 = vpack.c.b16 %v3136, %v3120
  %v3537 = vpack.c.b16 %v3137, %v3121
  %v3538 = vpack.c.b16 %v3138, %v3122
  %v3539 = vpack.c.b16 %v3139, %v3123
  %v3540 = vpack.c.b16 %v3140, %v3124
  %v3541 = vpack.c.b16 %v3157, %v3141
  %v3542 = vpack.c.b16 %v3158, %v3142
  %v3543 = vpack.c.b16 %v3159, %v3143
  %v3544 = vpack.c.b16 %v3160, %v3144
  %v3545 = vpack.c.b16 %v3161, %v3145
  %v3546 = vpack.c.b16 %v3162, %v3146
  %v3547 = vpack.c.b16 %v3163, %v3147
  %v3548 = vpack.c.b16 %v3164, %v3148
  %v3549 = vpack.c.b16 %v3165, %v3149
  %v3550 = vpack.c.b16 %v3166, %v3150
  %v3551 = vpack.c.b16 %v3167, %v3151
  %v3552 = vpack.c.b16 %v3168, %v3152
  %v3553 = vpack.c.b16 %v3169, %v3153
  %v3554 = vpack.c.b16 %v3170, %v3154
  %v3555 = vpack.c.b16 %v3171, %v3155
  %v3556 = vpack.c.b16 %v3172, %v3156
  %v3557 = vpack.c.b16 %v3189, %v3173
  %v3558 = vpack.c.b16 %v3190, %v3174
  %v3559 = vpack.c.b16 %v3191, %v3175
  %v3560 = vpack.c.b16 %v3192, %v3176
  %v3561 = vpack.c.b16 %v3193, %v3177
  %v3562 = vpack.c.b16 %v3194, %v3178
  %v3563 = vpack.c.b16 %v3195, %v3179
  %v3564 = vpack.c.b16 %v3196, %v3180
  %v3565 = vpack.c.b16 %v3197, %v3181
  %v3566 = vpack.c.b16 %v3198, %v3182
  %v3567 = vpack.c.b16 %v3199, %v3183
  %v3568 = vpack.c.b16 %v3200, %v3184
  %v3569 = vpack.c.b16 %v3201, %v3185
  %v3570 = vpack.c.b16 %v3202, %v3186
  %v3571 = vpack.c.b16 %v3203, %v3187
  %v3572 = vpack.c.b16 %v3204, %v3188
  %v3573 = vpack.c.b16 %v3221, %v3205
  %v3574 = vpack.c.b16 %v3222, %v3206
  %v3575 = vpack.c.b16 %v3223, %v3207
  %v3576 = vpack.c.b16 %v3224, %v3208
  %v3577 = vpack.c.b16 %v3225, %v3209
  %v3578 = vpack.c.b16 %v3226, %v3210
  %v3579 = vpack.c.b16 %v3227, %v3211
  %v3580 = vpack.c.b16 %v3228, %v3212
  %v3581 = vpack.c.b16 %v3229, %v3213
  %v3582 = vpack.c.b16 %v3230, %v3214
  %v3583 = vpack.c.b16 %v3231, %v3215
  %v3584 = vpack.c.b16 %v3232, %v3216
  %v3585 = vpack.c.b16 %v3233, %v3217
  %v3586 = vpack.c.b16 %v3234, %v3218
  %v3587 = vpack.c.b16 %v3235, %v3219
  %v3588 = vpack.c.b16 %v3236, %v3220
  %v3589 = vpack.c.b16 %v3253, %v3237
  %v3590 = vpack.c.b16 %v3254, %v3238
  %v3591 = vpack.c.b16 %v3255, %v3239
  %v3592 = vpack.c.b16 %v3256, %v3240
  %v3593 = vpack.c.b16 %v3257, %v3241
  %v3594 = vpack.c.b16 %v3258, %v3242
  %v3595 = vpack.c.b16 %v3259, %v3243
  %v3596 = vpack.c.b16 %v3260, %v3244
  %v3597 = vpack.c.b16 %v3261, %v3245
  %v3598 = vpack.c.b16 %v3262, %v3246
  %v3599 = vpack.c.b16 %v3263, %v3247
  %v3600 = vpack.c.b16 %v3264, %v3248
  %v3601 = vpack.c.b16 %v3265, %v3249
  %v3602 = vpack.c.b16 %v3266, %v3250
  %v3603 = vpack.c.b16 %v3267, %v3251
  %v3604 = vpack.c.b16 %v3268, %v3252
  %v3605 = vpack.c.b16 %v3269, %v3269
  %v3606 = vpack.c.b16 %v3270, %v3270
  %v3607 = vpack.c.b16 %v3271, %v3271
  %v3608 = vpack.c.b16 %v3272, %v3272
  %v3609 = vpack.c.b16 %v3273, %v3273
  %v3610 = vpack.c.b16 %v3274, %v3274
  %v3611 = vpack.c.b16 %v3275, %v3275
  %v3612 = vpack.c.b16 %v3276, %v3276
  %v3613 = vpack.c.b16 %v3277, %v3277
  %v3614 = vpack.c.b16 %v3278, %v3278
  %v3615 = vpack.c.b16 %v3279, %v3279
  %v3616 = vpack.c.b16 %v3280, %v3280
  %v3617 = vpack.c.b16 %v3281, %v3281
  %v3618 = vpack.c.b16 %v3282, %v3282
  %v3619 = vpack.c.b16 %v3283, %v3283
  %v3620 = vpack.c.b16 %v3284, %v3284
  %vm3941 = vcmask 556032
  %v3943 = vsel %vm3941, %v1972, 0
  %vm3945 = vcmask 1041408
  %v3947 = vsel %vm3945, %v3605, 0
  %v3950 = vsel %vm3945, %v3606, 0
  %v3953 = vsel %vm3945, %v3607, 0
  %v3956 = vsel %vm3945, %v3608, 0
  %v3959 = vsel %vm3945, %v3609, 0
  %v3962 = vsel %vm3945, %v3610, 0
  %v3965 = vsel %vm3945, %v3611, 0
  %v3968 = vsel %vm3945, %v3612, 0
  %v3971 = vsel %vm3945, %v3613, 0
  %v3974 = vsel %vm3945, %v3614, 0
  %v3977 = vsel %vm3945, %v3615, 0
  %v3980 = vsel %vm3945, %v3616, 0
  %v3983 = vsel %vm3945, %v3617, 0
  %v3986 = vsel %vm3945, %v3618, 0
  %v3989 = vsel %vm3945, %v3619, 0
  %v3992 = vsel %vm3945, %v3620, 0
  %3994 = vmatprep.subr.bf16.mxu0 %v3286
  %3995 = vmatpush1.bf16.msra.mxu0 %v3285
  %3996 = vmatprep.subr.bf16.mxu0 %v3302
  %3997 = vmatpush1.bf16.msra.mxu0 %v3301
  %3998 = vmatprep.subr.bf16.mxu0 %v3318
  %3999 = vmatpush1.bf16.msra.mxu0 %v3317
  %4000 = vmatprep.subr.bf16.mxu0 %v3334
  %4001 = vmatpush1.bf16.msra.mxu0 %v3333
  %4002 = vmatprep.subr.bf16.mxu0 %v3350
  %4003 = vmatpush1.bf16.msra.mxu0 %v3349
  %4004 = vmatprep.subr.bf16.mxu0 %v3366
  %4005 = vmatpush1.bf16.msra.mxu0 %v3365
  %4006 = vmatprep.subr.bf16.mxu0 %v3382
  %4007 = vmatpush1.bf16.msra.mxu0 %v3381
  %4008 = vmatprep.subr.bf16.mxu0 %v3398
  %4009 = vmatpush1.bf16.msra.mxu0 %v3397
  %4010 = vmatprep.subr.bf16.mxu0 %v3414
  %4011 = vmatpush1.bf16.msra.mxu0 %v3413
  %4012 = vmatprep.subr.bf16.mxu0 %v3430
  %4013 = vmatpush1.bf16.msra.mxu0 %v3429
  %4014 = vmatprep.subr.bf16.mxu0 %v3446
  %4015 = vmatpush1.bf16.msra.mxu0 %v3445
  %4016 = vmatprep.subr.bf16.mxu0 %v3462
  %4017 = vmatpush1.bf16.msra.mxu0 %v3461
  %4018 = vmatprep.subr.bf16.mxu0 %v3478
  %4019 = vmatpush1.bf16.msra.mxu0 %v3477
  %4020 = vmatprep.subr.bf16.mxu0 %v3494
  %4021 = vmatpush1.bf16.msra.mxu0 %v3493
  %4022 = vmatprep.subr.bf16.mxu0 %v3510
  %4023 = vmatpush1.bf16.msra.mxu0 %v3509
  %4024 = vmatprep.subr.bf16.mxu0 %v3526
  %4025 = vmatpush1.bf16.msra.mxu0 %v3525
  %4026 = vmatprep.mubr.bf16.mxu0 %v1971
  %4027 = vmatmul.mubr.bf16.gmra.mrb[0].mxu0 %v1970
  %v4028 = vpop.f32.mrb[0].mxu0
  %v4029 = vadd.f32 0.0, %v4028
  %v4030 = vpop.f32.mrb[0].mxu0
  %v4031 = vadd.f32 0.0, %v4030
  %v4032 = vpop.f32.mrb[0].mxu0
  %v4033 = vpop.f32.mrb[0].mxu0
  %4034 = vdwg.mxu0
  %4035 = vmatprep.subr.bf16.mxu0 %v3542
  %4036 = vmatpush1.bf16.msra.mxu0 %v3541
  %4037 = vmatprep.subr.bf16.mxu0 %v3558
  %4038 = vmatpush1.bf16.msra.mxu0 %v3557
  %4039 = vmatprep.subr.bf16.mxu0 %v3574
  %4040 = vmatpush1.bf16.msra.mxu0 %v3573
  %4041 = vmatprep.subr.bf16.mxu0 %v3590
  %4042 = vmatpush1.bf16.msra.mxu0 %v3589
  %4043 = vmatprep.subr.bf16.mxu0 %v3950
  %4044 = vmatpush1.bf16.msra.mxu0 %v3947
  %4045 = vmatprep.subr.bf16.mxu0 0
  %4046 = vmatpush1.bf16.msra.mxu0 0
  %4047 = vmatprep.subr.bf16.mxu0 0
  %4048 = vmatpush1.bf16.msra.mxu0 0
  %4049 = vmatprep.subr.bf16.mxu0 0
  %4050 = vmatpush1.bf16.msra.mxu0 0
  %4051 = vmatprep.subr.bf16.mxu0 0
  %4052 = vmatpush1.bf16.msra.mxu0 0
  %4053 = vmatprep.subr.bf16.mxu0 0
  %4054 = vmatpush1.bf16.msra.mxu0 0
  %4055 = vmatprep.subr.bf16.mxu0 0
  %4056 = vmatpush1.bf16.msra.mxu0 0
  %4057 = vmatprep.subr.bf16.mxu0 0
  %4058 = vmatpush1.bf16.msra.mxu0 0
  %4059 = vmatprep.subr.bf16.mxu0 0
  %4060 = vmatpush1.bf16.msra.mxu0 0
  %4061 = vmatprep.subr.bf16.mxu0 0
  %4062 = vmatpush1.bf16.msra.mxu0 0
  %4063 = vmatprep.subr.bf16.mxu0 0
  %4064 = vmatpush1.bf16.msra.mxu0 0
  %4065 = vmatprep.subr.bf16.mxu0 0
  %4066 = vmatpush1.bf16.msra.mxu0 0
  %4067 = vmatprep.mubr.bf16.mxu0 0
  %4068 = vmatmul.mubr.bf16.gmra.mrb[0].mxu0 %v3943
  %v4069 = vpop.f32.mrb[0].mxu0
  %v4070 = vadd.f32 %v4029, %v4069
  %v4071 = vpop.f32.mrb[0].mxu0
  %v4072 = vadd.f32 %v4031, %v4071
  %v4073 = vpop.f32.mrb[0].mxu0
  %v4074 = vpop.f32.mrb[0].mxu0
  %4075 = vdwg.mxu0
  %4076 = vmatprep.subr.bf16.mxu0 %v3288
  %4077 = vmatpush1.bf16.msra.mxu0 %v3287
  %4078 = vmatprep.subr.bf16.mxu0 %v3304
  %4079 = vmatpush1.bf16.msra.mxu0 %v3303
  %4080 = vmatprep.subr.bf16.mxu0 %v3320
  %4081 = vmatpush1.bf16.msra.mxu0 %v3319
  %4082 = vmatprep.subr.bf16.mxu0 %v3336
  %4083 = vmatpush1.bf16.msra.mxu0 %v3335
  %4084 = vmatprep.subr.bf16.mxu0 %v3352
  %4085 = vmatpush1.bf16.msra.mxu0 %v3351
  %4086 = vmatprep.subr.bf16.mxu0 %v3368
  %4087 = vmatpush1.bf16.msra.mxu0 %v3367
  %4088 = vmatprep.subr.bf16.mxu0 %v3384
  %4089 = vmatpush1.bf16.msra.mxu0 %v3383
  %4090 = vmatprep.subr.bf16.mxu0 %v3400
  %4091 = vmatpush1.bf16.msra.mxu0 %v3399
  %4092 = vmatprep.subr.bf16.mxu0 %v3416
  %4093 = vmatpush1.bf16.msra.mxu0 %v3415
  %4094 = vmatprep.subr.bf16.mxu0 %v3432
  %4095 = vmatpush1.bf16.msra.mxu0 %v3431
  %4096 = vmatprep.subr.bf16.mxu0 %v3448
  %4097 = vmatpush1.bf16.msra.mxu0 %v3447
  %4098 = vmatprep.subr.bf16.mxu0 %v3464
  %4099 = vmatpush1.bf16.msra.mxu0 %v3463
  %4100 = vmatprep.subr.bf16.mxu0 %v3480
  %4101 = vmatpush1.bf16.msra.mxu0 %v3479
  %4102 = vmatprep.subr.bf16.mxu0 %v3496
  %4103 = vmatpush1.bf16.msra.mxu0 %v3495
  %4104 = vmatprep.subr.bf16.mxu0 %v3512
  %4105 = vmatpush1.bf16.msra.mxu0 %v3511
  %4106 = vmatprep.subr.bf16.mxu0 %v3528
  %4107 = vmatpush1.bf16.msra.mxu0 %v3527
  %4108 = vmatprep.mubr.bf16.mxu0 %v1971
  %4109 = vmatmul.mubr.bf16.gmra.mrb[0].mxu0 %v1970
  %v4110 = vpop.f32.mrb[0].mxu0
  %v4111 = vadd.f32 0.0, %v4110
  %v4112 = vpop.f32.mrb[0].mxu0
  %v4113 = vadd.f32 0.0, %v4112
  %v4114 = vpop.f32.mrb[0].mxu0
  %v4115 = vpop.f32.mrb[0].mxu0
  %4116 = vdwg.mxu0
  %4117 = vmatprep.subr.bf16.mxu0 %v3544
  %4118 = vmatpush1.bf16.msra.mxu0 %v3543
  %4119 = vmatprep.subr.bf16.mxu0 %v3560
  %4120 = vmatpush1.bf16.msra.mxu0 %v3559
  %4121 = vmatprep.subr.bf16.mxu0 %v3576
  %4122 = vmatpush1.bf16.msra.mxu0 %v3575
  %4123 = vmatprep.subr.bf16.mxu0 %v3592
  %4124 = vmatpush1.bf16.msra.mxu0 %v3591
  %4125 = vmatprep.subr.bf16.mxu0 %v3956
  %4126 = vmatpush1.bf16.msra.mxu0 %v3953
  %4127 = vmatprep.subr.bf16.mxu0 0
  %4128 = vmatpush1.bf16.msra.mxu0 0
  %4129 = vmatprep.subr.bf16.mxu0 0
  %4130 = vmatpush1.bf16.msra.mxu0 0
  %4131 = vmatprep.subr.bf16.mxu0 0
  %4132 = vmatpush1.bf16.msra.mxu0 0
  %4133 = vmatprep.subr.bf16.mxu0 0
  %4134 = vmatpush1.bf16.msra.mxu0 0
  %4135 = vmatprep.subr.bf16.mxu0 0
  %4136 = vmatpush1.bf16.msra.mxu0 0
  %4137 = vmatprep.subr.bf16.mxu0 0
  %4138 = vmatpush1.bf16.msra.mxu0 0
  %4139 = vmatprep.subr.bf16.mxu0 0
  %4140 = vmatpush1.bf16.msra.mxu0 0
  %4141 = vmatprep.subr.bf16.mxu0 0
  %4142 = vmatpush1.bf16.msra.mxu0 0
  %4143 = vmatprep.subr.bf16.mxu0 0
  %4144 = vmatpush1.bf16.msra.mxu0 0
  %4145 = vmatprep.subr.bf16.mxu0 0
  %4146 = vmatpush1.bf16.msra.mxu0 0
  %4147 = vmatprep.subr.bf16.mxu0 0
  %4148 = vmatpush1.bf16.msra.mxu0 0
  %4149 = vmatprep.mubr.bf16.mxu0 0
  %4150 = vmatmul.mubr.bf16.gmra.mrb[0].mxu0 %v3943
  %v4151 = vpop.f32.mrb[0].mxu0
  %v4152 = vadd.f32 %v4111, %v4151
  %v4153 = vpop.f32.mrb[0].mxu0
  %v4154 = vadd.f32 %v4113, %v4153
  %v4155 = vpop.f32.mrb[0].mxu0
  %v4156 = vpop.f32.mrb[0].mxu0
  %4157 = vdwg.mxu0
  %4158 = vmatprep.subr.bf16.mxu0 %v3290
  %4159 = vmatpush1.bf16.msra.mxu0 %v3289
  %4160 = vmatprep.subr.bf16.mxu0 %v3306
  %4161 = vmatpush1.bf16.msra.mxu0 %v3305
  %4162 = vmatprep.subr.bf16.mxu0 %v3322
  %4163 = vmatpush1.bf16.msra.mxu0 %v3321
  %4164 = vmatprep.subr.bf16.mxu0 %v3338
  %4165 = vmatpush1.bf16.msra.mxu0 %v3337
  %4166 = vmatprep.subr.bf16.mxu0 %v3354
  %4167 = vmatpush1.bf16.msra.mxu0 %v3353
  %4168 = vmatprep.subr.bf16.mxu0 %v3370
  %4169 = vmatpush1.bf16.msra.mxu0 %v3369
  %4170 = vmatprep.subr.bf16.mxu0 %v3386
  %4171 = vmatpush1.bf16.msra.mxu0 %v3385
  %4172 = vmatprep.subr.bf16.mxu0 %v3402
  %4173 = vmatpush1.bf16.msra.mxu0 %v3401
  %4174 = vmatprep.subr.bf16.mxu0 %v3418
  %4175 = vmatpush1.bf16.msra.mxu0 %v3417
  %4176 = vmatprep.subr.bf16.mxu0 %v3434
  %4177 = vmatpush1.bf16.msra.mxu0 %v3433
  %4178 = vmatprep.subr.bf16.mxu0 %v3450
  %4179 = vmatpush1.bf16.msra.mxu0 %v3449
  %4180 = vmatprep.subr.bf16.mxu0 %v3466
  %4181 = vmatpush1.bf16.msra.mxu0 %v3465
  %4182 = vmatprep.subr.bf16.mxu0 %v3482
  %4183 = vmatpush1.bf16.msra.mxu0 %v3481
  %4184 = vmatprep.subr.bf16.mxu0 %v3498
  %4185 = vmatpush1.bf16.msra.mxu0 %v3497
  %4186 = vmatprep.subr.bf16.mxu0 %v3514
  %4187 = vmatpush1.bf16.msra.mxu0 %v3513
  %4188 = vmatprep.subr.bf16.mxu0 %v3530
  %4189 = vmatpush1.bf16.msra.mxu0 %v3529
  %4190 = vmatprep.mubr.bf16.mxu0 %v1971
  %4191 = vmatmul.mubr.bf16.gmra.mrb[0].mxu0 %v1970
  %v4192 = vpop.f32.mrb[0].mxu0
  %v4193 = vadd.f32 0.0, %v4192
  %v4194 = vpop.f32.mrb[0].mxu0
  %v4195 = vadd.f32 0.0, %v4194
  %v4196 = vpop.f32.mrb[0].mxu0
  %v4197 = vpop.f32.mrb[0].mxu0
  %4198 = vdwg.mxu0
  %4199 = vmatprep.subr.bf16.mxu0 %v3546
  %4200 = vmatpush1.bf16.msra.mxu0 %v3545
  %4201 = vmatprep.subr.bf16.mxu0 %v3562
  %4202 = vmatpush1.bf16.msra.mxu0 %v3561
  %4203 = vmatprep.subr.bf16.mxu0 %v3578
  %4204 = vmatpush1.bf16.msra.mxu0 %v3577
  %4205 = vmatprep.subr.bf16.mxu0 %v3594
  %4206 = vmatpush1.bf16.msra.mxu0 %v3593
  %4207 = vmatprep.subr.bf16.mxu0 %v3962
  %4208 = vmatpush1.bf16.msra.mxu0 %v3959
  %4209 = vmatprep.subr.bf16.mxu0 0
  %4210 = vmatpush1.bf16.msra.mxu0 0
  %4211 = vmatprep.subr.bf16.mxu0 0
  %4212 = vmatpush1.bf16.msra.mxu0 0
  %4213 = vmatprep.subr.bf16.mxu0 0
  %4214 = vmatpush1.bf16.msra.mxu0 0
  %4215 = vmatprep.subr.bf16.mxu0 0
  %4216 = vmatpush1.bf16.msra.mxu0 0
  %4217 = vmatprep.subr.bf16.mxu0 0
  %4218 = vmatpush1.bf16.msra.mxu0 0
  %4219 = vmatprep.subr.bf16.mxu0 0
  %4220 = vmatpush1.bf16.msra.mxu0 0
  %4221 = vmatprep.subr.bf16.mxu0 0
  %4222 = vmatpush1.bf16.msra.mxu0 0
  %4223 = vmatprep.subr.bf16.mxu0 0
  %4224 = vmatpush1.bf16.msra.mxu0 0
  %4225 = vmatprep.subr.bf16.mxu0 0
  %4226 = vmatpush1.bf16.msra.mxu0 0
  %4227 = vmatprep.subr.bf16.mxu0 0
  %4228 = vmatpush1.bf16.msra.mxu0 0
  %4229 = vmatprep.subr.bf16.mxu0 0
  %4230 = vmatpush1.bf16.msra.mxu0 0
  %4231 = vmatprep.mubr.bf16.mxu0 0
  %4232 = vmatmul.mubr.bf16.gmra.mrb[0].mxu0 %v3943
  %v4233 = vpop.f32.mrb[0].mxu0
  %v4234 = vadd.f32 %v4193, %v4233
  %v4235 = vpop.f32.mrb[0].mxu0
  %v4236 = vadd.f32 %v4195, %v4235
  %v4237 = vpop.f32.mrb[0].mxu0
  %v4238 = vpop.f32.mrb[0].mxu0
  %4239 = vdwg.mxu0
  %4240 = vmatprep.subr.bf16.mxu0 %v3292
  %4241 = vmatpush1.bf16.msra.mxu0 %v3291
  %4242 = vmatprep.subr.bf16.mxu0 %v3308
  %4243 = vmatpush1.bf16.msra.mxu0 %v3307
  %4244 = vmatprep.subr.bf16.mxu0 %v3324
  %4245 = vmatpush1.bf16.msra.mxu0 %v3323
  %4246 = vmatprep.subr.bf16.mxu0 %v3340
  %4247 = vmatpush1.bf16.msra.mxu0 %v3339
  %4248 = vmatprep.subr.bf16.mxu0 %v3356
  %4249 = vmatpush1.bf16.msra.mxu0 %v3355
  %4250 = vmatprep.subr.bf16.mxu0 %v3372
  %4251 = vmatpush1.bf16.msra.mxu0 %v3371
  %4252 = vmatprep.subr.bf16.mxu0 %v3388
  %4253 = vmatpush1.bf16.msra.mxu0 %v3387
  %4254 = vmatprep.subr.bf16.mxu0 %v3404
  %4255 = vmatpush1.bf16.msra.mxu0 %v3403
  %4256 = vmatprep.subr.bf16.mxu0 %v3420
  %4257 = vmatpush1.bf16.msra.mxu0 %v3419
  %4258 = vmatprep.subr.bf16.mxu0 %v3436
  %4259 = vmatpush1.bf16.msra.mxu0 %v3435
  %4260 = vmatprep.subr.bf16.mxu0 %v3452
  %4261 = vmatpush1.bf16.msra.mxu0 %v3451
  %4262 = vmatprep.subr.bf16.mxu0 %v3468
  %4263 = vmatpush1.bf16.msra.mxu0 %v3467
  %4264 = vmatprep.subr.bf16.mxu0 %v3484
  %4265 = vmatpush1.bf16.msra.mxu0 %v3483
  %4266 = vmatprep.subr.bf16.mxu0 %v3500
  %4267 = vmatpush1.bf16.msra.mxu0 %v3499
  %4268 = vmatprep.subr.bf16.mxu0 %v3516
  %4269 = vmatpush1.bf16.msra.mxu0 %v3515
  %4270 = vmatprep.subr.bf16.mxu0 %v3532
  %4271 = vmatpush1.bf16.msra.mxu0 %v3531
  %4272 = vmatprep.mubr.bf16.mxu0 %v1971
  %4273 = vmatmul.mubr.bf16.gmra.mrb[0].mxu0 %v1970
  %v4274 = vpop.f32.mrb[0].mxu0
  %v4275 = vadd.f32 0.0, %v4274
  %v4276 = vpop.f32.mrb[0].mxu0
  %v4277 = vadd.f32 0.0, %v4276
  %v4278 = vpop.f32.mrb[0].mxu0
  %v4279 = vpop.f32.mrb[0].mxu0
  %4280 = vdwg.mxu0
  %4281 = vmatprep.subr.bf16.mxu0 %v3548
  %4282 = vmatpush1.bf16.msra.mxu0 %v3547
  %4283 = vmatprep.subr.bf16.mxu0 %v3564
  %4284 = vmatpush1.bf16.msra.mxu0 %v3563
  %4285 = vmatprep.subr.bf16.mxu0 %v3580
  %4286 = vmatpush1.bf16.msra.mxu0 %v3579
  %4287 = vmatprep.subr.bf16.mxu0 %v3596
  %4288 = vmatpush1.bf16.msra.mxu0 %v3595
  %4289 = vmatprep.subr.bf16.mxu0 %v3968
  %4290 = vmatpush1.bf16.msra.mxu0 %v3965
  %4291 = vmatprep.subr.bf16.mxu0 0
  %4292 = vmatpush1.bf16.msra.mxu0 0
  %4293 = vmatprep.subr.bf16.mxu0 0
  %4294 = vmatpush1.bf16.msra.mxu0 0
  %4295 = vmatprep.subr.bf16.mxu0 0
  %4296 = vmatpush1.bf16.msra.mxu0 0
  %4297 = vmatprep.subr.bf16.mxu0 0
  %4298 = vmatpush1.bf16.msra.mxu0 0
  %4299 = vmatprep.subr.bf16.mxu0 0
  %4300 = vmatpush1.bf16.msra.mxu0 0
  %4301 = vmatprep.subr.bf16.mxu0 0
  %4302 = vmatpush1.bf16.msra.mxu0 0
  %4303 = vmatprep.subr.bf16.mxu0 0
  %4304 = vmatpush1.bf16.msra.mxu0 0
  %4305 = vmatprep.subr.bf16.mxu0 0
  %4306 = vmatpush1.bf16.msra.mxu0 0
  %4307 = vmatprep.subr.bf16.mxu0 0
  %4308 = vmatpush1.bf16.msra.mxu0 0
  %4309 = vmatprep.subr.bf16.mxu0 0
  %4310 = vmatpush1.bf16.msra.mxu0 0
  %4311 = vmatprep.subr.bf16.mxu0 0
  %4312 = vmatpush1.bf16.msra.mxu0 0
  %4313 = vmatprep.mubr.bf16.mxu0 0
  %4314 = vmatmul.mubr.bf16.gmra.mrb[0].mxu0 %v3943
  %v4315 = vpop.f32.mrb[0].mxu0
  %v4316 = vadd.f32 %v4275, %v4315
  %v4317 = vpop.f32.mrb[0].mxu0
  %v4318 = vadd.f32 %v4277, %v4317
  %v4319 = vpop.f32.mrb[0].mxu0
  %v4320 = vpop.f32.mrb[0].mxu0
  %4321 = vdwg.mxu0
  %4322 = vmatprep.subr.bf16.mxu0 %v3294
  %4323 = vmatpush1.bf16.msra.mxu0 %v3293
  %4324 = vmatprep.subr.bf16.mxu0 %v3310
  %4325 = vmatpush1.bf16.msra.mxu0 %v3309
  %4326 = vmatprep.subr.bf16.mxu0 %v3326
  %4327 = vmatpush1.bf16.msra.mxu0 %v3325
  %4328 = vmatprep.subr.bf16.mxu0 %v3342
  %4329 = vmatpush1.bf16.msra.mxu0 %v3341
  %4330 = vmatprep.subr.bf16.mxu0 %v3358
  %4331 = vmatpush1.bf16.msra.mxu0 %v3357
  %4332 = vmatprep.subr.bf16.mxu0 %v3374
  %4333 = vmatpush1.bf16.msra.mxu0 %v3373
  %4334 = vmatprep.subr.bf16.mxu0 %v3390
  %4335 = vmatpush1.bf16.msra.mxu0 %v3389
  %4336 = vmatprep.subr.bf16.mxu0 %v3406
  %4337 = vmatpush1.bf16.msra.mxu0 %v3405
  %4338 = vmatprep.subr.bf16.mxu0 %v3422
  %4339 = vmatpush1.bf16.msra.mxu0 %v3421
  %4340 = vmatprep.subr.bf16.mxu0 %v3438
  %4341 = vmatpush1.bf16.msra.mxu0 %v3437
  %4342 = vmatprep.subr.bf16.mxu0 %v3454
  %4343 = vmatpush1.bf16.msra.mxu0 %v3453
  %4344 = vmatprep.subr.bf16.mxu0 %v3470
  %4345 = vmatpush1.bf16.msra.mxu0 %v3469
  %4346 = vmatprep.subr.bf16.mxu0 %v3486
  %4347 = vmatpush1.bf16.msra.mxu0 %v3485
  %4348 = vmatprep.subr.bf16.mxu0 %v3502
  %4349 = vmatpush1.bf16.msra.mxu0 %v3501
  %4350 = vmatprep.subr.bf16.mxu0 %v3518
  %4351 = vmatpush1.bf16.msra.mxu0 %v3517
  %4352 = vmatprep.subr.bf16.mxu0 %v3534
  %4353 = vmatpush1.bf16.msra.mxu0 %v3533
  %4354 = vmatprep.mubr.bf16.mxu0 %v1971
  %4355 = vmatmul.mubr.bf16.gmra.mrb[0].mxu0 %v1970
  %v4356 = vpop.f32.mrb[0].mxu0
  %v4357 = vadd.f32 0.0, %v4356
  %v4358 = vpop.f32.mrb[0].mxu0
  %v4359 = vadd.f32 0.0, %v4358
  %v4360 = vpop.f32.mrb[0].mxu0
  %v4361 = vpop.f32.mrb[0].mxu0
  %4362 = vdwg.mxu0
  %4363 = vmatprep.subr.bf16.mxu0 %v3550
  %4364 = vmatpush1.bf16.msra.mxu0 %v3549
  %4365 = vmatprep.subr.bf16.mxu0 %v3566
  %4366 = vmatpush1.bf16.msra.mxu0 %v3565
  %4367 = vmatprep.subr.bf16.mxu0 %v3582
  %4368 = vmatpush1.bf16.msra.mxu0 %v3581
  %4369 = vmatprep.subr.bf16.mxu0 %v3598
  %4370 = vmatpush1.bf16.msra.mxu0 %v3597
  %4371 = vmatprep.subr.bf16.mxu0 %v3974
  %4372 = vmatpush1.bf16.msra.mxu0 %v3971
  %4373 = vmatprep.subr.bf16.mxu0 0
  %4374 = vmatpush1.bf16.msra.mxu0 0
  %4375 = vmatprep.subr.bf16.mxu0 0
  %4376 = vmatpush1.bf16.msra.mxu0 0
  %4377 = vmatprep.subr.bf16.mxu0 0
  %4378 = vmatpush1.bf16.msra.mxu0 0
  %4379 = vmatprep.subr.bf16.mxu0 0
  %4380 = vmatpush1.bf16.msra.mxu0 0
  %4381 = vmatprep.subr.bf16.mxu0 0
  %4382 = vmatpush1.bf16.msra.mxu0 0
  %4383 = vmatprep.subr.bf16.mxu0 0
  %4384 = vmatpush1.bf16.msra.mxu0 0
  %4385 = vmatprep.subr.bf16.mxu0 0
  %4386 = vmatpush1.bf16.msra.mxu0 0
  %4387 = vmatprep.subr.bf16.mxu0 0
  %4388 = vmatpush1.bf16.msra.mxu0 0
  %4389 = vmatprep.subr.bf16.mxu0 0
  %4390 = vmatpush1.bf16.msra.mxu0 0
  %4391 = vmatprep.subr.bf16.mxu0 0
  %4392 = vmatpush1.bf16.msra.mxu0 0
  %4393 = vmatprep.subr.bf16.mxu0 0
  %4394 = vmatpush1.bf16.msra.mxu0 0
  %4395 = vmatprep.mubr.bf16.mxu0 0
  %4396 = vmatmul.mubr.bf16.gmra.mrb[0].mxu0 %v3943
  %v4397 = vpop.f32.mrb[0].mxu0
  %v4398 = vadd.f32 %v4357, %v4397
  %v4399 = vpop.f32.mrb[0].mxu0
  %v4400 = vadd.f32 %v4359, %v4399
  %v4401 = vpop.f32.mrb[0].mxu0
  %v4402 = vpop.f32.mrb[0].mxu0
  %4403 = vdwg.mxu0
  %4404 = vmatprep.subr.bf16.mxu0 %v3296
  %4405 = vmatpush1.bf16.msra.mxu0 %v3295
  %4406 = vmatprep.subr.bf16.mxu0 %v3312
  %4407 = vmatpush1.bf16.msra.mxu0 %v3311
  %4408 = vmatprep.subr.bf16.mxu0 %v3328
  %4409 = vmatpush1.bf16.msra.mxu0 %v3327
  %4410 = vmatprep.subr.bf16.mxu0 %v3344
  %4411 = vmatpush1.bf16.msra.mxu0 %v3343
  %4412 = vmatprep.subr.bf16.mxu0 %v3360
  %4413 = vmatpush1.bf16.msra.mxu0 %v3359
  %4414 = vmatprep.subr.bf16.mxu0 %v3376
  %4415 = vmatpush1.bf16.msra.mxu0 %v3375
  %4416 = vmatprep.subr.bf16.mxu0 %v3392
  %4417 = vmatpush1.bf16.msra.mxu0 %v3391
  %4418 = vmatprep.subr.bf16.mxu0 %v3408
  %4419 = vmatpush1.bf16.msra.mxu0 %v3407
  %4420 = vmatprep.subr.bf16.mxu0 %v3424
  %4421 = vmatpush1.bf16.msra.mxu0 %v3423
  %4422 = vmatprep.subr.bf16.mxu0 %v3440
  %4423 = vmatpush1.bf16.msra.mxu0 %v3439
  %4424 = vmatprep.subr.bf16.mxu0 %v3456
  %4425 = vmatpush1.bf16.msra.mxu0 %v3455
  %4426 = vmatprep.subr.bf16.mxu0 %v3472
  %4427 = vmatpush1.bf16.msra.mxu0 %v3471
  %4428 = vmatprep.subr.bf16.mxu0 %v3488
  %4429 = vmatpush1.bf16.msra.mxu0 %v3487
  %4430 = vmatprep.subr.bf16.mxu0 %v3504
  %4431 = vmatpush1.bf16.msra.mxu0 %v3503
  %4432 = vmatprep.subr.bf16.mxu0 %v3520
  %4433 = vmatpush1.bf16.msra.mxu0 %v3519
  %4434 = vmatprep.subr.bf16.mxu0 %v3536
  %4435 = vmatpush1.bf16.msra.mxu0 %v3535
  %4436 = vmatprep.mubr.bf16.mxu0 %v1971
  %4437 = vmatmul.mubr.bf16.gmra.mrb[0].mxu0 %v1970
  %v4438 = vpop.f32.mrb[0].mxu0
  %v4439 = vadd.f32 0.0, %v4438
  %v4440 = vpop.f32.mrb[0].mxu0
  %v4441 = vadd.f32 0.0, %v4440
  %v4442 = vpop.f32.mrb[0].mxu0
  %v4443 = vpop.f32.mrb[0].mxu0
  %4444 = vdwg.mxu0
  %4445 = vmatprep.subr.bf16.mxu0 %v3552
  %4446 = vmatpush1.bf16.msra.mxu0 %v3551
  %4447 = vmatprep.subr.bf16.mxu0 %v3568
  %4448 = vmatpush1.bf16.msra.mxu0 %v3567
  %4449 = vmatprep.subr.bf16.mxu0 %v3584
  %4450 = vmatpush1.bf16.msra.mxu0 %v3583
  %4451 = vmatprep.subr.bf16.mxu0 %v3600
  %4452 = vmatpush1.bf16.msra.mxu0 %v3599
  %4453 = vmatprep.subr.bf16.mxu0 %v3980
  %4454 = vmatpush1.bf16.msra.mxu0 %v3977
  %4455 = vmatprep.subr.bf16.mxu0 0
  %4456 = vmatpush1.bf16.msra.mxu0 0
  %4457 = vmatprep.subr.bf16.mxu0 0
  %4458 = vmatpush1.bf16.msra.mxu0 0
  %4459 = vmatprep.subr.bf16.mxu0 0
  %4460 = vmatpush1.bf16.msra.mxu0 0
  %4461 = vmatprep.subr.bf16.mxu0 0
  %4462 = vmatpush1.bf16.msra.mxu0 0
  %4463 = vmatprep.subr.bf16.mxu0 0
  %4464 = vmatpush1.bf16.msra.mxu0 0
  %4465 = vmatprep.subr.bf16.mxu0 0
  %4466 = vmatpush1.bf16.msra.mxu0 0
  %4467 = vmatprep.subr.bf16.mxu0 0
  %4468 = vmatpush1.bf16.msra.mxu0 0
  %4469 = vmatprep.subr.bf16.mxu0 0
  %4470 = vmatpush1.bf16.msra.mxu0 0
  %4471 = vmatprep.subr.bf16.mxu0 0
  %4472 = vmatpush1.bf16.msra.mxu0 0
  %4473 = vmatprep.subr.bf16.mxu0 0
  %4474 = vmatpush1.bf16.msra.mxu0 0
  %4475 = vmatprep.subr.bf16.mxu0 0
  %4476 = vmatpush1.bf16.msra.mxu0 0
  %4477 = vmatprep.mubr.bf16.mxu0 0
  %4478 = vmatmul.mubr.bf16.gmra.mrb[0].mxu0 %v3943
  %v4479 = vpop.f32.mrb[0].mxu0
  %v4480 = vadd.f32 %v4439, %v4479
  %v4481 = vpop.f32.mrb[0].mxu0
  %v4482 = vadd.f32 %v4441, %v4481
  %v4483 = vpop.f32.mrb[0].mxu0
  %v4484 = vpop.f32.mrb[0].mxu0
  %4485 = vdwg.mxu0
  %4486 = vmatprep.subr.bf16.mxu0 %v3298
  %4487 = vmatpush1.bf16.msra.mxu0 %v3297
  %4488 = vmatprep.subr.bf16.mxu0 %v3314
  %4489 = vmatpush1.bf16.msra.mxu0 %v3313
  %4490 = vmatprep.subr.bf16.mxu0 %v3330
  %4491 = vmatpush1.bf16.msra.mxu0 %v3329
  %4492 = vmatprep.subr.bf16.mxu0 %v3346
  %4493 = vmatpush1.bf16.msra.mxu0 %v3345
  %4494 = vmatprep.subr.bf16.mxu0 %v3362
  %4495 = vmatpush1.bf16.msra.mxu0 %v3361
  %4496 = vmatprep.subr.bf16.mxu0 %v3378
  %4497 = vmatpush1.bf16.msra.mxu0 %v3377
  %4498 = vmatprep.subr.bf16.mxu0 %v3394
  %4499 = vmatpush1.bf16.msra.mxu0 %v3393
  %4500 = vmatprep.subr.bf16.mxu0 %v3410
  %4501 = vmatpush1.bf16.msra.mxu0 %v3409
  %4502 = vmatprep.subr.bf16.mxu0 %v3426
  %4503 = vmatpush1.bf16.msra.mxu0 %v3425
  %4504 = vmatprep.subr.bf16.mxu0 %v3442
  %4505 = vmatpush1.bf16.msra.mxu0 %v3441
  %4506 = vmatprep.subr.bf16.mxu0 %v3458
  %4507 = vmatpush1.bf16.msra.mxu0 %v3457
  %4508 = vmatprep.subr.bf16.mxu0 %v3474
  %4509 = vmatpush1.bf16.msra.mxu0 %v3473
  %4510 = vmatprep.subr.bf16.mxu0 %v3490
  %4511 = vmatpush1.bf16.msra.mxu0 %v3489
  %4512 = vmatprep.subr.bf16.mxu0 %v3506
  %4513 = vmatpush1.bf16.msra.mxu0 %v3505
  %4514 = vmatprep.subr.bf16.mxu0 %v3522
  %4515 = vmatpush1.bf16.msra.mxu0 %v3521
  %4516 = vmatprep.subr.bf16.mxu0 %v3538
  %4517 = vmatpush1.bf16.msra.mxu0 %v3537
  %4518 = vmatprep.mubr.bf16.mxu0 %v1971
  %4519 = vmatmul.mubr.bf16.gmra.mrb[0].mxu0 %v1970
  %v4520 = vpop.f32.mrb[0].mxu0
  %v4521 = vadd.f32 0.0, %v4520
  %v4522 = vpop.f32.mrb[0].mxu0
  %v4523 = vadd.f32 0.0, %v4522
  %v4524 = vpop.f32.mrb[0].mxu0
  %v4525 = vpop.f32.mrb[0].mxu0
  %4526 = vdwg.mxu0
  %4527 = vmatprep.subr.bf16.mxu0 %v3554
  %4528 = vmatpush1.bf16.msra.mxu0 %v3553
  %4529 = vmatprep.subr.bf16.mxu0 %v3570
  %4530 = vmatpush1.bf16.msra.mxu0 %v3569
  %4531 = vmatprep.subr.bf16.mxu0 %v3586
  %4532 = vmatpush1.bf16.msra.mxu0 %v3585
  %4533 = vmatprep.subr.bf16.mxu0 %v3602
  %4534 = vmatpush1.bf16.msra.mxu0 %v3601
  %4535 = vmatprep.subr.bf16.mxu0 %v3986
  %4536 = vmatpush1.bf16.msra.mxu0 %v3983
  %4537 = vmatprep.subr.bf16.mxu0 0
  %4538 = vmatpush1.bf16.msra.mxu0 0
  %4539 = vmatprep.subr.bf16.mxu0 0
  %4540 = vmatpush1.bf16.msra.mxu0 0
  %4541 = vmatprep.subr.bf16.mxu0 0
  %4542 = vmatpush1.bf16.msra.mxu0 0
  %4543 = vmatprep.subr.bf16.mxu0 0
  %4544 = vmatpush1.bf16.msra.mxu0 0
  %4545 = vmatprep.subr.bf16.mxu0 0
  %4546 = vmatpush1.bf16.msra.mxu0 0
  %4547 = vmatprep.subr.bf16.mxu0 0
  %4548 = vmatpush1.bf16.msra.mxu0 0
  %4549 = vmatprep.subr.bf16.mxu0 0
  %4550 = vmatpush1.bf16.msra.mxu0 0
  %4551 = vmatprep.subr.bf16.mxu0 0
  %4552 = vmatpush1.bf16.msra.mxu0 0
  %4553 = vmatprep.subr.bf16.mxu0 0
  %4554 = vmatpush1.bf16.msra.mxu0 0
  %4555 = vmatprep.subr.bf16.mxu0 0
  %4556 = vmatpush1.bf16.msra.mxu0 0
  %4557 = vmatprep.subr.bf16.mxu0 0
  %4558 = vmatpush1.bf16.msra.mxu0 0
  %4559 = vmatprep.mubr.bf16.mxu0 0
  %4560 = vmatmul.mubr.bf16.gmra.mrb[0].mxu0 %v3943
  %v4561 = vpop.f32.mrb[0].mxu0
  %v4562 = vadd.f32 %v4521, %v4561
  %v4563 = vpop.f32.mrb[0].mxu0
  %v4564 = vadd.f32 %v4523, %v4563
  %v4565 = vpop.f32.mrb[0].mxu0
  %v4566 = vpop.f32.mrb[0].mxu0
  %4567 = vdwg.mxu0
  %4568 = vmatprep.subr.bf16.mxu0 %v3300
  %4569 = vmatpush1.bf16.msra.mxu0 %v3299
  %4570 = vmatprep.subr.bf16.mxu0 %v3316
  %4571 = vmatpush1.bf16.msra.mxu0 %v3315
  %4572 = vmatprep.subr.bf16.mxu0 %v3332
  %4573 = vmatpush1.bf16.msra.mxu0 %v3331
  %4574 = vmatprep.subr.bf16.mxu0 %v3348
  %4575 = vmatpush1.bf16.msra.mxu0 %v3347
  %4576 = vmatprep.subr.bf16.mxu0 %v3364
  %4577 = vmatpush1.bf16.msra.mxu0 %v3363
  %4578 = vmatprep.subr.bf16.mxu0 %v3380
  %4579 = vmatpush1.bf16.msra.mxu0 %v3379
  %4580 = vmatprep.subr.bf16.mxu0 %v3396
  %4581 = vmatpush1.bf16.msra.mxu0 %v3395
  %4582 = vmatprep.subr.bf16.mxu0 %v3412
  %4583 = vmatpush1.bf16.msra.mxu0 %v3411
  %4584 = vmatprep.subr.bf16.mxu0 %v3428
  %4585 = vmatpush1.bf16.msra.mxu0 %v3427
  %4586 = vmatprep.subr.bf16.mxu0 %v3444
  %4587 = vmatpush1.bf16.msra.mxu0 %v3443
  %4588 = vmatprep.subr.bf16.mxu0 %v3460
  %4589 = vmatpush1.bf16.msra.mxu0 %v3459
  %4590 = vmatprep.subr.bf16.mxu0 %v3476
  %4591 = vmatpush1.bf16.msra.mxu0 %v3475
  %4592 = vmatprep.subr.bf16.mxu0 %v3492
  %4593 = vmatpush1.bf16.msra.mxu0 %v3491
  %4594 = vmatprep.subr.bf16.mxu0 %v3508
  %4595 = vmatpush1.bf16.msra.mxu0 %v3507
  %4596 = vmatprep.subr.bf16.mxu0 %v3524
  %4597 = vmatpush1.bf16.msra.mxu0 %v3523
  %4598 = vmatprep.subr.bf16.mxu0 %v3540
  %4599 = vmatpush1.bf16.msra.mxu0 %v3539
  %4600 = vmatprep.mubr.bf16.mxu0 %v1971
  %4601 = vmatmul.mubr.bf16.gmra.mrb[0].mxu0 %v1970
  %v4602 = vpop.f32.mrb[0].mxu0
  %v4603 = vadd.f32 0.0, %v4602
  %v4604 = vpop.f32.mrb[0].mxu0
  %v4605 = vadd.f32 0.0, %v4604
  %v4606 = vpop.f32.mrb[0].mxu0
  %v4607 = vpop.f32.mrb[0].mxu0
  %4608 = vdwg.mxu0
  %4609 = vmatprep.subr.bf16.mxu0 %v3556
  %4610 = vmatpush1.bf16.msra.mxu0 %v3555
  %4611 = vmatprep.subr.bf16.mxu0 %v3572
  %4612 = vmatpush1.bf16.msra.mxu0 %v3571
  %4613 = vmatprep.subr.bf16.mxu0 %v3588
  %4614 = vmatpush1.bf16.msra.mxu0 %v3587
  %4615 = vmatprep.subr.bf16.mxu0 %v3604
  %4616 = vmatpush1.bf16.msra.mxu0 %v3603
  %4617 = vmatprep.subr.bf16.mxu0 %v3992
  %4618 = vmatpush1.bf16.msra.mxu0 %v3989
  %4619 = vmatprep.subr.bf16.mxu0 0
  %4620 = vmatpush1.bf16.msra.mxu0 0
  %4621 = vmatprep.subr.bf16.mxu0 0
  %4622 = vmatpush1.bf16.msra.mxu0 0
  %4623 = vmatprep.subr.bf16.mxu0 0
  %4624 = vmatpush1.bf16.msra.mxu0 0
  %4625 = vmatprep.subr.bf16.mxu0 0
  %4626 = vmatpush1.bf16.msra.mxu0 0
  %4627 = vmatprep.subr.bf16.mxu0 0
  %4628 = vmatpush1.bf16.msra.mxu0 0
  %4629 = vmatprep.subr.bf16.mxu0 0
  %4630 = vmatpush1.bf16.msra.mxu0 0
  %4631 = vmatprep.subr.bf16.mxu0 0
  %4632 = vmatpush1.bf16.msra.mxu0 0
  %4633 = vmatprep.subr.bf16.mxu0 0
  %4634 = vmatpush1.bf16.msra.mxu0 0
  %4635 = vmatprep.subr.bf16.mxu0 0
  %4636 = vmatpush1.bf16.msra.mxu0 0
  %4637 = vmatprep.subr.bf16.mxu0 0
  %4638 = vmatpush1.bf16.msra.mxu0 0
  %4639 = vmatprep.subr.bf16.mxu0 0
  %4640 = vmatpush1.bf16.msra.mxu0 0
  %4641 = vmatprep.mubr.bf16.mxu0 0
  %4642 = vmatmul.mubr.bf16.gmra.mrb[0].mxu0 %v3943
  %v4643 = vpop.f32.mrb[0].mxu0
  %v4644 = vadd.f32 %v4603, %v4643
  %v4645 = vpop.f32.mrb[0].mxu0
  %v4646 = vadd.f32 %v4605, %v4645
  %v4647 = vpop.f32.mrb[0].mxu0
  %v4648 = vpop.f32.mrb[0].mxu0
  %4649 = vdwg.mxu0
  %v4650 = vmax.f32 %v4070, %v4234
  %v4651 = vmax.f32 %v4072, %v4236
  %v4652 = vmax.f32 %v4152, %v4316
  %v4653 = vmax.f32 %v4154, %v4318
  %v4654 = vmax.f32 %v4398, %v4562
  %v4655 = vmax.f32 %v4400, %v4564
  %v4656 = vmax.f32 %v4480, %v4644
  %v4657 = vmax.f32 %v4482, %v4646
  %v4658 = vmax.f32 %v4650, %v4654
  %v4659 = vmax.f32 %v4651, %v4655
  %v4660 = vmax.f32 %v4652, %v4656
  %v4661 = vmax.f32 %v4653, %v4657
  %v4662 = vld [vmem:[%s11] sm:$0xf]
  %v4664 = vlaneseq
  %v4665 = vshrl.u32 %v4664, 7
  %v4666 = vsub.s32 0, %v4665
  %v4667 = vrot.slane %v4662, %v4666
  %v4668 = vlaneseq
  %v4669 = vshrl.u32 %v4668, 7
  %v4670 = vsub.s32 1, %v4669
  %v4671 = vrot.slane %v4662, %v4670
  %v4672 = vlaneseq
  %v4673 = vshrl.u32 %v4672, 7
  %v4674 = vsub.s32 2, %v4673
  %v4675 = vrot.slane %v4662, %v4674
  %v4676 = vlaneseq
  %v4677 = vshrl.u32 %v4676, 7
  %v4678 = vsub.s32 3, %v4677
  %v4679 = vrot.slane %v4662, %v4678
  %v4684 = vadd.f32 %v4658, %v4667
  %v4685 = vadd.f32 %v4659, %v4671
  %v4686 = vadd.f32 %v4660, %v4675
  %v4687 = vadd.f32 %v4661, %v4679
  %v4688 = vmax.f32 %v4684, 0.0
  %v4689 = vmax.f32 %v4685, 0.0
  %v4690 = vmax.f32 %v4686, 0.0
  %v4691 = vmax.f32 %v4687, 0.0
  %v4692 = vpack.c.bf16 %v4688, %v4688
  %v4693 = vpack.c.bf16 %v4689, %v4689
  %v4694 = vpack.c.bf16 %v4690, %v4690
  %v4695 = vpack.c.bf16 %v4691, %v4691
  %v4696 = vld [vmem:[%s12] sm:$0xff]
  %v4697 = vld [vmem:[%s12 + $0x8] sm:$0xff]
  %v4698 = vld [vmem:[%s12 + $0x10] sm:$0xf]
  %v4699 = vld [vmem:[%s12 + $0x14] sm:$0xff]
  %v4700 = vld [vmem:[%s12 + $0x1c] sm:$0xff]
  %v4701 = vld [vmem:[%s12 + $0x24] sm:$0xf]
  %v4702 = vld [vmem:[%s12 + $0x28] sm:$0xff]
  %v4703 = vld [vmem:[%s12 + $0x30] sm:$0xff]
  %v4704 = vld [vmem:[%s12 + $0x38] sm:$0xf]
  %v4705 = vld [vmem:[%s12 + $0x3c] sm:$0xff]
  %v4706 = vld [vmem:[%s12 + $0x44] sm:$0xff]
  %v4707 = vld [vmem:[%s12 + $0x4c] sm:$0xf]
  %v4708 = vld [vmem:[%s12 + $0x50] sm:$0xff]
  %v4709 = vld [vmem:[%s12 + $0x58] sm:$0xff]
  %v4710 = vld [vmem:[%s12 + $0x60] sm:$0xf]
  %v4711 = vld [vmem:[%s12 + $0x64] sm:$0xff]
  %v4712 = vld [vmem:[%s12 + $0x6c] sm:$0xff]
  %v4713 = vld [vmem:[%s12 + $0x74] sm:$0xf]
  %v4714 = vld [vmem:[%s12 + $0x78] sm:$0xff]
  %v4715 = vld [vmem:[%s12 + $0x80] sm:$0xff]
  %v4716 = vld [vmem:[%s12 + $0x88] sm:$0xf]
  %v4717 = vld [vmem:[%s12 + $0x8c] sm:$0xff]
  %v4718 = vld [vmem:[%s12 + $0x94] sm:$0xff]
  %v4719 = vld [vmem:[%s12 + $0x9c] sm:$0xf]
  %v4720 = vld [vmem:[%s12 + $0xa0] sm:$0xff]
  %v4721 = vld [vmem:[%s12 + $0xa8] sm:$0xff]
  %v4722 = vld [vmem:[%s12 + $0xb0] sm:$0xf]
  %v4723 = vld [vmem:[%s12 + $0xb4] sm:$0xff]
  %v4724 = vld [vmem:[%s12 + $0xbc] sm:$0xff]
  %v4725 = vld [vmem:[%s12 + $0xc4] sm:$0xf]
  %v4726 = vld [vmem:[%s12 + $0xc8] sm:$0xff]
  %v4727 = vld [vmem:[%s12 + $0xd0] sm:$0xff]
  %v4728 = vld [vmem:[%s12 + $0xd8] sm:$0xf]
  %v4729 = vld [vmem:[%s12 + $0xdc] sm:$0xff]
  %v4730 = vld [vmem:[%s12 + $0xe4] sm:$0xff]
  %v4731 = vld [vmem:[%s12 + $0xec] sm:$0xf]
  %v4732 = vld [vmem:[%s12 + $0xf0] sm:$0xff]
  %v4733 = vld [vmem:[%s12 + $0xf8] sm:$0xff]
  %v4734 = vld [vmem:[%s12 + $0x100] sm:$0xf]
  %v4735 = vld [vmem:[%s12 + $0x104] sm:$0xff]
  %v4736 = vld [vmem:[%s12 + $0x10c] sm:$0xff]
  %v4737 = vld [vmem:[%s12 + $0x114] sm:$0xf]
  %v4738 = vld [vmem:[%s12 + $0x118] sm:$0xff]
  %v4739 = vld [vmem:[%s12 + $0x120] sm:$0xff]
  %v4740 = vld [vmem:[%s12 + $0x128] sm:$0xf]
  %v4741 = vld [vmem:[%s12 + $0x12c] sm:$0xff]
  %v4742 = vld [vmem:[%s12 + $0x134] sm:$0xff]
  %v4743 = vld [vmem:[%s12 + $0x13c] sm:$0xf]
  %v4744 = vld [vmem:[%s12 + $0x140] sm:$0xff]
  %v4745 = vld [vmem:[%s12 + $0x148] sm:$0xff]
  %v4746 = vld [vmem:[%s12 + $0x150] sm:$0xf]
  %v4747 = vld [vmem:[%s12 + $0x154] sm:$0xff]
  %v4748 = vld [vmem:[%s12 + $0x15c] sm:$0xff]
  %v4749 = vld [vmem:[%s12 + $0x164] sm:$0xf]
  %v4750 = vld [vmem:[%s12 + $0x168] sm:$0xff]
  %v4751 = vld [vmem:[%s12 + $0x170] sm:$0xff]
  %v4752 = vld [vmem:[%s12 + $0x178] sm:$0xf]
  %v4753 = vld [vmem:[%s12 + $0x17c] sm:$0xff]
  %v4754 = vld [vmem:[%s12 + $0x184] sm:$0xff]
  %v4755 = vld [vmem:[%s12 + $0x18c] sm:$0xf]
  %v4756 = vld [vmem:[%s12 + $0x190] sm:$0xff]
  %v4757 = vld [vmem:[%s12 + $0x198] sm:$0xff]
  %v4758 = vld [vmem:[%s12 + $0x1a0] sm:$0xf]
  %v4759 = vld [vmem:[%s12 + $0x1a4] sm:$0xff]
  %v4760 = vld [vmem:[%s12 + $0x1ac] sm:$0xff]
  %v4761 = vld [vmem:[%s12 + $0x1b4] sm:$0xf]
  %v4762 = vld [vmem:[%s12 + $0x1b8] sm:$0xff]
  %v4763 = vld [vmem:[%s12 + $0x1c0] sm:$0xff]
  %v4764 = vld [vmem:[%s12 + $0x1c8] sm:$0xf]
  %v4765 = vld [vmem:[%s12 + $0x1cc] sm:$0xff]
  %v4766 = vld [vmem:[%s12 + $0x1d4] sm:$0xff]
  %v4767 = vld [vmem:[%s12 + $0x1dc] sm:$0xf]
  %v4768 = vld [vmem:[%s12 + $0x1e0] sm:$0xff]
  %v4769 = vld [vmem:[%s12 + $0x1e8] sm:$0xff]
  %v4770 = vld [vmem:[%s12 + $0x1f0] sm:$0xf]
  %v4771 = vld [vmem:[%s12 + $0x1f4] sm:$0xff]
  %v4772 = vld [vmem:[%s12 + $0x1fc] sm:$0xff]
  %v4773 = vld [vmem:[%s12 + $0x204] sm:$0xf]
  %v4774 = vld [vmem:[%s12 + $0x208] sm:$0xff]
  %v4775 = vld [vmem:[%s12 + $0x210] sm:$0xff]
  %v4776 = vld [vmem:[%s12 + $0x218] sm:$0xf]
  %v4777 = vld [vmem:[%s12 + $0x21c] sm:$0xff]
  %v4778 = vld [vmem:[%s12 + $0x224] sm:$0xff]
  %v4779 = vld [vmem:[%s12 + $0x22c] sm:$0xf]
  %v4780 = vld [vmem:[%s12 + $0x230] sm:$0xff]
  %v4781 = vld [vmem:[%s12 + $0x238] sm:$0xff]
  %v4782 = vld [vmem:[%s12 + $0x240] sm:$0xf]
  %v4783 = vld [vmem:[%s12 + $0x244] sm:$0xff]
  %v4784 = vld [vmem:[%s12 + $0x24c] sm:$0xff]
  %v4785 = vld [vmem:[%s12 + $0x254] sm:$0xf]
  %v4786 = vld [vmem:[%s12 + $0x258] sm:$0xff]
  %v4787 = vld [vmem:[%s12 + $0x260] sm:$0xff]
  %v4788 = vld [vmem:[%s12 + $0x268] sm:$0xf]
  %v4789 = vld [vmem:[%s12 + $0x26c] sm:$0xff]
  %v4790 = vld [vmem:[%s12 + $0x274] sm:$0xff]
  %v4791 = vld [vmem:[%s12 + $0x27c] sm:$0xf]
  %v4792 = vld [vmem:[%s12 + $0x280] sm:$0xff]
  %v4793 = vld [vmem:[%s12 + $0x288] sm:$0xff]
  %v4794 = vld [vmem:[%s12 + $0x290] sm:$0xf]
  %v4795 = vld [vmem:[%s12 + $0x294] sm:$0xff]
  %v4796 = vld [vmem:[%s12 + $0x29c] sm:$0xff]
  %v4797 = vld [vmem:[%s12 + $0x2a4] sm:$0xf]
  %v4798 = vld [vmem:[%s12 + $0x2a8] sm:$0xff]
  %v4799 = vld [vmem:[%s12 + $0x2b0] sm:$0xff]
  %v4800 = vld [vmem:[%s12 + $0x2b8] sm:$0xf]
  %v4801 = vld [vmem:[%s12 + $0x2bc] sm:$0xff]
  %v4802 = vld [vmem:[%s12 + $0x2c4] sm:$0xff]
  %v4803 = vld [vmem:[%s12 + $0x2cc] sm:$0xf]
  %v4804 = vld [vmem:[%s12 + $0x2d0] sm:$0xff]
  %v4805 = vld [vmem:[%s12 + $0x2d8] sm:$0xff]
  %v4806 = vld [vmem:[%s12 + $0x2e0] sm:$0xf]
  %v4807 = vld [vmem:[%s12 + $0x2e4] sm:$0xff]
  %v4808 = vld [vmem:[%s12 + $0x2ec] sm:$0xff]
  %v4809 = vld [vmem:[%s12 + $0x2f4] sm:$0xf]
  %v4810 = vld [vmem:[%s12 + $0x2f8] sm:$0xff]
  %v4811 = vld [vmem:[%s12 + $0x300] sm:$0xff]
  %v4812 = vld [vmem:[%s12 + $0x308] sm:$0xf]
  %v4813 = vld [vmem:[%s12 + $0x30c] sm:$0xff]
  %v4814 = vld [vmem:[%s12 + $0x314] sm:$0xff]
  %v4815 = vld [vmem:[%s12 + $0x31c] sm:$0xf]
  %v4816 = vld [vmem:[%s12 + $0x320] sm:$0xff]
  %v4817 = vld [vmem:[%s12 + $0x328] sm:$0xff]
  %v4818 = vld [vmem:[%s12 + $0x330] sm:$0xf]
  %v4819 = vld [vmem:[%s12 + $0x334] sm:$0xff]
  %v4820 = vld [vmem:[%s12 + $0x33c] sm:$0xff]
  %v4821 = vld [vmem:[%s12 + $0x344] sm:$0xf]
  %v4822 = vld [vmem:[%s12 + $0x348] sm:$0xff]
  %v4823 = vld [vmem:[%s12 + $0x350] sm:$0xff]
  %v4824 = vld [vmem:[%s12 + $0x358] sm:$0xf]
  %v4825 = vld [vmem:[%s12 + $0x35c] sm:$0xff]
  %v4826 = vld [vmem:[%s12 + $0x364] sm:$0xff]
  %v4827 = vld [vmem:[%s12 + $0x36c] sm:$0xf]
  %v4828 = vld [vmem:[%s12 + $0x370] sm:$0xff]
  %v4829 = vld [vmem:[%s12 + $0x378] sm:$0xff]
  %v4830 = vld [vmem:[%s12 + $0x380] sm:$0xf]
  %v4831 = vld [vmem:[%s12 + $0x384] sm:$0xff]
  %v4832 = vld [vmem:[%s12 + $0x38c] sm:$0xff]
  %v4833 = vld [vmem:[%s12 + $0x394] sm:$0xf]
  %v4834 = vld [vmem:[%s12 + $0x398] sm:$0xff]
  %v4835 = vld [vmem:[%s12 + $0x3a0] sm:$0xff]
  %v4836 = vld [vmem:[%s12 + $0x3a8] sm:$0xf]
  %v4837 = vld [vmem:[%s12 + $0x3ac] sm:$0xff]
  %v4838 = vld [vmem:[%s12 + $0x3b4] sm:$0xff]
  %v4839 = vld [vmem:[%s12 + $0x3bc] sm:$0xf]
  %v4840 = vld [vmem:[%s12 + $0x3c0] sm:$0xff]
  %v4841 = vld [vmem:[%s12 + $0x3c8] sm:$0xff]
  %v4842 = vld [vmem:[%s12 + $0x3d0] sm:$0xf]
  %v4843 = vld [vmem:[%s12 + $0x3d4] sm:$0xff]
  %v4844 = vld [vmem:[%s12 + $0x3dc] sm:$0xff]
  %v4845 = vld [vmem:[%s12 + $0x3e4] sm:$0xf]
  %v4846 = vld [vmem:[%s12 + $0x3e8] sm:$0xff]
  %v4847 = vld [vmem:[%s12 + $0x3f0] sm:$0xff]
  %v4848 = vld [vmem:[%s12 + $0x3f8] sm:$0xf]
  %v4849 = vld [vmem:[%s12 + $0x3fc] sm:$0xff]
  %v4850 = vld [vmem:[%s12 + $0x404] sm:$0xff]
  %v4851 = vld [vmem:[%s12 + $0x40c] sm:$0xf]
  %v4852 = vld [vmem:[%s12 + $0x410] sm:$0xff]
  %v4853 = vld [vmem:[%s12 + $0x418] sm:$0xff]
  %v4854 = vld [vmem:[%s12 + $0x420] sm:$0xf]
  %v4855 = vld [vmem:[%s12 + $0x424] sm:$0xff]
  %v4856 = vld [vmem:[%s12 + $0x42c] sm:$0xff]
  %v4857 = vld [vmem:[%s12 + $0x434] sm:$0xf]
  %v4858 = vld [vmem:[%s12 + $0x438] sm:$0xff]
  %v4859 = vld [vmem:[%s12 + $0x440] sm:$0xff]
  %v4860 = vld [vmem:[%s12 + $0x448] sm:$0xf]
  %v4861 = vld [vmem:[%s12 + $0x44c] sm:$0xff]
  %v4862 = vld [vmem:[%s12 + $0x454] sm:$0xff]
  %v4863 = vld [vmem:[%s12 + $0x45c] sm:$0xf]
  %v4864 = vld [vmem:[%s12 + $0x460] sm:$0xff]
  %v4865 = vld [vmem:[%s12 + $0x468] sm:$0xff]
  %v4866 = vld [vmem:[%s12 + $0x470] sm:$0xf]
  %v4867 = vld [vmem:[%s12 + $0x474] sm:$0xff]
  %v4868 = vld [vmem:[%s12 + $0x47c] sm:$0xff]
  %v4869 = vld [vmem:[%s12 + $0x484] sm:$0xf]
  %v4870 = vld [vmem:[%s12 + $0x488] sm:$0xff]
  %v4871 = vld [vmem:[%s12 + $0x490] sm:$0xff]
  %v4872 = vld [vmem:[%s12 + $0x498] sm:$0xf]
  %v4873 = vld [vmem:[%s12 + $0x49c] sm:$0xff]
  %v4874 = vld [vmem:[%s12 + $0x4a4] sm:$0xff]
  %v4875 = vld [vmem:[%s12 + $0x4ac] sm:$0xf]
  %v4876 = vld [vmem:[%s12 + $0x4b0] sm:$0xff]
  %v4877 = vld [vmem:[%s12 + $0x4b8] sm:$0xff]
  %v4878 = vld [vmem:[%s12 + $0x4c0] sm:$0xf]
  %v4879 = vld [vmem:[%s12 + $0x4c4] sm:$0xff]
  %v4880 = vld [vmem:[%s12 + $0x4cc] sm:$0xff]
  %v4881 = vld [vmem:[%s12 + $0x4d4] sm:$0xf]
  %v4882 = vld [vmem:[%s12 + $0x4d8] sm:$0xff]
  %v4883 = vld [vmem:[%s12 + $0x4e0] sm:$0xff]
  %v4884 = vld [vmem:[%s12 + $0x4e8] sm:$0xf]
  %v4885 = vld [vmem:[%s12 + $0x4ec] sm:$0xff]
  %v4886 = vld [vmem:[%s12 + $0x4f4] sm:$0xff]
  %v4887 = vld [vmem:[%s12 + $0x4fc] sm:$0xf]
  %v5080 = vunpack.c.l.b16 %v4696
  %v5081 = vunpack.c.h.b16 %v4696
  %v5082 = vunpack.c.l.b16 %v4697
  %v5083 = vunpack.c.h.b16 %v4697
  %v5084 = vunpack.c.l.b16 %v4698
  %v5085 = vunpack.c.l.b16 %v4699
  %v5086 = vunpack.c.h.b16 %v4699
  %v5087 = vunpack.c.l.b16 %v4700
  %v5088 = vunpack.c.h.b16 %v4700
  %v5089 = vunpack.c.l.b16 %v4701
  %v5090 = vunpack.c.l.b16 %v4702
  %v5091 = vunpack.c.h.b16 %v4702
  %v5092 = vunpack.c.l.b16 %v4703
  %v5093 = vunpack.c.h.b16 %v4703
  %v5094 = vunpack.c.l.b16 %v4704
  %v5095 = vunpack.c.l.b16 %v4705
  %v5096 = vunpack.c.h.b16 %v4705
  %v5097 = vunpack.c.l.b16 %v4706
  %v5098 = vunpack.c.h.b16 %v4706
  %v5099 = vunpack.c.l.b16 %v4707
  %v5100 = vunpack.c.l.b16 %v4708
  %v5101 = vunpack.c.h.b16 %v4708
  %v5102 = vunpack.c.l.b16 %v4709
  %v5103 = vunpack.c.h.b16 %v4709
  %v5104 = vunpack.c.l.b16 %v4710
  %v5105 = vunpack.c.l.b16 %v4711
  %v5106 = vunpack.c.h.b16 %v4711
  %v5107 = vunpack.c.l.b16 %v4712
  %v5108 = vunpack.c.h.b16 %v4712
  %v5109 = vunpack.c.l.b16 %v4713
  %v5110 = vunpack.c.l.b16 %v4714
  %v5111 = vunpack.c.h.b16 %v4714
  %v5112 = vunpack.c.l.b16 %v4715
  %v5113 = vunpack.c.h.b16 %v4715
  %v5114 = vunpack.c.l.b16 %v4716
  %v5115 = vunpack.c.l.b16 %v4717
  %v5116 = vunpack.c.h.b16 %v4717
  %v5117 = vunpack.c.l.b16 %v4718
  %v5118 = vunpack.c.h.b16 %v4718
  %v5119 = vunpack.c.l.b16 %v4719
  %v5120 = vunpack.c.l.b16 %v4720
  %v5121 = vunpack.c.h.b16 %v4720
  %v5122 = vunpack.c.l.b16 %v4721
  %v5123 = vunpack.c.h.b16 %v4721
  %v5124 = vunpack.c.l.b16 %v4722
  %v5125 = vunpack.c.l.b16 %v4723
  %v5126 = vunpack.c.h.b16 %v4723
  %v5127 = vunpack.c.l.b16 %v4724
  %v5128 = vunpack.c.h.b16 %v4724
  %v5129 = vunpack.c.l.b16 %v4725
  %v5130 = vunpack.c.l.b16 %v4726
  %v5131 = vunpack.c.h.b16 %v4726
  %v5132 = vunpack.c.l.b16 %v4727
  %v5133 = vunpack.c.h.b16 %v4727
  %v5134 = vunpack.c.l.b16 %v4728
  %v5135 = vunpack.c.l.b16 %v4729
  %v5136 = vunpack.c.h.b16 %v4729
  %v5137 = vunpack.c.l.b16 %v4730
  %v5138 = vunpack.c.h.b16 %v4730
  %v5139 = vunpack.c.l.b16 %v4731
  %v5140 = vunpack.c.l.b16 %v4732
  %v5141 = vunpack.c.h.b16 %v4732
  %v5142 = vunpack.c.l.b16 %v4733
  %v5143 = vunpack.c.h.b16 %v4733
  %v5144 = vunpack.c.l.b16 %v4734
  %v5145 = vunpack.c.l.b16 %v4735
  %v5146 = vunpack.c.h.b16 %v4735
  %v5147 = vunpack.c.l.b16 %v4736
  %v5148 = vunpack.c.h.b16 %v4736
  %v5149 = vunpack.c.l.b16 %v4737
  %v5150 = vunpack.c.l.b16 %v4738
  %v5151 = vunpack.c.h.b16 %v4738
  %v5152 = vunpack.c.l.b16 %v4739
  %v5153 = vunpack.c.h.b16 %v4739
  %v5154 = vunpack.c.l.b16 %v4740
  %v5155 = vunpack.c.l.b16 %v4741
  %v5156 = vunpack.c.h.b16 %v4741
  %v5157 = vunpack.c.l.b16 %v4742
  %v5158 = vunpack.c.h.b16 %v4742
  %v5159 = vunpack.c.l.b16 %v4743
  %v5160 = vunpack.c.l.b16 %v4744
  %v5161 = vunpack.c.h.b16 %v4744
  %v5162 = vunpack.c.l.b16 %v4745
  %v5163 = vunpack.c.h.b16 %v4745
  %v5164 = vunpack.c.l.b16 %v4746
  %v5165 = vunpack.c.l.b16 %v4747
  %v5166 = vunpack.c.h.b16 %v4747
  %v5167 = vunpack.c.l.b16 %v4748
  %v5168 = vunpack.c.h.b16 %v4748
  %v5169 = vunpack.c.l.b16 %v4749
  %v5170 = vunpack.c.l.b16 %v4750
  %v5171 = vunpack.c.h.b16 %v4750
  %v5172 = vunpack.c.l.b16 %v4751
  %v5173 = vunpack.c.h.b16 %v4751
  %v5174 = vunpack.c.l.b16 %v4752
  %v5175 = vunpack.c.l.b16 %v4753
  %v5176 = vunpack.c.h.b16 %v4753
  %v5177 = vunpack.c.l.b16 %v4754
  %v5178 = vunpack.c.h.b16 %v4754
  %v5179 = vunpack.c.l.b16 %v4755
  %v5180 = vunpack.c.l.b16 %v4756
  %v5181 = vunpack.c.h.b16 %v4756
  %v5182 = vunpack.c.l.b16 %v4757
  %v5183 = vunpack.c.h.b16 %v4757
  %v5184 = vunpack.c.l.b16 %v4758
  %v5185 = vunpack.c.l.b16 %v4759
  %v5186 = vunpack.c.h.b16 %v4759
  %v5187 = vunpack.c.l.b16 %v4760
  %v5188 = vunpack.c.h.b16 %v4760
  %v5189 = vunpack.c.l.b16 %v4761
  %v5190 = vunpack.c.l.b16 %v4762
  %v5191 = vunpack.c.h.b16 %v4762
  %v5192 = vunpack.c.l.b16 %v4763
  %v5193 = vunpack.c.h.b16 %v4763
  %v5194 = vunpack.c.l.b16 %v4764
  %v5195 = vunpack.c.l.b16 %v4765
  %v5196 = vunpack.c.h.b16 %v4765
  %v5197 = vunpack.c.l.b16 %v4766
  %v5198 = vunpack.c.h.b16 %v4766
  %v5199 = vunpack.c.l.b16 %v4767
  %v5200 = vunpack.c.l.b16 %v4768
  %v5201 = vunpack.c.h.b16 %v4768
  %v5202 = vunpack.c.l.b16 %v4769
  %v5203 = vunpack.c.h.b16 %v4769
  %v5204 = vunpack.c.l.b16 %v4770
  %v5205 = vunpack.c.l.b16 %v4771
  %v5206 = vunpack.c.h.b16 %v4771
  %v5207 = vunpack.c.l.b16 %v4772
  %v5208 = vunpack.c.h.b16 %v4772
  %v5209 = vunpack.c.l.b16 %v4773
  %v5210 = vunpack.c.l.b16 %v4774
  %v5211 = vunpack.c.h.b16 %v4774
  %v5212 = vunpack.c.l.b16 %v4775
  %v5213 = vunpack.c.h.b16 %v4775
  %v5214 = vunpack.c.l.b16 %v4776
  %v5215 = vunpack.c.l.b16 %v4777
  %v5216 = vunpack.c.h.b16 %v4777
  %v5217 = vunpack.c.l.b16 %v4778
  %v5218 = vunpack.c.h.b16 %v4778
  %v5219 = vunpack.c.l.b16 %v4779
  %v5220 = vunpack.c.l.b16 %v4780
  %v5221 = vunpack.c.h.b16 %v4780
  %v5222 = vunpack.c.l.b16 %v4781
  %v5223 = vunpack.c.h.b16 %v4781
  %v5224 = vunpack.c.l.b16 %v4782
  %v5225 = vunpack.c.l.b16 %v4783
  %v5226 = vunpack.c.h.b16 %v4783
  %v5227 = vunpack.c.l.b16 %v4784
  %v5228 = vunpack.c.h.b16 %v4784
  %v5229 = vunpack.c.l.b16 %v4785
  %v5230 = vunpack.c.l.b16 %v4786
  %v5231 = vunpack.c.h.b16 %v4786
  %v5232 = vunpack.c.l.b16 %v4787
  %v5233 = vunpack.c.h.b16 %v4787
  %v5234 = vunpack.c.l.b16 %v4788
  %v5235 = vunpack.c.l.b16 %v4789
  %v5236 = vunpack.c.h.b16 %v4789
  %v5237 = vunpack.c.l.b16 %v4790
  %v5238 = vunpack.c.h.b16 %v4790
  %v5239 = vunpack.c.l.b16 %v4791
  %v5240 = vunpack.c.l.b16 %v4792
  %v5241 = vunpack.c.h.b16 %v4792
  %v5242 = vunpack.c.l.b16 %v4793
  %v5243 = vunpack.c.h.b16 %v4793
  %v5244 = vunpack.c.l.b16 %v4794
  %v5245 = vunpack.c.l.b16 %v4795
  %v5246 = vunpack.c.h.b16 %v4795
  %v5247 = vunpack.c.l.b16 %v4796
  %v5248 = vunpack.c.h.b16 %v4796
  %v5249 = vunpack.c.l.b16 %v4797
  %v5250 = vunpack.c.l.b16 %v4798
  %v5251 = vunpack.c.h.b16 %v4798
  %v5252 = vunpack.c.l.b16 %v4799
  %v5253 = vunpack.c.h.b16 %v4799
  %v5254 = vunpack.c.l.b16 %v4800
  %v5255 = vunpack.c.l.b16 %v4801
  %v5256 = vunpack.c.h.b16 %v4801
  %v5257 = vunpack.c.l.b16 %v4802
  %v5258 = vunpack.c.h.b16 %v4802
  %v5259 = vunpack.c.l.b16 %v4803
  %v5260 = vunpack.c.l.b16 %v4804
  %v5261 = vunpack.c.h.b16 %v4804
  %v5262 = vunpack.c.l.b16 %v4805
  %v5263 = vunpack.c.h.b16 %v4805
  %v5264 = vunpack.c.l.b16 %v4806
  %v5265 = vunpack.c.l.b16 %v4807
  %v5266 = vunpack.c.h.b16 %v4807
  %v5267 = vunpack.c.l.b16 %v4808
  %v5268 = vunpack.c.h.b16 %v4808
  %v5269 = vunpack.c.l.b16 %v4809
  %v5270 = vunpack.c.l.b16 %v4810
  %v5271 = vunpack.c.h.b16 %v4810
  %v5272 = vunpack.c.l.b16 %v4811
  %v5273 = vunpack.c.h.b16 %v4811
  %v5274 = vunpack.c.l.b16 %v4812
  %v5275 = vunpack.c.l.b16 %v4813
  %v5276 = vunpack.c.h.b16 %v4813
  %v5277 = vunpack.c.l.b16 %v4814
  %v5278 = vunpack.c.h.b16 %v4814
  %v5279 = vunpack.c.l.b16 %v4815
  %v5280 = vunpack.c.l.b16 %v4816
  %v5281 = vunpack.c.h.b16 %v4816
  %v5282 = vunpack.c.l.b16 %v4817
  %v5283 = vunpack.c.h.b16 %v4817
  %v5284 = vunpack.c.l.b16 %v4818
  %v5285 = vunpack.c.l.b16 %v4819
  %v5286 = vunpack.c.h.b16 %v4819
  %v5287 = vunpack.c.l.b16 %v4820
  %v5288 = vunpack.c.h.b16 %v4820
  %v5289 = vunpack.c.l.b16 %v4821
  %v5290 = vunpack.c.l.b16 %v4822
  %v5291 = vunpack.c.h.b16 %v4822
  %v5292 = vunpack.c.l.b16 %v4823
  %v5293 = vunpack.c.h.b16 %v4823
  %v5294 = vunpack.c.l.b16 %v4824
  %v5295 = vunpack.c.l.b16 %v4825
  %v5296 = vunpack.c.h.b16 %v4825
  %v5297 = vunpack.c.l.b16 %v4826
  %v5298 = vunpack.c.h.b16 %v4826
  %v5299 = vunpack.c.l.b16 %v4827
  %v5300 = vunpack.c.l.b16 %v4828
  %v5301 = vunpack.c.h.b16 %v4828
  %v5302 = vunpack.c.l.b16 %v4829
  %v5303 = vunpack.c.h.b16 %v4829
  %v5304 = vunpack.c.l.b16 %v4830
  %v5305 = vunpack.c.l.b16 %v4831
  %v5306 = vunpack.c.h.b16 %v4831
  %v5307 = vunpack.c.l.b16 %v4832
  %v5308 = vunpack.c.h.b16 %v4832
  %v5309 = vunpack.c.l.b16 %v4833
  %v5310 = vunpack.c.l.b16 %v4834
  %v5311 = vunpack.c.h.b16 %v4834
  %v5312 = vunpack.c.l.b16 %v4835
  %v5313 = vunpack.c.h.b16 %v4835
  %v5314 = vunpack.c.l.b16 %v4836
  %v5315 = vunpack.c.l.b16 %v4837
  %v5316 = vunpack.c.h.b16 %v4837
  %v5317 = vunpack.c.l.b16 %v4838
  %v5318 = vunpack.c.h.b16 %v4838
  %v5319 = vunpack.c.l.b16 %v4839
  %v5320 = vunpack.c.l.b16 %v4840
  %v5321 = vunpack.c.h.b16 %v4840
  %v5322 = vunpack.c.l.b16 %v4841
  %v5323 = vunpack.c.h.b16 %v4841
  %v5324 = vunpack.c.l.b16 %v4842
  %v5325 = vunpack.c.l.b16 %v4843
  %v5326 = vunpack.c.h.b16 %v4843
  %v5327 = vunpack.c.l.b16 %v4844
  %v5328 = vunpack.c.h.b16 %v4844
  %v5329 = vunpack.c.l.b16 %v4845
  %v5330 = vunpack.c.l.b16 %v4846
  %v5331 = vunpack.c.h.b16 %v4846
  %v5332 = vunpack.c.l.b16 %v4847
  %v5333 = vunpack.c.h.b16 %v4847
  %v5334 = vunpack.c.l.b16 %v4848
  %v5335 = vunpack.c.l.b16 %v4849
  %v5336 = vunpack.c.h.b16 %v4849
  %v5337 = vunpack.c.l.b16 %v4850
  %v5338 = vunpack.c.h.b16 %v4850
  %v5339 = vunpack.c.l.b16 %v4851
  %v5340 = vunpack.c.l.b16 %v4852
  %v5341 = vunpack.c.h.b16 %v4852
  %v5342 = vunpack.c.l.b16 %v4853
  %v5343 = vunpack.c.h.b16 %v4853
  %v5344 = vunpack.c.l.b16 %v4854
  %v5345 = vunpack.c.l.b16 %v4855
  %v5346 = vunpack.c.h.b16 %v4855
  %v5347 = vunpack.c.l.b16 %v4856
  %v5348 = vunpack.c.h.b16 %v4856
  %v5349 = vunpack.c.l.b16 %v4857
  %v5350 = vunpack.c.l.b16 %v4858
  %v5351 = vunpack.c.h.b16 %v4858
  %v5352 = vunpack.c.l.b16 %v4859
  %v5353 = vunpack.c.h.b16 %v4859
  %v5354 = vunpack.c.l.b16 %v4860
  %v5355 = vunpack.c.l.b16 %v4861
  %v5356 = vunpack.c.h.b16 %v4861
  %v5357 = vunpack.c.l.b16 %v4862
  %v5358 = vunpack.c.h.b16 %v4862
  %v5359 = vunpack.c.l.b16 %v4863
  %v5360 = vunpack.c.l.b16 %v4864
  %v5361 = vunpack.c.h.b16 %v4864
  %v5362 = vunpack.c.l.b16 %v4865
  %v5363 = vunpack.c.h.b16 %v4865
  %v5364 = vunpack.c.l.b16 %v4866
  %v5365 = vunpack.c.l.b16 %v4867
  %v5366 = vunpack.c.h.b16 %v4867
  %v5367 = vunpack.c.l.b16 %v4868
  %v5368 = vunpack.c.h.b16 %v4868
  %v5369 = vunpack.c.l.b16 %v4869
  %v5370 = vunpack.c.l.b16 %v4870
  %v5371 = vunpack.c.h.b16 %v4870
  %v5372 = vunpack.c.l.b16 %v4871
  %v5373 = vunpack.c.h.b16 %v4871
  %v5374 = vunpack.c.l.b16 %v4872
  %v5375 = vunpack.c.l.b16 %v4873
  %v5376 = vunpack.c.h.b16 %v4873
  %v5377 = vunpack.c.l.b16 %v4874
  %v5378 = vunpack.c.h.b16 %v4874
  %v5379 = vunpack.c.l.b16 %v4875
  %v5380 = vunpack.c.l.b16 %v4876
  %v5381 = vunpack.c.h.b16 %v4876
  %v5382 = vunpack.c.l.b16 %v4877
  %v5383 = vunpack.c.h.b16 %v4877
  %v5384 = vunpack.c.l.b16 %v4878
  %v5385 = vunpack.c.l.b16 %v4879
  %v5386 = vunpack.c.h.b16 %v4879
  %v5387 = vunpack.c.l.b16 %v4880
  %v5388 = vunpack.c.h.b16 %v4880
  %v5389 = vunpack.c.l.b16 %v4881
  %v5390 = vunpack.c.l.b16 %v4882
  %v5391 = vunpack.c.h.b16 %v4882
  %v5392 = vunpack.c.l.b16 %v4883
  %v5393 = vunpack.c.h.b16 %v4883
  %v5394 = vunpack.c.l.b16 %v4884
  %v5395 = vunpack.c.l.b16 %v4885
  %v5396 = vunpack.c.h.b16 %v4885
  %v5397 = vunpack.c.l.b16 %v4886
  %v5398 = vunpack.c.h.b16 %v4886
  %v5399 = vunpack.c.l.b16 %v4887
  %v5400 = vpack.c.b16 %v5085, %v5080
  %v5401 = vpack.c.b16 %v5086, %v5081
  %v5402 = vpack.c.b16 %v5087, %v5082
  %v5403 = vpack.c.b16 %v5088, %v5083
  %v5404 = vpack.c.b16 %v5089, %v5084
  %v5405 = vpack.c.b16 %v5095, %v5090
  %v5406 = vpack.c.b16 %v5096, %v5091
  %v5407 = vpack.c.b16 %v5097, %v5092
  %v5408 = vpack.c.b16 %v5098, %v5093
  %v5409 = vpack.c.b16 %v5099, %v5094
  %v5410 = vpack.c.b16 %v5105, %v5100
  %v5411 = vpack.c.b16 %v5106, %v5101
  %v5412 = vpack.c.b16 %v5107, %v5102
  %v5413 = vpack.c.b16 %v5108, %v5103
  %v5414 = vpack.c.b16 %v5109, %v5104
  %v5415 = vpack.c.b16 %v5115, %v5110
  %v5416 = vpack.c.b16 %v5116, %v5111
  %v5417 = vpack.c.b16 %v5117, %v5112
  %v5418 = vpack.c.b16 %v5118, %v5113
  %v5419 = vpack.c.b16 %v5119, %v5114
  %v5420 = vpack.c.b16 %v5125, %v5120
  %v5421 = vpack.c.b16 %v5126, %v5121
  %v5422 = vpack.c.b16 %v5127, %v5122
  %v5423 = vpack.c.b16 %v5128, %v5123
  %v5424 = vpack.c.b16 %v5129, %v5124
  %v5425 = vpack.c.b16 %v5135, %v5130
  %v5426 = vpack.c.b16 %v5136, %v5131
  %v5427 = vpack.c.b16 %v5137, %v5132
  %v5428 = vpack.c.b16 %v5138, %v5133
  %v5429 = vpack.c.b16 %v5139, %v5134
  %v5430 = vpack.c.b16 %v5145, %v5140
  %v5431 = vpack.c.b16 %v5146, %v5141
  %v5432 = vpack.c.b16 %v5147, %v5142
  %v5433 = vpack.c.b16 %v5148, %v5143
  %v5434 = vpack.c.b16 %v5149, %v5144
  %v5435 = vpack.c.b16 %v5155, %v5150
  %v5436 = vpack.c.b16 %v5156, %v5151
  %v5437 = vpack.c.b16 %v5157, %v5152
  %v5438 = vpack.c.b16 %v5158, %v5153
  %v5439 = vpack.c.b16 %v5159, %v5154
  %v5440 = vpack.c.b16 %v5165, %v5160
  %v5441 = vpack.c.b16 %v5166, %v5161
  %v5442 = vpack.c.b16 %v5167, %v5162
  %v5443 = vpack.c.b16 %v5168, %v5163
  %v5444 = vpack.c.b16 %v5169, %v5164
  %v5445 = vpack.c.b16 %v5175, %v5170
  %v5446 = vpack.c.b16 %v5176, %v5171
  %v5447 = vpack.c.b16 %v5177, %v5172
  %v5448 = vpack.c.b16 %v5178, %v5173
  %v5449 = vpack.c.b16 %v5179, %v5174
  %v5450 = vpack.c.b16 %v5185, %v5180
  %v5451 = vpack.c.b16 %v5186, %v5181
  %v5452 = vpack.c.b16 %v5187, %v5182
  %v5453 = vpack.c.b16 %v5188, %v5183
  %v5454 = vpack.c.b16 %v5189, %v5184
  %v5455 = vpack.c.b16 %v5195, %v5190
  %v5456 = vpack.c.b16 %v5196, %v5191
  %v5457 = vpack.c.b16 %v5197, %v5192
  %v5458 = vpack.c.b16 %v5198, %v5193
  %v5459 = vpack.c.b16 %v5199, %v5194
  %v5460 = vpack.c.b16 %v5205, %v5200
  %v5461 = vpack.c.b16 %v5206, %v5201
  %v5462 = vpack.c.b16 %v5207, %v5202
  %v5463 = vpack.c.b16 %v5208, %v5203
  %v5464 = vpack.c.b16 %v5209, %v5204
  %v5465 = vpack.c.b16 %v5215, %v5210
  %v5466 = vpack.c.b16 %v5216, %v5211
  %v5467 = vpack.c.b16 %v5217, %v5212
  %v5468 = vpack.c.b16 %v5218, %v5213
  %v5469 = vpack.c.b16 %v5219, %v5214
  %v5470 = vpack.c.b16 %v5225, %v5220
  %v5471 = vpack.c.b16 %v5226, %v5221
  %v5472 = vpack.c.b16 %v5227, %v5222
  %v5473 = vpack.c.b16 %v5228, %v5223
  %v5474 = vpack.c.b16 %v5229, %v5224
  %v5475 = vpack.c.b16 %v5235, %v5230
  %v5476 = vpack.c.b16 %v5236, %v5231
  %v5477 = vpack.c.b16 %v5237, %v5232
  %v5478 = vpack.c.b16 %v5238, %v5233
  %v5479 = vpack.c.b16 %v5239, %v5234
  %v5480 = vpack.c.b16 %v5245, %v5240
  %v5481 = vpack.c.b16 %v5246, %v5241
  %v5482 = vpack.c.b16 %v5247, %v5242
  %v5483 = vpack.c.b16 %v5248, %v5243
  %v5484 = vpack.c.b16 %v5249, %v5244
  %v5485 = vpack.c.b16 %v5255, %v5250
  %v5486 = vpack.c.b16 %v5256, %v5251
  %v5487 = vpack.c.b16 %v5257, %v5252
  %v5488 = vpack.c.b16 %v5258, %v5253
  %v5489 = vpack.c.b16 %v5259, %v5254
  %v5490 = vpack.c.b16 %v5265, %v5260
  %v5491 = vpack.c.b16 %v5266, %v5261
  %v5492 = vpack.c.b16 %v5267, %v5262
  %v5493 = vpack.c.b16 %v5268, %v5263
  %v5494 = vpack.c.b16 %v5269, %v5264
  %v5495 = vpack.c.b16 %v5275, %v5270
  %v5496 = vpack.c.b16 %v5276, %v5271
  %v5497 = vpack.c.b16 %v5277, %v5272
  %v5498 = vpack.c.b16 %v5278, %v5273
  %v5499 = vpack.c.b16 %v5279, %v5274
  %v5500 = vpack.c.b16 %v5285, %v5280
  %v5501 = vpack.c.b16 %v5286, %v5281
  %v5502 = vpack.c.b16 %v5287, %v5282
  %v5503 = vpack.c.b16 %v5288, %v5283
  %v5504 = vpack.c.b16 %v5289, %v5284
  %v5505 = vpack.c.b16 %v5295, %v5290
  %v5506 = vpack.c.b16 %v5296, %v5291
  %v5507 = vpack.c.b16 %v5297, %v5292
  %v5508 = vpack.c.b16 %v5298, %v5293
  %v5509 = vpack.c.b16 %v5299, %v5294
  %v5510 = vpack.c.b16 %v5305, %v5300
  %v5511 = vpack.c.b16 %v5306, %v5301
  %v5512 = vpack.c.b16 %v5307, %v5302
  %v5513 = vpack.c.b16 %v5308, %v5303
  %v5514 = vpack.c.b16 %v5309, %v5304
  %v5515 = vpack.c.b16 %v5315, %v5310
  %v5516 = vpack.c.b16 %v5316, %v5311
  %v5517 = vpack.c.b16 %v5317, %v5312
  %v5518 = vpack.c.b16 %v5318, %v5313
  %v5519 = vpack.c.b16 %v5319, %v5314
  %v5520 = vpack.c.b16 %v5325, %v5320
  %v5521 = vpack.c.b16 %v5326, %v5321
  %v5522 = vpack.c.b16 %v5327, %v5322
  %v5523 = vpack.c.b16 %v5328, %v5323
  %v5524 = vpack.c.b16 %v5329, %v5324
  %v5525 = vpack.c.b16 %v5335, %v5330
  %v5526 = vpack.c.b16 %v5336, %v5331
  %v5527 = vpack.c.b16 %v5337, %v5332
  %v5528 = vpack.c.b16 %v5338, %v5333
  %v5529 = vpack.c.b16 %v5339, %v5334
  %v5530 = vpack.c.b16 %v5345, %v5340
  %v5531 = vpack.c.b16 %v5346, %v5341
  %v5532 = vpack.c.b16 %v5347, %v5342
  %v5533 = vpack.c.b16 %v5348, %v5343
  %v5534 = vpack.c.b16 %v5349, %v5344
  %v5535 = vpack.c.b16 %v5355, %v5350
  %v5536 = vpack.c.b16 %v5356, %v5351
  %v5537 = vpack.c.b16 %v5357, %v5352
  %v5538 = vpack.c.b16 %v5358, %v5353
  %v5539 = vpack.c.b16 %v5359, %v5354
  %v5540 = vpack.c.b16 %v5365, %v5360
  %v5541 = vpack.c.b16 %v5366, %v5361
  %v5542 = vpack.c.b16 %v5367, %v5362
  %v5543 = vpack.c.b16 %v5368, %v5363
  %v5544 = vpack.c.b16 %v5369, %v5364
  %v5545 = vpack.c.b16 %v5375, %v5370
  %v5546 = vpack.c.b16 %v5376, %v5371
  %v5547 = vpack.c.b16 %v5377, %v5372
  %v5548 = vpack.c.b16 %v5378, %v5373
  %v5549 = vpack.c.b16 %v5379, %v5374
  %v5550 = vpack.c.b16 %v5385, %v5380
  %v5551 = vpack.c.b16 %v5386, %v5381
  %v5552 = vpack.c.b16 %v5387, %v5382
  %v5553 = vpack.c.b16 %v5388, %v5383
  %v5554 = vpack.c.b16 %v5389, %v5384
  %v5555 = vpack.c.b16 %v5395, %v5390
  %v5556 = vpack.c.b16 %v5396, %v5391
  %v5557 = vpack.c.b16 %v5397, %v5392
  %v5558 = vpack.c.b16 %v5398, %v5393
  %v5559 = vpack.c.b16 %v5399, %v5394
  %5720 = vmatprep.subr.bf16.mxu0 %v5401
  %5721 = vmatpush1.bf16.msra.mxu0 %v5400
  %5722 = vmatprep.subr.bf16.mxu0 %v5406
  %5723 = vmatpush1.bf16.msra.mxu0 %v5405
  %5724 = vmatprep.subr.bf16.mxu0 %v5411
  %5725 = vmatpush1.bf16.msra.mxu0 %v5410
  %5726 = vmatprep.subr.bf16.mxu0 %v5416
  %5727 = vmatpush1.bf16.msra.mxu0 %v5415
  %5728 = vmatprep.subr.bf16.mxu0 %v5421
  %5729 = vmatpush1.bf16.msra.mxu0 %v5420
  %5730 = vmatprep.subr.bf16.mxu0 %v5426
  %5731 = vmatpush1.bf16.msra.mxu0 %v5425
  %5732 = vmatprep.subr.bf16.mxu0 %v5431
  %5733 = vmatpush1.bf16.msra.mxu0 %v5430
  %5734 = vmatprep.subr.bf16.mxu0 %v5436
  %5735 = vmatpush1.bf16.msra.mxu0 %v5435
  %5736 = vmatprep.subr.bf16.mxu0 %v5441
  %5737 = vmatpush1.bf16.msra.mxu0 %v5440
  %5738 = vmatprep.subr.bf16.mxu0 %v5446
  %5739 = vmatpush1.bf16.msra.mxu0 %v5445
  %5740 = vmatprep.subr.bf16.mxu0 %v5451
  %5741 = vmatpush1.bf16.msra.mxu0 %v5450
  %5742 = vmatprep.subr.bf16.mxu0 %v5456
  %5743 = vmatpush1.bf16.msra.mxu0 %v5455
  %5744 = vmatprep.subr.bf16.mxu0 %v5461
  %5745 = vmatpush1.bf16.msra.mxu0 %v5460
  %5746 = vmatprep.subr.bf16.mxu0 %v5466
  %5747 = vmatpush1.bf16.msra.mxu0 %v5465
  %5748 = vmatprep.subr.bf16.mxu0 %v5471
  %5749 = vmatpush1.bf16.msra.mxu0 %v5470
  %5750 = vmatprep.subr.bf16.mxu0 %v5476
  %5751 = vmatpush1.bf16.msra.mxu0 %v5475
  %5752 = vmatprep.mubr.bf16.mxu0 %v4693
  %5753 = vmatmul.mubr.bf16.gmra.mrb[0].mxu0 %v4692
  %v5754 = vpop.f32.mrb[0].mxu0
  %v5755 = vadd.f32 0.0, %v5754
  %v5756 = vpop.f32.mrb[0].mxu0
  %v5757 = vadd.f32 0.0, %v5756
  %v5758 = vpop.f32.mrb[0].mxu0
  %v5759 = vpop.f32.mrb[0].mxu0
  %5760 = vdwg.mxu0
  %5761 = vmatprep.subr.bf16.mxu0 %v5481
  %5762 = vmatpush1.bf16.msra.mxu0 %v5480
  %5763 = vmatprep.subr.bf16.mxu0 %v5486
  %5764 = vmatpush1.bf16.msra.mxu0 %v5485
  %5765 = vmatprep.subr.bf16.mxu0 %v5491
  %5766 = vmatpush1.bf16.msra.mxu0 %v5490
  %5767 = vmatprep.subr.bf16.mxu0 %v5496
  %5768 = vmatpush1.bf16.msra.mxu0 %v5495
  %5769 = vmatprep.subr.bf16.mxu0 %v5501
  %5770 = vmatpush1.bf16.msra.mxu0 %v5500
  %5771 = vmatprep.subr.bf16.mxu0 %v5506
  %5772 = vmatpush1.bf16.msra.mxu0 %v5505
  %5773 = vmatprep.subr.bf16.mxu0 %v5511
  %5774 = vmatpush1.bf16.msra.mxu0 %v5510
  %5775 = vmatprep.subr.bf16.mxu0 %v5516
  %5776 = vmatpush1.bf16.msra.mxu0 %v5515
  %5777 = vmatprep.subr.bf16.mxu0 %v5521
  %5778 = vmatpush1.bf16.msra.mxu0 %v5520
  %5779 = vmatprep.subr.bf16.mxu0 %v5526
  %5780 = vmatpush1.bf16.msra.mxu0 %v5525
  %5781 = vmatprep.subr.bf16.mxu0 %v5531
  %5782 = vmatpush1.bf16.msra.mxu0 %v5530
  %5783 = vmatprep.subr.bf16.mxu0 %v5536
  %5784 = vmatpush1.bf16.msra.mxu0 %v5535
  %5785 = vmatprep.subr.bf16.mxu0 %v5541
  %5786 = vmatpush1.bf16.msra.mxu0 %v5540
  %5787 = vmatprep.subr.bf16.mxu0 %v5546
  %5788 = vmatpush1.bf16.msra.mxu0 %v5545
  %5789 = vmatprep.subr.bf16.mxu0 %v5551
  %5790 = vmatpush1.bf16.msra.mxu0 %v5550
  %5791 = vmatprep.subr.bf16.mxu0 %v5556
  %5792 = vmatpush1.bf16.msra.mxu0 %v5555
  %5793 = vmatprep.mubr.bf16.mxu0 %v4695
  %5794 = vmatmul.mubr.bf16.gmra.mrb[0].mxu0 %v4694
  %v5795 = vpop.f32.mrb[0].mxu0
  %v5796 = vadd.f32 %v5755, %v5795
  %v5797 = vpop.f32.mrb[0].mxu0
  %v5798 = vadd.f32 %v5757, %v5797
  %v5799 = vpop.f32.mrb[0].mxu0
  %v5800 = vpop.f32.mrb[0].mxu0
  %5801 = vdwg.mxu0
  %5802 = vmatprep.subr.bf16.mxu0 %v5403
  %5803 = vmatpush1.bf16.msra.mxu0 %v5402
  %5804 = vmatprep.subr.bf16.mxu0 %v5408
  %5805 = vmatpush1.bf16.msra.mxu0 %v5407
  %5806 = vmatprep.subr.bf16.mxu0 %v5413
  %5807 = vmatpush1.bf16.msra.mxu0 %v5412
  %5808 = vmatprep.subr.bf16.mxu0 %v5418
  %5809 = vmatpush1.bf16.msra.mxu0 %v5417
  %5810 = vmatprep.subr.bf16.mxu0 %v5423
  %5811 = vmatpush1.bf16.msra.mxu0 %v5422
  %5812 = vmatprep.subr.bf16.mxu0 %v5428
  %5813 = vmatpush1.bf16.msra.mxu0 %v5427
  %5814 = vmatprep.subr.bf16.mxu0 %v5433
  %5815 = vmatpush1.bf16.msra.mxu0 %v5432
  %5816 = vmatprep.subr.bf16.mxu0 %v5438
  %5817 = vmatpush1.bf16.msra.mxu0 %v5437
  %5818 = vmatprep.subr.bf16.mxu0 %v5443
  %5819 = vmatpush1.bf16.msra.mxu0 %v5442
  %5820 = vmatprep.subr.bf16.mxu0 %v5448
  %5821 = vmatpush1.bf16.msra.mxu0 %v5447
  %5822 = vmatprep.subr.bf16.mxu0 %v5453
  %5823 = vmatpush1.bf16.msra.mxu0 %v5452
  %5824 = vmatprep.subr.bf16.mxu0 %v5458
  %5825 = vmatpush1.bf16.msra.mxu0 %v5457
  %5826 = vmatprep.subr.bf16.mxu0 %v5463
  %5827 = vmatpush1.bf16.msra.mxu0 %v5462
  %5828 = vmatprep.subr.bf16.mxu0 %v5468
  %5829 = vmatpush1.bf16.msra.mxu0 %v5467
  %5830 = vmatprep.subr.bf16.mxu0 %v5473
  %5831 = vmatpush1.bf16.msra.mxu0 %v5472
  %5832 = vmatprep.subr.bf16.mxu0 %v5478
  %5833 = vmatpush1.bf16.msra.mxu0 %v5477
  %5834 = vmatprep.mubr.bf16.mxu0 %v4693
  %5835 = vmatmul.mubr.bf16.gmra.mrb[0].mxu0 %v4692
  %v5836 = vpop.f32.mrb[0].mxu0
  %v5837 = vadd.f32 0.0, %v5836
  %v5838 = vpop.f32.mrb[0].mxu0
  %v5839 = vadd.f32 0.0, %v5838
  %v5840 = vpop.f32.mrb[0].mxu0
  %v5841 = vpop.f32.mrb[0].mxu0
  %5842 = vdwg.mxu0
  %5843 = vmatprep.subr.bf16.mxu0 %v5483
  %5844 = vmatpush1.bf16.msra.mxu0 %v5482
  %5845 = vmatprep.subr.bf16.mxu0 %v5488
  %5846 = vmatpush1.bf16.msra.mxu0 %v5487
  %5847 = vmatprep.subr.bf16.mxu0 %v5493
  %5848 = vmatpush1.bf16.msra.mxu0 %v5492
  %5849 = vmatprep.subr.bf16.mxu0 %v5498
  %5850 = vmatpush1.bf16.msra.mxu0 %v5497
  %5851 = vmatprep.subr.bf16.mxu0 %v5503
  %5852 = vmatpush1.bf16.msra.mxu0 %v5502
  %5853 = vmatprep.subr.bf16.mxu0 %v5508
  %5854 = vmatpush1.bf16.msra.mxu0 %v5507
  %5855 = vmatprep.subr.bf16.mxu0 %v5513
  %5856 = vmatpush1.bf16.msra.mxu0 %v5512
  %5857 = vmatprep.subr.bf16.mxu0 %v5518
  %5858 = vmatpush1.bf16.msra.mxu0 %v5517
  %5859 = vmatprep.subr.bf16.mxu0 %v5523
  %5860 = vmatpush1.bf16.msra.mxu0 %v5522
  %5861 = vmatprep.subr.bf16.mxu0 %v5528
  %5862 = vmatpush1.bf16.msra.mxu0 %v5527
  %5863 = vmatprep.subr.bf16.mxu0 %v5533
  %5864 = vmatpush1.bf16.msra.mxu0 %v5532
  %5865 = vmatprep.subr.bf16.mxu0 %v5538
  %5866 = vmatpush1.bf16.msra.mxu0 %v5537
  %5867 = vmatprep.subr.bf16.mxu0 %v5543
  %5868 = vmatpush1.bf16.msra.mxu0 %v5542
  %5869 = vmatprep.subr.bf16.mxu0 %v5548
  %5870 = vmatpush1.bf16.msra.mxu0 %v5547
  %5871 = vmatprep.subr.bf16.mxu0 %v5553
  %5872 = vmatpush1.bf16.msra.mxu0 %v5552
  %5873 = vmatprep.subr.bf16.mxu0 %v5558
  %5874 = vmatpush1.bf16.msra.mxu0 %v5557
  %5875 = vmatprep.mubr.bf16.mxu0 %v4695
  %5876 = vmatmul.mubr.bf16.gmra.mrb[0].mxu0 %v4694
  %v5877 = vpop.f32.mrb[0].mxu0
  %v5878 = vadd.f32 %v5837, %v5877
  %v5879 = vpop.f32.mrb[0].mxu0
  %v5880 = vadd.f32 %v5839, %v5879
  %v5881 = vpop.f32.mrb[0].mxu0
  %v5882 = vpop.f32.mrb[0].mxu0
  %5883 = vdwg.mxu0
  %5884 = vmatprep.subr.bf16.mxu0 0
  %5885 = vmatpush1.bf16.msra.mxu0 %v5404
  %5886 = vmatprep.subr.bf16.mxu0 0
  %5887 = vmatpush1.bf16.msra.mxu0 %v5409
  %5888 = vmatprep.subr.bf16.mxu0 0
  %5889 = vmatpush1.bf16.msra.mxu0 %v5414
  %5890 = vmatprep.subr.bf16.mxu0 0
  %5891 = vmatpush1.bf16.msra.mxu0 %v5419
  %5892 = vmatprep.subr.bf16.mxu0 0
  %5893 = vmatpush1.bf16.msra.mxu0 %v5424
  %5894 = vmatprep.subr.bf16.mxu0 0
  %5895 = vmatpush1.bf16.msra.mxu0 %v5429
  %5896 = vmatprep.subr.bf16.mxu0 0
  %5897 = vmatpush1.bf16.msra.mxu0 %v5434
  %5898 = vmatprep.subr.bf16.mxu0 0
  %5899 = vmatpush1.bf16.msra.mxu0 %v5439
  %5900 = vmatprep.subr.bf16.mxu0 0
  %5901 = vmatpush1.bf16.msra.mxu0 %v5444
  %5902 = vmatprep.subr.bf16.mxu0 0
  %5903 = vmatpush1.bf16.msra.mxu0 %v5449
  %5904 = vmatprep.subr.bf16.mxu0 0
  %5905 = vmatpush1.bf16.msra.mxu0 %v5454
  %5906 = vmatprep.subr.bf16.mxu0 0
  %5907 = vmatpush1.bf16.msra.mxu0 %v5459
  %5908 = vmatprep.subr.bf16.mxu0 0
  %5909 = vmatpush1.bf16.msra.mxu0 %v5464
  %5910 = vmatprep.subr.bf16.mxu0 0
  %5911 = vmatpush1.bf16.msra.mxu0 %v5469
  %5912 = vmatprep.subr.bf16.mxu0 0
  %5913 = vmatpush1.bf16.msra.mxu0 %v5474
  %5914 = vmatprep.subr.bf16.mxu0 0
  %5915 = vmatpush1.bf16.msra.mxu0 %v5479
  %5916 = vmatprep.mubr.bf16.mxu0 %v4693
  %5917 = vmatmul.mubr.bf16.gmra.mrb[0].mxu0 %v4692
  %v5918 = vpop.f32.mrb[0].mxu0
  %v5919 = vadd.f32 0.0, %v5918
  %v5920 = vpop.f32.mrb[0].mxu0
  %v5921 = vpop.f32.mrb[0].mxu0
  %v5922 = vpop.f32.mrb[0].mxu0
  %5923 = vdwg.mxu0
  %5924 = vmatprep.subr.bf16.mxu0 0
  %5925 = vmatpush1.bf16.msra.mxu0 %v5484
  %5926 = vmatprep.subr.bf16.mxu0 0
  %5927 = vmatpush1.bf16.msra.mxu0 %v5489
  %5928 = vmatprep.subr.bf16.mxu0 0
  %5929 = vmatpush1.bf16.msra.mxu0 %v5494
  %5930 = vmatprep.subr.bf16.mxu0 0
  %5931 = vmatpush1.bf16.msra.mxu0 %v5499
  %5932 = vmatprep.subr.bf16.mxu0 0
  %5933 = vmatpush1.bf16.msra.mxu0 %v5504
  %5934 = vmatprep.subr.bf16.mxu0 0
  %5935 = vmatpush1.bf16.msra.mxu0 %v5509
  %5936 = vmatprep.subr.bf16.mxu0 0
  %5937 = vmatpush1.bf16.msra.mxu0 %v5514
  %5938 = vmatprep.subr.bf16.mxu0 0
  %5939 = vmatpush1.bf16.msra.mxu0 %v5519
  %5940 = vmatprep.subr.bf16.mxu0 0
  %5941 = vmatpush1.bf16.msra.mxu0 %v5524
  %5942 = vmatprep.subr.bf16.mxu0 0
  %5943 = vmatpush1.bf16.msra.mxu0 %v5529
  %5944 = vmatprep.subr.bf16.mxu0 0
  %5945 = vmatpush1.bf16.msra.mxu0 %v5534
  %5946 = vmatprep.subr.bf16.mxu0 0
  %5947 = vmatpush1.bf16.msra.mxu0 %v5539
  %5948 = vmatprep.subr.bf16.mxu0 0
  %5949 = vmatpush1.bf16.msra.mxu0 %v5544
  %5950 = vmatprep.subr.bf16.mxu0 0
  %5951 = vmatpush1.bf16.msra.mxu0 %v5549
  %5952 = vmatprep.subr.bf16.mxu0 0
  %5953 = vmatpush1.bf16.msra.mxu0 %v5554
  %5954 = vmatprep.subr.bf16.mxu0 0
  %5955 = vmatpush1.bf16.msra.mxu0 %v5559
  %5956 = vmatprep.mubr.bf16.mxu0 %v4695
  %5957 = vmatmul.mubr.bf16.gmra.mrb[0].mxu0 %v4694
  %v5958 = vpop.f32.mrb[0].mxu0
  %v5959 = vadd.f32 %v5919, %v5958
  %v5960 = vpop.f32.mrb[0].mxu0
  %v5961 = vpop.f32.mrb[0].mxu0
  %v5962 = vpop.f32.mrb[0].mxu0
  %5963 = vdwg.mxu0
  %5966 = vrot.lane.b32.xlu0 %v5798, 112
  %v5967 = vpop.permute.xlu0 %5966
  %5968 = vrot.lane.b32.xlu0 %v5878, 112
  %v5969 = vpop.permute.xlu0 %5968
  %vm5970 = vcmask 916480
  %v5971 = vsel %vm5970, %v5967, %v5969
  %v5974 = vmax.f32 %v5796, %v5971
  %v5975 = vmax.f32 %v5798, %v5969
  %5978 = vrot.lane.b32.xlu0 %v5880, 112
  %v5979 = vpop.permute.xlu0 %5978
  %5980 = vrot.lane.b32.xlu0 %v5959, 112
  %v5981 = vpop.permute.xlu0 %5980
  %v5982 = vsel %vm5970, %v5979, %v5981
  %v5985 = vmax.f32 %v5878, %v5982
  %v5986 = vmax.f32 %v5880, %v5981
  %5989 = vrot.lane.b32.xlu0 %v5985, 96
  %v5990 = vpop.permute.xlu0 %5989
  %5991 = vrot.lane.b32.xlu0 %v5986, 96
  %v5992 = vpop.permute.xlu0 %5991
  %vm5993 = vcmask 785408
  %v5994 = vsel %vm5993, %v5990, %v5992
  %v5997 = vmax.f32 %v5974, %v5994
  %v5998 = vmax.f32 %v5975, %v5992
  %v5999 = vld [vmem:[%s13] sm:$0x3]
  %v6001 = vlaneseq
  %v6002 = vshrl.u32 %v6001, 7
  %v6003 = vsub.s32 0, %v6002
  %v6004 = vrot.slane %v5999, %v6003
  %v6005 = vlaneseq
  %v6006 = vshrl.u32 %v6005, 7
  %v6007 = vsub.s32 1, %v6006
  %v6008 = vrot.slane %v5999, %v6007
  %v6011 = vadd.f32 %v5997, %v6004
  %v6012 = vadd.f32 %v5998, %v6008
  %v6013 = vmax.f32 %v6011, 0.0
  %v6014 = vmax.f32 %v6012, 0.0
  %v6015 = vpack.c.bf16 %v6013, %v6013
  %v6016 = vpack.c.bf16 %v6014, %v6014
  %v6017 = vld [vmem:[%s14] sm:$0xf]
  %v6018 = vld [vmem:[%s14 + $0x4] sm:$0xf]
  %v6019 = vld [vmem:[%s14 + $0x8] sm:$0xf]
  %v6020 = vld [vmem:[%s14 + $0xc] sm:$0xf]
  %v6021 = vld [vmem:[%s14 + $0x10] sm:$0xf]
  %v6022 = vld [vmem:[%s14 + $0x14] sm:$0xf]
  %v6023 = vld [vmem:[%s14 + $0x18] sm:$0xf]
  %v6024 = vld [vmem:[%s14 + $0x1c] sm:$0xf]
  %v6025 = vld [vmem:[%s14 + $0x20] sm:$0xf]
  %v6026 = vld [vmem:[%s14 + $0x24] sm:$0xf]
  %v6027 = vld [vmem:[%s14 + $0x28] sm:$0xf]
  %v6028 = vld [vmem:[%s14 + $0x2c] sm:$0xf]
  %v6029 = vld [vmem:[%s14 + $0x30] sm:$0xf]
  %v6030 = vld [vmem:[%s14 + $0x34] sm:$0xf]
  %v6031 = vld [vmem:[%s14 + $0x38] sm:$0xf]
  %v6032 = vld [vmem:[%s14 + $0x3c] sm:$0xf]
  %v6033 = vld [vmem:[%s14 + $0x40] sm:$0xf]
  %v6034 = vld [vmem:[%s14 + $0x44] sm:$0xf]
  %v6035 = vld [vmem:[%s15] sm:$0x1]
  %v6037 = vlaneseq
  %v6038 = vshrl.u32 %v6037, 7
  %v6039 = vsub.s32 0, %v6038
  %v6040 = vrot.slane %v6035, %v6039
  %v6060 = vunpack.c.l.b16 %v6017
  %v6061 = vunpack.c.l.b16 %v6018
  %v6062 = vunpack.c.l.b16 %v6019
  %v6063 = vunpack.c.l.b16 %v6020
  %v6064 = vunpack.c.l.b16 %v6021
  %v6065 = vunpack.c.l.b16 %v6022
  %v6066 = vunpack.c.l.b16 %v6023
  %v6067 = vunpack.c.l.b16 %v6024
  %v6068 = vunpack.c.l.b16 %v6025
  %v6069 = vunpack.c.l.b16 %v6026
  %v6070 = vunpack.c.l.b16 %v6027
  %v6071 = vunpack.c.l.b16 %v6028
  %v6072 = vunpack.c.l.b16 %v6029
  %v6073 = vunpack.c.l.b16 %v6030
  %v6074 = vunpack.c.l.b16 %v6031
  %v6075 = vunpack.c.l.b16 %v6032
  %v6076 = vunpack.c.l.b16 %v6033
  %v6077 = vunpack.c.l.b16 %v6034
  %v6078 = vpack.c.b16 %v6061, %v6060
  %v6079 = vpack.c.b16 %v6063, %v6062
  %v6080 = vpack.c.b16 %v6065, %v6064
  %v6081 = vpack.c.b16 %v6067, %v6066
  %v6082 = vpack.c.b16 %v6069, %v6068
  %v6083 = vpack.c.b16 %v6071, %v6070
  %v6084 = vpack.c.b16 %v6073, %v6072
  %v6085 = vpack.c.b16 %v6075, %v6074
  %v6086 = vpack.c.b16 %v6077, %v6076
  %vm6096 = vcmask 130048
  %v6098 = vsel %vm6096, %v6016, 0
  %6100 = vmatprep.subr.bf16.mxu0 0
  %6101 = vmatpush1.bf16.msra.mxu0 %v6078
  %6102 = vmatprep.subr.bf16.mxu0 0
  %6103 = vmatpush1.bf16.msra.mxu0 %v6079
  %6104 = vmatprep.subr.bf16.mxu0 0
  %6105 = vmatpush1.bf16.msra.mxu0 %v6080
  %6106 = vmatprep.subr.bf16.mxu0 0
  %6107 = vmatpush1.bf16.msra.mxu0 %v6081
  %6108 = vmatprep.subr.bf16.mxu0 0
  %6109 = vmatpush1.bf16.msra.mxu0 %v6082
  %6110 = vmatprep.subr.bf16.mxu0 0
  %6111 = vmatpush1.bf16.msra.mxu0 %v6083
  %6112 = vmatprep.subr.bf16.mxu0 0
  %6113 = vmatpush1.bf16.msra.mxu0 %v6084
  %6114 = vmatprep.subr.bf16.mxu0 0
  %6115 = vmatpush1.bf16.msra.mxu0 %v6085
  %6116 = vmatprep.subr.bf16.mxu0 0
  %6117 = vmatpush1.bf16.msra.mxu0 %v6086
  %6118 = vmatprep.subr.bf16.mxu0 0
  %6119 = vmatpush1.bf16.msra.mxu0 0
  %6120 = vmatprep.subr.bf16.mxu0 0
  %6121 = vmatpush1.bf16.msra.mxu0 0
  %6122 = vmatprep.subr.bf16.mxu0 0
  %6123 = vmatpush1.bf16.msra.mxu0 0
  %6124 = vmatprep.subr.bf16.mxu0 0
  %6125 = vmatpush1.bf16.msra.mxu0 0
  %6126 = vmatprep.subr.bf16.mxu0 0
  %6127 = vmatpush1.bf16.msra.mxu0 0
  %6128 = vmatprep.subr.bf16.mxu0 0
  %6129 = vmatpush1.bf16.msra.mxu0 0
  %6130 = vmatprep.subr.bf16.mxu0 0
  %6131 = vmatpush1.bf16.msra.mxu0 0
  %6132 = vmatprep.mubr.bf16.mxu0 %v6098
  %6133 = vmatmul.mubr.bf16.gmra.mrb[0].mxu0 %v6015
  %v6134 = vpop.f32.mrb[0].mxu0
  %v6135 = vadd.f32 %v6040, %v6134
  %v6136 = vpop.f32.mrb[0].mxu0
  %v6137 = vpop.f32.mrb[0].mxu0
  %v6138 = vpop.f32.mrb[0].mxu0
  %6139 = vdwg.mxu0
  %v6140 = vmax.f32 %v6135, 0.0
  %v6141 = vpack.c.bf16 %v1966, %v1966
  %v6142 = vld [vmem:[%s16] sm:$0xf]
  %v6143 = vld [vmem:[%s16 + $0x4] sm:$0xf]
  %v6144 = vld [vmem:[%s16 + $0x8] sm:$0xf]
  %v6145 = vld [vmem:[%s16 + $0xc] sm:$0xf]
  %v6146 = vld [vmem:[%s16 + $0x10] sm:$0xf]
  %v6147 = vld [vmem:[%s16 + $0x14] sm:$0xf]
  %v6148 = vld [vmem:[%s16 + $0x18] sm:$0xf]
  %v6149 = vld [vmem:[%s16 + $0x1c] sm:$0xf]
  %v6150 = vpack.c.bf16 %v6140, %v6140
  %v6151 = vld [vmem:[%s17] sm:$0xf]
  %v6152 = vld [vmem:[%s17 + $0x4] sm:$0xf]
  %v6153 = vld [vmem:[%s17 + $0x8] sm:$0xf]
  %v6154 = vld [vmem:[%s17 + $0xc] sm:$0xf]
  %v6159 = vunpack.c.l.b16 %v6151
  %v6160 = vunpack.c.l.b16 %v6152
  %v6161 = vunpack.c.l.b16 %v6153
  %v6162 = vunpack.c.l.b16 %v6154
  %v6163 = vpack.c.b16 %v6160, %v6159
  %v6164 = vpack.c.b16 %v6162, %v6161
  %vm6167 = vcmask 261120
  %v6169 = vsel %vm6167, %v6150, 0
  %6171 = vmatprep.subr.bf16.mxu0 0
  %6172 = vmatpush1.bf16.msra.mxu0 %v6163
  %6173 = vmatprep.subr.bf16.mxu0 0
  %6174 = vmatpush1.bf16.msra.mxu0 %v6164
  %6175 = vmatprep.subr.bf16.mxu0 0
  %6176 = vmatpush1.bf16.msra.mxu0 0
  %6177 = vmatprep.subr.bf16.mxu0 0
  %6178 = vmatpush1.bf16.msra.mxu0 0
  %6179 = vmatprep.subr.bf16.mxu0 0
  %6180 = vmatpush1.bf16.msra.mxu0 0
  %6181 = vmatprep.subr.bf16.mxu0 0
  %6182 = vmatpush1.bf16.msra.mxu0 0
  %6183 = vmatprep.subr.bf16.mxu0 0
  %6184 = vmatpush1.bf16.msra.mxu0 0
  %6185 = vmatprep.subr.bf16.mxu0 0
  %6186 = vmatpush1.bf16.msra.mxu0 0
  %6187 = vmatprep.subr.bf16.mxu0 0
  %6188 = vmatpush1.bf16.msra.mxu0 0
  %6189 = vmatprep.subr.bf16.mxu0 0
  %6190 = vmatpush1.bf16.msra.mxu0 0
  %6191 = vmatprep.subr.bf16.mxu0 0
  %6192 = vmatpush1.bf16.msra.mxu0 0
  %6193 = vmatprep.subr.bf16.mxu0 0
  %6194 = vmatpush1.bf16.msra.mxu0 0
  %6195 = vmatprep.subr.bf16.mxu0 0
  %6196 = vmatpush1.bf16.msra.mxu0 0
  %6197 = vmatprep.subr.bf16.mxu0 0
  %6198 = vmatpush1.bf16.msra.mxu0 0
  %6199 = vmatprep.subr.bf16.mxu0 0
  %6200 = vmatpush1.bf16.msra.mxu0 0
  %6201 = vmatprep.subr.bf16.mxu0 0
  %6202 = vmatpush1.bf16.msra.mxu0 0
  %6203 = vmatprep.mubr.bf16.mxu0 0
  %6204 = vmatmul.mubr.bf16.gmra.mrb[0].mxu0 %v6169
  %v6205 = vpop.f32.mrb[0].mxu0
  %v6206 = vadd.f32 0.0, %v6205
  %v6207 = vpop.f32.mrb[0].mxu0
  %v6208 = vpop.f32.mrb[0].mxu0
  %v6209 = vpop.f32.mrb[0].mxu0
  %6210 = vdwg.mxu0
  %v6219 = vunpack.c.l.b16 %v6142
  %v6220 = vunpack.c.l.b16 %v6143
  %v6221 = vunpack.c.l.b16 %v6144
  %v6222 = vunpack.c.l.b16 %v6145
  %v6223 = vunpack.c.l.b16 %v6146
  %v6224 = vunpack.c.l.b16 %v6147
  %v6225 = vunpack.c.l.b16 %v6148
  %v6226 = vunpack.c.l.b16 %v6149
  %v6227 = vpack.c.b16 %v6220, %v6219
  %v6228 = vpack.c.b16 %v6222, %v6221
  %v6229 = vpack.c.b16 %v6224, %v6223
  %v6230 = vpack.c.b16 %v6226, %v6225
  %v6236 = vsel %vm290, %v6141, 0
  %6238 = vmatprep.subr.bf16.mxu0 0
  %6239 = vmatpush1.bf16.msra.mxu0 %v6227
  %6240 = vmatprep.subr.bf16.mxu0 0
  %6241 = vmatpush1.bf16.msra.mxu0 %v6228
  %6242 = vmatprep.subr.bf16.mxu0 0
  %6243 = vmatpush1.bf16.msra.mxu0 %v6229
  %6244 = vmatprep.subr.bf16.mxu0 0
  %6245 = vmatpush1.bf16.msra.mxu0 %v6230
  %6246 = vmatprep.subr.bf16.mxu0 0
  %6247 = vmatpush1.bf16.msra.mxu0 0
  %6248 = vmatprep.subr.bf16.mxu0 0
  %6249 = vmatpush1.bf16.msra.mxu0 0
  %6250 = vmatprep.subr.bf16.mxu0 0
  %6251 = vmatpush1.bf16.msra.mxu0 0
  %6252 = vmatprep.subr.bf16.mxu0 0
  %6253 = vmatpush1.bf16.msra.mxu0 0
  %6254 = vmatprep.subr.bf16.mxu0 0
  %6255 = vmatpush1.bf16.msra.mxu0 0
  %6256 = vmatprep.subr.bf16.mxu0 0
  %6257 = vmatpush1.bf16.msra.mxu0 0
  %6258 = vmatprep.subr.bf16.mxu0 0
  %6259 = vmatpush1.bf16.msra.mxu0 0
  %6260 = vmatprep.subr.bf16.mxu0 0
  %6261 = vmatpush1.bf16.msra.mxu0 0
  %6262 = vmatprep.subr.bf16.mxu0 0
  %6263 = vmatpush1.bf16.msra.mxu0 0
  %6264 = vmatprep.subr.bf16.mxu0 0
  %6265 = vmatpush1.bf16.msra.mxu0 0
  %6266 = vmatprep.subr.bf16.mxu0 0
  %6267 = vmatpush1.bf16.msra.mxu0 0
  %6268 = vmatprep.subr.bf16.mxu0 0
  %6269 = vmatpush1.bf16.msra.mxu0 0
  %6270 = vmatprep.mubr.bf16.mxu0 0
  %6271 = vmatmul.mubr.bf16.gmra.mrb[0].mxu0 %v6236
  %v6272 = vpop.f32.mrb[0].mxu0
  %v6273 = vadd.f32 %v6206, %v6272
  %v6274 = vpop.f32.mrb[0].mxu0
  %v6275 = vpop.f32.mrb[0].mxu0
  %v6276 = vpop.f32.mrb[0].mxu0
  %6277 = vdwg.mxu0
  %v6278 = vld [vmem:[%s18] sm:$0x1]
  %v6280 = vlaneseq
  %v6281 = vshrl.u32 %v6280, 7
  %v6282 = vsub.s32 0, %v6281
  %v6283 = vrot.slane %v6278, %v6282
  %v6285 = vadd.f32 %v6273, %v6283
  %v6286 = vmax.f32 %v6285, 0.0
  %v6287 = vpack.c.bf16 %v6286, %v6286
  %v6288 = vld [vmem:[%s19] sm:$0xf]
  %v6289 = vld [vmem:[%s19 + $0x4] sm:$0xf]
  %v6290 = vld [vmem:[%s19 + $0x8] sm:$0xf]
  %v6291 = vld [vmem:[%s19 + $0xc] sm:$0xf]
  %v6292 = vld [vmem:[%s20] sm:$0x1]
  %v6294 = vlaneseq
  %v6295 = vshrl.u32 %v6294, 7
  %v6296 = vsub.s32 0, %v6295
  %v6297 = vrot.slane %v6292, %v6296
  %v6303 = vunpack.c.l.b16 %v6288
  %v6304 = vunpack.c.l.b16 %v6289
  %v6305 = vunpack.c.l.b16 %v6290
  %v6306 = vunpack.c.l.b16 %v6291
  %v6307 = vpack.c.b16 %v6304, %v6303
  %v6308 = vpack.c.b16 %v6306, %v6305
  %v6312 = vsel %vm6167, %v6287, 0
  %6314 = vmatprep.subr.bf16.mxu0 0
  %6315 = vmatpush1.bf16.msra.mxu0 %v6307
  %6316 = vmatprep.subr.bf16.mxu0 0
  %6317 = vmatpush1.bf16.msra.mxu0 %v6308
  %6318 = vmatprep.subr.bf16.mxu0 0
  %6319 = vmatpush1.bf16.msra.mxu0 0
  %6320 = vmatprep.subr.bf16.mxu0 0
  %6321 = vmatpush1.bf16.msra.mxu0 0
  %6322 = vmatprep.subr.bf16.mxu0 0
  %6323 = vmatpush1.bf16.msra.mxu0 0
  %6324 = vmatprep.subr.bf16.mxu0 0
  %6325 = vmatpush1.bf16.msra.mxu0 0
  %6326 = vmatprep.subr.bf16.mxu0 0
  %6327 = vmatpush1.bf16.msra.mxu0 0
  %6328 = vmatprep.subr.bf16.mxu0 0
  %6329 = vmatpush1.bf16.msra.mxu0 0
  %6330 = vmatprep.subr.bf16.mxu0 0
  %6331 = vmatpush1.bf16.msra.mxu0 0
  %6332 = vmatprep.subr.bf16.mxu0 0
  %6333 = vmatpush1.bf16.msra.mxu0 0
  %6334 = vmatprep.subr.bf16.mxu0 0
  %6335 = vmatpush1.bf16.msra.mxu0 0
  %6336 = vmatprep.subr.bf16.mxu0 0
  %6337 = vmatpush1.bf16.msra.mxu0 0
  %6338 = vmatprep.subr.bf16.mxu0 0
  %6339 = vmatpush1.bf16.msra.mxu0 0
  %6340 = vmatprep.subr.bf16.mxu0 0
  %6341 = vmatpush1.bf16.msra.mxu0 0
  %6342 = vmatprep.subr.bf16.mxu0 0
  %6343 = vmatpush1.bf16.msra.mxu0 0
  %6344 = vmatprep.subr.bf16.mxu0 0
  %6345 = vmatpush1.bf16.msra.mxu0 0
  %6346 = vmatprep.mubr.bf16.mxu0 0
  %6347 = vmatmul.mubr.bf16.gmra.mrb[0].mxu0 %v6312
  %v6348 = vpop.f32.mrb[0].mxu0
  %v6349 = vadd.f32 %v6297, %v6348
  %v6350 = vpop.f32.mrb[0].mxu0
  %v6351 = vpop.f32.mrb[0].mxu0
  %v6352 = vpop.f32.mrb[0].mxu0
  %6353 = vdwg.mxu0
  %v6354 = vmax.f32 %v6349, 0.0
  %v6355 = vpack.c.bf16 %v6354, %v6354
  %v6356 = vld [vmem:[%s21] sm:$0xf]
  %v6357 = vld [vmem:[%s21 + $0x4] sm:$0xf]
  %v6358 = vld [vmem:[#allocation3] sm:$0x1]
  %v6360 = vlaneseq
  %v6361 = vshrl.u32 %v6360, 7
  %v6362 = vsub.s32 0, %v6361
  %v6363 = vrot.slane %v6358, %v6362
  %v6367 = vunpack.c.l.b16 %v6356
  %v6368 = vunpack.c.l.b16 %v6357
  %v6369 = vpack.c.b16 %v6368, %v6367
  %v6372 = vsel %vm6096, %v6355, 0
  %6374 = vmatprep.subr.bf16.mxu0 0
  %6375 = vmatpush1.bf16.msra.mxu0 %v6369
  %6376 = vmatprep.subr.bf16.mxu0 0
  %6377 = vmatpush1.bf16.msra.mxu0 0
  %6378 = vmatprep.subr.bf16.mxu0 0
  %6379 = vmatpush1.bf16.msra.mxu0 0
  %6380 = vmatprep.subr.bf16.mxu0 0
  %6381 = vmatpush1.bf16.msra.mxu0 0
  %6382 = vmatprep.subr.bf16.mxu0 0
  %6383 = vmatpush1.bf16.msra.mxu0 0
  %6384 = vmatprep.subr.bf16.mxu0 0
  %6385 = vmatpush1.bf16.msra.mxu0 0
  %6386 = vmatprep.subr.bf16.mxu0 0
  %6387 = vmatpush1.bf16.msra.mxu0 0
  %6388 = vmatprep.subr.bf16.mxu0 0
  %6389 = vmatpush1.bf16.msra.mxu0 0
  %6390 = vmatprep.subr.bf16.mxu0 0
  %6391 = vmatpush1.bf16.msra.mxu0 0
  %6392 = vmatprep.subr.bf16.mxu0 0
  %6393 = vmatpush1.bf16.msra.mxu0 0
  %6394 = vmatprep.subr.bf16.mxu0 0
  %6395 = vmatpush1.bf16.msra.mxu0 0
  %6396 = vmatprep.subr.bf16.mxu0 0
  %6397 = vmatpush1.bf16.msra.mxu0 0
  %6398 = vmatprep.subr.bf16.mxu0 0
  %6399 = vmatpush1.bf16.msra.mxu0 0
  %6400 = vmatprep.subr.bf16.mxu0 0
  %6401 = vmatpush1.bf16.msra.mxu0 0
  %6402 = vmatprep.subr.bf16.mxu0 0
  %6403 = vmatpush1.bf16.msra.mxu0 0
  %6404 = vmatprep.subr.bf16.mxu0 0
  %6405 = vmatpush1.bf16.msra.mxu0 0
  %6406 = vmatprep.mubr.bf16.mxu0 0
  %6407 = vmatmul.mubr.bf16.gmra.mrb[0].mxu0 %v6372
  %v6408 = vpop.f32.mrb[0].mxu0
  %v6409 = vadd.f32 %v6363, %v6408
  %v6410 = vpop.f32.mrb[0].mxu0
  %v6411 = vpop.f32.mrb[0].mxu0
  %v6412 = vpop.f32.mrb[0].mxu0
  %6413 = vdwg.mxu0
  %vm6414 = vcmask 7168
  %6415 = vst.msk [vmem:[%s23] sm:$0xff] %vm6414, %v6409
  // Predicated region
  $region94: #{crnn_forward.1} parent=0 // pred_check
    _
  $region95: #{crnn_forward.1} parent=0 // pred_check_branch
    %6417 = sbr.rel (0) target = $region97
  $region96: #{crnn_forward.1} parent=0 // pred_region
    _
  $region97: #{crnn_forward.1} parent=0 // pred_fallthru
    _
  // Predicated region
  $region98: #{crnn_forward.1} parent=0 // pred_check
    _
  $region99: #{crnn_forward.1} parent=0 // pred_check_branch
    %6419 = sbr.rel (0) target = $region101
  $region100: #{crnn_forward.1} parent=0 // pred_region
    _
  $region101: #{crnn_forward.1} parent=0 // pred_fallthru
    _

</llo_original>
